<compile_context>
chip_gen: v6e
topology: v6e:2x2x1
jax: 0.10.0
libtpu: 0.0.40
codegen_flags: <defaults>
</compile_context>

<pallas_src>
import numpy as np

import jax
import jax.numpy as jnp
from jax.experimental import pallas as pl
from jax.experimental.pallas import tpu as pltpu


# ----------------------------------------------------------------------------
# Host-side (NumPy) weights-only preprocessing: (transposed) conv -> dense operator
# ----------------------------------------------------------------------------
def _tap_indices(out_len, in_len, stride, pad, tap, transpose):
    """For one kernel tap, map every output index -> contributing input index."""
    o = np.arange(out_len)
    if transpose:
        num = o + pad - tap               # out = stride*in - pad + tap
        i = num // stride
        valid = (num % stride == 0) & (i >= 0) & (i < in_len)
    else:
        i = stride * o - pad + tap        # in = stride*out - pad + tap
        valid = (i >= 0) & (i < in_len)
    return i, valid


def _structure(Hi, Wi, Ho, Wo, k, stride, pad, transpose):
    """S[kh, kw, hi*Wi+wi, ho*Wo+wo] = 1 iff input pixel (hi,wi) feeds output (ho,wo)
    through kernel tap (kh,kw).  One plane per tap, so overlapping taps are summed
    correctly by the downstream einsum (general for any k/stride/padding)."""
    S = np.zeros((k, k, Hi * Wi, Ho * Wo), np.float32)
    out_flat = np.arange(Ho * Wo).reshape(Ho, Wo)
    for kh in range(k):
        hi, hv = _tap_indices(Ho, Hi, stride, pad, kh, transpose)
        for kw in range(k):
            wi, wv = _tap_indices(Wo, Wi, stride, pad, kw, transpose)
            valid = hv[:, None] & wv[None, :]
            in_flat = hi[:, None] * Wi + wi[None, :]
            S[kh, kw, in_flat[valid], out_flat[valid]] = 1.0
    return S


def _layer_operator(w, b, Hi, Wi, transpose, stride=2, pad=1):
    """Return (A, bias_flat, (Ho, Wo, Cout)) such that
       out_flat(N, Ho*Wo*Cout) = act( x_flat(N, Hi*Wi*Cin) @ A + bias_flat )
    for NHWC-flattened activations.  Pure NumPy, host side, one-time."""
    if transpose:
        Cin, Cout, k, _ = w.shape                       # ConvTranspose2d layout
        Ho = (Hi - 1) * stride - 2 * pad + k
        Wo = (Wi - 1) * stride - 2 * pad + k
        eq = "xypq,ioxy->piqo"
    else:
        Cout, Cin, k, _ = w.shape                       # Conv2d layout
        Ho = (Hi + 2 * pad - k) // stride + 1
        Wo = (Wi + 2 * pad - k) // stride + 1
        eq = "xypq,oixy->piqo"
    S = _structure(Hi, Wi, Ho, Wo, k, stride, pad, transpose)
    A = np.einsum(eq, S, w).reshape(Hi * Wi * Cin, Ho * Wo * Cout)
    b_flat = np.broadcast_to(b, (Ho * Wo, Cout)).reshape(1, Ho * Wo * Cout)
    return A.astype(np.float32), np.array(b_flat, np.float32), (Ho, Wo, Cout)


def build_operators(params, H, W):
    """One-time, host-side construction of all dense layer operators.  Call once per
    parameter set; the returned dict of device arrays is reused by every forward call."""
    p = {k: np.asarray(v) for k, v in params.items()}

    A1, b1, (H1, W1, _) = _layer_operator(p["e1_w"], p["e1_b"], H, W, False)
    A2, b2, (H2, W2, _) = _layer_operator(p["e2_w"], p["e2_b"], H1, W1, False)
    Am, bm, (Hm, Wm, Cm) = _layer_operator(p["m_w"], p["m_b"], H2, W2, False)
    Av, bv, _ = _layer_operator(p["v_w"], p["v_b"], H2, W2, False)

    lat = Hm * Wm * Cm                              # flattened latent size (192)
    lat_pad = ((lat + 127) // 128) * 128            # 128-lane aligned half width (256)

    # Fused, lane-aligned mu || logvar operator: halves at [0:lat] and [lat_pad:lat_pad+lat].
    Amv = np.zeros((Am.shape[0], 2 * lat_pad), np.float32)
    Amv[:, :lat] = Am
    Amv[:, lat_pad:lat_pad + lat] = Av
    bmv = np.zeros((1, 2 * lat_pad), np.float32)
    bmv[:, :lat] = bm
    bmv[:, lat_pad:lat_pad + lat] = bv

    A3, b3, (H3, W3, _) = _layer_operator(p["d1_w"], p["d1_b"], Hm, Wm, True)
    A3p = np.zeros((lat_pad, A3.shape[1]), np.float32)   # row-pad K to lat_pad (zeros)
    A3p[:lat] = A3
    A4, b4, (H4, W4, _) = _layer_operator(p["d2_w"], p["d2_b"], H3, W3, True)
    A5, b5, _ = _layer_operator(p["d3_w"], p["d3_b"], H4, W4, True)

    bf = lambda a: jnp.asarray(a, jnp.bfloat16)     # MXU operands in bf16
    f32 = lambda a: jnp.asarray(a, jnp.float32)     # biases in f32 (added to f32 acc)
    return {
        "A1": bf(A1), "b1": f32(b1), "A2": bf(A2), "b2": f32(b2),
        "Amv": bf(Amv), "bmv": f32(bmv),
        "A3": bf(A3p), "b3": f32(b3), "A4": bf(A4), "b4": f32(b4),
        "A5": bf(A5), "b5": f32(b5),
    }


# ----------------------------------------------------------------------------
# The single fused Pallas kernel: 6 matmuls + bias + activations + reparametrisation
# ----------------------------------------------------------------------------
def _vae_fused_kernel(x_ref, eps_ref,
                      a1_ref, b1_ref, a2_ref, b2_ref, amv_ref, bmv_ref,
                      a3_ref, b3_ref, a4_ref, b4_ref, a5_ref, b5_ref,
                      recon_ref, mv_ref):
    def matmul_bias(h, a_ref, b_ref):
        # bf16 MXU operands, f32 accumulation + f32 bias.
        return jnp.dot(h, a_ref[...], preferred_element_type=jnp.float32) + b_ref[...]

    def relu_bf16(v):
        return jnp.maximum(v, 0.0).astype(jnp.bfloat16)

    # Encoder: Conv(3->12) -> Conv(12->24), ReLU, bf16 intermediates stay in vregs/VMEM.
    h = relu_bf16(matmul_bias(x_ref[...], a1_ref, b1_ref))
    h = relu_bf16(matmul_bias(h, a2_ref, b2_ref))

    # Fused mu || logvar head.  ReLU matches reference (enc_out_* = Sequential(Conv, ReLU)).
    mv = jnp.maximum(matmul_bias(h, amv_ref, bmv_ref), 0.0)
    mv_ref[...] = mv                                  # lane-dense 512-wide store

    half = mv.shape[1] // 2                           # 256: split on a 128-lane boundary
    mu, logvar = mv[:, :half], mv[:, half:]
    z = (eps_ref[...] * jnp.exp(0.5 * logvar) + mu).astype(jnp.bfloat16)

    # Decoder: ConvT(48->24) -> ConvT(24->12) -> ConvT(12->3) + tanh.
    h = relu_bf16(matmul_bias(z, a3_ref, b3_ref))
    h = relu_bf16(matmul_bias(h, a4_ref, b4_ref))
    recon_ref[...] = jnp.tanh(matmul_bias(h, a5_ref, b5_ref))


# ----------------------------------------------------------------------------
# VAE forward (jittable): takes precomputed operators + inputs
# ----------------------------------------------------------------------------
def vae_forward(ops, x, eps):
    N, Cin, H, W = x.shape
    _, Cm, Hm, Wm = eps.shape
    lat = Cm * Hm * Wm
    lat_pad = ops["Amv"].shape[1] // 2                # static (from array shape)
    in_w = H * W * Cin
    out_w = ops["A5"].shape[1]                        # == H*W*Cin for this architecture

    # NCHW -> flattened NHWC; bf16 input so the kernel has no per-layer casts.
    x2d = x.transpose(0, 2, 3, 1).reshape(N, in_w).astype(jnp.bfloat16)
    eps2d = eps.transpose(0, 2, 3, 1).reshape(N, lat).astype(jnp.float32)
    eps2d = jnp.pad(eps2d, ((0, 0), (0, lat_pad - lat)))   # pad to the 128-lane half width

    # Batch tiling: M rows per grid step (Pallas masks a ragged last tile).
    TB = N if N <= 256 else 256
    grid = (pl.cdiv(N, TB),)

    weights = (ops["A1"], ops["b1"], ops["A2"], ops["b2"], ops["Amv"], ops["bmv"],
               ops["A3"], ops["b3"], ops["A4"], ops["b4"], ops["A5"], ops["b5"])

    def batch_spec(width):
        return pl.BlockSpec((TB, width), lambda i: (i, 0))

    def weight_spec(a):                               # constant index -> resident in VMEM
        return pl.BlockSpec(a.shape, lambda i: (0, 0))

    recon2d, mv2d = pl.pallas_call(
        _vae_fused_kernel,
        out_shape=(
            jax.ShapeDtypeStruct((N, out_w), jnp.float32),
            jax.ShapeDtypeStruct((N, 2 * lat_pad), jnp.float32),
        ),
        grid=grid,
        in_specs=[batch_spec(in_w), batch_spec(lat_pad)]
                 + [weight_spec(a) for a in weights],
        out_specs=(batch_spec(out_w), batch_spec(2 * lat_pad)),
        compiler_params=pltpu.CompilerParams(
            dimension_semantics=("parallel",),        # batch tiles split across TCs on v7x
            vmem_limit_bytes=32 * 1024 * 1024,        # safe on v7x's 64 MiB VMEM too
        ),
    )(x2d, eps2d, *weights)

    recon = recon2d.reshape(N, H, W, Cin).transpose(0, 3, 1, 2)
    mu = mv2d[:, :lat].reshape(N, Hm, Wm, Cm).transpose(0, 3, 1, 2)
    logvar = mv2d[:, lat_pad:lat_pad + lat].reshape(N, Hm, Wm, Cm).transpose(0, 3, 1, 2)
    return recon, mu, logvar


# ----------------------------------------------------------------------------
# Parameter init (matches the PyTorch module's layer shapes)
# ----------------------------------------------------------------------------
def init_params(key, in_dim=3):
    ks = jax.random.split(key, 7)

    def w(k, shape, fan_in):
        return jax.random.normal(k, shape, jnp.float32) / jnp.sqrt(fan_in)

    return {
        # encoder: Conv2d(in_dim,12,4,s2,p1), Conv2d(12,24,4,s2,p1)
        "e1_w": w(ks[0], (12, in_dim, 4, 4), in_dim * 16), "e1_b": jnp.zeros((12,), jnp.float32),
        "e2_w": w(ks[1], (24, 12, 4, 4), 12 * 16),          "e2_b": jnp.zeros((24,), jnp.float32),
        # enc_out_1 / enc_out_2: Conv2d(24,48,4,s2,p1) + ReLU (per reference)
        "m_w": w(ks[2], (48, 24, 4, 4), 24 * 16),           "m_b": jnp.zeros((48,), jnp.float32),
        "v_w": w(ks[3], (48, 24, 4, 4), 24 * 16),           "v_b": jnp.zeros((48,), jnp.float32),
        # decoder: ConvTranspose2d(48,24), (24,12), (12,in_dim) all k4,s2,p1
        "d1_w": w(ks[4], (48, 24, 4, 4), 48 * 16),          "d1_b": jnp.zeros((24,), jnp.float32),
        "d2_w": w(ks[5], (24, 12, 4, 4), 24 * 16),          "d2_b": jnp.zeros((12,), jnp.float32),
        "d3_w": w(ks[6], (12, in_dim, 4, 4), 12 * 16),      "d3_b": jnp.zeros((in_dim,), jnp.float32),
    }


if __name__ == "__main__":
    key = jax.random.PRNGKey(0)
    k_param, k_x, k_eps = jax.random.split(key, 3)

    in_dim, N, H, W = 3, 2, 16, 16
    params = init_params(k_param, in_dim)

    # One-time, host-side operator construction (hoisted out of the forward path).
    ops = build_operators(params, H, W)

    x = jax.random.normal(k_x, (N, in_dim, H, W), jnp.float32)
    # latent spatial: 16 -> 8 -> 4 -> 2 ; latent channels = 48
    eps = jax.random.normal(k_eps, (N, 48, H // 8, W // 8), jnp.float32)

    fwd = jax.jit(vae_forward)
    recon, mu, logvar = fwd(ops, x, eps)
    jax.block_until_ready((recon, mu, logvar))

    assert recon.shape == (N, in_dim, H, W)
    assert mu.shape == (N, 48, H // 8, W // 8)
    assert logvar.shape == (N, 48, H // 8, W // 8)
    assert bool(jnp.isfinite(recon).all())
    assert bool(jnp.isfinite(mu).all()) and bool(jnp.isfinite(logvar).all())
    print("KERNEL_OK")
</pallas_src>

<mosaic_0001>
module attributes {stable_mosaic.version = 11 : i64} {
  func.func @_vae_fused_kernel(%arg0: i32, %arg1: memref<2x768xbf16, #tpu.memory_space<vmem>>, %arg2: memref<2x256xf32, #tpu.memory_space<vmem>>, %arg3: memref<768x768xbf16, #tpu.memory_space<vmem>>, %arg4: memref<1x768xf32, #tpu.memory_space<vmem>>, %arg5: memref<768x384xbf16, #tpu.memory_space<vmem>>, %arg6: memref<1x384xf32, #tpu.memory_space<vmem>>, %arg7: memref<384x512xbf16, #tpu.memory_space<vmem>>, %arg8: memref<1x512xf32, #tpu.memory_space<vmem>>, %arg9: memref<256x384xbf16, #tpu.memory_space<vmem>>, %arg10: memref<1x384xf32, #tpu.memory_space<vmem>>, %arg11: memref<384x768xbf16, #tpu.memory_space<vmem>>, %arg12: memref<1x768xf32, #tpu.memory_space<vmem>>, %arg13: memref<768x768xbf16, #tpu.memory_space<vmem>>, %arg14: memref<1x768xf32, #tpu.memory_space<vmem>>, %arg15: memref<2x768xf32, #tpu.memory_space<vmem>>, %arg16: memref<2x512xf32, #tpu.memory_space<vmem>>) attributes {dimension_semantics = [#tpu.dimension_semantics<parallel>], iteration_bounds = array<i64: 1>, scalar_prefetch = 0 : i64, scratch_operands = 0 : i64, tpu.core_type = #tpu.core_type<tc>, window_params = [{transform_indices = @transform_0, window_bounds = array<i64: 2, 768>}, {transform_indices = @transform_1, window_bounds = array<i64: 2, 256>}, {pipeline_mode = #tpu.pipeline_mode<synchronous>, transform_indices = @transform_2, window_bounds = array<i64: 768, 768>}, {pipeline_mode = #tpu.pipeline_mode<synchronous>, transform_indices = @transform_3, window_bounds = array<i64: 1, 768>}, {pipeline_mode = #tpu.pipeline_mode<synchronous>, transform_indices = @transform_4, window_bounds = array<i64: 768, 384>}, {pipeline_mode = #tpu.pipeline_mode<synchronous>, transform_indices = @transform_5, window_bounds = array<i64: 1, 384>}, {pipeline_mode = #tpu.pipeline_mode<synchronous>, transform_indices = @transform_6, window_bounds = array<i64: 384, 512>}, {pipeline_mode = #tpu.pipeline_mode<synchronous>, transform_indices = @transform_7, window_bounds = array<i64: 1, 512>}, {pipeline_mode = #tpu.pipeline_mode<synchronous>, transform_indices = @transform_8, window_bounds = array<i64: 256, 384>}, {pipeline_mode = #tpu.pipeline_mode<synchronous>, transform_indices = @transform_9, window_bounds = array<i64: 1, 384>}, {pipeline_mode = #tpu.pipeline_mode<synchronous>, transform_indices = @transform_10, window_bounds = array<i64: 384, 768>}, {pipeline_mode = #tpu.pipeline_mode<synchronous>, transform_indices = @transform_11, window_bounds = array<i64: 1, 768>}, {pipeline_mode = #tpu.pipeline_mode<synchronous>, transform_indices = @transform_12, window_bounds = array<i64: 768, 768>}, {pipeline_mode = #tpu.pipeline_mode<synchronous>, transform_indices = @transform_13, window_bounds = array<i64: 1, 768>}, {transform_indices = @transform_14, window_bounds = array<i64: 2, 768>}, {transform_indices = @transform_15, window_bounds = array<i64: 2, 512>}]} {
    %c0 = arith.constant 0 : index
    %c0_0 = arith.constant 0 : index
    %0 = vector.load %arg1[%c0, %c0_0] : memref<2x768xbf16, #tpu.memory_space<vmem>>, vector<2x768xbf16>
    %c0_1 = arith.constant 0 : index
    %c0_2 = arith.constant 0 : index
    %1 = vector.load %arg3[%c0_1, %c0_2] : memref<768x768xbf16, #tpu.memory_space<vmem>>, vector<768x768xbf16>
    %cst = arith.constant dense<0.000000e+00> : vector<2x768xf32>
    %2 = tpu.matmul %0, %1, %cst {dimension_numbers = #tpu.dot_dimension_numbers<[1], [0], [0], [1], [0, 0, 1, 1], [], []>} : vector<2x768xbf16>, vector<768x768xbf16>, vector<2x768xf32> -> vector<2x768xf32>
    %c0_3 = arith.constant 0 : index
    %c0_4 = arith.constant 0 : index
    %3 = vector.load %arg4[%c0_3, %c0_4] : memref<1x768xf32, #tpu.memory_space<vmem>>, vector<1x768xf32>
    %4 = vector.broadcast %3 : vector<1x768xf32> to vector<2x768xf32>
    %5 = arith.addf %2, %4 : vector<2x768xf32>
    %cst_5 = arith.constant 0.000000e+00 : f32
    %6 = vector.broadcast %cst_5 : f32 to vector<2x768xf32>
    %7 = arith.maximumf %5, %6 : vector<2x768xf32>
    %8 = arith.truncf %7 : vector<2x768xf32> to vector<2x768xbf16>
    %c0_6 = arith.constant 0 : index
    %c0_7 = arith.constant 0 : index
    %9 = vector.load %arg5[%c0_6, %c0_7] : memref<768x384xbf16, #tpu.memory_space<vmem>>, vector<768x384xbf16>
    %cst_8 = arith.constant dense<0.000000e+00> : vector<2x384xf32>
    %10 = tpu.matmul %8, %9, %cst_8 {dimension_numbers = #tpu.dot_dimension_numbers<[1], [0], [0], [1], [0, 0, 1, 1], [], []>} : vector<2x768xbf16>, vector<768x384xbf16>, vector<2x384xf32> -> vector<2x384xf32>
    %c0_9 = arith.constant 0 : index
    %c0_10 = arith.constant 0 : index
    %11 = vector.load %arg6[%c0_9, %c0_10] : memref<1x384xf32, #tpu.memory_space<vmem>>, vector<1x384xf32>
    %12 = vector.broadcast %11 : vector<1x384xf32> to vector<2x384xf32>
    %13 = arith.addf %10, %12 : vector<2x384xf32>
    %cst_11 = arith.constant 0.000000e+00 : f32
    %14 = vector.broadcast %cst_11 : f32 to vector<2x384xf32>
    %15 = arith.maximumf %13, %14 : vector<2x384xf32>
    %16 = arith.truncf %15 : vector<2x384xf32> to vector<2x384xbf16>
    %c0_12 = arith.constant 0 : index
    %c0_13 = arith.constant 0 : index
    %17 = vector.load %arg7[%c0_12, %c0_13] : memref<384x512xbf16, #tpu.memory_space<vmem>>, vector<384x512xbf16>
    %cst_14 = arith.constant dense<0.000000e+00> : vector<2x512xf32>
    %18 = tpu.matmul %16, %17, %cst_14 {dimension_numbers = #tpu.dot_dimension_numbers<[1], [0], [0], [1], [0, 0, 1, 1], [], []>} : vector<2x384xbf16>, vector<384x512xbf16>, vector<2x512xf32> -> vector<2x512xf32>
    %c0_15 = arith.constant 0 : index
    %c0_16 = arith.constant 0 : index
    %19 = vector.load %arg8[%c0_15, %c0_16] : memref<1x512xf32, #tpu.memory_space<vmem>>, vector<1x512xf32>
    %20 = vector.broadcast %19 : vector<1x512xf32> to vector<2x512xf32>
    %21 = arith.addf %18, %20 : vector<2x512xf32>
    %cst_17 = arith.constant 0.000000e+00 : f32
    %22 = vector.broadcast %cst_17 : f32 to vector<2x512xf32>
    %23 = arith.maximumf %21, %22 : vector<2x512xf32>
    %c0_18 = arith.constant 0 : index
    %c0_19 = arith.constant 0 : index
    %24 = vector.load %arg16[%c0_18, %c0_19] : memref<2x512xf32, #tpu.memory_space<vmem>>, vector<2x512xf32>
    tpu.vector_store %arg16[%c0_18, %c0_19], %23 {strides = array<i32>} : memref<2x512xf32, #tpu.memory_space<vmem>>, vector<2x512xf32>,
    %25 = vector.extract_strided_slice %23 {offsets = [0, 0], sizes = [2, 256], strides = [1, 1]} : vector<2x512xf32> to vector<2x256xf32>
    %26 = vector.extract_strided_slice %23 {offsets = [0, 256], sizes = [2, 256], strides = [1, 1]} : vector<2x512xf32> to vector<2x256xf32>
    %c0_20 = arith.constant 0 : index
    %c0_21 = arith.constant 0 : index
    %27 = vector.load %arg2[%c0_20, %c0_21] : memref<2x256xf32, #tpu.memory_space<vmem>>, vector<2x256xf32>
    %cst_22 = arith.constant 5.000000e-01 : f32
    %28 = vector.broadcast %cst_22 : f32 to vector<2x256xf32>
    %29 = arith.mulf %28, %26 : vector<2x256xf32>
    %30 = math.exp %29 : vector<2x256xf32>
    %31 = arith.mulf %27, %30 : vector<2x256xf32>
    %32 = arith.addf %31, %25 : vector<2x256xf32>
    %33 = arith.truncf %32 : vector<2x256xf32> to vector<2x256xbf16>
    %c0_23 = arith.constant 0 : index
    %c0_24 = arith.constant 0 : index
    %34 = vector.load %arg9[%c0_23, %c0_24] : memref<256x384xbf16, #tpu.memory_space<vmem>>, vector<256x384xbf16>
    %cst_25 = arith.constant dense<0.000000e+00> : vector<2x384xf32>
    %35 = tpu.matmul %33, %34, %cst_25 {dimension_numbers = #tpu.dot_dimension_numbers<[1], [0], [0], [1], [0, 0, 1, 1], [], []>} : vector<2x256xbf16>, vector<256x384xbf16>, vector<2x384xf32> -> vector<2x384xf32>
    %c0_26 = arith.constant 0 : index
    %c0_27 = arith.constant 0 : index
    %36 = vector.load %arg10[%c0_26, %c0_27] : memref<1x384xf32, #tpu.memory_space<vmem>>, vector<1x384xf32>
    %37 = vector.broadcast %36 : vector<1x384xf32> to vector<2x384xf32>
    %38 = arith.addf %35, %37 : vector<2x384xf32>
    %cst_28 = arith.constant 0.000000e+00 : f32
    %39 = vector.broadcast %cst_28 : f32 to vector<2x384xf32>
    %40 = arith.maximumf %38, %39 : vector<2x384xf32>
    %41 = arith.truncf %40 : vector<2x384xf32> to vector<2x384xbf16>
    %c0_29 = arith.constant 0 : index
    %c0_30 = arith.constant 0 : index
    %42 = vector.load %arg11[%c0_29, %c0_30] : memref<384x768xbf16, #tpu.memory_space<vmem>>, vector<384x768xbf16>
    %cst_31 = arith.constant dense<0.000000e+00> : vector<2x768xf32>
    %43 = tpu.matmul %41, %42, %cst_31 {dimension_numbers = #tpu.dot_dimension_numbers<[1], [0], [0], [1], [0, 0, 1, 1], [], []>} : vector<2x384xbf16>, vector<384x768xbf16>, vector<2x768xf32> -> vector<2x768xf32>
    %c0_32 = arith.constant 0 : index
    %c0_33 = arith.constant 0 : index
    %44 = vector.load %arg12[%c0_32, %c0_33] : memref<1x768xf32, #tpu.memory_space<vmem>>, vector<1x768xf32>
    %45 = vector.broadcast %44 : vector<1x768xf32> to vector<2x768xf32>
    %46 = arith.addf %43, %45 : vector<2x768xf32>
    %cst_34 = arith.constant 0.000000e+00 : f32
    %47 = vector.broadcast %cst_34 : f32 to vector<2x768xf32>
    %48 = arith.maximumf %46, %47 : vector<2x768xf32>
    %49 = arith.truncf %48 : vector<2x768xf32> to vector<2x768xbf16>
    %c0_35 = arith.constant 0 : index
    %c0_36 = arith.constant 0 : index
    %50 = vector.load %arg13[%c0_35, %c0_36] : memref<768x768xbf16, #tpu.memory_space<vmem>>, vector<768x768xbf16>
    %cst_37 = arith.constant dense<0.000000e+00> : vector<2x768xf32>
    %51 = tpu.matmul %49, %50, %cst_37 {dimension_numbers = #tpu.dot_dimension_numbers<[1], [0], [0], [1], [0, 0, 1, 1], [], []>} : vector<2x768xbf16>, vector<768x768xbf16>, vector<2x768xf32> -> vector<2x768xf32>
    %c0_38 = arith.constant 0 : index
    %c0_39 = arith.constant 0 : index
    %52 = vector.load %arg14[%c0_38, %c0_39] : memref<1x768xf32, #tpu.memory_space<vmem>>, vector<1x768xf32>
    %53 = vector.broadcast %52 : vector<1x768xf32> to vector<2x768xf32>
    %54 = arith.addf %51, %53 : vector<2x768xf32>
    %55 = math.tanh %54 : vector<2x768xf32>
    %c0_40 = arith.constant 0 : index
    %c0_41 = arith.constant 0 : index
    %56 = vector.load %arg15[%c0_40, %c0_41] : memref<2x768xf32, #tpu.memory_space<vmem>>, vector<2x768xf32>
    tpu.vector_store %arg15[%c0_40, %c0_41], %55 {strides = array<i32>} : memref<2x768xf32, #tpu.memory_space<vmem>>, vector<2x768xf32>,
    return
  }
  func.func @transform_0(%arg0: i32) -> (i32, i32) {
    %c0_i32 = arith.constant 0 : i32
    %c0_i32_0 = arith.constant 0 : i32
    return %arg0, %c0_i32 : i32, i32
  }
  func.func @transform_1(%arg0: i32) -> (i32, i32) {
    %c0_i32 = arith.constant 0 : i32
    %c0_i32_0 = arith.constant 0 : i32
    return %arg0, %c0_i32 : i32, i32
  }
  func.func @transform_2(%arg0: i32) -> (i32, i32) {
    %c0_i32 = arith.constant 0 : i32
    %c0_i32_0 = arith.constant 0 : i32
    %c0_i32_1 = arith.constant 0 : i32
    return %c0_i32, %c0_i32_0 : i32, i32
  }
  func.func @transform_3(%arg0: i32) -> (i32, i32) {
    %c0_i32 = arith.constant 0 : i32
    %c0_i32_0 = arith.constant 0 : i32
    %c0_i32_1 = arith.constant 0 : i32
    return %c0_i32, %c0_i32_0 : i32, i32
  }
  func.func @transform_4(%arg0: i32) -> (i32, i32) {
    %c0_i32 = arith.constant 0 : i32
    %c0_i32_0 = arith.constant 0 : i32
    %c0_i32_1 = arith.constant 0 : i32
    return %c0_i32, %c0_i32_0 : i32, i32
  }
  func.func @transform_5(%arg0: i32) -> (i32, i32) {
    %c0_i32 = arith.constant 0 : i32
    %c0_i32_0 = arith.constant 0 : i32
    %c0_i32_1 = arith.constant 0 : i32
    return %c0_i32, %c0_i32_0 : i32, i32
  }
  func.func @transform_6(%arg0: i32) -> (i32, i32) {
    %c0_i32 = arith.constant 0 : i32
    %c0_i32_0 = arith.constant 0 : i32
    %c0_i32_1 = arith.constant 0 : i32
    return %c0_i32, %c0_i32_0 : i32, i32
  }
  func.func @transform_7(%arg0: i32) -> (i32, i32) {
    %c0_i32 = arith.constant 0 : i32
    %c0_i32_0 = arith.constant 0 : i32
    %c0_i32_1 = arith.constant 0 : i32
    return %c0_i32, %c0_i32_0 : i32, i32
  }
  func.func @transform_8(%arg0: i32) -> (i32, i32) {
    %c0_i32 = arith.constant 0 : i32
    %c0_i32_0 = arith.constant 0 : i32
    %c0_i32_1 = arith.constant 0 : i32
    return %c0_i32, %c0_i32_0 : i32, i32
  }
  func.func @transform_9(%arg0: i32) -> (i32, i32) {
    %c0_i32 = arith.constant 0 : i32
    %c0_i32_0 = arith.constant 0 : i32
    %c0_i32_1 = arith.constant 0 : i32
    return %c0_i32, %c0_i32_0 : i32, i32
  }
  func.func @transform_10(%arg0: i32) -> (i32, i32) {
    %c0_i32 = arith.constant 0 : i32
    %c0_i32_0 = arith.constant 0 : i32
    %c0_i32_1 = arith.constant 0 : i32
    return %c0_i32, %c0_i32_0 : i32, i32
  }
  func.func @transform_11(%arg0: i32) -> (i32, i32) {
    %c0_i32 = arith.constant 0 : i32
    %c0_i32_0 = arith.constant 0 : i32
    %c0_i32_1 = arith.constant 0 : i32
    return %c0_i32, %c0_i32_0 : i32, i32
  }
  func.func @transform_12(%arg0: i32) -> (i32, i32) {
    %c0_i32 = arith.constant 0 : i32
    %c0_i32_0 = arith.constant 0 : i32
    %c0_i32_1 = arith.constant 0 : i32
    return %c0_i32, %c0_i32_0 : i32, i32
  }
  func.func @transform_13(%arg0: i32) -> (i32, i32) {
    %c0_i32 = arith.constant 0 : i32
    %c0_i32_0 = arith.constant 0 : i32
    %c0_i32_1 = arith.constant 0 : i32
    return %c0_i32, %c0_i32_0 : i32, i32
  }
  func.func @transform_14(%arg0: i32) -> (i32, i32) {
    %c0_i32 = arith.constant 0 : i32
    %c0_i32_0 = arith.constant 0 : i32
    return %arg0, %c0_i32 : i32, i32
  }
  func.func @transform_15(%arg0: i32) -> (i32, i32) {
    %c0_i32 = arith.constant 0 : i32
    %c0_i32_0 = arith.constant 0 : i32
    return %arg0, %c0_i32 : i32, i32
  }
}

</mosaic_0001>

<llo_original>
// kernel: vae_forward.1
$region0: #{vae_forward.1}
  #allocation0 [shape = 'u32[]', space=smem, size = 0x4, offset = 0x4, fixed_abs, tag = 'smem constant byte address 0x4 - core index']
  #allocation1 [shape = 'u32[144,128]{1,0:T(1,128)}', space=vmem, size = 0x12000, scoped, tag = 'internal scratch']
  %s0 = inlined_call_operand.vmem [shape: bf16[2,768], index: 0, kind: input, shape index: {}]
  %s1 = inlined_call_operand.vmem [shape: f32[2,256], index: 1, kind: input, shape index: {}]
  %s2 = inlined_call_operand.hbm [shape: bf16[768,768], index: 2, kind: input, shape index: {}]
  %s3 = inlined_call_operand.hbm [shape: f32[1,768], index: 3, kind: input, shape index: {}]
  %s4 = inlined_call_operand.hbm [shape: bf16[768,384], index: 4, kind: input, shape index: {}]
  %s5 = inlined_call_operand.hbm [shape: f32[1,384], index: 5, kind: input, shape index: {}]
  %s6 = inlined_call_operand.hbm [shape: bf16[384,512], index: 6, kind: input, shape index: {}]
  %s7 = inlined_call_operand.hbm [shape: f32[1,512], index: 7, kind: input, shape index: {}]
  %s8 = inlined_call_operand.hbm [shape: bf16[256,384], index: 8, kind: input, shape index: {}]
  %s9 = inlined_call_operand.hbm [shape: f32[1,384], index: 9, kind: input, shape index: {}]
  %s10 = inlined_call_operand.hbm [shape: bf16[384,768], index: 10, kind: input, shape index: {}]
  %s11 = inlined_call_operand.hbm [shape: f32[1,768], index: 11, kind: input, shape index: {}]
  %s12 = inlined_call_operand.hbm [shape: bf16[768,768], index: 12, kind: input, shape index: {}]
  %s13 = inlined_call_operand.hbm [shape: f32[1,768], index: 13, kind: input, shape index: {}]
  %s14 = inlined_call_operand.vmem [shape: f32[2,768], index: 14, kind: output, shape index: {0}]
  %s15 = inlined_call_operand.vmem [shape: f32[2,512], index: 15, kind: output, shape index: {1}]
  %16 = xla_tuple %s14, %s15
  %s17 = sld [smem:[#allocation0]]
  $region122: #{vae_forward.1} parent=0
    _
  %s19 = ssub.s32 1, %s17
  %s20 = scalar_select 0, %s19, %s17
  $region1: #{vae_forward.1} parent=0
    #allocation2 [shape = 'u8[1179648]{0}', space=vmem, size = 0x120000, scoped, tag = 'input window, operand 2, single buffered']
    #allocation3 [shape = 's32[1]{0}', space=sflag, size = 0x4, scoped, tag = 'scoped memory for vae_forward.1']
    #allocation4 [shape = 'u8[3072]{0}', space=vmem, size = 0xc00, scoped, tag = 'input window, operand 3, single buffered']
    #allocation5 [shape = 's32[1]{0}', space=sflag, size = 0x4, scoped, tag = 'scoped memory for vae_forward.1']
    #allocation6 [shape = 'u8[589824]{0}', space=vmem, size = 0x90000, scoped, tag = 'input window, operand 4, single buffered']
    #allocation7 [shape = 'u8[1536]{0}', space=vmem, size = 0x800, scoped, tag = 'input window, operand 5, single buffered']
    #allocation8 [shape = 's32[1]{0}', space=sflag, size = 0x4, scoped, tag = 'scoped memory for vae_forward.1']
    #allocation9 [shape = 'u8[393216]{0}', space=vmem, size = 0x60000, scoped, tag = 'input window, operand 6, single buffered']
    #allocation10 [shape = 'u8[2048]{0}', space=vmem, size = 0x800, scoped, tag = 'input window, operand 7, single buffered']
    #allocation11 [shape = 's32[1]{0}', space=sflag, size = 0x4, scoped, tag = 'scoped memory for vae_forward.1']
    #allocation12 [shape = 'u8[196608]{0}', space=vmem, size = 0x30000, scoped, tag = 'input window, operand 8, single buffered']
    #allocation13 [shape = 'u8[1536]{0}', space=vmem, size = 0x800, scoped, tag = 'input window, operand 9, single buffered']
    #allocation14 [shape = 's32[1]{0}', space=sflag, size = 0x4, scoped, tag = 'scoped memory for vae_forward.1']
    #allocation15 [shape = 'u8[589824]{0}', space=vmem, size = 0x90000, scoped, tag = 'input window, operand 10, single buffered']
    #allocation16 [shape = 'u8[3072]{0}', space=vmem, size = 0xc00, scoped, tag = 'input window, operand 11, single buffered']
    #allocation17 [shape = 's32[1]{0}', space=sflag, size = 0x4, scoped, tag = 'scoped memory for vae_forward.1']
    #allocation18 [shape = 'u8[1179648]{0}', space=vmem, size = 0x120000, scoped, tag = 'input window, operand 12, single buffered']
    #allocation19 [shape = 'u8[3072]{0}', space=vmem, size = 0xc00, scoped, tag = 'input window, operand 13, single buffered']
    #allocation20 [shape = 's32[1]{0}', space=sflag, size = 0x4, scoped, tag = 'scoped memory for vae_forward.1']
    %21 = vsyncpa [#allocation3], 0
    %22 = vsyncpa [#allocation5], 0
    %23 = vsyncpa [#allocation8], 0
    %24 = vsyncpa [#allocation11], 0
    %25 = vsyncpa [#allocation14], 0
    %26 = vsyncpa [#allocation17], 0
    %27 = vsyncpa [#allocation20], 0
    // Predicated region
    $region2: #{vae_forward.1} parent=1 // pred_check
      _
    $region3: #{vae_forward.1} parent=1 // pred_check_branch
      %29 = sbr.rel (0) target = $region5
    $region4: #{vae_forward.1} parent=1 // pred_region
      _
    $region5: #{vae_forward.1} parent=1 // pred_fallthru
      _
    // Predicated region
    $region6: #{vae_forward.1} parent=1 // pred_check
      _
    $region7: #{vae_forward.1} parent=1 // pred_check_branch
      %31 = sbr.rel (0) target = $region9
    $region8: #{vae_forward.1} parent=1 // pred_region
      _
    $region9: #{vae_forward.1} parent=1 // pred_fallthru
      _
    // Predicated region
    $region10: #{vae_forward.1} parent=1 // pred_check
      _
    $region11: #{vae_forward.1} parent=1 // pred_check_branch
      %33 = sbr.rel (0) target = $region13
    $region12: #{vae_forward.1} parent=1 // pred_region
      %s35 = ssub.s32 36864, 36864
      %36 = vsyncadd [#allocation3], %s35
      %s37 = sshll.u32 [#allocation2], 4
      %s38 = int_to_ptr.vmem [resolvable:$true] %s37
      %43 = dma.hbm_to_vmem [thread:$0]  %s2, 36864, %s38, [#allocation3], 384, 384, 24
    $region13: #{vae_forward.1} parent=1 // pred_fallthru
      _
    // Predicated region
    $region14: #{vae_forward.1} parent=1 // pred_check
      _
    $region15: #{vae_forward.1} parent=1 // pred_check_branch
      %45 = sbr.rel (0) target = $region17
    $region16: #{vae_forward.1} parent=1 // pred_region
      %s47 = ssub.s32 96, 96
      %48 = vsyncadd [#allocation5], %s47
      %s50 = sshll.u32 [#allocation4], 4
      %s51 = int_to_ptr.vmem [resolvable:$true] %s50
      %53 = dma.hbm_to_vmem [thread:$0]  %s3, 96, %s51, [#allocation5]
    $region17: #{vae_forward.1} parent=1 // pred_fallthru
      _
    // Predicated region
    $region18: #{vae_forward.1} parent=1 // pred_check
      _
    $region19: #{vae_forward.1} parent=1 // pred_check_branch
      %55 = sbr.rel (0) target = $region21
    $region20: #{vae_forward.1} parent=1 // pred_region
      %s57 = ssub.s32 18432, 18432
      %58 = vsyncadd [#allocation5], %s57
      %s59 = sshll.u32 [#allocation6], 4
      %s60 = int_to_ptr.vmem [resolvable:$true] %s59
      %65 = dma.hbm_to_vmem [thread:$0]  %s4, 18432, %s60, [#allocation5], 192, 192, 12
    $region21: #{vae_forward.1} parent=1 // pred_fallthru
      _
    // Predicated region
    $region22: #{vae_forward.1} parent=1 // pred_check
      _
    $region23: #{vae_forward.1} parent=1 // pred_check_branch
      %67 = sbr.rel (0) target = $region25
    $region24: #{vae_forward.1} parent=1 // pred_region
      %s69 = ssub.s32 48, 48
      %70 = vsyncadd [#allocation8], %s69
      %s72 = sshll.u32 [#allocation7], 4
      %s73 = int_to_ptr.vmem [resolvable:$true] %s72
      %75 = dma.hbm_to_vmem [thread:$0]  %s5, 48, %s73, [#allocation8]
    $region25: #{vae_forward.1} parent=1 // pred_fallthru
      _
    // Predicated region
    $region26: #{vae_forward.1} parent=1 // pred_check
      _
    $region27: #{vae_forward.1} parent=1 // pred_check_branch
      %77 = sbr.rel (0) target = $region29
    $region28: #{vae_forward.1} parent=1 // pred_region
      %s79 = ssub.s32 12288, 12288
      %80 = vsyncadd [#allocation8], %s79
      %s81 = sshll.u32 [#allocation9], 4
      %s82 = int_to_ptr.vmem [resolvable:$true] %s81
      %87 = dma.hbm_to_vmem [thread:$0]  %s6, 12288, %s82, [#allocation8], 256, 256, 16
    $region29: #{vae_forward.1} parent=1 // pred_fallthru
      _
    // Predicated region
    $region30: #{vae_forward.1} parent=1 // pred_check
      _
    $region31: #{vae_forward.1} parent=1 // pred_check_branch
      %89 = sbr.rel (0) target = $region33
    $region32: #{vae_forward.1} parent=1 // pred_region
      %s91 = ssub.s32 64, 64
      %92 = vsyncadd [#allocation11], %s91
      %s94 = sshll.u32 [#allocation10], 4
      %s95 = int_to_ptr.vmem [resolvable:$true] %s94
      %97 = dma.hbm_to_vmem [thread:$0]  %s7, 64, %s95, [#allocation11]
    $region33: #{vae_forward.1} parent=1 // pred_fallthru
      _
    // Predicated region
    $region34: #{vae_forward.1} parent=1 // pred_check
      _
    $region35: #{vae_forward.1} parent=1 // pred_check_branch
      %99 = sbr.rel (0) target = $region37
    $region36: #{vae_forward.1} parent=1 // pred_region
      %s101 = ssub.s32 6144, 6144
      %102 = vsyncadd [#allocation11], %s101
      %s103 = sshll.u32 [#allocation12], 4
      %s104 = int_to_ptr.vmem [resolvable:$true] %s103
      %109 = dma.hbm_to_vmem [thread:$0]  %s8, 6144, %s104, [#allocation11], 192, 192, 12
    $region37: #{vae_forward.1} parent=1 // pred_fallthru
      _
    // Predicated region
    $region38: #{vae_forward.1} parent=1 // pred_check
      _
    $region39: #{vae_forward.1} parent=1 // pred_check_branch
      %111 = sbr.rel (0) target = $region41
    $region40: #{vae_forward.1} parent=1 // pred_region
      %s113 = ssub.s32 48, 48
      %114 = vsyncadd [#allocation14], %s113
      %s116 = sshll.u32 [#allocation13], 4
      %s117 = int_to_ptr.vmem [resolvable:$true] %s116
      %119 = dma.hbm_to_vmem [thread:$0]  %s9, 48, %s117, [#allocation14]
    $region41: #{vae_forward.1} parent=1 // pred_fallthru
      _
    // Predicated region
    $region42: #{vae_forward.1} parent=1 // pred_check
      _
    $region43: #{vae_forward.1} parent=1 // pred_check_branch
      %121 = sbr.rel (0) target = $region45
    $region44: #{vae_forward.1} parent=1 // pred_region
      %s123 = ssub.s32 18432, 18432
      %124 = vsyncadd [#allocation14], %s123
      %s125 = sshll.u32 [#allocation15], 4
      %s126 = int_to_ptr.vmem [resolvable:$true] %s125
      %131 = dma.hbm_to_vmem [thread:$0]  %s10, 18432, %s126, [#allocation14], 384, 384, 24
    $region45: #{vae_forward.1} parent=1 // pred_fallthru
      _
    // Predicated region
    $region46: #{vae_forward.1} parent=1 // pred_check
      _
    $region47: #{vae_forward.1} parent=1 // pred_check_branch
      %133 = sbr.rel (0) target = $region49
    $region48: #{vae_forward.1} parent=1 // pred_region
      %s135 = ssub.s32 96, 96
      %136 = vsyncadd [#allocation17], %s135
      %s138 = sshll.u32 [#allocation16], 4
      %s139 = int_to_ptr.vmem [resolvable:$true] %s138
      %141 = dma.hbm_to_vmem [thread:$0]  %s11, 96, %s139, [#allocation17]
    $region49: #{vae_forward.1} parent=1 // pred_fallthru
      _
    // Predicated region
    $region50: #{vae_forward.1} parent=1 // pred_check
      _
    $region51: #{vae_forward.1} parent=1 // pred_check_branch
      %143 = sbr.rel (0) target = $region53
    $region52: #{vae_forward.1} parent=1 // pred_region
      %s145 = ssub.s32 36864, 36864
      %146 = vsyncadd [#allocation17], %s145
      %s147 = sshll.u32 [#allocation18], 4
      %s148 = int_to_ptr.vmem [resolvable:$true] %s147
      %153 = dma.hbm_to_vmem [thread:$0]  %s12, 36864, %s148, [#allocation17], 384, 384, 24
    $region53: #{vae_forward.1} parent=1 // pred_fallthru
      _
    // Predicated region
    $region54: #{vae_forward.1} parent=1 // pred_check
      _
    $region55: #{vae_forward.1} parent=1 // pred_check_branch
      %155 = sbr.rel (0) target = $region57
    $region56: #{vae_forward.1} parent=1 // pred_region
      %s157 = ssub.s32 96, 96
      %158 = vsyncadd [#allocation20], %s157
      %s160 = sshll.u32 [#allocation19], 4
      %s161 = int_to_ptr.vmem [resolvable:$true] %s160
      %163 = dma.hbm_to_vmem [thread:$0]  %s13, 96, %s161, [#allocation20]
    $region57: #{vae_forward.1} parent=1 // pred_fallthru
      _
    // Predicated region
    $region58: #{vae_forward.1} parent=1 // pred_check
      _
    $region59: #{vae_forward.1} parent=1 // pred_check_branch
      %165 = sbr.rel (0) target = $region61
    $region60: #{vae_forward.1} parent=1 // pred_region
      %166 = dma.done [#allocation3], 36864
    $region61: #{vae_forward.1} parent=1 // pred_fallthru
      _
    // Predicated region
    $region62: #{vae_forward.1} parent=1 // pred_check
      _
    $region63: #{vae_forward.1} parent=1 // pred_check_branch
      %168 = sbr.rel (0) target = $region65
    $region64: #{vae_forward.1} parent=1 // pred_region
      %169 = dma.done [#allocation5], 96
    $region65: #{vae_forward.1} parent=1 // pred_fallthru
      _
    // Predicated region
    $region66: #{vae_forward.1} parent=1 // pred_check
      _
    $region67: #{vae_forward.1} parent=1 // pred_check_branch
      %171 = sbr.rel (0) target = $region69
    $region68: #{vae_forward.1} parent=1 // pred_region
      %172 = dma.done [#allocation5], 18432
    $region69: #{vae_forward.1} parent=1 // pred_fallthru
      _
    // Predicated region
    $region70: #{vae_forward.1} parent=1 // pred_check
      _
    $region71: #{vae_forward.1} parent=1 // pred_check_branch
      %174 = sbr.rel (0) target = $region73
    $region72: #{vae_forward.1} parent=1 // pred_region
      %175 = dma.done [#allocation8], 48
    $region73: #{vae_forward.1} parent=1 // pred_fallthru
      _
    // Predicated region
    $region74: #{vae_forward.1} parent=1 // pred_check
      _
    $region75: #{vae_forward.1} parent=1 // pred_check_branch
      %177 = sbr.rel (0) target = $region77
    $region76: #{vae_forward.1} parent=1 // pred_region
      %178 = dma.done [#allocation8], 12288
    $region77: #{vae_forward.1} parent=1 // pred_fallthru
      _
    // Predicated region
    $region78: #{vae_forward.1} parent=1 // pred_check
      _
    $region79: #{vae_forward.1} parent=1 // pred_check_branch
      %180 = sbr.rel (0) target = $region81
    $region80: #{vae_forward.1} parent=1 // pred_region
      %181 = dma.done [#allocation11], 64
    $region81: #{vae_forward.1} parent=1 // pred_fallthru
      _
    // Predicated region
    $region82: #{vae_forward.1} parent=1 // pred_check
      _
    $region83: #{vae_forward.1} parent=1 // pred_check_branch
      %183 = sbr.rel (0) target = $region85
    $region84: #{vae_forward.1} parent=1 // pred_region
      %184 = dma.done [#allocation11], 6144
    $region85: #{vae_forward.1} parent=1 // pred_fallthru
      _
    // Predicated region
    $region86: #{vae_forward.1} parent=1 // pred_check
      _
    $region87: #{vae_forward.1} parent=1 // pred_check_branch
      %186 = sbr.rel (0) target = $region89
    $region88: #{vae_forward.1} parent=1 // pred_region
      %187 = dma.done [#allocation14], 48
    $region89: #{vae_forward.1} parent=1 // pred_fallthru
      _
    // Predicated region
    $region90: #{vae_forward.1} parent=1 // pred_check
      _
    $region91: #{vae_forward.1} parent=1 // pred_check_branch
      %189 = sbr.rel (0) target = $region93
    $region92: #{vae_forward.1} parent=1 // pred_region
      %190 = dma.done [#allocation14], 18432
    $region93: #{vae_forward.1} parent=1 // pred_fallthru
      _
    // Predicated region
    $region94: #{vae_forward.1} parent=1 // pred_check
      _
    $region95: #{vae_forward.1} parent=1 // pred_check_branch
      %192 = sbr.rel (0) target = $region97
    $region96: #{vae_forward.1} parent=1 // pred_region
      %193 = dma.done [#allocation17], 96
    $region97: #{vae_forward.1} parent=1 // pred_fallthru
      _
    // Predicated region
    $region98: #{vae_forward.1} parent=1 // pred_check
      _
    $region99: #{vae_forward.1} parent=1 // pred_check_branch
      %195 = sbr.rel (0) target = $region101
    $region100: #{vae_forward.1} parent=1 // pred_region
      %196 = dma.done [#allocation17], 36864
    $region101: #{vae_forward.1} parent=1 // pred_fallthru
      _
    // Predicated region
    $region102: #{vae_forward.1} parent=1 // pred_check
      _
    $region103: #{vae_forward.1} parent=1 // pred_check_branch
      %198 = sbr.rel (0) target = $region105
    $region104: #{vae_forward.1} parent=1 // pred_region
      %199 = dma.done [#allocation20], 96
    $region105: #{vae_forward.1} parent=1 // pred_fallthru
      _
    %v201 = vld [vmem:[%s0] sm:$0x3f]
    %v202 = vld [vmem:[#allocation2] sm:$0xff]
    %v203 = vld [vmem:[#allocation2 + $0x8] sm:$0xff]
    %v204 = vld [vmem:[#allocation2 + $0x10] sm:$0xff]
    %v205 = vld [vmem:[#allocation2 + $0x18] sm:$0xff]
    %v206 = vld [vmem:[#allocation2 + $0x20] sm:$0xff]
    %v207 = vld [vmem:[#allocation2 + $0x28] sm:$0xff]
    %v208 = vld [vmem:[#allocation2 + $0x30] sm:$0xff]
    %v209 = vld [vmem:[#allocation2 + $0x38] sm:$0xff]
    %v210 = vld [vmem:[#allocation2 + $0x40] sm:$0xff]
    %v211 = vld [vmem:[#allocation2 + $0x48] sm:$0xff]
    %v212 = vld [vmem:[#allocation2 + $0x50] sm:$0xff]
    %v213 = vld [vmem:[#allocation2 + $0x58] sm:$0xff]
    %v214 = vld [vmem:[#allocation2 + $0x60] sm:$0xff]
    %v215 = vld [vmem:[#allocation2 + $0x68] sm:$0xff]
    %v216 = vld [vmem:[#allocation2 + $0x70] sm:$0xff]
    %v217 = vld [vmem:[#allocation2 + $0x78] sm:$0xff]
    %v218 = vld [vmem:[#allocation2 + $0x80] sm:$0xff]
    %v219 = vld [vmem:[#allocation2 + $0x88] sm:$0xff]
    %v220 = vld [vmem:[#allocation2 + $0x90] sm:$0xff]
    %v221 = vld [vmem:[#allocation2 + $0x98] sm:$0xff]
    %v222 = vld [vmem:[#allocation2 + $0xa0] sm:$0xff]
    %v223 = vld [vmem:[#allocation2 + $0xa8] sm:$0xff]
    %v224 = vld [vmem:[#allocation2 + $0xb0] sm:$0xff]
    %v225 = vld [vmem:[#allocation2 + $0xb8] sm:$0xff]
    %v226 = vld [vmem:[#allocation2 + $0xc0] sm:$0xff]
    %v227 = vld [vmem:[#allocation2 + $0xc8] sm:$0xff]
    %v228 = vld [vmem:[#allocation2 + $0xd0] sm:$0xff]
    %v229 = vld [vmem:[#allocation2 + $0xd8] sm:$0xff]
    %v230 = vld [vmem:[#allocation2 + $0xe0] sm:$0xff]
    %v231 = vld [vmem:[#allocation2 + $0xe8] sm:$0xff]
    %v232 = vld [vmem:[#allocation2 + $0xf0] sm:$0xff]
    %v233 = vld [vmem:[#allocation2 + $0xf8] sm:$0xff]
    %v234 = vld [vmem:[#allocation2 + $0x100] sm:$0xff]
    %v235 = vld [vmem:[#allocation2 + $0x108] sm:$0xff]
    %v236 = vld [vmem:[#allocation2 + $0x110] sm:$0xff]
    %v237 = vld [vmem:[#allocation2 + $0x118] sm:$0xff]
    %v238 = vld [vmem:[#allocation2 + $0x120] sm:$0xff]
    %v239 = vld [vmem:[#allocation2 + $0x128] sm:$0xff]
    %v240 = vld [vmem:[#allocation2 + $0x130] sm:$0xff]
    %v241 = vld [vmem:[#allocation2 + $0x138] sm:$0xff]
    %v242 = vld [vmem:[#allocation2 + $0x140] sm:$0xff]
    %v243 = vld [vmem:[#allocation2 + $0x148] sm:$0xff]
    %v244 = vld [vmem:[#allocation2 + $0x150] sm:$0xff]
    %v245 = vld [vmem:[#allocation2 + $0x158] sm:$0xff]
    %v246 = vld [vmem:[#allocation2 + $0x160] sm:$0xff]
    %v247 = vld [vmem:[#allocation2 + $0x168] sm:$0xff]
    %v248 = vld [vmem:[#allocation2 + $0x170] sm:$0xff]
    %v249 = vld [vmem:[#allocation2 + $0x178] sm:$0xff]
    %v250 = vld [vmem:[#allocation2 + $0x180] sm:$0xff]
    %v251 = vld [vmem:[#allocation2 + $0x188] sm:$0xff]
    %v252 = vld [vmem:[#allocation2 + $0x190] sm:$0xff]
    %v253 = vld [vmem:[#allocation2 + $0x198] sm:$0xff]
    %v254 = vld [vmem:[#allocation2 + $0x1a0] sm:$0xff]
    %v255 = vld [vmem:[#allocation2 + $0x1a8] sm:$0xff]
    %v256 = vld [vmem:[#allocation2 + $0x1b0] sm:$0xff]
    %v257 = vld [vmem:[#allocation2 + $0x1b8] sm:$0xff]
    %v258 = vld [vmem:[#allocation2 + $0x1c0] sm:$0xff]
    %v259 = vld [vmem:[#allocation2 + $0x1c8] sm:$0xff]
    %v260 = vld [vmem:[#allocation2 + $0x1d0] sm:$0xff]
    %v261 = vld [vmem:[#allocation2 + $0x1d8] sm:$0xff]
    %v262 = vld [vmem:[#allocation2 + $0x1e0] sm:$0xff]
    %v263 = vld [vmem:[#allocation2 + $0x1e8] sm:$0xff]
    %v264 = vld [vmem:[#allocation2 + $0x1f0] sm:$0xff]
    %v265 = vld [vmem:[#allocation2 + $0x1f8] sm:$0xff]
    %v266 = vld [vmem:[#allocation2 + $0x200] sm:$0xff]
    %v267 = vld [vmem:[#allocation2 + $0x208] sm:$0xff]
    %v268 = vld [vmem:[#allocation2 + $0x210] sm:$0xff]
    %v269 = vld [vmem:[#allocation2 + $0x218] sm:$0xff]
    %v270 = vld [vmem:[#allocation2 + $0x220] sm:$0xff]
    %v271 = vld [vmem:[#allocation2 + $0x228] sm:$0xff]
    %v272 = vld [vmem:[#allocation2 + $0x230] sm:$0xff]
    %v273 = vld [vmem:[#allocation2 + $0x238] sm:$0xff]
    %v274 = vld [vmem:[#allocation2 + $0x240] sm:$0xff]
    %v275 = vld [vmem:[#allocation2 + $0x248] sm:$0xff]
    %v276 = vld [vmem:[#allocation2 + $0x250] sm:$0xff]
    %v277 = vld [vmem:[#allocation2 + $0x258] sm:$0xff]
    %v278 = vld [vmem:[#allocation2 + $0x260] sm:$0xff]
    %v279 = vld [vmem:[#allocation2 + $0x268] sm:$0xff]
    %v280 = vld [vmem:[#allocation2 + $0x270] sm:$0xff]
    %v281 = vld [vmem:[#allocation2 + $0x278] sm:$0xff]
    %v282 = vld [vmem:[#allocation2 + $0x280] sm:$0xff]
    %v283 = vld [vmem:[#allocation2 + $0x288] sm:$0xff]
    %v284 = vld [vmem:[#allocation2 + $0x290] sm:$0xff]
    %v285 = vld [vmem:[#allocation2 + $0x298] sm:$0xff]
    %v286 = vld [vmem:[#allocation2 + $0x2a0] sm:$0xff]
    %v287 = vld [vmem:[#allocation2 + $0x2a8] sm:$0xff]
    %v288 = vld [vmem:[#allocation2 + $0x2b0] sm:$0xff]
    %v289 = vld [vmem:[#allocation2 + $0x2b8] sm:$0xff]
    %v290 = vld [vmem:[#allocation2 + $0x2c0] sm:$0xff]
    %v291 = vld [vmem:[#allocation2 + $0x2c8] sm:$0xff]
    %v292 = vld [vmem:[#allocation2 + $0x2d0] sm:$0xff]
    %v293 = vld [vmem:[#allocation2 + $0x2d8] sm:$0xff]
    %v294 = vld [vmem:[#allocation2 + $0x2e0] sm:$0xff]
    %v295 = vld [vmem:[#allocation2 + $0x2e8] sm:$0xff]
    %v296 = vld [vmem:[#allocation2 + $0x2f0] sm:$0xff]
    %v297 = vld [vmem:[#allocation2 + $0x2f8] sm:$0xff]
    %v298 = vld [vmem:[#allocation2 + $0x300] sm:$0xff]
    %v299 = vld [vmem:[#allocation2 + $0x308] sm:$0xff]
    %v300 = vld [vmem:[#allocation2 + $0x310] sm:$0xff]
    %v301 = vld [vmem:[#allocation2 + $0x318] sm:$0xff]
    %v302 = vld [vmem:[#allocation2 + $0x320] sm:$0xff]
    %v303 = vld [vmem:[#allocation2 + $0x328] sm:$0xff]
    %v304 = vld [vmem:[#allocation2 + $0x330] sm:$0xff]
    %v305 = vld [vmem:[#allocation2 + $0x338] sm:$0xff]
    %v306 = vld [vmem:[#allocation2 + $0x340] sm:$0xff]
    %v307 = vld [vmem:[#allocation2 + $0x348] sm:$0xff]
    %v308 = vld [vmem:[#allocation2 + $0x350] sm:$0xff]
    %v309 = vld [vmem:[#allocation2 + $0x358] sm:$0xff]
    %v310 = vld [vmem:[#allocation2 + $0x360] sm:$0xff]
    %v311 = vld [vmem:[#allocation2 + $0x368] sm:$0xff]
    %v312 = vld [vmem:[#allocation2 + $0x370] sm:$0xff]
    %v313 = vld [vmem:[#allocation2 + $0x378] sm:$0xff]
    %v314 = vld [vmem:[#allocation2 + $0x380] sm:$0xff]
    %v315 = vld [vmem:[#allocation2 + $0x388] sm:$0xff]
    %v316 = vld [vmem:[#allocation2 + $0x390] sm:$0xff]
    %v317 = vld [vmem:[#allocation2 + $0x398] sm:$0xff]
    %v318 = vld [vmem:[#allocation2 + $0x3a0] sm:$0xff]
    %v319 = vld [vmem:[#allocation2 + $0x3a8] sm:$0xff]
    %v320 = vld [vmem:[#allocation2 + $0x3b0] sm:$0xff]
    %v321 = vld [vmem:[#allocation2 + $0x3b8] sm:$0xff]
    %v322 = vld [vmem:[#allocation2 + $0x3c0] sm:$0xff]
    %v323 = vld [vmem:[#allocation2 + $0x3c8] sm:$0xff]
    %v324 = vld [vmem:[#allocation2 + $0x3d0] sm:$0xff]
    %v325 = vld [vmem:[#allocation2 + $0x3d8] sm:$0xff]
    %v326 = vld [vmem:[#allocation2 + $0x3e0] sm:$0xff]
    %v327 = vld [vmem:[#allocation2 + $0x3e8] sm:$0xff]
    %v328 = vld [vmem:[#allocation2 + $0x3f0] sm:$0xff]
    %v329 = vld [vmem:[#allocation2 + $0x3f8] sm:$0xff]
    %v330 = vld [vmem:[#allocation2 + $0x400] sm:$0xff]
    %v331 = vld [vmem:[#allocation2 + $0x408] sm:$0xff]
    %v332 = vld [vmem:[#allocation2 + $0x410] sm:$0xff]
    %v333 = vld [vmem:[#allocation2 + $0x418] sm:$0xff]
    %v334 = vld [vmem:[#allocation2 + $0x420] sm:$0xff]
    %v335 = vld [vmem:[#allocation2 + $0x428] sm:$0xff]
    %v336 = vld [vmem:[#allocation2 + $0x430] sm:$0xff]
    %v337 = vld [vmem:[#allocation2 + $0x438] sm:$0xff]
    %v338 = vld [vmem:[#allocation2 + $0x440] sm:$0xff]
    %v339 = vld [vmem:[#allocation2 + $0x448] sm:$0xff]
    %v340 = vld [vmem:[#allocation2 + $0x450] sm:$0xff]
    %v341 = vld [vmem:[#allocation2 + $0x458] sm:$0xff]
    %v342 = vld [vmem:[#allocation2 + $0x460] sm:$0xff]
    %v343 = vld [vmem:[#allocation2 + $0x468] sm:$0xff]
    %v344 = vld [vmem:[#allocation2 + $0x470] sm:$0xff]
    %v345 = vld [vmem:[#allocation2 + $0x478] sm:$0xff]
    %v346 = vld [vmem:[#allocation2 + $0x480] sm:$0xff]
    %v347 = vld [vmem:[#allocation2 + $0x488] sm:$0xff]
    %v348 = vld [vmem:[#allocation2 + $0x490] sm:$0xff]
    %v349 = vld [vmem:[#allocation2 + $0x498] sm:$0xff]
    %v350 = vld [vmem:[#allocation2 + $0x4a0] sm:$0xff]
    %v351 = vld [vmem:[#allocation2 + $0x4a8] sm:$0xff]
    %v352 = vld [vmem:[#allocation2 + $0x4b0] sm:$0xff]
    %v353 = vld [vmem:[#allocation2 + $0x4b8] sm:$0xff]
    %v354 = vld [vmem:[#allocation2 + $0x4c0] sm:$0xff]
    %v355 = vld [vmem:[#allocation2 + $0x4c8] sm:$0xff]
    %v356 = vld [vmem:[#allocation2 + $0x4d0] sm:$0xff]
    %v357 = vld [vmem:[#allocation2 + $0x4d8] sm:$0xff]
    %v358 = vld [vmem:[#allocation2 + $0x4e0] sm:$0xff]
    %v359 = vld [vmem:[#allocation2 + $0x4e8] sm:$0xff]
    %v360 = vld [vmem:[#allocation2 + $0x4f0] sm:$0xff]
    %v361 = vld [vmem:[#allocation2 + $0x4f8] sm:$0xff]
    %v362 = vld [vmem:[#allocation2 + $0x500] sm:$0xff]
    %v363 = vld [vmem:[#allocation2 + $0x508] sm:$0xff]
    %v364 = vld [vmem:[#allocation2 + $0x510] sm:$0xff]
    %v365 = vld [vmem:[#allocation2 + $0x518] sm:$0xff]
    %v366 = vld [vmem:[#allocation2 + $0x520] sm:$0xff]
    %v367 = vld [vmem:[#allocation2 + $0x528] sm:$0xff]
    %v368 = vld [vmem:[#allocation2 + $0x530] sm:$0xff]
    %v369 = vld [vmem:[#allocation2 + $0x538] sm:$0xff]
    %v370 = vld [vmem:[#allocation2 + $0x540] sm:$0xff]
    %v371 = vld [vmem:[#allocation2 + $0x548] sm:$0xff]
    %v372 = vld [vmem:[#allocation2 + $0x550] sm:$0xff]
    %v373 = vld [vmem:[#allocation2 + $0x558] sm:$0xff]
    %v374 = vld [vmem:[#allocation2 + $0x560] sm:$0xff]
    %v375 = vld [vmem:[#allocation2 + $0x568] sm:$0xff]
    %v376 = vld [vmem:[#allocation2 + $0x570] sm:$0xff]
    %v377 = vld [vmem:[#allocation2 + $0x578] sm:$0xff]
    %v378 = vld [vmem:[#allocation2 + $0x580] sm:$0xff]
    %v379 = vld [vmem:[#allocation2 + $0x588] sm:$0xff]
    %v380 = vld [vmem:[#allocation2 + $0x590] sm:$0xff]
    %v381 = vld [vmem:[#allocation2 + $0x598] sm:$0xff]
    %v382 = vld [vmem:[#allocation2 + $0x5a0] sm:$0xff]
    %v383 = vld [vmem:[#allocation2 + $0x5a8] sm:$0xff]
    %v384 = vld [vmem:[#allocation2 + $0x5b0] sm:$0xff]
    %v385 = vld [vmem:[#allocation2 + $0x5b8] sm:$0xff]
    %v386 = vld [vmem:[#allocation2 + $0x5c0] sm:$0xff]
    %v387 = vld [vmem:[#allocation2 + $0x5c8] sm:$0xff]
    %v388 = vld [vmem:[#allocation2 + $0x5d0] sm:$0xff]
    %v389 = vld [vmem:[#allocation2 + $0x5d8] sm:$0xff]
    %v390 = vld [vmem:[#allocation2 + $0x5e0] sm:$0xff]
    %v391 = vld [vmem:[#allocation2 + $0x5e8] sm:$0xff]
    %v392 = vld [vmem:[#allocation2 + $0x5f0] sm:$0xff]
    %v393 = vld [vmem:[#allocation2 + $0x5f8] sm:$0xff]
    %v394 = vld [vmem:[#allocation2 + $0x600] sm:$0xff]
    %v395 = vld [vmem:[#allocation2 + $0x608] sm:$0xff]
    %v396 = vld [vmem:[#allocation2 + $0x610] sm:$0xff]
    %v397 = vld [vmem:[#allocation2 + $0x618] sm:$0xff]
    %v398 = vld [vmem:[#allocation2 + $0x620] sm:$0xff]
    %v399 = vld [vmem:[#allocation2 + $0x628] sm:$0xff]
    %v400 = vld [vmem:[#allocation2 + $0x630] sm:$0xff]
    %v401 = vld [vmem:[#allocation2 + $0x638] sm:$0xff]
    %v402 = vld [vmem:[#allocation2 + $0x640] sm:$0xff]
    %v403 = vld [vmem:[#allocation2 + $0x648] sm:$0xff]
    %v404 = vld [vmem:[#allocation2 + $0x650] sm:$0xff]
    %v405 = vld [vmem:[#allocation2 + $0x658] sm:$0xff]
    %v406 = vld [vmem:[#allocation2 + $0x660] sm:$0xff]
    %v407 = vld [vmem:[#allocation2 + $0x668] sm:$0xff]
    %v408 = vld [vmem:[#allocation2 + $0x670] sm:$0xff]
    %v409 = vld [vmem:[#allocation2 + $0x678] sm:$0xff]
    %v410 = vld [vmem:[#allocation2 + $0x680] sm:$0xff]
    %v411 = vld [vmem:[#allocation2 + $0x688] sm:$0xff]
    %v412 = vld [vmem:[#allocation2 + $0x690] sm:$0xff]
    %v413 = vld [vmem:[#allocation2 + $0x698] sm:$0xff]
    %v414 = vld [vmem:[#allocation2 + $0x6a0] sm:$0xff]
    %v415 = vld [vmem:[#allocation2 + $0x6a8] sm:$0xff]
    %v416 = vld [vmem:[#allocation2 + $0x6b0] sm:$0xff]
    %v417 = vld [vmem:[#allocation2 + $0x6b8] sm:$0xff]
    %v418 = vld [vmem:[#allocation2 + $0x6c0] sm:$0xff]
    %v419 = vld [vmem:[#allocation2 + $0x6c8] sm:$0xff]
    %v420 = vld [vmem:[#allocation2 + $0x6d0] sm:$0xff]
    %v421 = vld [vmem:[#allocation2 + $0x6d8] sm:$0xff]
    %v422 = vld [vmem:[#allocation2 + $0x6e0] sm:$0xff]
    %v423 = vld [vmem:[#allocation2 + $0x6e8] sm:$0xff]
    %v424 = vld [vmem:[#allocation2 + $0x6f0] sm:$0xff]
    %v425 = vld [vmem:[#allocation2 + $0x6f8] sm:$0xff]
    %v426 = vld [vmem:[#allocation2 + $0x700] sm:$0xff]
    %v427 = vld [vmem:[#allocation2 + $0x708] sm:$0xff]
    %v428 = vld [vmem:[#allocation2 + $0x710] sm:$0xff]
    %v429 = vld [vmem:[#allocation2 + $0x718] sm:$0xff]
    %v430 = vld [vmem:[#allocation2 + $0x720] sm:$0xff]
    %v431 = vld [vmem:[#allocation2 + $0x728] sm:$0xff]
    %v432 = vld [vmem:[#allocation2 + $0x730] sm:$0xff]
    %v433 = vld [vmem:[#allocation2 + $0x738] sm:$0xff]
    %v434 = vld [vmem:[#allocation2 + $0x740] sm:$0xff]
    %v435 = vld [vmem:[#allocation2 + $0x748] sm:$0xff]
    %v436 = vld [vmem:[#allocation2 + $0x750] sm:$0xff]
    %v437 = vld [vmem:[#allocation2 + $0x758] sm:$0xff]
    %v438 = vld [vmem:[#allocation2 + $0x760] sm:$0xff]
    %v439 = vld [vmem:[#allocation2 + $0x768] sm:$0xff]
    %v440 = vld [vmem:[#allocation2 + $0x770] sm:$0xff]
    %v441 = vld [vmem:[#allocation2 + $0x778] sm:$0xff]
    %v442 = vld [vmem:[#allocation2 + $0x780] sm:$0xff]
    %v443 = vld [vmem:[#allocation2 + $0x788] sm:$0xff]
    %v444 = vld [vmem:[#allocation2 + $0x790] sm:$0xff]
    %v445 = vld [vmem:[#allocation2 + $0x798] sm:$0xff]
    %v446 = vld [vmem:[#allocation2 + $0x7a0] sm:$0xff]
    %v447 = vld [vmem:[#allocation2 + $0x7a8] sm:$0xff]
    %v448 = vld [vmem:[#allocation2 + $0x7b0] sm:$0xff]
    %v449 = vld [vmem:[#allocation2 + $0x7b8] sm:$0xff]
    %v450 = vld [vmem:[#allocation2 + $0x7c0] sm:$0xff]
    %v451 = vld [vmem:[#allocation2 + $0x7c8] sm:$0xff]
    %v452 = vld [vmem:[#allocation2 + $0x7d0] sm:$0xff]
    %v453 = vld [vmem:[#allocation2 + $0x7d8] sm:$0xff]
    %v454 = vld [vmem:[#allocation2 + $0x7e0] sm:$0xff]
    %v455 = vld [vmem:[#allocation2 + $0x7e8] sm:$0xff]
    %v456 = vld [vmem:[#allocation2 + $0x7f0] sm:$0xff]
    %v457 = vld [vmem:[#allocation2 + $0x7f8] sm:$0xff]
    %v458 = vld [vmem:[#allocation2 + $0x800] sm:$0xff]
    %v459 = vld [vmem:[#allocation2 + $0x808] sm:$0xff]
    %v460 = vld [vmem:[#allocation2 + $0x810] sm:$0xff]
    %v461 = vld [vmem:[#allocation2 + $0x818] sm:$0xff]
    %v462 = vld [vmem:[#allocation2 + $0x820] sm:$0xff]
    %v463 = vld [vmem:[#allocation2 + $0x828] sm:$0xff]
    %v464 = vld [vmem:[#allocation2 + $0x830] sm:$0xff]
    %v465 = vld [vmem:[#allocation2 + $0x838] sm:$0xff]
    %v466 = vld [vmem:[#allocation2 + $0x840] sm:$0xff]
    %v467 = vld [vmem:[#allocation2 + $0x848] sm:$0xff]
    %v468 = vld [vmem:[#allocation2 + $0x850] sm:$0xff]
    %v469 = vld [vmem:[#allocation2 + $0x858] sm:$0xff]
    %v470 = vld [vmem:[#allocation2 + $0x860] sm:$0xff]
    %v471 = vld [vmem:[#allocation2 + $0x868] sm:$0xff]
    %v472 = vld [vmem:[#allocation2 + $0x870] sm:$0xff]
    %v473 = vld [vmem:[#allocation2 + $0x878] sm:$0xff]
    %v474 = vld [vmem:[#allocation2 + $0x880] sm:$0xff]
    %v475 = vld [vmem:[#allocation2 + $0x888] sm:$0xff]
    %v476 = vld [vmem:[#allocation2 + $0x890] sm:$0xff]
    %v477 = vld [vmem:[#allocation2 + $0x898] sm:$0xff]
    %v478 = vld [vmem:[#allocation2 + $0x8a0] sm:$0xff]
    %v479 = vld [vmem:[#allocation2 + $0x8a8] sm:$0xff]
    %v480 = vld [vmem:[#allocation2 + $0x8b0] sm:$0xff]
    %v481 = vld [vmem:[#allocation2 + $0x8b8] sm:$0xff]
    %v482 = vld [vmem:[#allocation2 + $0x8c0] sm:$0xff]
    %v483 = vld [vmem:[#allocation2 + $0x8c8] sm:$0xff]
    %v484 = vld [vmem:[#allocation2 + $0x8d0] sm:$0xff]
    %v485 = vld [vmem:[#allocation2 + $0x8d8] sm:$0xff]
    %v486 = vld [vmem:[#allocation2 + $0x8e0] sm:$0xff]
    %v487 = vld [vmem:[#allocation2 + $0x8e8] sm:$0xff]
    %v488 = vld [vmem:[#allocation2 + $0x8f0] sm:$0xff]
    %v489 = vld [vmem:[#allocation2 + $0x8f8] sm:$0xff]
    %v490 = vld [vmem:[#allocation4] sm:$0x3f]
    %v492 = vlaneseq
    %v493 = vshrl.u32 %v492, 7
    %v494 = vsub.s32 0, %v493
    %v495 = vrot.slane %v490, %v494
    %v496 = vlaneseq
    %v497 = vshrl.u32 %v496, 7
    %v498 = vsub.s32 1, %v497
    %v499 = vrot.slane %v490, %v498
    %v500 = vlaneseq
    %v501 = vshrl.u32 %v500, 7
    %v502 = vsub.s32 2, %v501
    %v503 = vrot.slane %v490, %v502
    %v504 = vlaneseq
    %v505 = vshrl.u32 %v504, 7
    %v506 = vsub.s32 3, %v505
    %v507 = vrot.slane %v490, %v506
    %v508 = vlaneseq
    %v509 = vshrl.u32 %v508, 7
    %v510 = vsub.s32 4, %v509
    %v511 = vrot.slane %v490, %v510
    %v512 = vlaneseq
    %v513 = vshrl.u32 %v512, 7
    %v514 = vsub.s32 5, %v513
    %v515 = vrot.slane %v490, %v514
    %v523 = vcombine.high %v201, %v201
    %v525 = vunpack.c.l.s4 1966171168
    %v526 = vunpack.c.0.s8 %v525
    %v527 = vlaneseq
    %v528 = vshrl.u32 %v527, 7
    %v529 = vsub.s32 %v526, %v528
    %v530 = vrot.slane %v201, %v529
    %v532 = vunpack.c.l.s4 1966171168
    %v533 = vunpack.c.0.s8 %v532
    %v534 = vlaneseq
    %v535 = vshrl.u32 %v534, 7
    %v536 = vsub.s32 %v533, %v535
    %v537 = vrot.slane %v523, %v536
    %v538 = vcombine.high %v530, %v530
    %v539 = vcombine.high %v537, %v537
    %v541 = vunpack.c.l.s4 1966171168
    %v542 = vunpack.c.0.s8 %v541
    %v543 = vlaneseq
    %v544 = vshrl.u32 %v543, 7
    %v545 = vsub.s32 %v542, %v544
    %v546 = vrot.slane %v530, %v545
    %v548 = vunpack.c.l.s4 1966171168
    %v549 = vunpack.c.0.s8 %v548
    %v550 = vlaneseq
    %v551 = vshrl.u32 %v550, 7
    %v552 = vsub.s32 %v549, %v551
    %v553 = vrot.slane %v537, %v552
    %v555 = vunpack.c.l.s4 1966171168
    %v556 = vunpack.c.0.s8 %v555
    %v557 = vlaneseq
    %v558 = vshrl.u32 %v557, 7
    %v559 = vsub.s32 %v556, %v558
    %v560 = vrot.slane %v538, %v559
    %v562 = vunpack.c.l.s4 1966171168
    %v563 = vunpack.c.0.s8 %v562
    %v564 = vlaneseq
    %v565 = vshrl.u32 %v564, 7
    %v566 = vsub.s32 %v563, %v565
    %v567 = vrot.slane %v539, %v566
    %v568 = vcombine.high %v546, %v546
    %v569 = vcombine.high %v560, %v560
    %v864 = vunpack.c.l.b16 %v202
    %v865 = vunpack.c.h.b16 %v202
    %v866 = vunpack.c.l.b16 %v203
    %v867 = vunpack.c.h.b16 %v203
    %v868 = vunpack.c.l.b16 %v204
    %v869 = vunpack.c.h.b16 %v204
    %v870 = vunpack.c.l.b16 %v205
    %v871 = vunpack.c.h.b16 %v205
    %v872 = vunpack.c.l.b16 %v206
    %v873 = vunpack.c.h.b16 %v206
    %v874 = vunpack.c.l.b16 %v207
    %v875 = vunpack.c.h.b16 %v207
    %v876 = vunpack.c.l.b16 %v208
    %v877 = vunpack.c.h.b16 %v208
    %v878 = vunpack.c.l.b16 %v209
    %v879 = vunpack.c.h.b16 %v209
    %v880 = vunpack.c.l.b16 %v210
    %v881 = vunpack.c.h.b16 %v210
    %v882 = vunpack.c.l.b16 %v211
    %v883 = vunpack.c.h.b16 %v211
    %v884 = vunpack.c.l.b16 %v212
    %v885 = vunpack.c.h.b16 %v212
    %v886 = vunpack.c.l.b16 %v213
    %v887 = vunpack.c.h.b16 %v213
    %v888 = vunpack.c.l.b16 %v214
    %v889 = vunpack.c.h.b16 %v214
    %v890 = vunpack.c.l.b16 %v215
    %v891 = vunpack.c.h.b16 %v215
    %v892 = vunpack.c.l.b16 %v216
    %v893 = vunpack.c.h.b16 %v216
    %v894 = vunpack.c.l.b16 %v217
    %v895 = vunpack.c.h.b16 %v217
    %v896 = vunpack.c.l.b16 %v218
    %v897 = vunpack.c.h.b16 %v218
    %v898 = vunpack.c.l.b16 %v219
    %v899 = vunpack.c.h.b16 %v219
    %v900 = vunpack.c.l.b16 %v220
    %v901 = vunpack.c.h.b16 %v220
    %v902 = vunpack.c.l.b16 %v221
    %v903 = vunpack.c.h.b16 %v221
    %v904 = vunpack.c.l.b16 %v222
    %v905 = vunpack.c.h.b16 %v222
    %v906 = vunpack.c.l.b16 %v223
    %v907 = vunpack.c.h.b16 %v223
    %v908 = vunpack.c.l.b16 %v224
    %v909 = vunpack.c.h.b16 %v224
    %v910 = vunpack.c.l.b16 %v225
    %v911 = vunpack.c.h.b16 %v225
    %v912 = vunpack.c.l.b16 %v226
    %v913 = vunpack.c.h.b16 %v226
    %v914 = vunpack.c.l.b16 %v227
    %v915 = vunpack.c.h.b16 %v227
    %v916 = vunpack.c.l.b16 %v228
    %v917 = vunpack.c.h.b16 %v228
    %v918 = vunpack.c.l.b16 %v229
    %v919 = vunpack.c.h.b16 %v229
    %v920 = vunpack.c.l.b16 %v230
    %v921 = vunpack.c.h.b16 %v230
    %v922 = vunpack.c.l.b16 %v231
    %v923 = vunpack.c.h.b16 %v231
    %v924 = vunpack.c.l.b16 %v232
    %v925 = vunpack.c.h.b16 %v232
    %v926 = vunpack.c.l.b16 %v233
    %v927 = vunpack.c.h.b16 %v233
    %v928 = vunpack.c.l.b16 %v234
    %v929 = vunpack.c.h.b16 %v234
    %v930 = vunpack.c.l.b16 %v235
    %v931 = vunpack.c.h.b16 %v235
    %v932 = vunpack.c.l.b16 %v236
    %v933 = vunpack.c.h.b16 %v236
    %v934 = vunpack.c.l.b16 %v237
    %v935 = vunpack.c.h.b16 %v237
    %v936 = vunpack.c.l.b16 %v238
    %v937 = vunpack.c.h.b16 %v238
    %v938 = vunpack.c.l.b16 %v239
    %v939 = vunpack.c.h.b16 %v239
    %v940 = vunpack.c.l.b16 %v240
    %v941 = vunpack.c.h.b16 %v240
    %v942 = vunpack.c.l.b16 %v241
    %v943 = vunpack.c.h.b16 %v241
    %v944 = vunpack.c.l.b16 %v242
    %v945 = vunpack.c.h.b16 %v242
    %v946 = vunpack.c.l.b16 %v243
    %v947 = vunpack.c.h.b16 %v243
    %v948 = vunpack.c.l.b16 %v244
    %v949 = vunpack.c.h.b16 %v244
    %v950 = vunpack.c.l.b16 %v245
    %v951 = vunpack.c.h.b16 %v245
    %v952 = vunpack.c.l.b16 %v246
    %v953 = vunpack.c.h.b16 %v246
    %v954 = vunpack.c.l.b16 %v247
    %v955 = vunpack.c.h.b16 %v247
    %v956 = vunpack.c.l.b16 %v248
    %v957 = vunpack.c.h.b16 %v248
    %v958 = vunpack.c.l.b16 %v249
    %v959 = vunpack.c.h.b16 %v249
    %v960 = vunpack.c.l.b16 %v250
    %v961 = vunpack.c.h.b16 %v250
    %v962 = vunpack.c.l.b16 %v251
    %v963 = vunpack.c.h.b16 %v251
    %v964 = vunpack.c.l.b16 %v252
    %v965 = vunpack.c.h.b16 %v252
    %v966 = vunpack.c.l.b16 %v253
    %v967 = vunpack.c.h.b16 %v253
    %v968 = vunpack.c.l.b16 %v254
    %v969 = vunpack.c.h.b16 %v254
    %v970 = vunpack.c.l.b16 %v255
    %v971 = vunpack.c.h.b16 %v255
    %v972 = vunpack.c.l.b16 %v256
    %v973 = vunpack.c.h.b16 %v256
    %v974 = vunpack.c.l.b16 %v257
    %v975 = vunpack.c.h.b16 %v257
    %v976 = vunpack.c.l.b16 %v258
    %v977 = vunpack.c.h.b16 %v258
    %v978 = vunpack.c.l.b16 %v259
    %v979 = vunpack.c.h.b16 %v259
    %v980 = vunpack.c.l.b16 %v260
    %v981 = vunpack.c.h.b16 %v260
    %v982 = vunpack.c.l.b16 %v261
    %v983 = vunpack.c.h.b16 %v261
    %v984 = vunpack.c.l.b16 %v262
    %v985 = vunpack.c.h.b16 %v262
    %v986 = vunpack.c.l.b16 %v263
    %v987 = vunpack.c.h.b16 %v263
    %v988 = vunpack.c.l.b16 %v264
    %v989 = vunpack.c.h.b16 %v264
    %v990 = vunpack.c.l.b16 %v265
    %v991 = vunpack.c.h.b16 %v265
    %v992 = vunpack.c.l.b16 %v266
    %v993 = vunpack.c.h.b16 %v266
    %v994 = vunpack.c.l.b16 %v267
    %v995 = vunpack.c.h.b16 %v267
    %v996 = vunpack.c.l.b16 %v268
    %v997 = vunpack.c.h.b16 %v268
    %v998 = vunpack.c.l.b16 %v269
    %v999 = vunpack.c.h.b16 %v269
    %v1000 = vunpack.c.l.b16 %v270
    %v1001 = vunpack.c.h.b16 %v270
    %v1002 = vunpack.c.l.b16 %v271
    %v1003 = vunpack.c.h.b16 %v271
    %v1004 = vunpack.c.l.b16 %v272
    %v1005 = vunpack.c.h.b16 %v272
    %v1006 = vunpack.c.l.b16 %v273
    %v1007 = vunpack.c.h.b16 %v273
    %v1008 = vunpack.c.l.b16 %v274
    %v1009 = vunpack.c.h.b16 %v274
    %v1010 = vunpack.c.l.b16 %v275
    %v1011 = vunpack.c.h.b16 %v275
    %v1012 = vunpack.c.l.b16 %v276
    %v1013 = vunpack.c.h.b16 %v276
    %v1014 = vunpack.c.l.b16 %v277
    %v1015 = vunpack.c.h.b16 %v277
    %v1016 = vunpack.c.l.b16 %v278
    %v1017 = vunpack.c.h.b16 %v278
    %v1018 = vunpack.c.l.b16 %v279
    %v1019 = vunpack.c.h.b16 %v279
    %v1020 = vunpack.c.l.b16 %v280
    %v1021 = vunpack.c.h.b16 %v280
    %v1022 = vunpack.c.l.b16 %v281
    %v1023 = vunpack.c.h.b16 %v281
    %v1024 = vunpack.c.l.b16 %v282
    %v1025 = vunpack.c.h.b16 %v282
    %v1026 = vunpack.c.l.b16 %v283
    %v1027 = vunpack.c.h.b16 %v283
    %v1028 = vunpack.c.l.b16 %v284
    %v1029 = vunpack.c.h.b16 %v284
    %v1030 = vunpack.c.l.b16 %v285
    %v1031 = vunpack.c.h.b16 %v285
    %v1032 = vunpack.c.l.b16 %v286
    %v1033 = vunpack.c.h.b16 %v286
    %v1034 = vunpack.c.l.b16 %v287
    %v1035 = vunpack.c.h.b16 %v287
    %v1036 = vunpack.c.l.b16 %v288
    %v1037 = vunpack.c.h.b16 %v288
    %v1038 = vunpack.c.l.b16 %v289
    %v1039 = vunpack.c.h.b16 %v289
    %v1040 = vunpack.c.l.b16 %v290
    %v1041 = vunpack.c.h.b16 %v290
    %v1042 = vunpack.c.l.b16 %v291
    %v1043 = vunpack.c.h.b16 %v291
    %v1044 = vunpack.c.l.b16 %v292
    %v1045 = vunpack.c.h.b16 %v292
    %v1046 = vunpack.c.l.b16 %v293
    %v1047 = vunpack.c.h.b16 %v293
    %v1048 = vunpack.c.l.b16 %v294
    %v1049 = vunpack.c.h.b16 %v294
    %v1050 = vunpack.c.l.b16 %v295
    %v1051 = vunpack.c.h.b16 %v295
    %v1052 = vunpack.c.l.b16 %v296
    %v1053 = vunpack.c.h.b16 %v296
    %v1054 = vunpack.c.l.b16 %v297
    %v1055 = vunpack.c.h.b16 %v297
    %v1056 = vunpack.c.l.b16 %v298
    %v1057 = vunpack.c.h.b16 %v298
    %v1058 = vunpack.c.l.b16 %v299
    %v1059 = vunpack.c.h.b16 %v299
    %v1060 = vunpack.c.l.b16 %v300
    %v1061 = vunpack.c.h.b16 %v300
    %v1062 = vunpack.c.l.b16 %v301
    %v1063 = vunpack.c.h.b16 %v301
    %v1064 = vunpack.c.l.b16 %v302
    %v1065 = vunpack.c.h.b16 %v302
    %v1066 = vunpack.c.l.b16 %v303
    %v1067 = vunpack.c.h.b16 %v303
    %v1068 = vunpack.c.l.b16 %v304
    %v1069 = vunpack.c.h.b16 %v304
    %v1070 = vunpack.c.l.b16 %v305
    %v1071 = vunpack.c.h.b16 %v305
    %v1072 = vunpack.c.l.b16 %v306
    %v1073 = vunpack.c.h.b16 %v306
    %v1074 = vunpack.c.l.b16 %v307
    %v1075 = vunpack.c.h.b16 %v307
    %v1076 = vunpack.c.l.b16 %v308
    %v1077 = vunpack.c.h.b16 %v308
    %v1078 = vunpack.c.l.b16 %v309
    %v1079 = vunpack.c.h.b16 %v309
    %v1080 = vunpack.c.l.b16 %v310
    %v1081 = vunpack.c.h.b16 %v310
    %v1082 = vunpack.c.l.b16 %v311
    %v1083 = vunpack.c.h.b16 %v311
    %v1084 = vunpack.c.l.b16 %v312
    %v1085 = vunpack.c.h.b16 %v312
    %v1086 = vunpack.c.l.b16 %v313
    %v1087 = vunpack.c.h.b16 %v313
    %v1088 = vunpack.c.l.b16 %v314
    %v1089 = vunpack.c.h.b16 %v314
    %v1090 = vunpack.c.l.b16 %v315
    %v1091 = vunpack.c.h.b16 %v315
    %v1092 = vunpack.c.l.b16 %v316
    %v1093 = vunpack.c.h.b16 %v316
    %v1094 = vunpack.c.l.b16 %v317
    %v1095 = vunpack.c.h.b16 %v317
    %v1096 = vunpack.c.l.b16 %v318
    %v1097 = vunpack.c.h.b16 %v318
    %v1098 = vunpack.c.l.b16 %v319
    %v1099 = vunpack.c.h.b16 %v319
    %v1100 = vunpack.c.l.b16 %v320
    %v1101 = vunpack.c.h.b16 %v320
    %v1102 = vunpack.c.l.b16 %v321
    %v1103 = vunpack.c.h.b16 %v321
    %v1104 = vunpack.c.l.b16 %v322
    %v1105 = vunpack.c.h.b16 %v322
    %v1106 = vunpack.c.l.b16 %v323
    %v1107 = vunpack.c.h.b16 %v323
    %v1108 = vunpack.c.l.b16 %v324
    %v1109 = vunpack.c.h.b16 %v324
    %v1110 = vunpack.c.l.b16 %v325
    %v1111 = vunpack.c.h.b16 %v325
    %v1112 = vunpack.c.l.b16 %v326
    %v1113 = vunpack.c.h.b16 %v326
    %v1114 = vunpack.c.l.b16 %v327
    %v1115 = vunpack.c.h.b16 %v327
    %v1116 = vunpack.c.l.b16 %v328
    %v1117 = vunpack.c.h.b16 %v328
    %v1118 = vunpack.c.l.b16 %v329
    %v1119 = vunpack.c.h.b16 %v329
    %v1120 = vunpack.c.l.b16 %v330
    %v1121 = vunpack.c.h.b16 %v330
    %v1122 = vunpack.c.l.b16 %v331
    %v1123 = vunpack.c.h.b16 %v331
    %v1124 = vunpack.c.l.b16 %v332
    %v1125 = vunpack.c.h.b16 %v332
    %v1126 = vunpack.c.l.b16 %v333
    %v1127 = vunpack.c.h.b16 %v333
    %v1128 = vunpack.c.l.b16 %v334
    %v1129 = vunpack.c.h.b16 %v334
    %v1130 = vunpack.c.l.b16 %v335
    %v1131 = vunpack.c.h.b16 %v335
    %v1132 = vunpack.c.l.b16 %v336
    %v1133 = vunpack.c.h.b16 %v336
    %v1134 = vunpack.c.l.b16 %v337
    %v1135 = vunpack.c.h.b16 %v337
    %v1136 = vunpack.c.l.b16 %v338
    %v1137 = vunpack.c.h.b16 %v338
    %v1138 = vunpack.c.l.b16 %v339
    %v1139 = vunpack.c.h.b16 %v339
    %v1140 = vunpack.c.l.b16 %v340
    %v1141 = vunpack.c.h.b16 %v340
    %v1142 = vunpack.c.l.b16 %v341
    %v1143 = vunpack.c.h.b16 %v341
    %v1144 = vunpack.c.l.b16 %v342
    %v1145 = vunpack.c.h.b16 %v342
    %v1146 = vunpack.c.l.b16 %v343
    %v1147 = vunpack.c.h.b16 %v343
    %v1148 = vunpack.c.l.b16 %v344
    %v1149 = vunpack.c.h.b16 %v344
    %v1150 = vunpack.c.l.b16 %v345
    %v1151 = vunpack.c.h.b16 %v345
    %v1152 = vunpack.c.l.b16 %v346
    %v1153 = vunpack.c.h.b16 %v346
    %v1154 = vunpack.c.l.b16 %v347
    %v1155 = vunpack.c.h.b16 %v347
    %v1156 = vunpack.c.l.b16 %v348
    %v1157 = vunpack.c.h.b16 %v348
    %v1158 = vunpack.c.l.b16 %v349
    %v1159 = vunpack.c.h.b16 %v349
    %v1160 = vunpack.c.l.b16 %v350
    %v1161 = vunpack.c.h.b16 %v350
    %v1162 = vunpack.c.l.b16 %v351
    %v1163 = vunpack.c.h.b16 %v351
    %v1164 = vunpack.c.l.b16 %v352
    %v1165 = vunpack.c.h.b16 %v352
    %v1166 = vunpack.c.l.b16 %v353
    %v1167 = vunpack.c.h.b16 %v353
    %v1168 = vunpack.c.l.b16 %v354
    %v1169 = vunpack.c.h.b16 %v354
    %v1170 = vunpack.c.l.b16 %v355
    %v1171 = vunpack.c.h.b16 %v355
    %v1172 = vunpack.c.l.b16 %v356
    %v1173 = vunpack.c.h.b16 %v356
    %v1174 = vunpack.c.l.b16 %v357
    %v1175 = vunpack.c.h.b16 %v357
    %v1176 = vunpack.c.l.b16 %v358
    %v1177 = vunpack.c.h.b16 %v358
    %v1178 = vunpack.c.l.b16 %v359
    %v1179 = vunpack.c.h.b16 %v359
    %v1180 = vunpack.c.l.b16 %v360
    %v1181 = vunpack.c.h.b16 %v360
    %v1182 = vunpack.c.l.b16 %v361
    %v1183 = vunpack.c.h.b16 %v361
    %v1184 = vunpack.c.l.b16 %v362
    %v1185 = vunpack.c.h.b16 %v362
    %v1186 = vunpack.c.l.b16 %v363
    %v1187 = vunpack.c.h.b16 %v363
    %v1188 = vunpack.c.l.b16 %v364
    %v1189 = vunpack.c.h.b16 %v364
    %v1190 = vunpack.c.l.b16 %v365
    %v1191 = vunpack.c.h.b16 %v365
    %v1192 = vunpack.c.l.b16 %v366
    %v1193 = vunpack.c.h.b16 %v366
    %v1194 = vunpack.c.l.b16 %v367
    %v1195 = vunpack.c.h.b16 %v367
    %v1196 = vunpack.c.l.b16 %v368
    %v1197 = vunpack.c.h.b16 %v368
    %v1198 = vunpack.c.l.b16 %v369
    %v1199 = vunpack.c.h.b16 %v369
    %v1200 = vunpack.c.l.b16 %v370
    %v1201 = vunpack.c.h.b16 %v370
    %v1202 = vunpack.c.l.b16 %v371
    %v1203 = vunpack.c.h.b16 %v371
    %v1204 = vunpack.c.l.b16 %v372
    %v1205 = vunpack.c.h.b16 %v372
    %v1206 = vunpack.c.l.b16 %v373
    %v1207 = vunpack.c.h.b16 %v373
    %v1208 = vunpack.c.l.b16 %v374
    %v1209 = vunpack.c.h.b16 %v374
    %v1210 = vunpack.c.l.b16 %v375
    %v1211 = vunpack.c.h.b16 %v375
    %v1212 = vunpack.c.l.b16 %v376
    %v1213 = vunpack.c.h.b16 %v376
    %v1214 = vunpack.c.l.b16 %v377
    %v1215 = vunpack.c.h.b16 %v377
    %v1216 = vunpack.c.l.b16 %v378
    %v1217 = vunpack.c.h.b16 %v378
    %v1218 = vunpack.c.l.b16 %v379
    %v1219 = vunpack.c.h.b16 %v379
    %v1220 = vunpack.c.l.b16 %v380
    %v1221 = vunpack.c.h.b16 %v380
    %v1222 = vunpack.c.l.b16 %v381
    %v1223 = vunpack.c.h.b16 %v381
    %v1224 = vunpack.c.l.b16 %v382
    %v1225 = vunpack.c.h.b16 %v382
    %v1226 = vunpack.c.l.b16 %v383
    %v1227 = vunpack.c.h.b16 %v383
    %v1228 = vunpack.c.l.b16 %v384
    %v1229 = vunpack.c.h.b16 %v384
    %v1230 = vunpack.c.l.b16 %v385
    %v1231 = vunpack.c.h.b16 %v385
    %v1232 = vunpack.c.l.b16 %v386
    %v1233 = vunpack.c.h.b16 %v386
    %v1234 = vunpack.c.l.b16 %v387
    %v1235 = vunpack.c.h.b16 %v387
    %v1236 = vunpack.c.l.b16 %v388
    %v1237 = vunpack.c.h.b16 %v388
    %v1238 = vunpack.c.l.b16 %v389
    %v1239 = vunpack.c.h.b16 %v389
    %v1240 = vunpack.c.l.b16 %v390
    %v1241 = vunpack.c.h.b16 %v390
    %v1242 = vunpack.c.l.b16 %v391
    %v1243 = vunpack.c.h.b16 %v391
    %v1244 = vunpack.c.l.b16 %v392
    %v1245 = vunpack.c.h.b16 %v392
    %v1246 = vunpack.c.l.b16 %v393
    %v1247 = vunpack.c.h.b16 %v393
    %v1248 = vunpack.c.l.b16 %v394
    %v1249 = vunpack.c.h.b16 %v394
    %v1250 = vunpack.c.l.b16 %v395
    %v1251 = vunpack.c.h.b16 %v395
    %v1252 = vunpack.c.l.b16 %v396
    %v1253 = vunpack.c.h.b16 %v396
    %v1254 = vunpack.c.l.b16 %v397
    %v1255 = vunpack.c.h.b16 %v397
    %v1256 = vunpack.c.l.b16 %v398
    %v1257 = vunpack.c.h.b16 %v398
    %v1258 = vunpack.c.l.b16 %v399
    %v1259 = vunpack.c.h.b16 %v399
    %v1260 = vunpack.c.l.b16 %v400
    %v1261 = vunpack.c.h.b16 %v400
    %v1262 = vunpack.c.l.b16 %v401
    %v1263 = vunpack.c.h.b16 %v401
    %v1264 = vunpack.c.l.b16 %v402
    %v1265 = vunpack.c.h.b16 %v402
    %v1266 = vunpack.c.l.b16 %v403
    %v1267 = vunpack.c.h.b16 %v403
    %v1268 = vunpack.c.l.b16 %v404
    %v1269 = vunpack.c.h.b16 %v404
    %v1270 = vunpack.c.l.b16 %v405
    %v1271 = vunpack.c.h.b16 %v405
    %v1272 = vunpack.c.l.b16 %v406
    %v1273 = vunpack.c.h.b16 %v406
    %v1274 = vunpack.c.l.b16 %v407
    %v1275 = vunpack.c.h.b16 %v407
    %v1276 = vunpack.c.l.b16 %v408
    %v1277 = vunpack.c.h.b16 %v408
    %v1278 = vunpack.c.l.b16 %v409
    %v1279 = vunpack.c.h.b16 %v409
    %v1280 = vunpack.c.l.b16 %v410
    %v1281 = vunpack.c.h.b16 %v410
    %v1282 = vunpack.c.l.b16 %v411
    %v1283 = vunpack.c.h.b16 %v411
    %v1284 = vunpack.c.l.b16 %v412
    %v1285 = vunpack.c.h.b16 %v412
    %v1286 = vunpack.c.l.b16 %v413
    %v1287 = vunpack.c.h.b16 %v413
    %v1288 = vunpack.c.l.b16 %v414
    %v1289 = vunpack.c.h.b16 %v414
    %v1290 = vunpack.c.l.b16 %v415
    %v1291 = vunpack.c.h.b16 %v415
    %v1292 = vunpack.c.l.b16 %v416
    %v1293 = vunpack.c.h.b16 %v416
    %v1294 = vunpack.c.l.b16 %v417
    %v1295 = vunpack.c.h.b16 %v417
    %v1296 = vunpack.c.l.b16 %v418
    %v1297 = vunpack.c.h.b16 %v418
    %v1298 = vunpack.c.l.b16 %v419
    %v1299 = vunpack.c.h.b16 %v419
    %v1300 = vunpack.c.l.b16 %v420
    %v1301 = vunpack.c.h.b16 %v420
    %v1302 = vunpack.c.l.b16 %v421
    %v1303 = vunpack.c.h.b16 %v421
    %v1304 = vunpack.c.l.b16 %v422
    %v1305 = vunpack.c.h.b16 %v422
    %v1306 = vunpack.c.l.b16 %v423
    %v1307 = vunpack.c.h.b16 %v423
    %v1308 = vunpack.c.l.b16 %v424
    %v1309 = vunpack.c.h.b16 %v424
    %v1310 = vunpack.c.l.b16 %v425
    %v1311 = vunpack.c.h.b16 %v425
    %v1312 = vunpack.c.l.b16 %v426
    %v1313 = vunpack.c.h.b16 %v426
    %v1314 = vunpack.c.l.b16 %v427
    %v1315 = vunpack.c.h.b16 %v427
    %v1316 = vunpack.c.l.b16 %v428
    %v1317 = vunpack.c.h.b16 %v428
    %v1318 = vunpack.c.l.b16 %v429
    %v1319 = vunpack.c.h.b16 %v429
    %v1320 = vunpack.c.l.b16 %v430
    %v1321 = vunpack.c.h.b16 %v430
    %v1322 = vunpack.c.l.b16 %v431
    %v1323 = vunpack.c.h.b16 %v431
    %v1324 = vunpack.c.l.b16 %v432
    %v1325 = vunpack.c.h.b16 %v432
    %v1326 = vunpack.c.l.b16 %v433
    %v1327 = vunpack.c.h.b16 %v433
    %v1328 = vunpack.c.l.b16 %v434
    %v1329 = vunpack.c.h.b16 %v434
    %v1330 = vunpack.c.l.b16 %v435
    %v1331 = vunpack.c.h.b16 %v435
    %v1332 = vunpack.c.l.b16 %v436
    %v1333 = vunpack.c.h.b16 %v436
    %v1334 = vunpack.c.l.b16 %v437
    %v1335 = vunpack.c.h.b16 %v437
    %v1336 = vunpack.c.l.b16 %v438
    %v1337 = vunpack.c.h.b16 %v438
    %v1338 = vunpack.c.l.b16 %v439
    %v1339 = vunpack.c.h.b16 %v439
    %v1340 = vunpack.c.l.b16 %v440
    %v1341 = vunpack.c.h.b16 %v440
    %v1342 = vunpack.c.l.b16 %v441
    %v1343 = vunpack.c.h.b16 %v441
    %v1344 = vunpack.c.l.b16 %v442
    %v1345 = vunpack.c.h.b16 %v442
    %v1346 = vunpack.c.l.b16 %v443
    %v1347 = vunpack.c.h.b16 %v443
    %v1348 = vunpack.c.l.b16 %v444
    %v1349 = vunpack.c.h.b16 %v444
    %v1350 = vunpack.c.l.b16 %v445
    %v1351 = vunpack.c.h.b16 %v445
    %v1352 = vunpack.c.l.b16 %v446
    %v1353 = vunpack.c.h.b16 %v446
    %v1354 = vunpack.c.l.b16 %v447
    %v1355 = vunpack.c.h.b16 %v447
    %v1356 = vunpack.c.l.b16 %v448
    %v1357 = vunpack.c.h.b16 %v448
    %v1358 = vunpack.c.l.b16 %v449
    %v1359 = vunpack.c.h.b16 %v449
    %v1360 = vunpack.c.l.b16 %v450
    %v1361 = vunpack.c.h.b16 %v450
    %v1362 = vunpack.c.l.b16 %v451
    %v1363 = vunpack.c.h.b16 %v451
    %v1364 = vunpack.c.l.b16 %v452
    %v1365 = vunpack.c.h.b16 %v452
    %v1366 = vunpack.c.l.b16 %v453
    %v1367 = vunpack.c.h.b16 %v453
    %v1368 = vunpack.c.l.b16 %v454
    %v1369 = vunpack.c.h.b16 %v454
    %v1370 = vunpack.c.l.b16 %v455
    %v1371 = vunpack.c.h.b16 %v455
    %v1372 = vunpack.c.l.b16 %v456
    %v1373 = vunpack.c.h.b16 %v456
    %v1374 = vunpack.c.l.b16 %v457
    %v1375 = vunpack.c.h.b16 %v457
    %v1376 = vunpack.c.l.b16 %v458
    %v1377 = vunpack.c.h.b16 %v458
    %v1378 = vunpack.c.l.b16 %v459
    %v1379 = vunpack.c.h.b16 %v459
    %v1380 = vunpack.c.l.b16 %v460
    %v1381 = vunpack.c.h.b16 %v460
    %v1382 = vunpack.c.l.b16 %v461
    %v1383 = vunpack.c.h.b16 %v461
    %v1384 = vunpack.c.l.b16 %v462
    %v1385 = vunpack.c.h.b16 %v462
    %v1386 = vunpack.c.l.b16 %v463
    %v1387 = vunpack.c.h.b16 %v463
    %v1388 = vunpack.c.l.b16 %v464
    %v1389 = vunpack.c.h.b16 %v464
    %v1390 = vunpack.c.l.b16 %v465
    %v1391 = vunpack.c.h.b16 %v465
    %v1392 = vunpack.c.l.b16 %v466
    %v1393 = vunpack.c.h.b16 %v466
    %v1394 = vunpack.c.l.b16 %v467
    %v1395 = vunpack.c.h.b16 %v467
    %v1396 = vunpack.c.l.b16 %v468
    %v1397 = vunpack.c.h.b16 %v468
    %v1398 = vunpack.c.l.b16 %v469
    %v1399 = vunpack.c.h.b16 %v469
    %v1400 = vunpack.c.l.b16 %v470
    %v1401 = vunpack.c.h.b16 %v470
    %v1402 = vunpack.c.l.b16 %v471
    %v1403 = vunpack.c.h.b16 %v471
    %v1404 = vunpack.c.l.b16 %v472
    %v1405 = vunpack.c.h.b16 %v472
    %v1406 = vunpack.c.l.b16 %v473
    %v1407 = vunpack.c.h.b16 %v473
    %v1408 = vunpack.c.l.b16 %v474
    %v1409 = vunpack.c.h.b16 %v474
    %v1410 = vunpack.c.l.b16 %v475
    %v1411 = vunpack.c.h.b16 %v475
    %v1412 = vunpack.c.l.b16 %v476
    %v1413 = vunpack.c.h.b16 %v476
    %v1414 = vunpack.c.l.b16 %v477
    %v1415 = vunpack.c.h.b16 %v477
    %v1416 = vunpack.c.l.b16 %v478
    %v1417 = vunpack.c.h.b16 %v478
    %v1418 = vunpack.c.l.b16 %v479
    %v1419 = vunpack.c.h.b16 %v479
    %v1420 = vunpack.c.l.b16 %v480
    %v1421 = vunpack.c.h.b16 %v480
    %v1422 = vunpack.c.l.b16 %v481
    %v1423 = vunpack.c.h.b16 %v481
    %v1424 = vunpack.c.l.b16 %v482
    %v1425 = vunpack.c.h.b16 %v482
    %v1426 = vunpack.c.l.b16 %v483
    %v1427 = vunpack.c.h.b16 %v483
    %v1428 = vunpack.c.l.b16 %v484
    %v1429 = vunpack.c.h.b16 %v484
    %v1430 = vunpack.c.l.b16 %v485
    %v1431 = vunpack.c.h.b16 %v485
    %v1432 = vunpack.c.l.b16 %v486
    %v1433 = vunpack.c.h.b16 %v486
    %v1434 = vunpack.c.l.b16 %v487
    %v1435 = vunpack.c.h.b16 %v487
    %v1436 = vunpack.c.l.b16 %v488
    %v1437 = vunpack.c.h.b16 %v488
    %v1438 = vunpack.c.l.b16 %v489
    %v1439 = vunpack.c.h.b16 %v489
    %v1440 = vpack.c.b16 %v870, %v864
    %v1441 = vpack.c.b16 %v871, %v865
    %v1442 = vpack.c.b16 %v872, %v866
    %v1443 = vpack.c.b16 %v873, %v867
    %v1444 = vpack.c.b16 %v874, %v868
    %v1445 = vpack.c.b16 %v875, %v869
    %v1446 = vpack.c.b16 %v882, %v876
    %v1447 = vpack.c.b16 %v883, %v877
    %v1448 = vpack.c.b16 %v884, %v878
    %v1449 = vpack.c.b16 %v885, %v879
    %v1450 = vpack.c.b16 %v886, %v880
    %v1451 = vpack.c.b16 %v887, %v881
    %v1452 = vpack.c.b16 %v894, %v888
    %v1453 = vpack.c.b16 %v895, %v889
    %v1454 = vpack.c.b16 %v896, %v890
    %v1455 = vpack.c.b16 %v897, %v891
    %v1456 = vpack.c.b16 %v898, %v892
    %v1457 = vpack.c.b16 %v899, %v893
    %v1458 = vpack.c.b16 %v906, %v900
    %v1459 = vpack.c.b16 %v907, %v901
    %v1460 = vpack.c.b16 %v908, %v902
    %v1461 = vpack.c.b16 %v909, %v903
    %v1462 = vpack.c.b16 %v910, %v904
    %v1463 = vpack.c.b16 %v911, %v905
    %v1464 = vpack.c.b16 %v918, %v912
    %v1465 = vpack.c.b16 %v919, %v913
    %v1466 = vpack.c.b16 %v920, %v914
    %v1467 = vpack.c.b16 %v921, %v915
    %v1468 = vpack.c.b16 %v922, %v916
    %v1469 = vpack.c.b16 %v923, %v917
    %v1470 = vpack.c.b16 %v930, %v924
    %v1471 = vpack.c.b16 %v931, %v925
    %v1472 = vpack.c.b16 %v932, %v926
    %v1473 = vpack.c.b16 %v933, %v927
    %v1474 = vpack.c.b16 %v934, %v928
    %v1475 = vpack.c.b16 %v935, %v929
    %v1476 = vpack.c.b16 %v942, %v936
    %v1477 = vpack.c.b16 %v943, %v937
    %v1478 = vpack.c.b16 %v944, %v938
    %v1479 = vpack.c.b16 %v945, %v939
    %v1480 = vpack.c.b16 %v946, %v940
    %v1481 = vpack.c.b16 %v947, %v941
    %v1482 = vpack.c.b16 %v954, %v948
    %v1483 = vpack.c.b16 %v955, %v949
    %v1484 = vpack.c.b16 %v956, %v950
    %v1485 = vpack.c.b16 %v957, %v951
    %v1486 = vpack.c.b16 %v958, %v952
    %v1487 = vpack.c.b16 %v959, %v953
    %v1488 = vpack.c.b16 %v966, %v960
    %v1489 = vpack.c.b16 %v967, %v961
    %v1490 = vpack.c.b16 %v968, %v962
    %v1491 = vpack.c.b16 %v969, %v963
    %v1492 = vpack.c.b16 %v970, %v964
    %v1493 = vpack.c.b16 %v971, %v965
    %v1494 = vpack.c.b16 %v978, %v972
    %v1495 = vpack.c.b16 %v979, %v973
    %v1496 = vpack.c.b16 %v980, %v974
    %v1497 = vpack.c.b16 %v981, %v975
    %v1498 = vpack.c.b16 %v982, %v976
    %v1499 = vpack.c.b16 %v983, %v977
    %v1500 = vpack.c.b16 %v990, %v984
    %v1501 = vpack.c.b16 %v991, %v985
    %v1502 = vpack.c.b16 %v992, %v986
    %v1503 = vpack.c.b16 %v993, %v987
    %v1504 = vpack.c.b16 %v994, %v988
    %v1505 = vpack.c.b16 %v995, %v989
    %v1506 = vpack.c.b16 %v1002, %v996
    %v1507 = vpack.c.b16 %v1003, %v997
    %v1508 = vpack.c.b16 %v1004, %v998
    %v1509 = vpack.c.b16 %v1005, %v999
    %v1510 = vpack.c.b16 %v1006, %v1000
    %v1511 = vpack.c.b16 %v1007, %v1001
    %v1512 = vpack.c.b16 %v1014, %v1008
    %v1513 = vpack.c.b16 %v1015, %v1009
    %v1514 = vpack.c.b16 %v1016, %v1010
    %v1515 = vpack.c.b16 %v1017, %v1011
    %v1516 = vpack.c.b16 %v1018, %v1012
    %v1517 = vpack.c.b16 %v1019, %v1013
    %v1518 = vpack.c.b16 %v1026, %v1020
    %v1519 = vpack.c.b16 %v1027, %v1021
    %v1520 = vpack.c.b16 %v1028, %v1022
    %v1521 = vpack.c.b16 %v1029, %v1023
    %v1522 = vpack.c.b16 %v1030, %v1024
    %v1523 = vpack.c.b16 %v1031, %v1025
    %v1524 = vpack.c.b16 %v1038, %v1032
    %v1525 = vpack.c.b16 %v1039, %v1033
    %v1526 = vpack.c.b16 %v1040, %v1034
    %v1527 = vpack.c.b16 %v1041, %v1035
    %v1528 = vpack.c.b16 %v1042, %v1036
    %v1529 = vpack.c.b16 %v1043, %v1037
    %v1530 = vpack.c.b16 %v1050, %v1044
    %v1531 = vpack.c.b16 %v1051, %v1045
    %v1532 = vpack.c.b16 %v1052, %v1046
    %v1533 = vpack.c.b16 %v1053, %v1047
    %v1534 = vpack.c.b16 %v1054, %v1048
    %v1535 = vpack.c.b16 %v1055, %v1049
    %v1536 = vpack.c.b16 %v1062, %v1056
    %v1537 = vpack.c.b16 %v1063, %v1057
    %v1538 = vpack.c.b16 %v1064, %v1058
    %v1539 = vpack.c.b16 %v1065, %v1059
    %v1540 = vpack.c.b16 %v1066, %v1060
    %v1541 = vpack.c.b16 %v1067, %v1061
    %v1542 = vpack.c.b16 %v1074, %v1068
    %v1543 = vpack.c.b16 %v1075, %v1069
    %v1544 = vpack.c.b16 %v1076, %v1070
    %v1545 = vpack.c.b16 %v1077, %v1071
    %v1546 = vpack.c.b16 %v1078, %v1072
    %v1547 = vpack.c.b16 %v1079, %v1073
    %v1548 = vpack.c.b16 %v1086, %v1080
    %v1549 = vpack.c.b16 %v1087, %v1081
    %v1550 = vpack.c.b16 %v1088, %v1082
    %v1551 = vpack.c.b16 %v1089, %v1083
    %v1552 = vpack.c.b16 %v1090, %v1084
    %v1553 = vpack.c.b16 %v1091, %v1085
    %v1554 = vpack.c.b16 %v1098, %v1092
    %v1555 = vpack.c.b16 %v1099, %v1093
    %v1556 = vpack.c.b16 %v1100, %v1094
    %v1557 = vpack.c.b16 %v1101, %v1095
    %v1558 = vpack.c.b16 %v1102, %v1096
    %v1559 = vpack.c.b16 %v1103, %v1097
    %v1560 = vpack.c.b16 %v1110, %v1104
    %v1561 = vpack.c.b16 %v1111, %v1105
    %v1562 = vpack.c.b16 %v1112, %v1106
    %v1563 = vpack.c.b16 %v1113, %v1107
    %v1564 = vpack.c.b16 %v1114, %v1108
    %v1565 = vpack.c.b16 %v1115, %v1109
    %v1566 = vpack.c.b16 %v1122, %v1116
    %v1567 = vpack.c.b16 %v1123, %v1117
    %v1568 = vpack.c.b16 %v1124, %v1118
    %v1569 = vpack.c.b16 %v1125, %v1119
    %v1570 = vpack.c.b16 %v1126, %v1120
    %v1571 = vpack.c.b16 %v1127, %v1121
    %v1572 = vpack.c.b16 %v1134, %v1128
    %v1573 = vpack.c.b16 %v1135, %v1129
    %v1574 = vpack.c.b16 %v1136, %v1130
    %v1575 = vpack.c.b16 %v1137, %v1131
    %v1576 = vpack.c.b16 %v1138, %v1132
    %v1577 = vpack.c.b16 %v1139, %v1133
    %v1578 = vpack.c.b16 %v1146, %v1140
    %v1579 = vpack.c.b16 %v1147, %v1141
    %v1580 = vpack.c.b16 %v1148, %v1142
    %v1581 = vpack.c.b16 %v1149, %v1143
    %v1582 = vpack.c.b16 %v1150, %v1144
    %v1583 = vpack.c.b16 %v1151, %v1145
    %v1584 = vpack.c.b16 %v1158, %v1152
    %v1585 = vpack.c.b16 %v1159, %v1153
    %v1586 = vpack.c.b16 %v1160, %v1154
    %v1587 = vpack.c.b16 %v1161, %v1155
    %v1588 = vpack.c.b16 %v1162, %v1156
    %v1589 = vpack.c.b16 %v1163, %v1157
    %v1590 = vpack.c.b16 %v1170, %v1164
    %v1591 = vpack.c.b16 %v1171, %v1165
    %v1592 = vpack.c.b16 %v1172, %v1166
    %v1593 = vpack.c.b16 %v1173, %v1167
    %v1594 = vpack.c.b16 %v1174, %v1168
    %v1595 = vpack.c.b16 %v1175, %v1169
    %v1596 = vpack.c.b16 %v1182, %v1176
    %v1597 = vpack.c.b16 %v1183, %v1177
    %v1598 = vpack.c.b16 %v1184, %v1178
    %v1599 = vpack.c.b16 %v1185, %v1179
    %v1600 = vpack.c.b16 %v1186, %v1180
    %v1601 = vpack.c.b16 %v1187, %v1181
    %v1602 = vpack.c.b16 %v1194, %v1188
    %v1603 = vpack.c.b16 %v1195, %v1189
    %v1604 = vpack.c.b16 %v1196, %v1190
    %v1605 = vpack.c.b16 %v1197, %v1191
    %v1606 = vpack.c.b16 %v1198, %v1192
    %v1607 = vpack.c.b16 %v1199, %v1193
    %v1608 = vpack.c.b16 %v1206, %v1200
    %v1609 = vpack.c.b16 %v1207, %v1201
    %v1610 = vpack.c.b16 %v1208, %v1202
    %v1611 = vpack.c.b16 %v1209, %v1203
    %v1612 = vpack.c.b16 %v1210, %v1204
    %v1613 = vpack.c.b16 %v1211, %v1205
    %v1614 = vpack.c.b16 %v1218, %v1212
    %v1615 = vpack.c.b16 %v1219, %v1213
    %v1616 = vpack.c.b16 %v1220, %v1214
    %v1617 = vpack.c.b16 %v1221, %v1215
    %v1618 = vpack.c.b16 %v1222, %v1216
    %v1619 = vpack.c.b16 %v1223, %v1217
    %v1620 = vpack.c.b16 %v1230, %v1224
    %v1621 = vpack.c.b16 %v1231, %v1225
    %v1622 = vpack.c.b16 %v1232, %v1226
    %v1623 = vpack.c.b16 %v1233, %v1227
    %v1624 = vpack.c.b16 %v1234, %v1228
    %v1625 = vpack.c.b16 %v1235, %v1229
    %v1626 = vpack.c.b16 %v1242, %v1236
    %v1627 = vpack.c.b16 %v1243, %v1237
    %v1628 = vpack.c.b16 %v1244, %v1238
    %v1629 = vpack.c.b16 %v1245, %v1239
    %v1630 = vpack.c.b16 %v1246, %v1240
    %v1631 = vpack.c.b16 %v1247, %v1241
    %v1632 = vpack.c.b16 %v1254, %v1248
    %v1633 = vpack.c.b16 %v1255, %v1249
    %v1634 = vpack.c.b16 %v1256, %v1250
    %v1635 = vpack.c.b16 %v1257, %v1251
    %v1636 = vpack.c.b16 %v1258, %v1252
    %v1637 = vpack.c.b16 %v1259, %v1253
    %v1638 = vpack.c.b16 %v1266, %v1260
    %v1639 = vpack.c.b16 %v1267, %v1261
    %v1640 = vpack.c.b16 %v1268, %v1262
    %v1641 = vpack.c.b16 %v1269, %v1263
    %v1642 = vpack.c.b16 %v1270, %v1264
    %v1643 = vpack.c.b16 %v1271, %v1265
    %v1644 = vpack.c.b16 %v1278, %v1272
    %v1645 = vpack.c.b16 %v1279, %v1273
    %v1646 = vpack.c.b16 %v1280, %v1274
    %v1647 = vpack.c.b16 %v1281, %v1275
    %v1648 = vpack.c.b16 %v1282, %v1276
    %v1649 = vpack.c.b16 %v1283, %v1277
    %v1650 = vpack.c.b16 %v1290, %v1284
    %v1651 = vpack.c.b16 %v1291, %v1285
    %v1652 = vpack.c.b16 %v1292, %v1286
    %v1653 = vpack.c.b16 %v1293, %v1287
    %v1654 = vpack.c.b16 %v1294, %v1288
    %v1655 = vpack.c.b16 %v1295, %v1289
    %v1656 = vpack.c.b16 %v1302, %v1296
    %v1657 = vpack.c.b16 %v1303, %v1297
    %v1658 = vpack.c.b16 %v1304, %v1298
    %v1659 = vpack.c.b16 %v1305, %v1299
    %v1660 = vpack.c.b16 %v1306, %v1300
    %v1661 = vpack.c.b16 %v1307, %v1301
    %v1662 = vpack.c.b16 %v1314, %v1308
    %v1663 = vpack.c.b16 %v1315, %v1309
    %v1664 = vpack.c.b16 %v1316, %v1310
    %v1665 = vpack.c.b16 %v1317, %v1311
    %v1666 = vpack.c.b16 %v1318, %v1312
    %v1667 = vpack.c.b16 %v1319, %v1313
    %v1668 = vpack.c.b16 %v1326, %v1320
    %v1669 = vpack.c.b16 %v1327, %v1321
    %v1670 = vpack.c.b16 %v1328, %v1322
    %v1671 = vpack.c.b16 %v1329, %v1323
    %v1672 = vpack.c.b16 %v1330, %v1324
    %v1673 = vpack.c.b16 %v1331, %v1325
    %v1674 = vpack.c.b16 %v1338, %v1332
    %v1675 = vpack.c.b16 %v1339, %v1333
    %v1676 = vpack.c.b16 %v1340, %v1334
    %v1677 = vpack.c.b16 %v1341, %v1335
    %v1678 = vpack.c.b16 %v1342, %v1336
    %v1679 = vpack.c.b16 %v1343, %v1337
    %v1680 = vpack.c.b16 %v1350, %v1344
    %v1681 = vpack.c.b16 %v1351, %v1345
    %v1682 = vpack.c.b16 %v1352, %v1346
    %v1683 = vpack.c.b16 %v1353, %v1347
    %v1684 = vpack.c.b16 %v1354, %v1348
    %v1685 = vpack.c.b16 %v1355, %v1349
    %v1686 = vpack.c.b16 %v1362, %v1356
    %v1687 = vpack.c.b16 %v1363, %v1357
    %v1688 = vpack.c.b16 %v1364, %v1358
    %v1689 = vpack.c.b16 %v1365, %v1359
    %v1690 = vpack.c.b16 %v1366, %v1360
    %v1691 = vpack.c.b16 %v1367, %v1361
    %v1692 = vpack.c.b16 %v1374, %v1368
    %v1693 = vpack.c.b16 %v1375, %v1369
    %v1694 = vpack.c.b16 %v1376, %v1370
    %v1695 = vpack.c.b16 %v1377, %v1371
    %v1696 = vpack.c.b16 %v1378, %v1372
    %v1697 = vpack.c.b16 %v1379, %v1373
    %v1698 = vpack.c.b16 %v1386, %v1380
    %v1699 = vpack.c.b16 %v1387, %v1381
    %v1700 = vpack.c.b16 %v1388, %v1382
    %v1701 = vpack.c.b16 %v1389, %v1383
    %v1702 = vpack.c.b16 %v1390, %v1384
    %v1703 = vpack.c.b16 %v1391, %v1385
    %v1704 = vpack.c.b16 %v1398, %v1392
    %v1705 = vpack.c.b16 %v1399, %v1393
    %v1706 = vpack.c.b16 %v1400, %v1394
    %v1707 = vpack.c.b16 %v1401, %v1395
    %v1708 = vpack.c.b16 %v1402, %v1396
    %v1709 = vpack.c.b16 %v1403, %v1397
    %v1710 = vpack.c.b16 %v1410, %v1404
    %v1711 = vpack.c.b16 %v1411, %v1405
    %v1712 = vpack.c.b16 %v1412, %v1406
    %v1713 = vpack.c.b16 %v1413, %v1407
    %v1714 = vpack.c.b16 %v1414, %v1408
    %v1715 = vpack.c.b16 %v1415, %v1409
    %v1716 = vpack.c.b16 %v1422, %v1416
    %v1717 = vpack.c.b16 %v1423, %v1417
    %v1718 = vpack.c.b16 %v1424, %v1418
    %v1719 = vpack.c.b16 %v1425, %v1419
    %v1720 = vpack.c.b16 %v1426, %v1420
    %v1721 = vpack.c.b16 %v1427, %v1421
    %v1722 = vpack.c.b16 %v1434, %v1428
    %v1723 = vpack.c.b16 %v1435, %v1429
    %v1724 = vpack.c.b16 %v1436, %v1430
    %v1725 = vpack.c.b16 %v1437, %v1431
    %v1726 = vpack.c.b16 %v1438, %v1432
    %v1727 = vpack.c.b16 %v1439, %v1433
    %2016 = vmatprep.subr.bf16.mxu0 %v1483
    %2017 = vmatpush1.bf16.msra.mxu0 %v1482
    %2018 = vmatprep.subr.bf16.mxu0 %v1477
    %2019 = vmatpush1.bf16.msra.mxu0 %v1476
    %2020 = vmatprep.subr.bf16.mxu0 %v1471
    %2021 = vmatpush1.bf16.msra.mxu0 %v1470
    %2022 = vmatprep.subr.bf16.mxu0 %v1465
    %2023 = vmatpush1.bf16.msra.mxu0 %v1464
    %2024 = vmatprep.subr.bf16.mxu0 %v1459
    %2025 = vmatpush1.bf16.msra.mxu0 %v1458
    %2026 = vmatprep.subr.bf16.mxu0 %v1453
    %2027 = vmatpush1.bf16.msra.mxu0 %v1452
    %2028 = vmatprep.subr.bf16.mxu0 %v1447
    %2029 = vmatpush1.bf16.msra.mxu0 %v1446
    %2030 = vmatprep.subr.bf16.mxu0 %v1441
    %2031 = vmatpush1.bf16.msra.mxu0 %v1440
    %2032 = vmatprep.subr.bf16.mxu0 %v1531
    %2033 = vmatpush2.bf16.msra.mxu0 %v1530
    %2034 = vmatprep.subr.bf16.mxu0 %v1525
    %2035 = vmatpush2.bf16.msra.mxu0 %v1524
    %2036 = vmatprep.subr.bf16.mxu0 %v1519
    %2037 = vmatpush2.bf16.msra.mxu0 %v1518
    %2038 = vmatprep.subr.bf16.mxu0 %v1513
    %2039 = vmatpush2.bf16.msra.mxu0 %v1512
    %2040 = vmatprep.subr.bf16.mxu0 %v1507
    %2041 = vmatpush2.bf16.msra.mxu0 %v1506
    %2042 = vmatprep.subr.bf16.mxu0 %v1501
    %2043 = vmatpush2.bf16.msra.mxu0 %v1500
    %2044 = vmatprep.subr.bf16.mxu0 %v1495
    %2045 = vmatpush2.bf16.msra.mxu0 %v1494
    %2046 = vmatprep.subr.bf16.mxu0 %v1489
    %2047 = vmatpush2.bf16.msra.mxu0 %v1488
    %2048 = vmatprep.mubr.bf16.mxu0 %v560
    %2049 = vmatmul.mubr.bf16.gmra.mxu0 %v546
    %v2050 = vpop.f32.mrf.mxu0
    %v2051 = vadd.f32 %v495, %v2050
    %v2052 = vpop.f32.mrf.mxu0
    %v2053 = vadd.f32 %v499, %v2052
    %v2054 = vpop.f32.mrf.mxu0
    %v2055 = vpop.f32.mrf.mxu0
    %2056 = vdwg.mxu0
    %2057 = vmatprep.subr.bf16.mxu0 %v1579
    %2058 = vmatpush1.bf16.msra.mxu0 %v1578
    %2059 = vmatprep.subr.bf16.mxu0 %v1573
    %2060 = vmatpush1.bf16.msra.mxu0 %v1572
    %2061 = vmatprep.subr.bf16.mxu0 %v1567
    %2062 = vmatpush1.bf16.msra.mxu0 %v1566
    %2063 = vmatprep.subr.bf16.mxu0 %v1561
    %2064 = vmatpush1.bf16.msra.mxu0 %v1560
    %2065 = vmatprep.subr.bf16.mxu0 %v1555
    %2066 = vmatpush1.bf16.msra.mxu0 %v1554
    %2067 = vmatprep.subr.bf16.mxu0 %v1549
    %2068 = vmatpush1.bf16.msra.mxu0 %v1548
    %2069 = vmatprep.subr.bf16.mxu0 %v1543
    %2070 = vmatpush1.bf16.msra.mxu0 %v1542
    %2071 = vmatprep.subr.bf16.mxu0 %v1537
    %2072 = vmatpush1.bf16.msra.mxu0 %v1536
    %2073 = vmatprep.subr.bf16.mxu0 %v1627
    %2074 = vmatpush2.bf16.msra.mxu0 %v1626
    %2075 = vmatprep.subr.bf16.mxu0 %v1621
    %2076 = vmatpush2.bf16.msra.mxu0 %v1620
    %2077 = vmatprep.subr.bf16.mxu0 %v1615
    %2078 = vmatpush2.bf16.msra.mxu0 %v1614
    %2079 = vmatprep.subr.bf16.mxu0 %v1609
    %2080 = vmatpush2.bf16.msra.mxu0 %v1608
    %2081 = vmatprep.subr.bf16.mxu0 %v1603
    %2082 = vmatpush2.bf16.msra.mxu0 %v1602
    %2083 = vmatprep.subr.bf16.mxu0 %v1597
    %2084 = vmatpush2.bf16.msra.mxu0 %v1596
    %2085 = vmatprep.subr.bf16.mxu0 %v1591
    %2086 = vmatpush2.bf16.msra.mxu0 %v1590
    %2087 = vmatprep.subr.bf16.mxu0 %v1585
    %2088 = vmatpush2.bf16.msra.mxu0 %v1584
    %2089 = vmatprep.mubr.bf16.mxu0 %v569
    %2090 = vmatmul.mubr.bf16.gmra.mxu0 %v568
    %v2091 = vpop.f32.mrf.mxu0
    %v2092 = vadd.f32 %v2051, %v2091
    %v2093 = vpop.f32.mrf.mxu0
    %v2094 = vadd.f32 %v2053, %v2093
    %v2095 = vpop.f32.mrf.mxu0
    %v2096 = vpop.f32.mrf.mxu0
    %2097 = vdwg.mxu0
    %2098 = vmatprep.subr.bf16.mxu0 %v1675
    %2099 = vmatpush1.bf16.msra.mxu0 %v1674
    %2100 = vmatprep.subr.bf16.mxu0 %v1669
    %2101 = vmatpush1.bf16.msra.mxu0 %v1668
    %2102 = vmatprep.subr.bf16.mxu0 %v1663
    %2103 = vmatpush1.bf16.msra.mxu0 %v1662
    %2104 = vmatprep.subr.bf16.mxu0 %v1657
    %2105 = vmatpush1.bf16.msra.mxu0 %v1656
    %2106 = vmatprep.subr.bf16.mxu0 %v1651
    %2107 = vmatpush1.bf16.msra.mxu0 %v1650
    %2108 = vmatprep.subr.bf16.mxu0 %v1645
    %2109 = vmatpush1.bf16.msra.mxu0 %v1644
    %2110 = vmatprep.subr.bf16.mxu0 %v1639
    %2111 = vmatpush1.bf16.msra.mxu0 %v1638
    %2112 = vmatprep.subr.bf16.mxu0 %v1633
    %2113 = vmatpush1.bf16.msra.mxu0 %v1632
    %2114 = vmatprep.subr.bf16.mxu0 %v1723
    %2115 = vmatpush2.bf16.msra.mxu0 %v1722
    %2116 = vmatprep.subr.bf16.mxu0 %v1717
    %2117 = vmatpush2.bf16.msra.mxu0 %v1716
    %2118 = vmatprep.subr.bf16.mxu0 %v1711
    %2119 = vmatpush2.bf16.msra.mxu0 %v1710
    %2120 = vmatprep.subr.bf16.mxu0 %v1705
    %2121 = vmatpush2.bf16.msra.mxu0 %v1704
    %2122 = vmatprep.subr.bf16.mxu0 %v1699
    %2123 = vmatpush2.bf16.msra.mxu0 %v1698
    %2124 = vmatprep.subr.bf16.mxu0 %v1693
    %2125 = vmatpush2.bf16.msra.mxu0 %v1692
    %2126 = vmatprep.subr.bf16.mxu0 %v1687
    %2127 = vmatpush2.bf16.msra.mxu0 %v1686
    %2128 = vmatprep.subr.bf16.mxu0 %v1681
    %2129 = vmatpush2.bf16.msra.mxu0 %v1680
    %2130 = vmatprep.mubr.bf16.mxu0 %v567
    %2131 = vmatmul.mubr.bf16.gmra.mxu0 %v553
    %v2132 = vpop.f32.mrf.mxu0
    %v2133 = vadd.f32 %v2092, %v2132
    %v2134 = vpop.f32.mrf.mxu0
    %v2135 = vadd.f32 %v2094, %v2134
    %v2136 = vpop.f32.mrf.mxu0
    %v2137 = vpop.f32.mrf.mxu0
    %2138 = vdwg.mxu0
    %2139 = vmatprep.subr.bf16.mxu0 %v1485
    %2140 = vmatpush1.bf16.msra.mxu0 %v1484
    %2141 = vmatprep.subr.bf16.mxu0 %v1479
    %2142 = vmatpush1.bf16.msra.mxu0 %v1478
    %2143 = vmatprep.subr.bf16.mxu0 %v1473
    %2144 = vmatpush1.bf16.msra.mxu0 %v1472
    %2145 = vmatprep.subr.bf16.mxu0 %v1467
    %2146 = vmatpush1.bf16.msra.mxu0 %v1466
    %2147 = vmatprep.subr.bf16.mxu0 %v1461
    %2148 = vmatpush1.bf16.msra.mxu0 %v1460
    %2149 = vmatprep.subr.bf16.mxu0 %v1455
    %2150 = vmatpush1.bf16.msra.mxu0 %v1454
    %2151 = vmatprep.subr.bf16.mxu0 %v1449
    %2152 = vmatpush1.bf16.msra.mxu0 %v1448
    %2153 = vmatprep.subr.bf16.mxu0 %v1443
    %2154 = vmatpush1.bf16.msra.mxu0 %v1442
    %2155 = vmatprep.subr.bf16.mxu0 %v1533
    %2156 = vmatpush2.bf16.msra.mxu0 %v1532
    %2157 = vmatprep.subr.bf16.mxu0 %v1527
    %2158 = vmatpush2.bf16.msra.mxu0 %v1526
    %2159 = vmatprep.subr.bf16.mxu0 %v1521
    %2160 = vmatpush2.bf16.msra.mxu0 %v1520
    %2161 = vmatprep.subr.bf16.mxu0 %v1515
    %2162 = vmatpush2.bf16.msra.mxu0 %v1514
    %2163 = vmatprep.subr.bf16.mxu0 %v1509
    %2164 = vmatpush2.bf16.msra.mxu0 %v1508
    %2165 = vmatprep.subr.bf16.mxu0 %v1503
    %2166 = vmatpush2.bf16.msra.mxu0 %v1502
    %2167 = vmatprep.subr.bf16.mxu0 %v1497
    %2168 = vmatpush2.bf16.msra.mxu0 %v1496
    %2169 = vmatprep.subr.bf16.mxu0 %v1491
    %2170 = vmatpush2.bf16.msra.mxu0 %v1490
    %2171 = vmatprep.mubr.bf16.mxu0 %v560
    %2172 = vmatmul.mubr.bf16.gmra.mxu0 %v546
    %v2173 = vpop.f32.mrf.mxu0
    %v2174 = vadd.f32 %v503, %v2173
    %v2175 = vpop.f32.mrf.mxu0
    %v2176 = vadd.f32 %v507, %v2175
    %v2177 = vpop.f32.mrf.mxu0
    %v2178 = vpop.f32.mrf.mxu0
    %2179 = vdwg.mxu0
    %2180 = vmatprep.subr.bf16.mxu0 %v1581
    %2181 = vmatpush1.bf16.msra.mxu0 %v1580
    %2182 = vmatprep.subr.bf16.mxu0 %v1575
    %2183 = vmatpush1.bf16.msra.mxu0 %v1574
    %2184 = vmatprep.subr.bf16.mxu0 %v1569
    %2185 = vmatpush1.bf16.msra.mxu0 %v1568
    %2186 = vmatprep.subr.bf16.mxu0 %v1563
    %2187 = vmatpush1.bf16.msra.mxu0 %v1562
    %2188 = vmatprep.subr.bf16.mxu0 %v1557
    %2189 = vmatpush1.bf16.msra.mxu0 %v1556
    %2190 = vmatprep.subr.bf16.mxu0 %v1551
    %2191 = vmatpush1.bf16.msra.mxu0 %v1550
    %2192 = vmatprep.subr.bf16.mxu0 %v1545
    %2193 = vmatpush1.bf16.msra.mxu0 %v1544
    %2194 = vmatprep.subr.bf16.mxu0 %v1539
    %2195 = vmatpush1.bf16.msra.mxu0 %v1538
    %2196 = vmatprep.subr.bf16.mxu0 %v1629
    %2197 = vmatpush2.bf16.msra.mxu0 %v1628
    %2198 = vmatprep.subr.bf16.mxu0 %v1623
    %2199 = vmatpush2.bf16.msra.mxu0 %v1622
    %2200 = vmatprep.subr.bf16.mxu0 %v1617
    %2201 = vmatpush2.bf16.msra.mxu0 %v1616
    %2202 = vmatprep.subr.bf16.mxu0 %v1611
    %2203 = vmatpush2.bf16.msra.mxu0 %v1610
    %2204 = vmatprep.subr.bf16.mxu0 %v1605
    %2205 = vmatpush2.bf16.msra.mxu0 %v1604
    %2206 = vmatprep.subr.bf16.mxu0 %v1599
    %2207 = vmatpush2.bf16.msra.mxu0 %v1598
    %2208 = vmatprep.subr.bf16.mxu0 %v1593
    %2209 = vmatpush2.bf16.msra.mxu0 %v1592
    %2210 = vmatprep.subr.bf16.mxu0 %v1587
    %2211 = vmatpush2.bf16.msra.mxu0 %v1586
    %2212 = vmatprep.mubr.bf16.mxu0 %v569
    %2213 = vmatmul.mubr.bf16.gmra.mxu0 %v568
    %v2214 = vpop.f32.mrf.mxu0
    %v2215 = vadd.f32 %v2174, %v2214
    %v2216 = vpop.f32.mrf.mxu0
    %v2217 = vadd.f32 %v2176, %v2216
    %v2218 = vpop.f32.mrf.mxu0
    %v2219 = vpop.f32.mrf.mxu0
    %2220 = vdwg.mxu0
    %2221 = vmatprep.subr.bf16.mxu0 %v1677
    %2222 = vmatpush1.bf16.msra.mxu0 %v1676
    %2223 = vmatprep.subr.bf16.mxu0 %v1671
    %2224 = vmatpush1.bf16.msra.mxu0 %v1670
    %2225 = vmatprep.subr.bf16.mxu0 %v1665
    %2226 = vmatpush1.bf16.msra.mxu0 %v1664
    %2227 = vmatprep.subr.bf16.mxu0 %v1659
    %2228 = vmatpush1.bf16.msra.mxu0 %v1658
    %2229 = vmatprep.subr.bf16.mxu0 %v1653
    %2230 = vmatpush1.bf16.msra.mxu0 %v1652
    %2231 = vmatprep.subr.bf16.mxu0 %v1647
    %2232 = vmatpush1.bf16.msra.mxu0 %v1646
    %2233 = vmatprep.subr.bf16.mxu0 %v1641
    %2234 = vmatpush1.bf16.msra.mxu0 %v1640
    %2235 = vmatprep.subr.bf16.mxu0 %v1635
    %2236 = vmatpush1.bf16.msra.mxu0 %v1634
    %2237 = vmatprep.subr.bf16.mxu0 %v1725
    %2238 = vmatpush2.bf16.msra.mxu0 %v1724
    %2239 = vmatprep.subr.bf16.mxu0 %v1719
    %2240 = vmatpush2.bf16.msra.mxu0 %v1718
    %2241 = vmatprep.subr.bf16.mxu0 %v1713
    %2242 = vmatpush2.bf16.msra.mxu0 %v1712
    %2243 = vmatprep.subr.bf16.mxu0 %v1707
    %2244 = vmatpush2.bf16.msra.mxu0 %v1706
    %2245 = vmatprep.subr.bf16.mxu0 %v1701
    %2246 = vmatpush2.bf16.msra.mxu0 %v1700
    %2247 = vmatprep.subr.bf16.mxu0 %v1695
    %2248 = vmatpush2.bf16.msra.mxu0 %v1694
    %2249 = vmatprep.subr.bf16.mxu0 %v1689
    %2250 = vmatpush2.bf16.msra.mxu0 %v1688
    %2251 = vmatprep.subr.bf16.mxu0 %v1683
    %2252 = vmatpush2.bf16.msra.mxu0 %v1682
    %2253 = vmatprep.mubr.bf16.mxu0 %v567
    %2254 = vmatmul.mubr.bf16.gmra.mxu0 %v553
    %v2255 = vpop.f32.mrf.mxu0
    %v2256 = vadd.f32 %v2215, %v2255
    %v2257 = vpop.f32.mrf.mxu0
    %v2258 = vadd.f32 %v2217, %v2257
    %v2259 = vpop.f32.mrf.mxu0
    %v2260 = vpop.f32.mrf.mxu0
    %2261 = vdwg.mxu0
    %2262 = vmatprep.subr.bf16.mxu0 %v1487
    %2263 = vmatpush1.bf16.msra.mxu0 %v1486
    %2264 = vmatprep.subr.bf16.mxu0 %v1481
    %2265 = vmatpush1.bf16.msra.mxu0 %v1480
    %2266 = vmatprep.subr.bf16.mxu0 %v1475
    %2267 = vmatpush1.bf16.msra.mxu0 %v1474
    %2268 = vmatprep.subr.bf16.mxu0 %v1469
    %2269 = vmatpush1.bf16.msra.mxu0 %v1468
    %2270 = vmatprep.subr.bf16.mxu0 %v1463
    %2271 = vmatpush1.bf16.msra.mxu0 %v1462
    %2272 = vmatprep.subr.bf16.mxu0 %v1457
    %2273 = vmatpush1.bf16.msra.mxu0 %v1456
    %2274 = vmatprep.subr.bf16.mxu0 %v1451
    %2275 = vmatpush1.bf16.msra.mxu0 %v1450
    %2276 = vmatprep.subr.bf16.mxu0 %v1445
    %2277 = vmatpush1.bf16.msra.mxu0 %v1444
    %2278 = vmatprep.subr.bf16.mxu0 %v1535
    %2279 = vmatpush2.bf16.msra.mxu0 %v1534
    %2280 = vmatprep.subr.bf16.mxu0 %v1529
    %2281 = vmatpush2.bf16.msra.mxu0 %v1528
    %2282 = vmatprep.subr.bf16.mxu0 %v1523
    %2283 = vmatpush2.bf16.msra.mxu0 %v1522
    %2284 = vmatprep.subr.bf16.mxu0 %v1517
    %2285 = vmatpush2.bf16.msra.mxu0 %v1516
    %2286 = vmatprep.subr.bf16.mxu0 %v1511
    %2287 = vmatpush2.bf16.msra.mxu0 %v1510
    %2288 = vmatprep.subr.bf16.mxu0 %v1505
    %2289 = vmatpush2.bf16.msra.mxu0 %v1504
    %2290 = vmatprep.subr.bf16.mxu0 %v1499
    %2291 = vmatpush2.bf16.msra.mxu0 %v1498
    %2292 = vmatprep.subr.bf16.mxu0 %v1493
    %2293 = vmatpush2.bf16.msra.mxu0 %v1492
    %2294 = vmatprep.mubr.bf16.mxu0 %v560
    %2295 = vmatmul.mubr.bf16.gmra.mxu0 %v546
    %v2296 = vpop.f32.mrf.mxu0
    %v2297 = vadd.f32 %v511, %v2296
    %v2298 = vpop.f32.mrf.mxu0
    %v2299 = vadd.f32 %v515, %v2298
    %v2300 = vpop.f32.mrf.mxu0
    %v2301 = vpop.f32.mrf.mxu0
    %2302 = vdwg.mxu0
    %2303 = vmatprep.subr.bf16.mxu0 %v1583
    %2304 = vmatpush1.bf16.msra.mxu0 %v1582
    %2305 = vmatprep.subr.bf16.mxu0 %v1577
    %2306 = vmatpush1.bf16.msra.mxu0 %v1576
    %2307 = vmatprep.subr.bf16.mxu0 %v1571
    %2308 = vmatpush1.bf16.msra.mxu0 %v1570
    %2309 = vmatprep.subr.bf16.mxu0 %v1565
    %2310 = vmatpush1.bf16.msra.mxu0 %v1564
    %2311 = vmatprep.subr.bf16.mxu0 %v1559
    %2312 = vmatpush1.bf16.msra.mxu0 %v1558
    %2313 = vmatprep.subr.bf16.mxu0 %v1553
    %2314 = vmatpush1.bf16.msra.mxu0 %v1552
    %2315 = vmatprep.subr.bf16.mxu0 %v1547
    %2316 = vmatpush1.bf16.msra.mxu0 %v1546
    %2317 = vmatprep.subr.bf16.mxu0 %v1541
    %2318 = vmatpush1.bf16.msra.mxu0 %v1540
    %2319 = vmatprep.subr.bf16.mxu0 %v1631
    %2320 = vmatpush2.bf16.msra.mxu0 %v1630
    %2321 = vmatprep.subr.bf16.mxu0 %v1625
    %2322 = vmatpush2.bf16.msra.mxu0 %v1624
    %2323 = vmatprep.subr.bf16.mxu0 %v1619
    %2324 = vmatpush2.bf16.msra.mxu0 %v1618
    %2325 = vmatprep.subr.bf16.mxu0 %v1613
    %2326 = vmatpush2.bf16.msra.mxu0 %v1612
    %2327 = vmatprep.subr.bf16.mxu0 %v1607
    %2328 = vmatpush2.bf16.msra.mxu0 %v1606
    %2329 = vmatprep.subr.bf16.mxu0 %v1601
    %2330 = vmatpush2.bf16.msra.mxu0 %v1600
    %2331 = vmatprep.subr.bf16.mxu0 %v1595
    %2332 = vmatpush2.bf16.msra.mxu0 %v1594
    %2333 = vmatprep.subr.bf16.mxu0 %v1589
    %2334 = vmatpush2.bf16.msra.mxu0 %v1588
    %2335 = vmatprep.mubr.bf16.mxu0 %v569
    %2336 = vmatmul.mubr.bf16.gmra.mxu0 %v568
    %v2337 = vpop.f32.mrf.mxu0
    %v2338 = vadd.f32 %v2297, %v2337
    %v2339 = vpop.f32.mrf.mxu0
    %v2340 = vadd.f32 %v2299, %v2339
    %v2341 = vpop.f32.mrf.mxu0
    %v2342 = vpop.f32.mrf.mxu0
    %2343 = vdwg.mxu0
    %2344 = vmatprep.subr.bf16.mxu0 %v1679
    %2345 = vmatpush1.bf16.msra.mxu0 %v1678
    %2346 = vmatprep.subr.bf16.mxu0 %v1673
    %2347 = vmatpush1.bf16.msra.mxu0 %v1672
    %2348 = vmatprep.subr.bf16.mxu0 %v1667
    %2349 = vmatpush1.bf16.msra.mxu0 %v1666
    %2350 = vmatprep.subr.bf16.mxu0 %v1661
    %2351 = vmatpush1.bf16.msra.mxu0 %v1660
    %2352 = vmatprep.subr.bf16.mxu0 %v1655
    %2353 = vmatpush1.bf16.msra.mxu0 %v1654
    %2354 = vmatprep.subr.bf16.mxu0 %v1649
    %2355 = vmatpush1.bf16.msra.mxu0 %v1648
    %2356 = vmatprep.subr.bf16.mxu0 %v1643
    %2357 = vmatpush1.bf16.msra.mxu0 %v1642
    %2358 = vmatprep.subr.bf16.mxu0 %v1637
    %2359 = vmatpush1.bf16.msra.mxu0 %v1636
    %2360 = vmatprep.subr.bf16.mxu0 %v1727
    %2361 = vmatpush2.bf16.msra.mxu0 %v1726
    %2362 = vmatprep.subr.bf16.mxu0 %v1721
    %2363 = vmatpush2.bf16.msra.mxu0 %v1720
    %2364 = vmatprep.subr.bf16.mxu0 %v1715
    %2365 = vmatpush2.bf16.msra.mxu0 %v1714
    %2366 = vmatprep.subr.bf16.mxu0 %v1709
    %2367 = vmatpush2.bf16.msra.mxu0 %v1708
    %2368 = vmatprep.subr.bf16.mxu0 %v1703
    %2369 = vmatpush2.bf16.msra.mxu0 %v1702
    %2370 = vmatprep.subr.bf16.mxu0 %v1697
    %2371 = vmatpush2.bf16.msra.mxu0 %v1696
    %2372 = vmatprep.subr.bf16.mxu0 %v1691
    %2373 = vmatpush2.bf16.msra.mxu0 %v1690
    %2374 = vmatprep.subr.bf16.mxu0 %v1685
    %2375 = vmatpush2.bf16.msra.mxu0 %v1684
    %2376 = vmatprep.mubr.bf16.mxu0 %v567
    %2377 = vmatmul.mubr.bf16.gmra.mxu0 %v553
    %v2378 = vpop.f32.mrf.mxu0
    %v2379 = vadd.f32 %v2338, %v2378
    %v2380 = vpop.f32.mrf.mxu0
    %v2381 = vadd.f32 %v2340, %v2380
    %v2382 = vpop.f32.mrf.mxu0
    %v2383 = vpop.f32.mrf.mxu0
    %2384 = vdwg.mxu0
    %v2385 = vmax.f32 %v2133, 0.0
    %v2386 = vmax.f32 %v2135, 0.0
    %v2387 = vmax.f32 %v2256, 0.0
    %v2388 = vmax.f32 %v2258, 0.0
    %v2389 = vmax.f32 %v2379, 0.0
    %v2390 = vmax.f32 %v2381, 0.0
    %v2391 = vpack.c.bf16 %v2385, %v2385
    %v2392 = vpack.c.bf16 %v2386, %v2386
    %v2393 = vpack.c.bf16 %v2387, %v2387
    %v2394 = vpack.c.bf16 %v2388, %v2388
    %v2395 = vpack.c.bf16 %v2389, %v2389
    %v2396 = vpack.c.bf16 %v2390, %v2390
    %v2397 = vld [vmem:[#allocation6] sm:$0xff]
    %v2398 = vld [vmem:[#allocation6 + $0x8] sm:$0xf]
    %v2399 = vld [vmem:[#allocation6 + $0xc] sm:$0xff]
    %v2400 = vld [vmem:[#allocation6 + $0x14] sm:$0xf]
    %v2401 = vld [vmem:[#allocation6 + $0x18] sm:$0xff]
    %v2402 = vld [vmem:[#allocation6 + $0x20] sm:$0xf]
    %v2403 = vld [vmem:[#allocation6 + $0x24] sm:$0xff]
    %v2404 = vld [vmem:[#allocation6 + $0x2c] sm:$0xf]
    %v2405 = vld [vmem:[#allocation6 + $0x30] sm:$0xff]
    %v2406 = vld [vmem:[#allocation6 + $0x38] sm:$0xf]
    %v2407 = vld [vmem:[#allocation6 + $0x3c] sm:$0xff]
    %v2408 = vld [vmem:[#allocation6 + $0x44] sm:$0xf]
    %v2409 = vld [vmem:[#allocation6 + $0x48] sm:$0xff]
    %v2410 = vld [vmem:[#allocation6 + $0x50] sm:$0xf]
    %v2411 = vld [vmem:[#allocation6 + $0x54] sm:$0xff]
    %v2412 = vld [vmem:[#allocation6 + $0x5c] sm:$0xf]
    %v2413 = vld [vmem:[#allocation6 + $0x60] sm:$0xff]
    %v2414 = vld [vmem:[#allocation6 + $0x68] sm:$0xf]
    %v2415 = vld [vmem:[#allocation6 + $0x6c] sm:$0xff]
    %v2416 = vld [vmem:[#allocation6 + $0x74] sm:$0xf]
    %v2417 = vld [vmem:[#allocation6 + $0x78] sm:$0xff]
    %v2418 = vld [vmem:[#allocation6 + $0x80] sm:$0xf]
    %v2419 = vld [vmem:[#allocation6 + $0x84] sm:$0xff]
    %v2420 = vld [vmem:[#allocation6 + $0x8c] sm:$0xf]
    %v2421 = vld [vmem:[#allocation6 + $0x90] sm:$0xff]
    %v2422 = vld [vmem:[#allocation6 + $0x98] sm:$0xf]
    %v2423 = vld [vmem:[#allocation6 + $0x9c] sm:$0xff]
    %v2424 = vld [vmem:[#allocation6 + $0xa4] sm:$0xf]
    %v2425 = vld [vmem:[#allocation6 + $0xa8] sm:$0xff]
    %v2426 = vld [vmem:[#allocation6 + $0xb0] sm:$0xf]
    %v2427 = vld [vmem:[#allocation6 + $0xb4] sm:$0xff]
    %v2428 = vld [vmem:[#allocation6 + $0xbc] sm:$0xf]
    %v2429 = vld [vmem:[#allocation6 + $0xc0] sm:$0xff]
    %v2430 = vld [vmem:[#allocation6 + $0xc8] sm:$0xf]
    %v2431 = vld [vmem:[#allocation6 + $0xcc] sm:$0xff]
    %v2432 = vld [vmem:[#allocation6 + $0xd4] sm:$0xf]
    %v2433 = vld [vmem:[#allocation6 + $0xd8] sm:$0xff]
    %v2434 = vld [vmem:[#allocation6 + $0xe0] sm:$0xf]
    %v2435 = vld [vmem:[#allocation6 + $0xe4] sm:$0xff]
    %v2436 = vld [vmem:[#allocation6 + $0xec] sm:$0xf]
    %v2437 = vld [vmem:[#allocation6 + $0xf0] sm:$0xff]
    %v2438 = vld [vmem:[#allocation6 + $0xf8] sm:$0xf]
    %v2439 = vld [vmem:[#allocation6 + $0xfc] sm:$0xff]
    %v2440 = vld [vmem:[#allocation6 + $0x104] sm:$0xf]
    %v2441 = vld [vmem:[#allocation6 + $0x108] sm:$0xff]
    %v2442 = vld [vmem:[#allocation6 + $0x110] sm:$0xf]
    %v2443 = vld [vmem:[#allocation6 + $0x114] sm:$0xff]
    %v2444 = vld [vmem:[#allocation6 + $0x11c] sm:$0xf]
    %v2445 = vld [vmem:[#allocation6 + $0x120] sm:$0xff]
    %v2446 = vld [vmem:[#allocation6 + $0x128] sm:$0xf]
    %v2447 = vld [vmem:[#allocation6 + $0x12c] sm:$0xff]
    %v2448 = vld [vmem:[#allocation6 + $0x134] sm:$0xf]
    %v2449 = vld [vmem:[#allocation6 + $0x138] sm:$0xff]
    %v2450 = vld [vmem:[#allocation6 + $0x140] sm:$0xf]
    %v2451 = vld [vmem:[#allocation6 + $0x144] sm:$0xff]
    %v2452 = vld [vmem:[#allocation6 + $0x14c] sm:$0xf]
    %v2453 = vld [vmem:[#allocation6 + $0x150] sm:$0xff]
    %v2454 = vld [vmem:[#allocation6 + $0x158] sm:$0xf]
    %v2455 = vld [vmem:[#allocation6 + $0x15c] sm:$0xff]
    %v2456 = vld [vmem:[#allocation6 + $0x164] sm:$0xf]
    %v2457 = vld [vmem:[#allocation6 + $0x168] sm:$0xff]
    %v2458 = vld [vmem:[#allocation6 + $0x170] sm:$0xf]
    %v2459 = vld [vmem:[#allocation6 + $0x174] sm:$0xff]
    %v2460 = vld [vmem:[#allocation6 + $0x17c] sm:$0xf]
    %v2461 = vld [vmem:[#allocation6 + $0x180] sm:$0xff]
    %v2462 = vld [vmem:[#allocation6 + $0x188] sm:$0xf]
    %v2463 = vld [vmem:[#allocation6 + $0x18c] sm:$0xff]
    %v2464 = vld [vmem:[#allocation6 + $0x194] sm:$0xf]
    %v2465 = vld [vmem:[#allocation6 + $0x198] sm:$0xff]
    %v2466 = vld [vmem:[#allocation6 + $0x1a0] sm:$0xf]
    %v2467 = vld [vmem:[#allocation6 + $0x1a4] sm:$0xff]
    %v2468 = vld [vmem:[#allocation6 + $0x1ac] sm:$0xf]
    %v2469 = vld [vmem:[#allocation6 + $0x1b0] sm:$0xff]
    %v2470 = vld [vmem:[#allocation6 + $0x1b8] sm:$0xf]
    %v2471 = vld [vmem:[#allocation6 + $0x1bc] sm:$0xff]
    %v2472 = vld [vmem:[#allocation6 + $0x1c4] sm:$0xf]
    %v2473 = vld [vmem:[#allocation6 + $0x1c8] sm:$0xff]
    %v2474 = vld [vmem:[#allocation6 + $0x1d0] sm:$0xf]
    %v2475 = vld [vmem:[#allocation6 + $0x1d4] sm:$0xff]
    %v2476 = vld [vmem:[#allocation6 + $0x1dc] sm:$0xf]
    %v2477 = vld [vmem:[#allocation6 + $0x1e0] sm:$0xff]
    %v2478 = vld [vmem:[#allocation6 + $0x1e8] sm:$0xf]
    %v2479 = vld [vmem:[#allocation6 + $0x1ec] sm:$0xff]
    %v2480 = vld [vmem:[#allocation6 + $0x1f4] sm:$0xf]
    %v2481 = vld [vmem:[#allocation6 + $0x1f8] sm:$0xff]
    %v2482 = vld [vmem:[#allocation6 + $0x200] sm:$0xf]
    %v2483 = vld [vmem:[#allocation6 + $0x204] sm:$0xff]
    %v2484 = vld [vmem:[#allocation6 + $0x20c] sm:$0xf]
    %v2485 = vld [vmem:[#allocation6 + $0x210] sm:$0xff]
    %v2486 = vld [vmem:[#allocation6 + $0x218] sm:$0xf]
    %v2487 = vld [vmem:[#allocation6 + $0x21c] sm:$0xff]
    %v2488 = vld [vmem:[#allocation6 + $0x224] sm:$0xf]
    %v2489 = vld [vmem:[#allocation6 + $0x228] sm:$0xff]
    %v2490 = vld [vmem:[#allocation6 + $0x230] sm:$0xf]
    %v2491 = vld [vmem:[#allocation6 + $0x234] sm:$0xff]
    %v2492 = vld [vmem:[#allocation6 + $0x23c] sm:$0xf]
    %v2493 = vld [vmem:[#allocation6 + $0x240] sm:$0xff]
    %v2494 = vld [vmem:[#allocation6 + $0x248] sm:$0xf]
    %v2495 = vld [vmem:[#allocation6 + $0x24c] sm:$0xff]
    %v2496 = vld [vmem:[#allocation6 + $0x254] sm:$0xf]
    %v2497 = vld [vmem:[#allocation6 + $0x258] sm:$0xff]
    %v2498 = vld [vmem:[#allocation6 + $0x260] sm:$0xf]
    %v2499 = vld [vmem:[#allocation6 + $0x264] sm:$0xff]
    %v2500 = vld [vmem:[#allocation6 + $0x26c] sm:$0xf]
    %v2501 = vld [vmem:[#allocation6 + $0x270] sm:$0xff]
    %v2502 = vld [vmem:[#allocation6 + $0x278] sm:$0xf]
    %v2503 = vld [vmem:[#allocation6 + $0x27c] sm:$0xff]
    %v2504 = vld [vmem:[#allocation6 + $0x284] sm:$0xf]
    %v2505 = vld [vmem:[#allocation6 + $0x288] sm:$0xff]
    %v2506 = vld [vmem:[#allocation6 + $0x290] sm:$0xf]
    %v2507 = vld [vmem:[#allocation6 + $0x294] sm:$0xff]
    %v2508 = vld [vmem:[#allocation6 + $0x29c] sm:$0xf]
    %v2509 = vld [vmem:[#allocation6 + $0x2a0] sm:$0xff]
    %v2510 = vld [vmem:[#allocation6 + $0x2a8] sm:$0xf]
    %v2511 = vld [vmem:[#allocation6 + $0x2ac] sm:$0xff]
    %v2512 = vld [vmem:[#allocation6 + $0x2b4] sm:$0xf]
    %v2513 = vld [vmem:[#allocation6 + $0x2b8] sm:$0xff]
    %v2514 = vld [vmem:[#allocation6 + $0x2c0] sm:$0xf]
    %v2515 = vld [vmem:[#allocation6 + $0x2c4] sm:$0xff]
    %v2516 = vld [vmem:[#allocation6 + $0x2cc] sm:$0xf]
    %v2517 = vld [vmem:[#allocation6 + $0x2d0] sm:$0xff]
    %v2518 = vld [vmem:[#allocation6 + $0x2d8] sm:$0xf]
    %v2519 = vld [vmem:[#allocation6 + $0x2dc] sm:$0xff]
    %v2520 = vld [vmem:[#allocation6 + $0x2e4] sm:$0xf]
    %v2521 = vld [vmem:[#allocation6 + $0x2e8] sm:$0xff]
    %v2522 = vld [vmem:[#allocation6 + $0x2f0] sm:$0xf]
    %v2523 = vld [vmem:[#allocation6 + $0x2f4] sm:$0xff]
    %v2524 = vld [vmem:[#allocation6 + $0x2fc] sm:$0xf]
    %v2525 = vld [vmem:[#allocation6 + $0x300] sm:$0xff]
    %v2526 = vld [vmem:[#allocation6 + $0x308] sm:$0xf]
    %v2527 = vld [vmem:[#allocation6 + $0x30c] sm:$0xff]
    %v2528 = vld [vmem:[#allocation6 + $0x314] sm:$0xf]
    %v2529 = vld [vmem:[#allocation6 + $0x318] sm:$0xff]
    %v2530 = vld [vmem:[#allocation6 + $0x320] sm:$0xf]
    %v2531 = vld [vmem:[#allocation6 + $0x324] sm:$0xff]
    %v2532 = vld [vmem:[#allocation6 + $0x32c] sm:$0xf]
    %v2533 = vld [vmem:[#allocation6 + $0x330] sm:$0xff]
    %v2534 = vld [vmem:[#allocation6 + $0x338] sm:$0xf]
    %v2535 = vld [vmem:[#allocation6 + $0x33c] sm:$0xff]
    %v2536 = vld [vmem:[#allocation6 + $0x344] sm:$0xf]
    %v2537 = vld [vmem:[#allocation6 + $0x348] sm:$0xff]
    %v2538 = vld [vmem:[#allocation6 + $0x350] sm:$0xf]
    %v2539 = vld [vmem:[#allocation6 + $0x354] sm:$0xff]
    %v2540 = vld [vmem:[#allocation6 + $0x35c] sm:$0xf]
    %v2541 = vld [vmem:[#allocation6 + $0x360] sm:$0xff]
    %v2542 = vld [vmem:[#allocation6 + $0x368] sm:$0xf]
    %v2543 = vld [vmem:[#allocation6 + $0x36c] sm:$0xff]
    %v2544 = vld [vmem:[#allocation6 + $0x374] sm:$0xf]
    %v2545 = vld [vmem:[#allocation6 + $0x378] sm:$0xff]
    %v2546 = vld [vmem:[#allocation6 + $0x380] sm:$0xf]
    %v2547 = vld [vmem:[#allocation6 + $0x384] sm:$0xff]
    %v2548 = vld [vmem:[#allocation6 + $0x38c] sm:$0xf]
    %v2549 = vld [vmem:[#allocation6 + $0x390] sm:$0xff]
    %v2550 = vld [vmem:[#allocation6 + $0x398] sm:$0xf]
    %v2551 = vld [vmem:[#allocation6 + $0x39c] sm:$0xff]
    %v2552 = vld [vmem:[#allocation6 + $0x3a4] sm:$0xf]
    %v2553 = vld [vmem:[#allocation6 + $0x3a8] sm:$0xff]
    %v2554 = vld [vmem:[#allocation6 + $0x3b0] sm:$0xf]
    %v2555 = vld [vmem:[#allocation6 + $0x3b4] sm:$0xff]
    %v2556 = vld [vmem:[#allocation6 + $0x3bc] sm:$0xf]
    %v2557 = vld [vmem:[#allocation6 + $0x3c0] sm:$0xff]
    %v2558 = vld [vmem:[#allocation6 + $0x3c8] sm:$0xf]
    %v2559 = vld [vmem:[#allocation6 + $0x3cc] sm:$0xff]
    %v2560 = vld [vmem:[#allocation6 + $0x3d4] sm:$0xf]
    %v2561 = vld [vmem:[#allocation6 + $0x3d8] sm:$0xff]
    %v2562 = vld [vmem:[#allocation6 + $0x3e0] sm:$0xf]
    %v2563 = vld [vmem:[#allocation6 + $0x3e4] sm:$0xff]
    %v2564 = vld [vmem:[#allocation6 + $0x3ec] sm:$0xf]
    %v2565 = vld [vmem:[#allocation6 + $0x3f0] sm:$0xff]
    %v2566 = vld [vmem:[#allocation6 + $0x3f8] sm:$0xf]
    %v2567 = vld [vmem:[#allocation6 + $0x3fc] sm:$0xff]
    %v2568 = vld [vmem:[#allocation6 + $0x404] sm:$0xf]
    %v2569 = vld [vmem:[#allocation6 + $0x408] sm:$0xff]
    %v2570 = vld [vmem:[#allocation6 + $0x410] sm:$0xf]
    %v2571 = vld [vmem:[#allocation6 + $0x414] sm:$0xff]
    %v2572 = vld [vmem:[#allocation6 + $0x41c] sm:$0xf]
    %v2573 = vld [vmem:[#allocation6 + $0x420] sm:$0xff]
    %v2574 = vld [vmem:[#allocation6 + $0x428] sm:$0xf]
    %v2575 = vld [vmem:[#allocation6 + $0x42c] sm:$0xff]
    %v2576 = vld [vmem:[#allocation6 + $0x434] sm:$0xf]
    %v2577 = vld [vmem:[#allocation6 + $0x438] sm:$0xff]
    %v2578 = vld [vmem:[#allocation6 + $0x440] sm:$0xf]
    %v2579 = vld [vmem:[#allocation6 + $0x444] sm:$0xff]
    %v2580 = vld [vmem:[#allocation6 + $0x44c] sm:$0xf]
    %v2581 = vld [vmem:[#allocation6 + $0x450] sm:$0xff]
    %v2582 = vld [vmem:[#allocation6 + $0x458] sm:$0xf]
    %v2583 = vld [vmem:[#allocation6 + $0x45c] sm:$0xff]
    %v2584 = vld [vmem:[#allocation6 + $0x464] sm:$0xf]
    %v2585 = vld [vmem:[#allocation6 + $0x468] sm:$0xff]
    %v2586 = vld [vmem:[#allocation6 + $0x470] sm:$0xf]
    %v2587 = vld [vmem:[#allocation6 + $0x474] sm:$0xff]
    %v2588 = vld [vmem:[#allocation6 + $0x47c] sm:$0xf]
    %v2589 = vld [vmem:[#allocation7] sm:$0x7]
    %v2591 = vlaneseq
    %v2592 = vshrl.u32 %v2591, 7
    %v2593 = vsub.s32 0, %v2592
    %v2594 = vrot.slane %v2589, %v2593
    %v2595 = vlaneseq
    %v2596 = vshrl.u32 %v2595, 7
    %v2597 = vsub.s32 1, %v2596
    %v2598 = vrot.slane %v2589, %v2597
    %v2599 = vlaneseq
    %v2600 = vshrl.u32 %v2599, 7
    %v2601 = vsub.s32 2, %v2600
    %v2602 = vrot.slane %v2589, %v2601
    %v2798 = vunpack.c.l.b16 %v2397
    %v2799 = vunpack.c.h.b16 %v2397
    %v2800 = vunpack.c.l.b16 %v2398
    %v2801 = vunpack.c.l.b16 %v2399
    %v2802 = vunpack.c.h.b16 %v2399
    %v2803 = vunpack.c.l.b16 %v2400
    %v2804 = vunpack.c.l.b16 %v2401
    %v2805 = vunpack.c.h.b16 %v2401
    %v2806 = vunpack.c.l.b16 %v2402
    %v2807 = vunpack.c.l.b16 %v2403
    %v2808 = vunpack.c.h.b16 %v2403
    %v2809 = vunpack.c.l.b16 %v2404
    %v2810 = vunpack.c.l.b16 %v2405
    %v2811 = vunpack.c.h.b16 %v2405
    %v2812 = vunpack.c.l.b16 %v2406
    %v2813 = vunpack.c.l.b16 %v2407
    %v2814 = vunpack.c.h.b16 %v2407
    %v2815 = vunpack.c.l.b16 %v2408
    %v2816 = vunpack.c.l.b16 %v2409
    %v2817 = vunpack.c.h.b16 %v2409
    %v2818 = vunpack.c.l.b16 %v2410
    %v2819 = vunpack.c.l.b16 %v2411
    %v2820 = vunpack.c.h.b16 %v2411
    %v2821 = vunpack.c.l.b16 %v2412
    %v2822 = vunpack.c.l.b16 %v2413
    %v2823 = vunpack.c.h.b16 %v2413
    %v2824 = vunpack.c.l.b16 %v2414
    %v2825 = vunpack.c.l.b16 %v2415
    %v2826 = vunpack.c.h.b16 %v2415
    %v2827 = vunpack.c.l.b16 %v2416
    %v2828 = vunpack.c.l.b16 %v2417
    %v2829 = vunpack.c.h.b16 %v2417
    %v2830 = vunpack.c.l.b16 %v2418
    %v2831 = vunpack.c.l.b16 %v2419
    %v2832 = vunpack.c.h.b16 %v2419
    %v2833 = vunpack.c.l.b16 %v2420
    %v2834 = vunpack.c.l.b16 %v2421
    %v2835 = vunpack.c.h.b16 %v2421
    %v2836 = vunpack.c.l.b16 %v2422
    %v2837 = vunpack.c.l.b16 %v2423
    %v2838 = vunpack.c.h.b16 %v2423
    %v2839 = vunpack.c.l.b16 %v2424
    %v2840 = vunpack.c.l.b16 %v2425
    %v2841 = vunpack.c.h.b16 %v2425
    %v2842 = vunpack.c.l.b16 %v2426
    %v2843 = vunpack.c.l.b16 %v2427
    %v2844 = vunpack.c.h.b16 %v2427
    %v2845 = vunpack.c.l.b16 %v2428
    %v2846 = vunpack.c.l.b16 %v2429
    %v2847 = vunpack.c.h.b16 %v2429
    %v2848 = vunpack.c.l.b16 %v2430
    %v2849 = vunpack.c.l.b16 %v2431
    %v2850 = vunpack.c.h.b16 %v2431
    %v2851 = vunpack.c.l.b16 %v2432
    %v2852 = vunpack.c.l.b16 %v2433
    %v2853 = vunpack.c.h.b16 %v2433
    %v2854 = vunpack.c.l.b16 %v2434
    %v2855 = vunpack.c.l.b16 %v2435
    %v2856 = vunpack.c.h.b16 %v2435
    %v2857 = vunpack.c.l.b16 %v2436
    %v2858 = vunpack.c.l.b16 %v2437
    %v2859 = vunpack.c.h.b16 %v2437
    %v2860 = vunpack.c.l.b16 %v2438
    %v2861 = vunpack.c.l.b16 %v2439
    %v2862 = vunpack.c.h.b16 %v2439
    %v2863 = vunpack.c.l.b16 %v2440
    %v2864 = vunpack.c.l.b16 %v2441
    %v2865 = vunpack.c.h.b16 %v2441
    %v2866 = vunpack.c.l.b16 %v2442
    %v2867 = vunpack.c.l.b16 %v2443
    %v2868 = vunpack.c.h.b16 %v2443
    %v2869 = vunpack.c.l.b16 %v2444
    %v2870 = vunpack.c.l.b16 %v2445
    %v2871 = vunpack.c.h.b16 %v2445
    %v2872 = vunpack.c.l.b16 %v2446
    %v2873 = vunpack.c.l.b16 %v2447
    %v2874 = vunpack.c.h.b16 %v2447
    %v2875 = vunpack.c.l.b16 %v2448
    %v2876 = vunpack.c.l.b16 %v2449
    %v2877 = vunpack.c.h.b16 %v2449
    %v2878 = vunpack.c.l.b16 %v2450
    %v2879 = vunpack.c.l.b16 %v2451
    %v2880 = vunpack.c.h.b16 %v2451
    %v2881 = vunpack.c.l.b16 %v2452
    %v2882 = vunpack.c.l.b16 %v2453
    %v2883 = vunpack.c.h.b16 %v2453
    %v2884 = vunpack.c.l.b16 %v2454
    %v2885 = vunpack.c.l.b16 %v2455
    %v2886 = vunpack.c.h.b16 %v2455
    %v2887 = vunpack.c.l.b16 %v2456
    %v2888 = vunpack.c.l.b16 %v2457
    %v2889 = vunpack.c.h.b16 %v2457
    %v2890 = vunpack.c.l.b16 %v2458
    %v2891 = vunpack.c.l.b16 %v2459
    %v2892 = vunpack.c.h.b16 %v2459
    %v2893 = vunpack.c.l.b16 %v2460
    %v2894 = vunpack.c.l.b16 %v2461
    %v2895 = vunpack.c.h.b16 %v2461
    %v2896 = vunpack.c.l.b16 %v2462
    %v2897 = vunpack.c.l.b16 %v2463
    %v2898 = vunpack.c.h.b16 %v2463
    %v2899 = vunpack.c.l.b16 %v2464
    %v2900 = vunpack.c.l.b16 %v2465
    %v2901 = vunpack.c.h.b16 %v2465
    %v2902 = vunpack.c.l.b16 %v2466
    %v2903 = vunpack.c.l.b16 %v2467
    %v2904 = vunpack.c.h.b16 %v2467
    %v2905 = vunpack.c.l.b16 %v2468
    %v2906 = vunpack.c.l.b16 %v2469
    %v2907 = vunpack.c.h.b16 %v2469
    %v2908 = vunpack.c.l.b16 %v2470
    %v2909 = vunpack.c.l.b16 %v2471
    %v2910 = vunpack.c.h.b16 %v2471
    %v2911 = vunpack.c.l.b16 %v2472
    %v2912 = vunpack.c.l.b16 %v2473
    %v2913 = vunpack.c.h.b16 %v2473
    %v2914 = vunpack.c.l.b16 %v2474
    %v2915 = vunpack.c.l.b16 %v2475
    %v2916 = vunpack.c.h.b16 %v2475
    %v2917 = vunpack.c.l.b16 %v2476
    %v2918 = vunpack.c.l.b16 %v2477
    %v2919 = vunpack.c.h.b16 %v2477
    %v2920 = vunpack.c.l.b16 %v2478
    %v2921 = vunpack.c.l.b16 %v2479
    %v2922 = vunpack.c.h.b16 %v2479
    %v2923 = vunpack.c.l.b16 %v2480
    %v2924 = vunpack.c.l.b16 %v2481
    %v2925 = vunpack.c.h.b16 %v2481
    %v2926 = vunpack.c.l.b16 %v2482
    %v2927 = vunpack.c.l.b16 %v2483
    %v2928 = vunpack.c.h.b16 %v2483
    %v2929 = vunpack.c.l.b16 %v2484
    %v2930 = vunpack.c.l.b16 %v2485
    %v2931 = vunpack.c.h.b16 %v2485
    %v2932 = vunpack.c.l.b16 %v2486
    %v2933 = vunpack.c.l.b16 %v2487
    %v2934 = vunpack.c.h.b16 %v2487
    %v2935 = vunpack.c.l.b16 %v2488
    %v2936 = vunpack.c.l.b16 %v2489
    %v2937 = vunpack.c.h.b16 %v2489
    %v2938 = vunpack.c.l.b16 %v2490
    %v2939 = vunpack.c.l.b16 %v2491
    %v2940 = vunpack.c.h.b16 %v2491
    %v2941 = vunpack.c.l.b16 %v2492
    %v2942 = vunpack.c.l.b16 %v2493
    %v2943 = vunpack.c.h.b16 %v2493
    %v2944 = vunpack.c.l.b16 %v2494
    %v2945 = vunpack.c.l.b16 %v2495
    %v2946 = vunpack.c.h.b16 %v2495
    %v2947 = vunpack.c.l.b16 %v2496
    %v2948 = vunpack.c.l.b16 %v2497
    %v2949 = vunpack.c.h.b16 %v2497
    %v2950 = vunpack.c.l.b16 %v2498
    %v2951 = vunpack.c.l.b16 %v2499
    %v2952 = vunpack.c.h.b16 %v2499
    %v2953 = vunpack.c.l.b16 %v2500
    %v2954 = vunpack.c.l.b16 %v2501
    %v2955 = vunpack.c.h.b16 %v2501
    %v2956 = vunpack.c.l.b16 %v2502
    %v2957 = vunpack.c.l.b16 %v2503
    %v2958 = vunpack.c.h.b16 %v2503
    %v2959 = vunpack.c.l.b16 %v2504
    %v2960 = vunpack.c.l.b16 %v2505
    %v2961 = vunpack.c.h.b16 %v2505
    %v2962 = vunpack.c.l.b16 %v2506
    %v2963 = vunpack.c.l.b16 %v2507
    %v2964 = vunpack.c.h.b16 %v2507
    %v2965 = vunpack.c.l.b16 %v2508
    %v2966 = vunpack.c.l.b16 %v2509
    %v2967 = vunpack.c.h.b16 %v2509
    %v2968 = vunpack.c.l.b16 %v2510
    %v2969 = vunpack.c.l.b16 %v2511
    %v2970 = vunpack.c.h.b16 %v2511
    %v2971 = vunpack.c.l.b16 %v2512
    %v2972 = vunpack.c.l.b16 %v2513
    %v2973 = vunpack.c.h.b16 %v2513
    %v2974 = vunpack.c.l.b16 %v2514
    %v2975 = vunpack.c.l.b16 %v2515
    %v2976 = vunpack.c.h.b16 %v2515
    %v2977 = vunpack.c.l.b16 %v2516
    %v2978 = vunpack.c.l.b16 %v2517
    %v2979 = vunpack.c.h.b16 %v2517
    %v2980 = vunpack.c.l.b16 %v2518
    %v2981 = vunpack.c.l.b16 %v2519
    %v2982 = vunpack.c.h.b16 %v2519
    %v2983 = vunpack.c.l.b16 %v2520
    %v2984 = vunpack.c.l.b16 %v2521
    %v2985 = vunpack.c.h.b16 %v2521
    %v2986 = vunpack.c.l.b16 %v2522
    %v2987 = vunpack.c.l.b16 %v2523
    %v2988 = vunpack.c.h.b16 %v2523
    %v2989 = vunpack.c.l.b16 %v2524
    %v2990 = vunpack.c.l.b16 %v2525
    %v2991 = vunpack.c.h.b16 %v2525
    %v2992 = vunpack.c.l.b16 %v2526
    %v2993 = vunpack.c.l.b16 %v2527
    %v2994 = vunpack.c.h.b16 %v2527
    %v2995 = vunpack.c.l.b16 %v2528
    %v2996 = vunpack.c.l.b16 %v2529
    %v2997 = vunpack.c.h.b16 %v2529
    %v2998 = vunpack.c.l.b16 %v2530
    %v2999 = vunpack.c.l.b16 %v2531
    %v3000 = vunpack.c.h.b16 %v2531
    %v3001 = vunpack.c.l.b16 %v2532
    %v3002 = vunpack.c.l.b16 %v2533
    %v3003 = vunpack.c.h.b16 %v2533
    %v3004 = vunpack.c.l.b16 %v2534
    %v3005 = vunpack.c.l.b16 %v2535
    %v3006 = vunpack.c.h.b16 %v2535
    %v3007 = vunpack.c.l.b16 %v2536
    %v3008 = vunpack.c.l.b16 %v2537
    %v3009 = vunpack.c.h.b16 %v2537
    %v3010 = vunpack.c.l.b16 %v2538
    %v3011 = vunpack.c.l.b16 %v2539
    %v3012 = vunpack.c.h.b16 %v2539
    %v3013 = vunpack.c.l.b16 %v2540
    %v3014 = vunpack.c.l.b16 %v2541
    %v3015 = vunpack.c.h.b16 %v2541
    %v3016 = vunpack.c.l.b16 %v2542
    %v3017 = vunpack.c.l.b16 %v2543
    %v3018 = vunpack.c.h.b16 %v2543
    %v3019 = vunpack.c.l.b16 %v2544
    %v3020 = vunpack.c.l.b16 %v2545
    %v3021 = vunpack.c.h.b16 %v2545
    %v3022 = vunpack.c.l.b16 %v2546
    %v3023 = vunpack.c.l.b16 %v2547
    %v3024 = vunpack.c.h.b16 %v2547
    %v3025 = vunpack.c.l.b16 %v2548
    %v3026 = vunpack.c.l.b16 %v2549
    %v3027 = vunpack.c.h.b16 %v2549
    %v3028 = vunpack.c.l.b16 %v2550
    %v3029 = vunpack.c.l.b16 %v2551
    %v3030 = vunpack.c.h.b16 %v2551
    %v3031 = vunpack.c.l.b16 %v2552
    %v3032 = vunpack.c.l.b16 %v2553
    %v3033 = vunpack.c.h.b16 %v2553
    %v3034 = vunpack.c.l.b16 %v2554
    %v3035 = vunpack.c.l.b16 %v2555
    %v3036 = vunpack.c.h.b16 %v2555
    %v3037 = vunpack.c.l.b16 %v2556
    %v3038 = vunpack.c.l.b16 %v2557
    %v3039 = vunpack.c.h.b16 %v2557
    %v3040 = vunpack.c.l.b16 %v2558
    %v3041 = vunpack.c.l.b16 %v2559
    %v3042 = vunpack.c.h.b16 %v2559
    %v3043 = vunpack.c.l.b16 %v2560
    %v3044 = vunpack.c.l.b16 %v2561
    %v3045 = vunpack.c.h.b16 %v2561
    %v3046 = vunpack.c.l.b16 %v2562
    %v3047 = vunpack.c.l.b16 %v2563
    %v3048 = vunpack.c.h.b16 %v2563
    %v3049 = vunpack.c.l.b16 %v2564
    %v3050 = vunpack.c.l.b16 %v2565
    %v3051 = vunpack.c.h.b16 %v2565
    %v3052 = vunpack.c.l.b16 %v2566
    %v3053 = vunpack.c.l.b16 %v2567
    %v3054 = vunpack.c.h.b16 %v2567
    %v3055 = vunpack.c.l.b16 %v2568
    %v3056 = vunpack.c.l.b16 %v2569
    %v3057 = vunpack.c.h.b16 %v2569
    %v3058 = vunpack.c.l.b16 %v2570
    %v3059 = vunpack.c.l.b16 %v2571
    %v3060 = vunpack.c.h.b16 %v2571
    %v3061 = vunpack.c.l.b16 %v2572
    %v3062 = vunpack.c.l.b16 %v2573
    %v3063 = vunpack.c.h.b16 %v2573
    %v3064 = vunpack.c.l.b16 %v2574
    %v3065 = vunpack.c.l.b16 %v2575
    %v3066 = vunpack.c.h.b16 %v2575
    %v3067 = vunpack.c.l.b16 %v2576
    %v3068 = vunpack.c.l.b16 %v2577
    %v3069 = vunpack.c.h.b16 %v2577
    %v3070 = vunpack.c.l.b16 %v2578
    %v3071 = vunpack.c.l.b16 %v2579
    %v3072 = vunpack.c.h.b16 %v2579
    %v3073 = vunpack.c.l.b16 %v2580
    %v3074 = vunpack.c.l.b16 %v2581
    %v3075 = vunpack.c.h.b16 %v2581
    %v3076 = vunpack.c.l.b16 %v2582
    %v3077 = vunpack.c.l.b16 %v2583
    %v3078 = vunpack.c.h.b16 %v2583
    %v3079 = vunpack.c.l.b16 %v2584
    %v3080 = vunpack.c.l.b16 %v2585
    %v3081 = vunpack.c.h.b16 %v2585
    %v3082 = vunpack.c.l.b16 %v2586
    %v3083 = vunpack.c.l.b16 %v2587
    %v3084 = vunpack.c.h.b16 %v2587
    %v3085 = vunpack.c.l.b16 %v2588
    %v3086 = vpack.c.b16 %v2801, %v2798
    %v3087 = vpack.c.b16 %v2802, %v2799
    %v3088 = vpack.c.b16 %v2803, %v2800
    %v3089 = vpack.c.b16 %v2807, %v2804
    %v3090 = vpack.c.b16 %v2808, %v2805
    %v3091 = vpack.c.b16 %v2809, %v2806
    %v3092 = vpack.c.b16 %v2813, %v2810
    %v3093 = vpack.c.b16 %v2814, %v2811
    %v3094 = vpack.c.b16 %v2815, %v2812
    %v3095 = vpack.c.b16 %v2819, %v2816
    %v3096 = vpack.c.b16 %v2820, %v2817
    %v3097 = vpack.c.b16 %v2821, %v2818
    %v3098 = vpack.c.b16 %v2825, %v2822
    %v3099 = vpack.c.b16 %v2826, %v2823
    %v3100 = vpack.c.b16 %v2827, %v2824
    %v3101 = vpack.c.b16 %v2831, %v2828
    %v3102 = vpack.c.b16 %v2832, %v2829
    %v3103 = vpack.c.b16 %v2833, %v2830
    %v3104 = vpack.c.b16 %v2837, %v2834
    %v3105 = vpack.c.b16 %v2838, %v2835
    %v3106 = vpack.c.b16 %v2839, %v2836
    %v3107 = vpack.c.b16 %v2843, %v2840
    %v3108 = vpack.c.b16 %v2844, %v2841
    %v3109 = vpack.c.b16 %v2845, %v2842
    %v3110 = vpack.c.b16 %v2849, %v2846
    %v3111 = vpack.c.b16 %v2850, %v2847
    %v3112 = vpack.c.b16 %v2851, %v2848
    %v3113 = vpack.c.b16 %v2855, %v2852
    %v3114 = vpack.c.b16 %v2856, %v2853
    %v3115 = vpack.c.b16 %v2857, %v2854
    %v3116 = vpack.c.b16 %v2861, %v2858
    %v3117 = vpack.c.b16 %v2862, %v2859
    %v3118 = vpack.c.b16 %v2863, %v2860
    %v3119 = vpack.c.b16 %v2867, %v2864
    %v3120 = vpack.c.b16 %v2868, %v2865
    %v3121 = vpack.c.b16 %v2869, %v2866
    %v3122 = vpack.c.b16 %v2873, %v2870
    %v3123 = vpack.c.b16 %v2874, %v2871
    %v3124 = vpack.c.b16 %v2875, %v2872
    %v3125 = vpack.c.b16 %v2879, %v2876
    %v3126 = vpack.c.b16 %v2880, %v2877
    %v3127 = vpack.c.b16 %v2881, %v2878
    %v3128 = vpack.c.b16 %v2885, %v2882
    %v3129 = vpack.c.b16 %v2886, %v2883
    %v3130 = vpack.c.b16 %v2887, %v2884
    %v3131 = vpack.c.b16 %v2891, %v2888
    %v3132 = vpack.c.b16 %v2892, %v2889
    %v3133 = vpack.c.b16 %v2893, %v2890
    %v3134 = vpack.c.b16 %v2897, %v2894
    %v3135 = vpack.c.b16 %v2898, %v2895
    %v3136 = vpack.c.b16 %v2899, %v2896
    %v3137 = vpack.c.b16 %v2903, %v2900
    %v3138 = vpack.c.b16 %v2904, %v2901
    %v3139 = vpack.c.b16 %v2905, %v2902
    %v3140 = vpack.c.b16 %v2909, %v2906
    %v3141 = vpack.c.b16 %v2910, %v2907
    %v3142 = vpack.c.b16 %v2911, %v2908
    %v3143 = vpack.c.b16 %v2915, %v2912
    %v3144 = vpack.c.b16 %v2916, %v2913
    %v3145 = vpack.c.b16 %v2917, %v2914
    %v3146 = vpack.c.b16 %v2921, %v2918
    %v3147 = vpack.c.b16 %v2922, %v2919
    %v3148 = vpack.c.b16 %v2923, %v2920
    %v3149 = vpack.c.b16 %v2927, %v2924
    %v3150 = vpack.c.b16 %v2928, %v2925
    %v3151 = vpack.c.b16 %v2929, %v2926
    %v3152 = vpack.c.b16 %v2933, %v2930
    %v3153 = vpack.c.b16 %v2934, %v2931
    %v3154 = vpack.c.b16 %v2935, %v2932
    %v3155 = vpack.c.b16 %v2939, %v2936
    %v3156 = vpack.c.b16 %v2940, %v2937
    %v3157 = vpack.c.b16 %v2941, %v2938
    %v3158 = vpack.c.b16 %v2945, %v2942
    %v3159 = vpack.c.b16 %v2946, %v2943
    %v3160 = vpack.c.b16 %v2947, %v2944
    %v3161 = vpack.c.b16 %v2951, %v2948
    %v3162 = vpack.c.b16 %v2952, %v2949
    %v3163 = vpack.c.b16 %v2953, %v2950
    %v3164 = vpack.c.b16 %v2957, %v2954
    %v3165 = vpack.c.b16 %v2958, %v2955
    %v3166 = vpack.c.b16 %v2959, %v2956
    %v3167 = vpack.c.b16 %v2963, %v2960
    %v3168 = vpack.c.b16 %v2964, %v2961
    %v3169 = vpack.c.b16 %v2965, %v2962
    %v3170 = vpack.c.b16 %v2969, %v2966
    %v3171 = vpack.c.b16 %v2970, %v2967
    %v3172 = vpack.c.b16 %v2971, %v2968
    %v3173 = vpack.c.b16 %v2975, %v2972
    %v3174 = vpack.c.b16 %v2976, %v2973
    %v3175 = vpack.c.b16 %v2977, %v2974
    %v3176 = vpack.c.b16 %v2981, %v2978
    %v3177 = vpack.c.b16 %v2982, %v2979
    %v3178 = vpack.c.b16 %v2983, %v2980
    %v3179 = vpack.c.b16 %v2987, %v2984
    %v3180 = vpack.c.b16 %v2988, %v2985
    %v3181 = vpack.c.b16 %v2989, %v2986
    %v3182 = vpack.c.b16 %v2993, %v2990
    %v3183 = vpack.c.b16 %v2994, %v2991
    %v3184 = vpack.c.b16 %v2995, %v2992
    %v3185 = vpack.c.b16 %v2999, %v2996
    %v3186 = vpack.c.b16 %v3000, %v2997
    %v3187 = vpack.c.b16 %v3001, %v2998
    %v3188 = vpack.c.b16 %v3005, %v3002
    %v3189 = vpack.c.b16 %v3006, %v3003
    %v3190 = vpack.c.b16 %v3007, %v3004
    %v3191 = vpack.c.b16 %v3011, %v3008
    %v3192 = vpack.c.b16 %v3012, %v3009
    %v3193 = vpack.c.b16 %v3013, %v3010
    %v3194 = vpack.c.b16 %v3017, %v3014
    %v3195 = vpack.c.b16 %v3018, %v3015
    %v3196 = vpack.c.b16 %v3019, %v3016
    %v3197 = vpack.c.b16 %v3023, %v3020
    %v3198 = vpack.c.b16 %v3024, %v3021
    %v3199 = vpack.c.b16 %v3025, %v3022
    %v3200 = vpack.c.b16 %v3029, %v3026
    %v3201 = vpack.c.b16 %v3030, %v3027
    %v3202 = vpack.c.b16 %v3031, %v3028
    %v3203 = vpack.c.b16 %v3035, %v3032
    %v3204 = vpack.c.b16 %v3036, %v3033
    %v3205 = vpack.c.b16 %v3037, %v3034
    %v3206 = vpack.c.b16 %v3041, %v3038
    %v3207 = vpack.c.b16 %v3042, %v3039
    %v3208 = vpack.c.b16 %v3043, %v3040
    %v3209 = vpack.c.b16 %v3047, %v3044
    %v3210 = vpack.c.b16 %v3048, %v3045
    %v3211 = vpack.c.b16 %v3049, %v3046
    %v3212 = vpack.c.b16 %v3053, %v3050
    %v3213 = vpack.c.b16 %v3054, %v3051
    %v3214 = vpack.c.b16 %v3055, %v3052
    %v3215 = vpack.c.b16 %v3059, %v3056
    %v3216 = vpack.c.b16 %v3060, %v3057
    %v3217 = vpack.c.b16 %v3061, %v3058
    %v3218 = vpack.c.b16 %v3065, %v3062
    %v3219 = vpack.c.b16 %v3066, %v3063
    %v3220 = vpack.c.b16 %v3067, %v3064
    %v3221 = vpack.c.b16 %v3071, %v3068
    %v3222 = vpack.c.b16 %v3072, %v3069
    %v3223 = vpack.c.b16 %v3073, %v3070
    %v3224 = vpack.c.b16 %v3077, %v3074
    %v3225 = vpack.c.b16 %v3078, %v3075
    %v3226 = vpack.c.b16 %v3079, %v3076
    %v3227 = vpack.c.b16 %v3083, %v3080
    %v3228 = vpack.c.b16 %v3084, %v3081
    %v3229 = vpack.c.b16 %v3085, %v3082
    %3374 = vmatprep.subr.bf16.mxu0 %v3108
    %3375 = vmatpush1.bf16.msra.mxu0 %v3107
    %3376 = vmatprep.subr.bf16.mxu0 %v3105
    %3377 = vmatpush1.bf16.msra.mxu0 %v3104
    %3378 = vmatprep.subr.bf16.mxu0 %v3102
    %3379 = vmatpush1.bf16.msra.mxu0 %v3101
    %3380 = vmatprep.subr.bf16.mxu0 %v3099
    %3381 = vmatpush1.bf16.msra.mxu0 %v3098
    %3382 = vmatprep.subr.bf16.mxu0 %v3096
    %3383 = vmatpush1.bf16.msra.mxu0 %v3095
    %3384 = vmatprep.subr.bf16.mxu0 %v3093
    %3385 = vmatpush1.bf16.msra.mxu0 %v3092
    %3386 = vmatprep.subr.bf16.mxu0 %v3090
    %3387 = vmatpush1.bf16.msra.mxu0 %v3089
    %3388 = vmatprep.subr.bf16.mxu0 %v3087
    %3389 = vmatpush1.bf16.msra.mxu0 %v3086
    %3390 = vmatprep.subr.bf16.mxu0 %v3132
    %3391 = vmatpush2.bf16.msra.mxu0 %v3131
    %3392 = vmatprep.subr.bf16.mxu0 %v3129
    %3393 = vmatpush2.bf16.msra.mxu0 %v3128
    %3394 = vmatprep.subr.bf16.mxu0 %v3126
    %3395 = vmatpush2.bf16.msra.mxu0 %v3125
    %3396 = vmatprep.subr.bf16.mxu0 %v3123
    %3397 = vmatpush2.bf16.msra.mxu0 %v3122
    %3398 = vmatprep.subr.bf16.mxu0 %v3120
    %3399 = vmatpush2.bf16.msra.mxu0 %v3119
    %3400 = vmatprep.subr.bf16.mxu0 %v3117
    %3401 = vmatpush2.bf16.msra.mxu0 %v3116
    %3402 = vmatprep.subr.bf16.mxu0 %v3114
    %3403 = vmatpush2.bf16.msra.mxu0 %v3113
    %3404 = vmatprep.subr.bf16.mxu0 %v3111
    %3405 = vmatpush2.bf16.msra.mxu0 %v3110
    %3406 = vmatprep.mubr.bf16.mxu0 %v2392
    %3407 = vmatmul.mubr.bf16.gmra.mxu0 %v2391
    %v3408 = vpop.f32.mrf.mxu0
    %v3409 = vadd.f32 %v2594, %v3408
    %v3410 = vpop.f32.mrf.mxu0
    %v3411 = vadd.f32 %v2598, %v3410
    %v3412 = vpop.f32.mrf.mxu0
    %v3413 = vpop.f32.mrf.mxu0
    %3414 = vdwg.mxu0
    %3415 = vmatprep.subr.bf16.mxu0 %v3156
    %3416 = vmatpush1.bf16.msra.mxu0 %v3155
    %3417 = vmatprep.subr.bf16.mxu0 %v3153
    %3418 = vmatpush1.bf16.msra.mxu0 %v3152
    %3419 = vmatprep.subr.bf16.mxu0 %v3150
    %3420 = vmatpush1.bf16.msra.mxu0 %v3149
    %3421 = vmatprep.subr.bf16.mxu0 %v3147
    %3422 = vmatpush1.bf16.msra.mxu0 %v3146
    %3423 = vmatprep.subr.bf16.mxu0 %v3144
    %3424 = vmatpush1.bf16.msra.mxu0 %v3143
    %3425 = vmatprep.subr.bf16.mxu0 %v3141
    %3426 = vmatpush1.bf16.msra.mxu0 %v3140
    %3427 = vmatprep.subr.bf16.mxu0 %v3138
    %3428 = vmatpush1.bf16.msra.mxu0 %v3137
    %3429 = vmatprep.subr.bf16.mxu0 %v3135
    %3430 = vmatpush1.bf16.msra.mxu0 %v3134
    %3431 = vmatprep.subr.bf16.mxu0 %v3180
    %3432 = vmatpush2.bf16.msra.mxu0 %v3179
    %3433 = vmatprep.subr.bf16.mxu0 %v3177
    %3434 = vmatpush2.bf16.msra.mxu0 %v3176
    %3435 = vmatprep.subr.bf16.mxu0 %v3174
    %3436 = vmatpush2.bf16.msra.mxu0 %v3173
    %3437 = vmatprep.subr.bf16.mxu0 %v3171
    %3438 = vmatpush2.bf16.msra.mxu0 %v3170
    %3439 = vmatprep.subr.bf16.mxu0 %v3168
    %3440 = vmatpush2.bf16.msra.mxu0 %v3167
    %3441 = vmatprep.subr.bf16.mxu0 %v3165
    %3442 = vmatpush2.bf16.msra.mxu0 %v3164
    %3443 = vmatprep.subr.bf16.mxu0 %v3162
    %3444 = vmatpush2.bf16.msra.mxu0 %v3161
    %3445 = vmatprep.subr.bf16.mxu0 %v3159
    %3446 = vmatpush2.bf16.msra.mxu0 %v3158
    %3447 = vmatprep.mubr.bf16.mxu0 %v2394
    %3448 = vmatmul.mubr.bf16.gmra.mxu0 %v2393
    %v3449 = vpop.f32.mrf.mxu0
    %v3450 = vadd.f32 %v3409, %v3449
    %v3451 = vpop.f32.mrf.mxu0
    %v3452 = vadd.f32 %v3411, %v3451
    %v3453 = vpop.f32.mrf.mxu0
    %v3454 = vpop.f32.mrf.mxu0
    %3455 = vdwg.mxu0
    %3456 = vmatprep.subr.bf16.mxu0 %v3204
    %3457 = vmatpush1.bf16.msra.mxu0 %v3203
    %3458 = vmatprep.subr.bf16.mxu0 %v3201
    %3459 = vmatpush1.bf16.msra.mxu0 %v3200
    %3460 = vmatprep.subr.bf16.mxu0 %v3198
    %3461 = vmatpush1.bf16.msra.mxu0 %v3197
    %3462 = vmatprep.subr.bf16.mxu0 %v3195
    %3463 = vmatpush1.bf16.msra.mxu0 %v3194
    %3464 = vmatprep.subr.bf16.mxu0 %v3192
    %3465 = vmatpush1.bf16.msra.mxu0 %v3191
    %3466 = vmatprep.subr.bf16.mxu0 %v3189
    %3467 = vmatpush1.bf16.msra.mxu0 %v3188
    %3468 = vmatprep.subr.bf16.mxu0 %v3186
    %3469 = vmatpush1.bf16.msra.mxu0 %v3185
    %3470 = vmatprep.subr.bf16.mxu0 %v3183
    %3471 = vmatpush1.bf16.msra.mxu0 %v3182
    %3472 = vmatprep.subr.bf16.mxu0 %v3228
    %3473 = vmatpush2.bf16.msra.mxu0 %v3227
    %3474 = vmatprep.subr.bf16.mxu0 %v3225
    %3475 = vmatpush2.bf16.msra.mxu0 %v3224
    %3476 = vmatprep.subr.bf16.mxu0 %v3222
    %3477 = vmatpush2.bf16.msra.mxu0 %v3221
    %3478 = vmatprep.subr.bf16.mxu0 %v3219
    %3479 = vmatpush2.bf16.msra.mxu0 %v3218
    %3480 = vmatprep.subr.bf16.mxu0 %v3216
    %3481 = vmatpush2.bf16.msra.mxu0 %v3215
    %3482 = vmatprep.subr.bf16.mxu0 %v3213
    %3483 = vmatpush2.bf16.msra.mxu0 %v3212
    %3484 = vmatprep.subr.bf16.mxu0 %v3210
    %3485 = vmatpush2.bf16.msra.mxu0 %v3209
    %3486 = vmatprep.subr.bf16.mxu0 %v3207
    %3487 = vmatpush2.bf16.msra.mxu0 %v3206
    %3488 = vmatprep.mubr.bf16.mxu0 %v2396
    %3489 = vmatmul.mubr.bf16.gmra.mxu0 %v2395
    %v3490 = vpop.f32.mrf.mxu0
    %v3491 = vadd.f32 %v3450, %v3490
    %v3492 = vpop.f32.mrf.mxu0
    %v3493 = vadd.f32 %v3452, %v3492
    %v3494 = vpop.f32.mrf.mxu0
    %v3495 = vpop.f32.mrf.mxu0
    %3496 = vdwg.mxu0
    %3497 = vmatprep.subr.bf16.mxu0 0
    %3498 = vmatpush1.bf16.msra.mxu0 %v3109
    %3499 = vmatprep.subr.bf16.mxu0 0
    %3500 = vmatpush1.bf16.msra.mxu0 %v3106
    %3501 = vmatprep.subr.bf16.mxu0 0
    %3502 = vmatpush1.bf16.msra.mxu0 %v3103
    %3503 = vmatprep.subr.bf16.mxu0 0
    %3504 = vmatpush1.bf16.msra.mxu0 %v3100
    %3505 = vmatprep.subr.bf16.mxu0 0
    %3506 = vmatpush1.bf16.msra.mxu0 %v3097
    %3507 = vmatprep.subr.bf16.mxu0 0
    %3508 = vmatpush1.bf16.msra.mxu0 %v3094
    %3509 = vmatprep.subr.bf16.mxu0 0
    %3510 = vmatpush1.bf16.msra.mxu0 %v3091
    %3511 = vmatprep.subr.bf16.mxu0 0
    %3512 = vmatpush1.bf16.msra.mxu0 %v3088
    %3513 = vmatprep.subr.bf16.mxu0 0
    %3514 = vmatpush2.bf16.msra.mxu0 %v3133
    %3515 = vmatprep.subr.bf16.mxu0 0
    %3516 = vmatpush2.bf16.msra.mxu0 %v3130
    %3517 = vmatprep.subr.bf16.mxu0 0
    %3518 = vmatpush2.bf16.msra.mxu0 %v3127
    %3519 = vmatprep.subr.bf16.mxu0 0
    %3520 = vmatpush2.bf16.msra.mxu0 %v3124
    %3521 = vmatprep.subr.bf16.mxu0 0
    %3522 = vmatpush2.bf16.msra.mxu0 %v3121
    %3523 = vmatprep.subr.bf16.mxu0 0
    %3524 = vmatpush2.bf16.msra.mxu0 %v3118
    %3525 = vmatprep.subr.bf16.mxu0 0
    %3526 = vmatpush2.bf16.msra.mxu0 %v3115
    %3527 = vmatprep.subr.bf16.mxu0 0
    %3528 = vmatpush2.bf16.msra.mxu0 %v3112
    %3529 = vmatprep.mubr.bf16.mxu0 %v2392
    %3530 = vmatmul.mubr.bf16.gmra.mxu0 %v2391
    %v3531 = vpop.f32.mrf.mxu0
    %v3532 = vadd.f32 %v2602, %v3531
    %v3533 = vpop.f32.mrf.mxu0
    %v3534 = vpop.f32.mrf.mxu0
    %v3535 = vpop.f32.mrf.mxu0
    %3536 = vdwg.mxu0
    %3537 = vmatprep.subr.bf16.mxu0 0
    %3538 = vmatpush1.bf16.msra.mxu0 %v3157
    %3539 = vmatprep.subr.bf16.mxu0 0
    %3540 = vmatpush1.bf16.msra.mxu0 %v3154
    %3541 = vmatprep.subr.bf16.mxu0 0
    %3542 = vmatpush1.bf16.msra.mxu0 %v3151
    %3543 = vmatprep.subr.bf16.mxu0 0
    %3544 = vmatpush1.bf16.msra.mxu0 %v3148
    %3545 = vmatprep.subr.bf16.mxu0 0
    %3546 = vmatpush1.bf16.msra.mxu0 %v3145
    %3547 = vmatprep.subr.bf16.mxu0 0
    %3548 = vmatpush1.bf16.msra.mxu0 %v3142
    %3549 = vmatprep.subr.bf16.mxu0 0
    %3550 = vmatpush1.bf16.msra.mxu0 %v3139
    %3551 = vmatprep.subr.bf16.mxu0 0
    %3552 = vmatpush1.bf16.msra.mxu0 %v3136
    %3553 = vmatprep.subr.bf16.mxu0 0
    %3554 = vmatpush2.bf16.msra.mxu0 %v3181
    %3555 = vmatprep.subr.bf16.mxu0 0
    %3556 = vmatpush2.bf16.msra.mxu0 %v3178
    %3557 = vmatprep.subr.bf16.mxu0 0
    %3558 = vmatpush2.bf16.msra.mxu0 %v3175
    %3559 = vmatprep.subr.bf16.mxu0 0
    %3560 = vmatpush2.bf16.msra.mxu0 %v3172
    %3561 = vmatprep.subr.bf16.mxu0 0
    %3562 = vmatpush2.bf16.msra.mxu0 %v3169
    %3563 = vmatprep.subr.bf16.mxu0 0
    %3564 = vmatpush2.bf16.msra.mxu0 %v3166
    %3565 = vmatprep.subr.bf16.mxu0 0
    %3566 = vmatpush2.bf16.msra.mxu0 %v3163
    %3567 = vmatprep.subr.bf16.mxu0 0
    %3568 = vmatpush2.bf16.msra.mxu0 %v3160
    %3569 = vmatprep.mubr.bf16.mxu0 %v2394
    %3570 = vmatmul.mubr.bf16.gmra.mxu0 %v2393
    %v3571 = vpop.f32.mrf.mxu0
    %v3572 = vadd.f32 %v3532, %v3571
    %v3573 = vpop.f32.mrf.mxu0
    %v3574 = vpop.f32.mrf.mxu0
    %v3575 = vpop.f32.mrf.mxu0
    %3576 = vdwg.mxu0
    %3577 = vmatprep.subr.bf16.mxu0 0
    %3578 = vmatpush1.bf16.msra.mxu0 %v3205
    %3579 = vmatprep.subr.bf16.mxu0 0
    %3580 = vmatpush1.bf16.msra.mxu0 %v3202
    %3581 = vmatprep.subr.bf16.mxu0 0
    %3582 = vmatpush1.bf16.msra.mxu0 %v3199
    %3583 = vmatprep.subr.bf16.mxu0 0
    %3584 = vmatpush1.bf16.msra.mxu0 %v3196
    %3585 = vmatprep.subr.bf16.mxu0 0
    %3586 = vmatpush1.bf16.msra.mxu0 %v3193
    %3587 = vmatprep.subr.bf16.mxu0 0
    %3588 = vmatpush1.bf16.msra.mxu0 %v3190
    %3589 = vmatprep.subr.bf16.mxu0 0
    %3590 = vmatpush1.bf16.msra.mxu0 %v3187
    %3591 = vmatprep.subr.bf16.mxu0 0
    %3592 = vmatpush1.bf16.msra.mxu0 %v3184
    %3593 = vmatprep.subr.bf16.mxu0 0
    %3594 = vmatpush2.bf16.msra.mxu0 %v3229
    %3595 = vmatprep.subr.bf16.mxu0 0
    %3596 = vmatpush2.bf16.msra.mxu0 %v3226
    %3597 = vmatprep.subr.bf16.mxu0 0
    %3598 = vmatpush2.bf16.msra.mxu0 %v3223
    %3599 = vmatprep.subr.bf16.mxu0 0
    %3600 = vmatpush2.bf16.msra.mxu0 %v3220
    %3601 = vmatprep.subr.bf16.mxu0 0
    %3602 = vmatpush2.bf16.msra.mxu0 %v3217
    %3603 = vmatprep.subr.bf16.mxu0 0
    %3604 = vmatpush2.bf16.msra.mxu0 %v3214
    %3605 = vmatprep.subr.bf16.mxu0 0
    %3606 = vmatpush2.bf16.msra.mxu0 %v3211
    %3607 = vmatprep.subr.bf16.mxu0 0
    %3608 = vmatpush2.bf16.msra.mxu0 %v3208
    %3609 = vmatprep.mubr.bf16.mxu0 %v2396
    %3610 = vmatmul.mubr.bf16.gmra.mxu0 %v2395
    %v3611 = vpop.f32.mrf.mxu0
    %v3612 = vadd.f32 %v3572, %v3611
    %v3613 = vpop.f32.mrf.mxu0
    %v3614 = vpop.f32.mrf.mxu0
    %v3615 = vpop.f32.mrf.mxu0
    %3616 = vdwg.mxu0
    %v3617 = vmax.f32 %v3491, 0.0
    %v3618 = vmax.f32 %v3493, 0.0
    %v3619 = vmax.f32 %v3612, 0.0
    %v3620 = vpack.c.bf16 %v3617, %v3617
    %v3621 = vpack.c.bf16 %v3618, %v3618
    %v3622 = vpack.c.bf16 %v3619, %v3619
    %v3623 = vld [vmem:[#allocation9] sm:$0xff]
    %v3624 = vld [vmem:[#allocation9 + $0x8] sm:$0xff]
    %v3625 = vld [vmem:[#allocation9 + $0x10] sm:$0xff]
    %v3626 = vld [vmem:[#allocation9 + $0x18] sm:$0xff]
    %v3627 = vld [vmem:[#allocation9 + $0x20] sm:$0xff]
    %v3628 = vld [vmem:[#allocation9 + $0x28] sm:$0xff]
    %v3629 = vld [vmem:[#allocation9 + $0x30] sm:$0xff]
    %v3630 = vld [vmem:[#allocation9 + $0x38] sm:$0xff]
    %v3631 = vld [vmem:[#allocation9 + $0x40] sm:$0xff]
    %v3632 = vld [vmem:[#allocation9 + $0x48] sm:$0xff]
    %v3633 = vld [vmem:[#allocation9 + $0x50] sm:$0xff]
    %v3634 = vld [vmem:[#allocation9 + $0x58] sm:$0xff]
    %v3635 = vld [vmem:[#allocation9 + $0x60] sm:$0xff]
    %v3636 = vld [vmem:[#allocation9 + $0x68] sm:$0xff]
    %v3637 = vld [vmem:[#allocation9 + $0x70] sm:$0xff]
    %v3638 = vld [vmem:[#allocation9 + $0x78] sm:$0xff]
    %v3639 = vld [vmem:[#allocation9 + $0x80] sm:$0xff]
    %v3640 = vld [vmem:[#allocation9 + $0x88] sm:$0xff]
    %v3641 = vld [vmem:[#allocation9 + $0x90] sm:$0xff]
    %v3642 = vld [vmem:[#allocation9 + $0x98] sm:$0xff]
    %v3643 = vld [vmem:[#allocation9 + $0xa0] sm:$0xff]
    %v3644 = vld [vmem:[#allocation9 + $0xa8] sm:$0xff]
    %v3645 = vld [vmem:[#allocation9 + $0xb0] sm:$0xff]
    %v3646 = vld [vmem:[#allocation9 + $0xb8] sm:$0xff]
    %v3647 = vld [vmem:[#allocation9 + $0xc0] sm:$0xff]
    %v3648 = vld [vmem:[#allocation9 + $0xc8] sm:$0xff]
    %v3649 = vld [vmem:[#allocation9 + $0xd0] sm:$0xff]
    %v3650 = vld [vmem:[#allocation9 + $0xd8] sm:$0xff]
    %v3651 = vld [vmem:[#allocation9 + $0xe0] sm:$0xff]
    %v3652 = vld [vmem:[#allocation9 + $0xe8] sm:$0xff]
    %v3653 = vld [vmem:[#allocation9 + $0xf0] sm:$0xff]
    %v3654 = vld [vmem:[#allocation9 + $0xf8] sm:$0xff]
    %v3655 = vld [vmem:[#allocation9 + $0x100] sm:$0xff]
    %v3656 = vld [vmem:[#allocation9 + $0x108] sm:$0xff]
    %v3657 = vld [vmem:[#allocation9 + $0x110] sm:$0xff]
    %v3658 = vld [vmem:[#allocation9 + $0x118] sm:$0xff]
    %v3659 = vld [vmem:[#allocation9 + $0x120] sm:$0xff]
    %v3660 = vld [vmem:[#allocation9 + $0x128] sm:$0xff]
    %v3661 = vld [vmem:[#allocation9 + $0x130] sm:$0xff]
    %v3662 = vld [vmem:[#allocation9 + $0x138] sm:$0xff]
    %v3663 = vld [vmem:[#allocation9 + $0x140] sm:$0xff]
    %v3664 = vld [vmem:[#allocation9 + $0x148] sm:$0xff]
    %v3665 = vld [vmem:[#allocation9 + $0x150] sm:$0xff]
    %v3666 = vld [vmem:[#allocation9 + $0x158] sm:$0xff]
    %v3667 = vld [vmem:[#allocation9 + $0x160] sm:$0xff]
    %v3668 = vld [vmem:[#allocation9 + $0x168] sm:$0xff]
    %v3669 = vld [vmem:[#allocation9 + $0x170] sm:$0xff]
    %v3670 = vld [vmem:[#allocation9 + $0x178] sm:$0xff]
    %v3671 = vld [vmem:[#allocation9 + $0x180] sm:$0xff]
    %v3672 = vld [vmem:[#allocation9 + $0x188] sm:$0xff]
    %v3673 = vld [vmem:[#allocation9 + $0x190] sm:$0xff]
    %v3674 = vld [vmem:[#allocation9 + $0x198] sm:$0xff]
    %v3675 = vld [vmem:[#allocation9 + $0x1a0] sm:$0xff]
    %v3676 = vld [vmem:[#allocation9 + $0x1a8] sm:$0xff]
    %v3677 = vld [vmem:[#allocation9 + $0x1b0] sm:$0xff]
    %v3678 = vld [vmem:[#allocation9 + $0x1b8] sm:$0xff]
    %v3679 = vld [vmem:[#allocation9 + $0x1c0] sm:$0xff]
    %v3680 = vld [vmem:[#allocation9 + $0x1c8] sm:$0xff]
    %v3681 = vld [vmem:[#allocation9 + $0x1d0] sm:$0xff]
    %v3682 = vld [vmem:[#allocation9 + $0x1d8] sm:$0xff]
    %v3683 = vld [vmem:[#allocation9 + $0x1e0] sm:$0xff]
    %v3684 = vld [vmem:[#allocation9 + $0x1e8] sm:$0xff]
    %v3685 = vld [vmem:[#allocation9 + $0x1f0] sm:$0xff]
    %v3686 = vld [vmem:[#allocation9 + $0x1f8] sm:$0xff]
    %v3687 = vld [vmem:[#allocation9 + $0x200] sm:$0xff]
    %v3688 = vld [vmem:[#allocation9 + $0x208] sm:$0xff]
    %v3689 = vld [vmem:[#allocation9 + $0x210] sm:$0xff]
    %v3690 = vld [vmem:[#allocation9 + $0x218] sm:$0xff]
    %v3691 = vld [vmem:[#allocation9 + $0x220] sm:$0xff]
    %v3692 = vld [vmem:[#allocation9 + $0x228] sm:$0xff]
    %v3693 = vld [vmem:[#allocation9 + $0x230] sm:$0xff]
    %v3694 = vld [vmem:[#allocation9 + $0x238] sm:$0xff]
    %v3695 = vld [vmem:[#allocation9 + $0x240] sm:$0xff]
    %v3696 = vld [vmem:[#allocation9 + $0x248] sm:$0xff]
    %v3697 = vld [vmem:[#allocation9 + $0x250] sm:$0xff]
    %v3698 = vld [vmem:[#allocation9 + $0x258] sm:$0xff]
    %v3699 = vld [vmem:[#allocation9 + $0x260] sm:$0xff]
    %v3700 = vld [vmem:[#allocation9 + $0x268] sm:$0xff]
    %v3701 = vld [vmem:[#allocation9 + $0x270] sm:$0xff]
    %v3702 = vld [vmem:[#allocation9 + $0x278] sm:$0xff]
    %v3703 = vld [vmem:[#allocation9 + $0x280] sm:$0xff]
    %v3704 = vld [vmem:[#allocation9 + $0x288] sm:$0xff]
    %v3705 = vld [vmem:[#allocation9 + $0x290] sm:$0xff]
    %v3706 = vld [vmem:[#allocation9 + $0x298] sm:$0xff]
    %v3707 = vld [vmem:[#allocation9 + $0x2a0] sm:$0xff]
    %v3708 = vld [vmem:[#allocation9 + $0x2a8] sm:$0xff]
    %v3709 = vld [vmem:[#allocation9 + $0x2b0] sm:$0xff]
    %v3710 = vld [vmem:[#allocation9 + $0x2b8] sm:$0xff]
    %v3711 = vld [vmem:[#allocation9 + $0x2c0] sm:$0xff]
    %v3712 = vld [vmem:[#allocation9 + $0x2c8] sm:$0xff]
    %v3713 = vld [vmem:[#allocation9 + $0x2d0] sm:$0xff]
    %v3714 = vld [vmem:[#allocation9 + $0x2d8] sm:$0xff]
    %v3715 = vld [vmem:[#allocation9 + $0x2e0] sm:$0xff]
    %v3716 = vld [vmem:[#allocation9 + $0x2e8] sm:$0xff]
    %v3717 = vld [vmem:[#allocation9 + $0x2f0] sm:$0xff]
    %v3718 = vld [vmem:[#allocation9 + $0x2f8] sm:$0xff]
    %v3719 = vld [vmem:[#allocation10] sm:$0xf]
    %v3721 = vlaneseq
    %v3722 = vshrl.u32 %v3721, 7
    %v3723 = vsub.s32 0, %v3722
    %v3724 = vrot.slane %v3719, %v3723
    %v3725 = vlaneseq
    %v3726 = vshrl.u32 %v3725, 7
    %v3727 = vsub.s32 1, %v3726
    %v3728 = vrot.slane %v3719, %v3727
    %v3729 = vlaneseq
    %v3730 = vshrl.u32 %v3729, 7
    %v3731 = vsub.s32 2, %v3730
    %v3732 = vrot.slane %v3719, %v3731
    %v3733 = vlaneseq
    %v3734 = vshrl.u32 %v3733, 7
    %v3735 = vsub.s32 3, %v3734
    %v3736 = vrot.slane %v3719, %v3735
    %v3837 = vunpack.c.l.b16 %v3623
    %v3838 = vunpack.c.h.b16 %v3623
    %v3839 = vunpack.c.l.b16 %v3624
    %v3840 = vunpack.c.h.b16 %v3624
    %v3841 = vunpack.c.l.b16 %v3625
    %v3842 = vunpack.c.h.b16 %v3625
    %v3843 = vunpack.c.l.b16 %v3626
    %v3844 = vunpack.c.h.b16 %v3626
    %v3845 = vunpack.c.l.b16 %v3627
    %v3846 = vunpack.c.h.b16 %v3627
    %v3847 = vunpack.c.l.b16 %v3628
    %v3848 = vunpack.c.h.b16 %v3628
    %v3849 = vunpack.c.l.b16 %v3629
    %v3850 = vunpack.c.h.b16 %v3629
    %v3851 = vunpack.c.l.b16 %v3630
    %v3852 = vunpack.c.h.b16 %v3630
    %v3853 = vunpack.c.l.b16 %v3631
    %v3854 = vunpack.c.h.b16 %v3631
    %v3855 = vunpack.c.l.b16 %v3632
    %v3856 = vunpack.c.h.b16 %v3632
    %v3857 = vunpack.c.l.b16 %v3633
    %v3858 = vunpack.c.h.b16 %v3633
    %v3859 = vunpack.c.l.b16 %v3634
    %v3860 = vunpack.c.h.b16 %v3634
    %v3861 = vunpack.c.l.b16 %v3635
    %v3862 = vunpack.c.h.b16 %v3635
    %v3863 = vunpack.c.l.b16 %v3636
    %v3864 = vunpack.c.h.b16 %v3636
    %v3865 = vunpack.c.l.b16 %v3637
    %v3866 = vunpack.c.h.b16 %v3637
    %v3867 = vunpack.c.l.b16 %v3638
    %v3868 = vunpack.c.h.b16 %v3638
    %v3869 = vunpack.c.l.b16 %v3639
    %v3870 = vunpack.c.h.b16 %v3639
    %v3871 = vunpack.c.l.b16 %v3640
    %v3872 = vunpack.c.h.b16 %v3640
    %v3873 = vunpack.c.l.b16 %v3641
    %v3874 = vunpack.c.h.b16 %v3641
    %v3875 = vunpack.c.l.b16 %v3642
    %v3876 = vunpack.c.h.b16 %v3642
    %v3877 = vunpack.c.l.b16 %v3643
    %v3878 = vunpack.c.h.b16 %v3643
    %v3879 = vunpack.c.l.b16 %v3644
    %v3880 = vunpack.c.h.b16 %v3644
    %v3881 = vunpack.c.l.b16 %v3645
    %v3882 = vunpack.c.h.b16 %v3645
    %v3883 = vunpack.c.l.b16 %v3646
    %v3884 = vunpack.c.h.b16 %v3646
    %v3885 = vunpack.c.l.b16 %v3647
    %v3886 = vunpack.c.h.b16 %v3647
    %v3887 = vunpack.c.l.b16 %v3648
    %v3888 = vunpack.c.h.b16 %v3648
    %v3889 = vunpack.c.l.b16 %v3649
    %v3890 = vunpack.c.h.b16 %v3649
    %v3891 = vunpack.c.l.b16 %v3650
    %v3892 = vunpack.c.h.b16 %v3650
    %v3893 = vunpack.c.l.b16 %v3651
    %v3894 = vunpack.c.h.b16 %v3651
    %v3895 = vunpack.c.l.b16 %v3652
    %v3896 = vunpack.c.h.b16 %v3652
    %v3897 = vunpack.c.l.b16 %v3653
    %v3898 = vunpack.c.h.b16 %v3653
    %v3899 = vunpack.c.l.b16 %v3654
    %v3900 = vunpack.c.h.b16 %v3654
    %v3901 = vunpack.c.l.b16 %v3655
    %v3902 = vunpack.c.h.b16 %v3655
    %v3903 = vunpack.c.l.b16 %v3656
    %v3904 = vunpack.c.h.b16 %v3656
    %v3905 = vunpack.c.l.b16 %v3657
    %v3906 = vunpack.c.h.b16 %v3657
    %v3907 = vunpack.c.l.b16 %v3658
    %v3908 = vunpack.c.h.b16 %v3658
    %v3909 = vunpack.c.l.b16 %v3659
    %v3910 = vunpack.c.h.b16 %v3659
    %v3911 = vunpack.c.l.b16 %v3660
    %v3912 = vunpack.c.h.b16 %v3660
    %v3913 = vunpack.c.l.b16 %v3661
    %v3914 = vunpack.c.h.b16 %v3661
    %v3915 = vunpack.c.l.b16 %v3662
    %v3916 = vunpack.c.h.b16 %v3662
    %v3917 = vunpack.c.l.b16 %v3663
    %v3918 = vunpack.c.h.b16 %v3663
    %v3919 = vunpack.c.l.b16 %v3664
    %v3920 = vunpack.c.h.b16 %v3664
    %v3921 = vunpack.c.l.b16 %v3665
    %v3922 = vunpack.c.h.b16 %v3665
    %v3923 = vunpack.c.l.b16 %v3666
    %v3924 = vunpack.c.h.b16 %v3666
    %v3925 = vunpack.c.l.b16 %v3667
    %v3926 = vunpack.c.h.b16 %v3667
    %v3927 = vunpack.c.l.b16 %v3668
    %v3928 = vunpack.c.h.b16 %v3668
    %v3929 = vunpack.c.l.b16 %v3669
    %v3930 = vunpack.c.h.b16 %v3669
    %v3931 = vunpack.c.l.b16 %v3670
    %v3932 = vunpack.c.h.b16 %v3670
    %v3933 = vunpack.c.l.b16 %v3671
    %v3934 = vunpack.c.h.b16 %v3671
    %v3935 = vunpack.c.l.b16 %v3672
    %v3936 = vunpack.c.h.b16 %v3672
    %v3937 = vunpack.c.l.b16 %v3673
    %v3938 = vunpack.c.h.b16 %v3673
    %v3939 = vunpack.c.l.b16 %v3674
    %v3940 = vunpack.c.h.b16 %v3674
    %v3941 = vunpack.c.l.b16 %v3675
    %v3942 = vunpack.c.h.b16 %v3675
    %v3943 = vunpack.c.l.b16 %v3676
    %v3944 = vunpack.c.h.b16 %v3676
    %v3945 = vunpack.c.l.b16 %v3677
    %v3946 = vunpack.c.h.b16 %v3677
    %v3947 = vunpack.c.l.b16 %v3678
    %v3948 = vunpack.c.h.b16 %v3678
    %v3949 = vunpack.c.l.b16 %v3679
    %v3950 = vunpack.c.h.b16 %v3679
    %v3951 = vunpack.c.l.b16 %v3680
    %v3952 = vunpack.c.h.b16 %v3680
    %v3953 = vunpack.c.l.b16 %v3681
    %v3954 = vunpack.c.h.b16 %v3681
    %v3955 = vunpack.c.l.b16 %v3682
    %v3956 = vunpack.c.h.b16 %v3682
    %v3957 = vunpack.c.l.b16 %v3683
    %v3958 = vunpack.c.h.b16 %v3683
    %v3959 = vunpack.c.l.b16 %v3684
    %v3960 = vunpack.c.h.b16 %v3684
    %v3961 = vunpack.c.l.b16 %v3685
    %v3962 = vunpack.c.h.b16 %v3685
    %v3963 = vunpack.c.l.b16 %v3686
    %v3964 = vunpack.c.h.b16 %v3686
    %v3965 = vunpack.c.l.b16 %v3687
    %v3966 = vunpack.c.h.b16 %v3687
    %v3967 = vunpack.c.l.b16 %v3688
    %v3968 = vunpack.c.h.b16 %v3688
    %v3969 = vunpack.c.l.b16 %v3689
    %v3970 = vunpack.c.h.b16 %v3689
    %v3971 = vunpack.c.l.b16 %v3690
    %v3972 = vunpack.c.h.b16 %v3690
    %v3973 = vunpack.c.l.b16 %v3691
    %v3974 = vunpack.c.h.b16 %v3691
    %v3975 = vunpack.c.l.b16 %v3692
    %v3976 = vunpack.c.h.b16 %v3692
    %v3977 = vunpack.c.l.b16 %v3693
    %v3978 = vunpack.c.h.b16 %v3693
    %v3979 = vunpack.c.l.b16 %v3694
    %v3980 = vunpack.c.h.b16 %v3694
    %v3981 = vunpack.c.l.b16 %v3695
    %v3982 = vunpack.c.h.b16 %v3695
    %v3983 = vunpack.c.l.b16 %v3696
    %v3984 = vunpack.c.h.b16 %v3696
    %v3985 = vunpack.c.l.b16 %v3697
    %v3986 = vunpack.c.h.b16 %v3697
    %v3987 = vunpack.c.l.b16 %v3698
    %v3988 = vunpack.c.h.b16 %v3698
    %v3989 = vunpack.c.l.b16 %v3699
    %v3990 = vunpack.c.h.b16 %v3699
    %v3991 = vunpack.c.l.b16 %v3700
    %v3992 = vunpack.c.h.b16 %v3700
    %v3993 = vunpack.c.l.b16 %v3701
    %v3994 = vunpack.c.h.b16 %v3701
    %v3995 = vunpack.c.l.b16 %v3702
    %v3996 = vunpack.c.h.b16 %v3702
    %v3997 = vunpack.c.l.b16 %v3703
    %v3998 = vunpack.c.h.b16 %v3703
    %v3999 = vunpack.c.l.b16 %v3704
    %v4000 = vunpack.c.h.b16 %v3704
    %v4001 = vunpack.c.l.b16 %v3705
    %v4002 = vunpack.c.h.b16 %v3705
    %v4003 = vunpack.c.l.b16 %v3706
    %v4004 = vunpack.c.h.b16 %v3706
    %v4005 = vunpack.c.l.b16 %v3707
    %v4006 = vunpack.c.h.b16 %v3707
    %v4007 = vunpack.c.l.b16 %v3708
    %v4008 = vunpack.c.h.b16 %v3708
    %v4009 = vunpack.c.l.b16 %v3709
    %v4010 = vunpack.c.h.b16 %v3709
    %v4011 = vunpack.c.l.b16 %v3710
    %v4012 = vunpack.c.h.b16 %v3710
    %v4013 = vunpack.c.l.b16 %v3711
    %v4014 = vunpack.c.h.b16 %v3711
    %v4015 = vunpack.c.l.b16 %v3712
    %v4016 = vunpack.c.h.b16 %v3712
    %v4017 = vunpack.c.l.b16 %v3713
    %v4018 = vunpack.c.h.b16 %v3713
    %v4019 = vunpack.c.l.b16 %v3714
    %v4020 = vunpack.c.h.b16 %v3714
    %v4021 = vunpack.c.l.b16 %v3715
    %v4022 = vunpack.c.h.b16 %v3715
    %v4023 = vunpack.c.l.b16 %v3716
    %v4024 = vunpack.c.h.b16 %v3716
    %v4025 = vunpack.c.l.b16 %v3717
    %v4026 = vunpack.c.h.b16 %v3717
    %v4027 = vunpack.c.l.b16 %v3718
    %v4028 = vunpack.c.h.b16 %v3718
    %v4029 = vpack.c.b16 %v3841, %v3837
    %v4030 = vpack.c.b16 %v3842, %v3838
    %v4031 = vpack.c.b16 %v3843, %v3839
    %v4032 = vpack.c.b16 %v3844, %v3840
    %v4033 = vpack.c.b16 %v3849, %v3845
    %v4034 = vpack.c.b16 %v3850, %v3846
    %v4035 = vpack.c.b16 %v3851, %v3847
    %v4036 = vpack.c.b16 %v3852, %v3848
    %v4037 = vpack.c.b16 %v3857, %v3853
    %v4038 = vpack.c.b16 %v3858, %v3854
    %v4039 = vpack.c.b16 %v3859, %v3855
    %v4040 = vpack.c.b16 %v3860, %v3856
    %v4041 = vpack.c.b16 %v3865, %v3861
    %v4042 = vpack.c.b16 %v3866, %v3862
    %v4043 = vpack.c.b16 %v3867, %v3863
    %v4044 = vpack.c.b16 %v3868, %v3864
    %v4045 = vpack.c.b16 %v3873, %v3869
    %v4046 = vpack.c.b16 %v3874, %v3870
    %v4047 = vpack.c.b16 %v3875, %v3871
    %v4048 = vpack.c.b16 %v3876, %v3872
    %v4049 = vpack.c.b16 %v3881, %v3877
    %v4050 = vpack.c.b16 %v3882, %v3878
    %v4051 = vpack.c.b16 %v3883, %v3879
    %v4052 = vpack.c.b16 %v3884, %v3880
    %v4053 = vpack.c.b16 %v3889, %v3885
    %v4054 = vpack.c.b16 %v3890, %v3886
    %v4055 = vpack.c.b16 %v3891, %v3887
    %v4056 = vpack.c.b16 %v3892, %v3888
    %v4057 = vpack.c.b16 %v3897, %v3893
    %v4058 = vpack.c.b16 %v3898, %v3894
    %v4059 = vpack.c.b16 %v3899, %v3895
    %v4060 = vpack.c.b16 %v3900, %v3896
    %v4061 = vpack.c.b16 %v3905, %v3901
    %v4062 = vpack.c.b16 %v3906, %v3902
    %v4063 = vpack.c.b16 %v3907, %v3903
    %v4064 = vpack.c.b16 %v3908, %v3904
    %v4065 = vpack.c.b16 %v3913, %v3909
    %v4066 = vpack.c.b16 %v3914, %v3910
    %v4067 = vpack.c.b16 %v3915, %v3911
    %v4068 = vpack.c.b16 %v3916, %v3912
    %v4069 = vpack.c.b16 %v3921, %v3917
    %v4070 = vpack.c.b16 %v3922, %v3918
    %v4071 = vpack.c.b16 %v3923, %v3919
    %v4072 = vpack.c.b16 %v3924, %v3920
    %v4073 = vpack.c.b16 %v3929, %v3925
    %v4074 = vpack.c.b16 %v3930, %v3926
    %v4075 = vpack.c.b16 %v3931, %v3927
    %v4076 = vpack.c.b16 %v3932, %v3928
    %v4077 = vpack.c.b16 %v3937, %v3933
    %v4078 = vpack.c.b16 %v3938, %v3934
    %v4079 = vpack.c.b16 %v3939, %v3935
    %v4080 = vpack.c.b16 %v3940, %v3936
    %v4081 = vpack.c.b16 %v3945, %v3941
    %v4082 = vpack.c.b16 %v3946, %v3942
    %v4083 = vpack.c.b16 %v3947, %v3943
    %v4084 = vpack.c.b16 %v3948, %v3944
    %v4085 = vpack.c.b16 %v3953, %v3949
    %v4086 = vpack.c.b16 %v3954, %v3950
    %v4087 = vpack.c.b16 %v3955, %v3951
    %v4088 = vpack.c.b16 %v3956, %v3952
    %v4089 = vpack.c.b16 %v3961, %v3957
    %v4090 = vpack.c.b16 %v3962, %v3958
    %v4091 = vpack.c.b16 %v3963, %v3959
    %v4092 = vpack.c.b16 %v3964, %v3960
    %v4093 = vpack.c.b16 %v3969, %v3965
    %v4094 = vpack.c.b16 %v3970, %v3966
    %v4095 = vpack.c.b16 %v3971, %v3967
    %v4096 = vpack.c.b16 %v3972, %v3968
    %v4097 = vpack.c.b16 %v3977, %v3973
    %v4098 = vpack.c.b16 %v3978, %v3974
    %v4099 = vpack.c.b16 %v3979, %v3975
    %v4100 = vpack.c.b16 %v3980, %v3976
    %v4101 = vpack.c.b16 %v3985, %v3981
    %v4102 = vpack.c.b16 %v3986, %v3982
    %v4103 = vpack.c.b16 %v3987, %v3983
    %v4104 = vpack.c.b16 %v3988, %v3984
    %v4105 = vpack.c.b16 %v3993, %v3989
    %v4106 = vpack.c.b16 %v3994, %v3990
    %v4107 = vpack.c.b16 %v3995, %v3991
    %v4108 = vpack.c.b16 %v3996, %v3992
    %v4109 = vpack.c.b16 %v4001, %v3997
    %v4110 = vpack.c.b16 %v4002, %v3998
    %v4111 = vpack.c.b16 %v4003, %v3999
    %v4112 = vpack.c.b16 %v4004, %v4000
    %v4113 = vpack.c.b16 %v4009, %v4005
    %v4114 = vpack.c.b16 %v4010, %v4006
    %v4115 = vpack.c.b16 %v4011, %v4007
    %v4116 = vpack.c.b16 %v4012, %v4008
    %v4117 = vpack.c.b16 %v4017, %v4013
    %v4118 = vpack.c.b16 %v4018, %v4014
    %v4119 = vpack.c.b16 %v4019, %v4015
    %v4120 = vpack.c.b16 %v4020, %v4016
    %v4121 = vpack.c.b16 %v4025, %v4021
    %v4122 = vpack.c.b16 %v4026, %v4022
    %v4123 = vpack.c.b16 %v4027, %v4023
    %v4124 = vpack.c.b16 %v4028, %v4024
    %4221 = vmatprep.subr.bf16.mxu0 %v4058
    %4222 = vmatpush1.bf16.msra.mxu0 %v4057
    %4223 = vmatprep.subr.bf16.mxu0 %v4054
    %4224 = vmatpush1.bf16.msra.mxu0 %v4053
    %4225 = vmatprep.subr.bf16.mxu0 %v4050
    %4226 = vmatpush1.bf16.msra.mxu0 %v4049
    %4227 = vmatprep.subr.bf16.mxu0 %v4046
    %4228 = vmatpush1.bf16.msra.mxu0 %v4045
    %4229 = vmatprep.subr.bf16.mxu0 %v4042
    %4230 = vmatpush1.bf16.msra.mxu0 %v4041
    %4231 = vmatprep.subr.bf16.mxu0 %v4038
    %4232 = vmatpush1.bf16.msra.mxu0 %v4037
    %4233 = vmatprep.subr.bf16.mxu0 %v4034
    %4234 = vmatpush1.bf16.msra.mxu0 %v4033
    %4235 = vmatprep.subr.bf16.mxu0 %v4030
    %4236 = vmatpush1.bf16.msra.mxu0 %v4029
    %4237 = vmatprep.subr.bf16.mxu0 %v4090
    %4238 = vmatpush2.bf16.msra.mxu0 %v4089
    %4239 = vmatprep.subr.bf16.mxu0 %v4086
    %4240 = vmatpush2.bf16.msra.mxu0 %v4085
    %4241 = vmatprep.subr.bf16.mxu0 %v4082
    %4242 = vmatpush2.bf16.msra.mxu0 %v4081
    %4243 = vmatprep.subr.bf16.mxu0 %v4078
    %4244 = vmatpush2.bf16.msra.mxu0 %v4077
    %4245 = vmatprep.subr.bf16.mxu0 %v4074
    %4246 = vmatpush2.bf16.msra.mxu0 %v4073
    %4247 = vmatprep.subr.bf16.mxu0 %v4070
    %4248 = vmatpush2.bf16.msra.mxu0 %v4069
    %4249 = vmatprep.subr.bf16.mxu0 %v4066
    %4250 = vmatpush2.bf16.msra.mxu0 %v4065
    %4251 = vmatprep.subr.bf16.mxu0 %v4062
    %4252 = vmatpush2.bf16.msra.mxu0 %v4061
    %4253 = vmatprep.mubr.bf16.mxu0 %v3621
    %4254 = vmatmul.mubr.bf16.gmra.mxu0 %v3620
    %v4255 = vpop.f32.mrf.mxu0
    %v4256 = vadd.f32 %v3724, %v4255
    %v4257 = vpop.f32.mrf.mxu0
    %v4258 = vadd.f32 %v3728, %v4257
    %v4259 = vpop.f32.mrf.mxu0
    %v4260 = vpop.f32.mrf.mxu0
    %4261 = vdwg.mxu0
    %4262 = vmatprep.subr.bf16.mxu0 %v4122
    %4263 = vmatpush1.bf16.msra.mxu0 %v4121
    %4264 = vmatprep.subr.bf16.mxu0 %v4118
    %4265 = vmatpush1.bf16.msra.mxu0 %v4117
    %4266 = vmatprep.subr.bf16.mxu0 %v4114
    %4267 = vmatpush1.bf16.msra.mxu0 %v4113
    %4268 = vmatprep.subr.bf16.mxu0 %v4110
    %4269 = vmatpush1.bf16.msra.mxu0 %v4109
    %4270 = vmatprep.subr.bf16.mxu0 %v4106
    %4271 = vmatpush1.bf16.msra.mxu0 %v4105
    %4272 = vmatprep.subr.bf16.mxu0 %v4102
    %4273 = vmatpush1.bf16.msra.mxu0 %v4101
    %4274 = vmatprep.subr.bf16.mxu0 %v4098
    %4275 = vmatpush1.bf16.msra.mxu0 %v4097
    %4276 = vmatprep.subr.bf16.mxu0 %v4094
    %4277 = vmatpush1.bf16.msra.mxu0 %v4093
    %4278 = vmatprep.subr.bf16.mxu0 0
    %4279 = vmatpush2.bf16.msra.mxu0 0
    %4280 = vmatprep.subr.bf16.mxu0 0
    %4281 = vmatpush2.bf16.msra.mxu0 0
    %4282 = vmatprep.subr.bf16.mxu0 0
    %4283 = vmatpush2.bf16.msra.mxu0 0
    %4284 = vmatprep.subr.bf16.mxu0 0
    %4285 = vmatpush2.bf16.msra.mxu0 0
    %4286 = vmatprep.subr.bf16.mxu0 0
    %4287 = vmatpush2.bf16.msra.mxu0 0
    %4288 = vmatprep.subr.bf16.mxu0 0
    %4289 = vmatpush2.bf16.msra.mxu0 0
    %4290 = vmatprep.subr.bf16.mxu0 0
    %4291 = vmatpush2.bf16.msra.mxu0 0
    %4292 = vmatprep.subr.bf16.mxu0 0
    %4293 = vmatpush2.bf16.msra.mxu0 0
    %4294 = vmatprep.mubr.bf16.mxu0 0
    %4295 = vmatmul.mubr.bf16.gmra.mxu0 %v3622
    %v4296 = vpop.f32.mrf.mxu0
    %v4297 = vadd.f32 %v4256, %v4296
    %v4298 = vpop.f32.mrf.mxu0
    %v4299 = vadd.f32 %v4258, %v4298
    %v4300 = vpop.f32.mrf.mxu0
    %v4301 = vpop.f32.mrf.mxu0
    %4302 = vdwg.mxu0
    %4303 = vmatprep.subr.bf16.mxu0 %v4060
    %4304 = vmatpush1.bf16.msra.mxu0 %v4059
    %4305 = vmatprep.subr.bf16.mxu0 %v4056
    %4306 = vmatpush1.bf16.msra.mxu0 %v4055
    %4307 = vmatprep.subr.bf16.mxu0 %v4052
    %4308 = vmatpush1.bf16.msra.mxu0 %v4051
    %4309 = vmatprep.subr.bf16.mxu0 %v4048
    %4310 = vmatpush1.bf16.msra.mxu0 %v4047
    %4311 = vmatprep.subr.bf16.mxu0 %v4044
    %4312 = vmatpush1.bf16.msra.mxu0 %v4043
    %4313 = vmatprep.subr.bf16.mxu0 %v4040
    %4314 = vmatpush1.bf16.msra.mxu0 %v4039
    %4315 = vmatprep.subr.bf16.mxu0 %v4036
    %4316 = vmatpush1.bf16.msra.mxu0 %v4035
    %4317 = vmatprep.subr.bf16.mxu0 %v4032
    %4318 = vmatpush1.bf16.msra.mxu0 %v4031
    %4319 = vmatprep.subr.bf16.mxu0 %v4092
    %4320 = vmatpush2.bf16.msra.mxu0 %v4091
    %4321 = vmatprep.subr.bf16.mxu0 %v4088
    %4322 = vmatpush2.bf16.msra.mxu0 %v4087
    %4323 = vmatprep.subr.bf16.mxu0 %v4084
    %4324 = vmatpush2.bf16.msra.mxu0 %v4083
    %4325 = vmatprep.subr.bf16.mxu0 %v4080
    %4326 = vmatpush2.bf16.msra.mxu0 %v4079
    %4327 = vmatprep.subr.bf16.mxu0 %v4076
    %4328 = vmatpush2.bf16.msra.mxu0 %v4075
    %4329 = vmatprep.subr.bf16.mxu0 %v4072
    %4330 = vmatpush2.bf16.msra.mxu0 %v4071
    %4331 = vmatprep.subr.bf16.mxu0 %v4068
    %4332 = vmatpush2.bf16.msra.mxu0 %v4067
    %4333 = vmatprep.subr.bf16.mxu0 %v4064
    %4334 = vmatpush2.bf16.msra.mxu0 %v4063
    %4335 = vmatprep.mubr.bf16.mxu0 %v3621
    %4336 = vmatmul.mubr.bf16.gmra.mxu0 %v3620
    %v4337 = vpop.f32.mrf.mxu0
    %v4338 = vadd.f32 %v3732, %v4337
    %v4339 = vpop.f32.mrf.mxu0
    %v4340 = vadd.f32 %v3736, %v4339
    %v4341 = vpop.f32.mrf.mxu0
    %v4342 = vpop.f32.mrf.mxu0
    %4343 = vdwg.mxu0
    %4344 = vmatprep.subr.bf16.mxu0 %v4124
    %4345 = vmatpush1.bf16.msra.mxu0 %v4123
    %4346 = vmatprep.subr.bf16.mxu0 %v4120
    %4347 = vmatpush1.bf16.msra.mxu0 %v4119
    %4348 = vmatprep.subr.bf16.mxu0 %v4116
    %4349 = vmatpush1.bf16.msra.mxu0 %v4115
    %4350 = vmatprep.subr.bf16.mxu0 %v4112
    %4351 = vmatpush1.bf16.msra.mxu0 %v4111
    %4352 = vmatprep.subr.bf16.mxu0 %v4108
    %4353 = vmatpush1.bf16.msra.mxu0 %v4107
    %4354 = vmatprep.subr.bf16.mxu0 %v4104
    %4355 = vmatpush1.bf16.msra.mxu0 %v4103
    %4356 = vmatprep.subr.bf16.mxu0 %v4100
    %4357 = vmatpush1.bf16.msra.mxu0 %v4099
    %4358 = vmatprep.subr.bf16.mxu0 %v4096
    %4359 = vmatpush1.bf16.msra.mxu0 %v4095
    %4360 = vmatprep.subr.bf16.mxu0 0
    %4361 = vmatpush2.bf16.msra.mxu0 0
    %4362 = vmatprep.subr.bf16.mxu0 0
    %4363 = vmatpush2.bf16.msra.mxu0 0
    %4364 = vmatprep.subr.bf16.mxu0 0
    %4365 = vmatpush2.bf16.msra.mxu0 0
    %4366 = vmatprep.subr.bf16.mxu0 0
    %4367 = vmatpush2.bf16.msra.mxu0 0
    %4368 = vmatprep.subr.bf16.mxu0 0
    %4369 = vmatpush2.bf16.msra.mxu0 0
    %4370 = vmatprep.subr.bf16.mxu0 0
    %4371 = vmatpush2.bf16.msra.mxu0 0
    %4372 = vmatprep.subr.bf16.mxu0 0
    %4373 = vmatpush2.bf16.msra.mxu0 0
    %4374 = vmatprep.subr.bf16.mxu0 0
    %4375 = vmatpush2.bf16.msra.mxu0 0
    %4376 = vmatprep.mubr.bf16.mxu0 0
    %4377 = vmatmul.mubr.bf16.gmra.mxu0 %v3622
    %v4378 = vpop.f32.mrf.mxu0
    %v4379 = vadd.f32 %v4338, %v4378
    %v4380 = vpop.f32.mrf.mxu0
    %v4381 = vadd.f32 %v4340, %v4380
    %v4382 = vpop.f32.mrf.mxu0
    %v4383 = vpop.f32.mrf.mxu0
    %4384 = vdwg.mxu0
    %v4385 = vmax.f32 %v4297, 0.0
    %v4386 = vmax.f32 %v4299, 0.0
    %v4387 = vmax.f32 %v4379, 0.0
    %v4388 = vmax.f32 %v4381, 0.0
    %v4393 = vcombine.low %v4385, %v4386
    %v4394 = vcombine.low %v4387, %v4388
    %v4396 = vunpack.c.l.s4 1983009808
    %v4397 = vunpack.c.0.s8 %v4396
    %v4398 = vlaneseq
    %v4399 = vshrl.u32 %v4398, 7
    %v4400 = vsub.s32 %v4397, %v4399
    %v4401 = vrot.slane %v4393, %v4400
    %v4403 = vunpack.c.l.s4 1983009808
    %v4404 = vunpack.c.0.s8 %v4403
    %v4405 = vlaneseq
    %v4406 = vshrl.u32 %v4405, 7
    %v4407 = vsub.s32 %v4404, %v4406
    %v4408 = vrot.slane %v4394, %v4407
    %v4409 = vcombine.low %v4401, %v4408
    %4411 = vst [vmem:[%s15] sm:$0xff] %v4409
    %v4412 = vld [vmem:[%s1] sm:$0xf]
    %v4413 = vmul.f32 %v4387, 0.5
    %v4414 = vmul.f32 %v4388, 0.5
    %v4415 = vmul.f32 %v4413, 1.442695
    %v4416 = vpow.pop %v4415
    %v4417 = vmul.f32 %v4414, 1.442695
    %v4418 = vpow.pop %v4417
    %v4421 = vcombine.low %v4416, %v4418
    %v4423 = vunpack.c.l.s4 1983009808
    %v4424 = vunpack.c.0.s8 %v4423
    %v4425 = vlaneseq
    %v4426 = vshrl.u32 %v4425, 7
    %v4427 = vsub.s32 %v4424, %v4426
    %v4428 = vrot.slane %v4421, %v4427
    %v4430 = vmul.f32 %v4412, %v4428
    %v4432 = vadd.f32 %v4430, %v4401
    %v4435 = vunpack.c.l.s4 1983009808
    %v4436 = vunpack.c.0.s8 %v4435
    %v4437 = vlaneseq
    %v4438 = vshrl.u32 %v4437, 7
    %v4439 = vsub.s32 %v4436, %v4438
    %v4440 = vrot.slane %v4432, %v4439
    %v4441 = vcombine.high %v4440, %v4440
    %v4444 = vpack.c.bf16 %v4440, %v4440
    %v4445 = vpack.c.bf16 %v4441, %v4441
    %v4446 = vld [vmem:[#allocation12] sm:$0xff]
    %v4447 = vld [vmem:[#allocation12 + $0x8] sm:$0xf]
    %v4448 = vld [vmem:[#allocation12 + $0xc] sm:$0xff]
    %v4449 = vld [vmem:[#allocation12 + $0x14] sm:$0xf]
    %v4450 = vld [vmem:[#allocation12 + $0x18] sm:$0xff]
    %v4451 = vld [vmem:[#allocation12 + $0x20] sm:$0xf]
    %v4452 = vld [vmem:[#allocation12 + $0x24] sm:$0xff]
    %v4453 = vld [vmem:[#allocation12 + $0x2c] sm:$0xf]
    %v4454 = vld [vmem:[#allocation12 + $0x30] sm:$0xff]
    %v4455 = vld [vmem:[#allocation12 + $0x38] sm:$0xf]
    %v4456 = vld [vmem:[#allocation12 + $0x3c] sm:$0xff]
    %v4457 = vld [vmem:[#allocation12 + $0x44] sm:$0xf]
    %v4458 = vld [vmem:[#allocation12 + $0x48] sm:$0xff]
    %v4459 = vld [vmem:[#allocation12 + $0x50] sm:$0xf]
    %v4460 = vld [vmem:[#allocation12 + $0x54] sm:$0xff]
    %v4461 = vld [vmem:[#allocation12 + $0x5c] sm:$0xf]
    %v4462 = vld [vmem:[#allocation12 + $0x60] sm:$0xff]
    %v4463 = vld [vmem:[#allocation12 + $0x68] sm:$0xf]
    %v4464 = vld [vmem:[#allocation12 + $0x6c] sm:$0xff]
    %v4465 = vld [vmem:[#allocation12 + $0x74] sm:$0xf]
    %v4466 = vld [vmem:[#allocation12 + $0x78] sm:$0xff]
    %v4467 = vld [vmem:[#allocation12 + $0x80] sm:$0xf]
    %v4468 = vld [vmem:[#allocation12 + $0x84] sm:$0xff]
    %v4469 = vld [vmem:[#allocation12 + $0x8c] sm:$0xf]
    %v4470 = vld [vmem:[#allocation12 + $0x90] sm:$0xff]
    %v4471 = vld [vmem:[#allocation12 + $0x98] sm:$0xf]
    %v4472 = vld [vmem:[#allocation12 + $0x9c] sm:$0xff]
    %v4473 = vld [vmem:[#allocation12 + $0xa4] sm:$0xf]
    %v4474 = vld [vmem:[#allocation12 + $0xa8] sm:$0xff]
    %v4475 = vld [vmem:[#allocation12 + $0xb0] sm:$0xf]
    %v4476 = vld [vmem:[#allocation12 + $0xb4] sm:$0xff]
    %v4477 = vld [vmem:[#allocation12 + $0xbc] sm:$0xf]
    %v4478 = vld [vmem:[#allocation12 + $0xc0] sm:$0xff]
    %v4479 = vld [vmem:[#allocation12 + $0xc8] sm:$0xf]
    %v4480 = vld [vmem:[#allocation12 + $0xcc] sm:$0xff]
    %v4481 = vld [vmem:[#allocation12 + $0xd4] sm:$0xf]
    %v4482 = vld [vmem:[#allocation12 + $0xd8] sm:$0xff]
    %v4483 = vld [vmem:[#allocation12 + $0xe0] sm:$0xf]
    %v4484 = vld [vmem:[#allocation12 + $0xe4] sm:$0xff]
    %v4485 = vld [vmem:[#allocation12 + $0xec] sm:$0xf]
    %v4486 = vld [vmem:[#allocation12 + $0xf0] sm:$0xff]
    %v4487 = vld [vmem:[#allocation12 + $0xf8] sm:$0xf]
    %v4488 = vld [vmem:[#allocation12 + $0xfc] sm:$0xff]
    %v4489 = vld [vmem:[#allocation12 + $0x104] sm:$0xf]
    %v4490 = vld [vmem:[#allocation12 + $0x108] sm:$0xff]
    %v4491 = vld [vmem:[#allocation12 + $0x110] sm:$0xf]
    %v4492 = vld [vmem:[#allocation12 + $0x114] sm:$0xff]
    %v4493 = vld [vmem:[#allocation12 + $0x11c] sm:$0xf]
    %v4494 = vld [vmem:[#allocation12 + $0x120] sm:$0xff]
    %v4495 = vld [vmem:[#allocation12 + $0x128] sm:$0xf]
    %v4496 = vld [vmem:[#allocation12 + $0x12c] sm:$0xff]
    %v4497 = vld [vmem:[#allocation12 + $0x134] sm:$0xf]
    %v4498 = vld [vmem:[#allocation12 + $0x138] sm:$0xff]
    %v4499 = vld [vmem:[#allocation12 + $0x140] sm:$0xf]
    %v4500 = vld [vmem:[#allocation12 + $0x144] sm:$0xff]
    %v4501 = vld [vmem:[#allocation12 + $0x14c] sm:$0xf]
    %v4502 = vld [vmem:[#allocation12 + $0x150] sm:$0xff]
    %v4503 = vld [vmem:[#allocation12 + $0x158] sm:$0xf]
    %v4504 = vld [vmem:[#allocation12 + $0x15c] sm:$0xff]
    %v4505 = vld [vmem:[#allocation12 + $0x164] sm:$0xf]
    %v4506 = vld [vmem:[#allocation12 + $0x168] sm:$0xff]
    %v4507 = vld [vmem:[#allocation12 + $0x170] sm:$0xf]
    %v4508 = vld [vmem:[#allocation12 + $0x174] sm:$0xff]
    %v4509 = vld [vmem:[#allocation12 + $0x17c] sm:$0xf]
    %v4510 = vld [vmem:[#allocation13] sm:$0x7]
    %v4512 = vlaneseq
    %v4513 = vshrl.u32 %v4512, 7
    %v4514 = vsub.s32 0, %v4513
    %v4515 = vrot.slane %v4510, %v4514
    %v4516 = vlaneseq
    %v4517 = vshrl.u32 %v4516, 7
    %v4518 = vsub.s32 1, %v4517
    %v4519 = vrot.slane %v4510, %v4518
    %v4520 = vlaneseq
    %v4521 = vshrl.u32 %v4520, 7
    %v4522 = vsub.s32 2, %v4521
    %v4523 = vrot.slane %v4510, %v4522
    %v4591 = vunpack.c.l.b16 %v4446
    %v4592 = vunpack.c.h.b16 %v4446
    %v4593 = vunpack.c.l.b16 %v4447
    %v4594 = vunpack.c.l.b16 %v4448
    %v4595 = vunpack.c.h.b16 %v4448
    %v4596 = vunpack.c.l.b16 %v4449
    %v4597 = vunpack.c.l.b16 %v4450
    %v4598 = vunpack.c.h.b16 %v4450
    %v4599 = vunpack.c.l.b16 %v4451
    %v4600 = vunpack.c.l.b16 %v4452
    %v4601 = vunpack.c.h.b16 %v4452
    %v4602 = vunpack.c.l.b16 %v4453
    %v4603 = vunpack.c.l.b16 %v4454
    %v4604 = vunpack.c.h.b16 %v4454
    %v4605 = vunpack.c.l.b16 %v4455
    %v4606 = vunpack.c.l.b16 %v4456
    %v4607 = vunpack.c.h.b16 %v4456
    %v4608 = vunpack.c.l.b16 %v4457
    %v4609 = vunpack.c.l.b16 %v4458
    %v4610 = vunpack.c.h.b16 %v4458
    %v4611 = vunpack.c.l.b16 %v4459
    %v4612 = vunpack.c.l.b16 %v4460
    %v4613 = vunpack.c.h.b16 %v4460
    %v4614 = vunpack.c.l.b16 %v4461
    %v4615 = vunpack.c.l.b16 %v4462
    %v4616 = vunpack.c.h.b16 %v4462
    %v4617 = vunpack.c.l.b16 %v4463
    %v4618 = vunpack.c.l.b16 %v4464
    %v4619 = vunpack.c.h.b16 %v4464
    %v4620 = vunpack.c.l.b16 %v4465
    %v4621 = vunpack.c.l.b16 %v4466
    %v4622 = vunpack.c.h.b16 %v4466
    %v4623 = vunpack.c.l.b16 %v4467
    %v4624 = vunpack.c.l.b16 %v4468
    %v4625 = vunpack.c.h.b16 %v4468
    %v4626 = vunpack.c.l.b16 %v4469
    %v4627 = vunpack.c.l.b16 %v4470
    %v4628 = vunpack.c.h.b16 %v4470
    %v4629 = vunpack.c.l.b16 %v4471
    %v4630 = vunpack.c.l.b16 %v4472
    %v4631 = vunpack.c.h.b16 %v4472
    %v4632 = vunpack.c.l.b16 %v4473
    %v4633 = vunpack.c.l.b16 %v4474
    %v4634 = vunpack.c.h.b16 %v4474
    %v4635 = vunpack.c.l.b16 %v4475
    %v4636 = vunpack.c.l.b16 %v4476
    %v4637 = vunpack.c.h.b16 %v4476
    %v4638 = vunpack.c.l.b16 %v4477
    %v4639 = vunpack.c.l.b16 %v4478
    %v4640 = vunpack.c.h.b16 %v4478
    %v4641 = vunpack.c.l.b16 %v4479
    %v4642 = vunpack.c.l.b16 %v4480
    %v4643 = vunpack.c.h.b16 %v4480
    %v4644 = vunpack.c.l.b16 %v4481
    %v4645 = vunpack.c.l.b16 %v4482
    %v4646 = vunpack.c.h.b16 %v4482
    %v4647 = vunpack.c.l.b16 %v4483
    %v4648 = vunpack.c.l.b16 %v4484
    %v4649 = vunpack.c.h.b16 %v4484
    %v4650 = vunpack.c.l.b16 %v4485
    %v4651 = vunpack.c.l.b16 %v4486
    %v4652 = vunpack.c.h.b16 %v4486
    %v4653 = vunpack.c.l.b16 %v4487
    %v4654 = vunpack.c.l.b16 %v4488
    %v4655 = vunpack.c.h.b16 %v4488
    %v4656 = vunpack.c.l.b16 %v4489
    %v4657 = vunpack.c.l.b16 %v4490
    %v4658 = vunpack.c.h.b16 %v4490
    %v4659 = vunpack.c.l.b16 %v4491
    %v4660 = vunpack.c.l.b16 %v4492
    %v4661 = vunpack.c.h.b16 %v4492
    %v4662 = vunpack.c.l.b16 %v4493
    %v4663 = vunpack.c.l.b16 %v4494
    %v4664 = vunpack.c.h.b16 %v4494
    %v4665 = vunpack.c.l.b16 %v4495
    %v4666 = vunpack.c.l.b16 %v4496
    %v4667 = vunpack.c.h.b16 %v4496
    %v4668 = vunpack.c.l.b16 %v4497
    %v4669 = vunpack.c.l.b16 %v4498
    %v4670 = vunpack.c.h.b16 %v4498
    %v4671 = vunpack.c.l.b16 %v4499
    %v4672 = vunpack.c.l.b16 %v4500
    %v4673 = vunpack.c.h.b16 %v4500
    %v4674 = vunpack.c.l.b16 %v4501
    %v4675 = vunpack.c.l.b16 %v4502
    %v4676 = vunpack.c.h.b16 %v4502
    %v4677 = vunpack.c.l.b16 %v4503
    %v4678 = vunpack.c.l.b16 %v4504
    %v4679 = vunpack.c.h.b16 %v4504
    %v4680 = vunpack.c.l.b16 %v4505
    %v4681 = vunpack.c.l.b16 %v4506
    %v4682 = vunpack.c.h.b16 %v4506
    %v4683 = vunpack.c.l.b16 %v4507
    %v4684 = vunpack.c.l.b16 %v4508
    %v4685 = vunpack.c.h.b16 %v4508
    %v4686 = vunpack.c.l.b16 %v4509
    %v4687 = vpack.c.b16 %v4594, %v4591
    %v4688 = vpack.c.b16 %v4595, %v4592
    %v4689 = vpack.c.b16 %v4596, %v4593
    %v4690 = vpack.c.b16 %v4600, %v4597
    %v4691 = vpack.c.b16 %v4601, %v4598
    %v4692 = vpack.c.b16 %v4602, %v4599
    %v4693 = vpack.c.b16 %v4606, %v4603
    %v4694 = vpack.c.b16 %v4607, %v4604
    %v4695 = vpack.c.b16 %v4608, %v4605
    %v4696 = vpack.c.b16 %v4612, %v4609
    %v4697 = vpack.c.b16 %v4613, %v4610
    %v4698 = vpack.c.b16 %v4614, %v4611
    %v4699 = vpack.c.b16 %v4618, %v4615
    %v4700 = vpack.c.b16 %v4619, %v4616
    %v4701 = vpack.c.b16 %v4620, %v4617
    %v4702 = vpack.c.b16 %v4624, %v4621
    %v4703 = vpack.c.b16 %v4625, %v4622
    %v4704 = vpack.c.b16 %v4626, %v4623
    %v4705 = vpack.c.b16 %v4630, %v4627
    %v4706 = vpack.c.b16 %v4631, %v4628
    %v4707 = vpack.c.b16 %v4632, %v4629
    %v4708 = vpack.c.b16 %v4636, %v4633
    %v4709 = vpack.c.b16 %v4637, %v4634
    %v4710 = vpack.c.b16 %v4638, %v4635
    %v4711 = vpack.c.b16 %v4642, %v4639
    %v4712 = vpack.c.b16 %v4643, %v4640
    %v4713 = vpack.c.b16 %v4644, %v4641
    %v4714 = vpack.c.b16 %v4648, %v4645
    %v4715 = vpack.c.b16 %v4649, %v4646
    %v4716 = vpack.c.b16 %v4650, %v4647
    %v4717 = vpack.c.b16 %v4654, %v4651
    %v4718 = vpack.c.b16 %v4655, %v4652
    %v4719 = vpack.c.b16 %v4656, %v4653
    %v4720 = vpack.c.b16 %v4660, %v4657
    %v4721 = vpack.c.b16 %v4661, %v4658
    %v4722 = vpack.c.b16 %v4662, %v4659
    %v4723 = vpack.c.b16 %v4666, %v4663
    %v4724 = vpack.c.b16 %v4667, %v4664
    %v4725 = vpack.c.b16 %v4668, %v4665
    %v4726 = vpack.c.b16 %v4672, %v4669
    %v4727 = vpack.c.b16 %v4673, %v4670
    %v4728 = vpack.c.b16 %v4674, %v4671
    %v4729 = vpack.c.b16 %v4678, %v4675
    %v4730 = vpack.c.b16 %v4679, %v4676
    %v4731 = vpack.c.b16 %v4680, %v4677
    %v4732 = vpack.c.b16 %v4684, %v4681
    %v4733 = vpack.c.b16 %v4685, %v4682
    %v4734 = vpack.c.b16 %v4686, %v4683
    %4783 = vmatprep.subr.bf16.mxu0 %v4709
    %4784 = vmatpush1.bf16.msra.mxu0 %v4708
    %4785 = vmatprep.subr.bf16.mxu0 %v4706
    %4786 = vmatpush1.bf16.msra.mxu0 %v4705
    %4787 = vmatprep.subr.bf16.mxu0 %v4703
    %4788 = vmatpush1.bf16.msra.mxu0 %v4702
    %4789 = vmatprep.subr.bf16.mxu0 %v4700
    %4790 = vmatpush1.bf16.msra.mxu0 %v4699
    %4791 = vmatprep.subr.bf16.mxu0 %v4697
    %4792 = vmatpush1.bf16.msra.mxu0 %v4696
    %4793 = vmatprep.subr.bf16.mxu0 %v4694
    %4794 = vmatpush1.bf16.msra.mxu0 %v4693
    %4795 = vmatprep.subr.bf16.mxu0 %v4691
    %4796 = vmatpush1.bf16.msra.mxu0 %v4690
    %4797 = vmatprep.subr.bf16.mxu0 %v4688
    %4798 = vmatpush1.bf16.msra.mxu0 %v4687
    %4799 = vmatprep.subr.bf16.mxu0 %v4733
    %4800 = vmatpush2.bf16.msra.mxu0 %v4732
    %4801 = vmatprep.subr.bf16.mxu0 %v4730
    %4802 = vmatpush2.bf16.msra.mxu0 %v4729
    %4803 = vmatprep.subr.bf16.mxu0 %v4727
    %4804 = vmatpush2.bf16.msra.mxu0 %v4726
    %4805 = vmatprep.subr.bf16.mxu0 %v4724
    %4806 = vmatpush2.bf16.msra.mxu0 %v4723
    %4807 = vmatprep.subr.bf16.mxu0 %v4721
    %4808 = vmatpush2.bf16.msra.mxu0 %v4720
    %4809 = vmatprep.subr.bf16.mxu0 %v4718
    %4810 = vmatpush2.bf16.msra.mxu0 %v4717
    %4811 = vmatprep.subr.bf16.mxu0 %v4715
    %4812 = vmatpush2.bf16.msra.mxu0 %v4714
    %4813 = vmatprep.subr.bf16.mxu0 %v4712
    %4814 = vmatpush2.bf16.msra.mxu0 %v4711
    %4815 = vmatprep.mubr.bf16.mxu0 %v4445
    %4816 = vmatmul.mubr.bf16.gmra.mxu0 %v4444
    %v4817 = vpop.f32.mrf.mxu0
    %v4818 = vadd.f32 %v4515, %v4817
    %v4819 = vpop.f32.mrf.mxu0
    %v4820 = vadd.f32 %v4519, %v4819
    %v4821 = vpop.f32.mrf.mxu0
    %v4822 = vpop.f32.mrf.mxu0
    %4823 = vdwg.mxu0
    %4824 = vmatprep.subr.bf16.mxu0 0
    %4825 = vmatpush1.bf16.msra.mxu0 %v4710
    %4826 = vmatprep.subr.bf16.mxu0 0
    %4827 = vmatpush1.bf16.msra.mxu0 %v4707
    %4828 = vmatprep.subr.bf16.mxu0 0
    %4829 = vmatpush1.bf16.msra.mxu0 %v4704
    %4830 = vmatprep.subr.bf16.mxu0 0
    %4831 = vmatpush1.bf16.msra.mxu0 %v4701
    %4832 = vmatprep.subr.bf16.mxu0 0
    %4833 = vmatpush1.bf16.msra.mxu0 %v4698
    %4834 = vmatprep.subr.bf16.mxu0 0
    %4835 = vmatpush1.bf16.msra.mxu0 %v4695
    %4836 = vmatprep.subr.bf16.mxu0 0
    %4837 = vmatpush1.bf16.msra.mxu0 %v4692
    %4838 = vmatprep.subr.bf16.mxu0 0
    %4839 = vmatpush1.bf16.msra.mxu0 %v4689
    %4840 = vmatprep.subr.bf16.mxu0 0
    %4841 = vmatpush2.bf16.msra.mxu0 %v4734
    %4842 = vmatprep.subr.bf16.mxu0 0
    %4843 = vmatpush2.bf16.msra.mxu0 %v4731
    %4844 = vmatprep.subr.bf16.mxu0 0
    %4845 = vmatpush2.bf16.msra.mxu0 %v4728
    %4846 = vmatprep.subr.bf16.mxu0 0
    %4847 = vmatpush2.bf16.msra.mxu0 %v4725
    %4848 = vmatprep.subr.bf16.mxu0 0
    %4849 = vmatpush2.bf16.msra.mxu0 %v4722
    %4850 = vmatprep.subr.bf16.mxu0 0
    %4851 = vmatpush2.bf16.msra.mxu0 %v4719
    %4852 = vmatprep.subr.bf16.mxu0 0
    %4853 = vmatpush2.bf16.msra.mxu0 %v4716
    %4854 = vmatprep.subr.bf16.mxu0 0
    %4855 = vmatpush2.bf16.msra.mxu0 %v4713
    %4856 = vmatprep.mubr.bf16.mxu0 %v4445
    %4857 = vmatmul.mubr.bf16.gmra.mxu0 %v4444
    %v4858 = vpop.f32.mrf.mxu0
    %v4859 = vadd.f32 %v4523, %v4858
    %v4860 = vpop.f32.mrf.mxu0
    %v4861 = vpop.f32.mrf.mxu0
    %v4862 = vpop.f32.mrf.mxu0
    %4863 = vdwg.mxu0
    %v4864 = vmax.f32 %v4818, 0.0
    %v4865 = vmax.f32 %v4820, 0.0
    %v4866 = vmax.f32 %v4859, 0.0
    %v4867 = vpack.c.bf16 %v4864, %v4864
    %v4868 = vpack.c.bf16 %v4865, %v4865
    %v4869 = vpack.c.bf16 %v4866, %v4866
    %v4870 = vld [vmem:[#allocation15] sm:$0xff]
    %v4871 = vld [vmem:[#allocation15 + $0x8] sm:$0xff]
    %v4872 = vld [vmem:[#allocation15 + $0x10] sm:$0xff]
    %v4873 = vld [vmem:[#allocation15 + $0x18] sm:$0xff]
    %v4874 = vld [vmem:[#allocation15 + $0x20] sm:$0xff]
    %v4875 = vld [vmem:[#allocation15 + $0x28] sm:$0xff]
    %v4876 = vld [vmem:[#allocation15 + $0x30] sm:$0xff]
    %v4877 = vld [vmem:[#allocation15 + $0x38] sm:$0xff]
    %v4878 = vld [vmem:[#allocation15 + $0x40] sm:$0xff]
    %v4879 = vld [vmem:[#allocation15 + $0x48] sm:$0xff]
    %v4880 = vld [vmem:[#allocation15 + $0x50] sm:$0xff]
    %v4881 = vld [vmem:[#allocation15 + $0x58] sm:$0xff]
    %v4882 = vld [vmem:[#allocation15 + $0x60] sm:$0xff]
    %v4883 = vld [vmem:[#allocation15 + $0x68] sm:$0xff]
    %v4884 = vld [vmem:[#allocation15 + $0x70] sm:$0xff]
    %v4885 = vld [vmem:[#allocation15 + $0x78] sm:$0xff]
    %v4886 = vld [vmem:[#allocation15 + $0x80] sm:$0xff]
    %v4887 = vld [vmem:[#allocation15 + $0x88] sm:$0xff]
    %v4888 = vld [vmem:[#allocation15 + $0x90] sm:$0xff]
    %v4889 = vld [vmem:[#allocation15 + $0x98] sm:$0xff]
    %v4890 = vld [vmem:[#allocation15 + $0xa0] sm:$0xff]
    %v4891 = vld [vmem:[#allocation15 + $0xa8] sm:$0xff]
    %v4892 = vld [vmem:[#allocation15 + $0xb0] sm:$0xff]
    %v4893 = vld [vmem:[#allocation15 + $0xb8] sm:$0xff]
    %v4894 = vld [vmem:[#allocation15 + $0xc0] sm:$0xff]
    %v4895 = vld [vmem:[#allocation15 + $0xc8] sm:$0xff]
    %v4896 = vld [vmem:[#allocation15 + $0xd0] sm:$0xff]
    %v4897 = vld [vmem:[#allocation15 + $0xd8] sm:$0xff]
    %v4898 = vld [vmem:[#allocation15 + $0xe0] sm:$0xff]
    %v4899 = vld [vmem:[#allocation15 + $0xe8] sm:$0xff]
    %v4900 = vld [vmem:[#allocation15 + $0xf0] sm:$0xff]
    %v4901 = vld [vmem:[#allocation15 + $0xf8] sm:$0xff]
    %v4902 = vld [vmem:[#allocation15 + $0x100] sm:$0xff]
    %v4903 = vld [vmem:[#allocation15 + $0x108] sm:$0xff]
    %v4904 = vld [vmem:[#allocation15 + $0x110] sm:$0xff]
    %v4905 = vld [vmem:[#allocation15 + $0x118] sm:$0xff]
    %v4906 = vld [vmem:[#allocation15 + $0x120] sm:$0xff]
    %v4907 = vld [vmem:[#allocation15 + $0x128] sm:$0xff]
    %v4908 = vld [vmem:[#allocation15 + $0x130] sm:$0xff]
    %v4909 = vld [vmem:[#allocation15 + $0x138] sm:$0xff]
    %v4910 = vld [vmem:[#allocation15 + $0x140] sm:$0xff]
    %v4911 = vld [vmem:[#allocation15 + $0x148] sm:$0xff]
    %v4912 = vld [vmem:[#allocation15 + $0x150] sm:$0xff]
    %v4913 = vld [vmem:[#allocation15 + $0x158] sm:$0xff]
    %v4914 = vld [vmem:[#allocation15 + $0x160] sm:$0xff]
    %v4915 = vld [vmem:[#allocation15 + $0x168] sm:$0xff]
    %v4916 = vld [vmem:[#allocation15 + $0x170] sm:$0xff]
    %v4917 = vld [vmem:[#allocation15 + $0x178] sm:$0xff]
    %v4918 = vld [vmem:[#allocation15 + $0x180] sm:$0xff]
    %v4919 = vld [vmem:[#allocation15 + $0x188] sm:$0xff]
    %v4920 = vld [vmem:[#allocation15 + $0x190] sm:$0xff]
    %v4921 = vld [vmem:[#allocation15 + $0x198] sm:$0xff]
    %v4922 = vld [vmem:[#allocation15 + $0x1a0] sm:$0xff]
    %v4923 = vld [vmem:[#allocation15 + $0x1a8] sm:$0xff]
    %v4924 = vld [vmem:[#allocation15 + $0x1b0] sm:$0xff]
    %v4925 = vld [vmem:[#allocation15 + $0x1b8] sm:$0xff]
    %v4926 = vld [vmem:[#allocation15 + $0x1c0] sm:$0xff]
    %v4927 = vld [vmem:[#allocation15 + $0x1c8] sm:$0xff]
    %v4928 = vld [vmem:[#allocation15 + $0x1d0] sm:$0xff]
    %v4929 = vld [vmem:[#allocation15 + $0x1d8] sm:$0xff]
    %v4930 = vld [vmem:[#allocation15 + $0x1e0] sm:$0xff]
    %v4931 = vld [vmem:[#allocation15 + $0x1e8] sm:$0xff]
    %v4932 = vld [vmem:[#allocation15 + $0x1f0] sm:$0xff]
    %v4933 = vld [vmem:[#allocation15 + $0x1f8] sm:$0xff]
    %v4934 = vld [vmem:[#allocation15 + $0x200] sm:$0xff]
    %v4935 = vld [vmem:[#allocation15 + $0x208] sm:$0xff]
    %v4936 = vld [vmem:[#allocation15 + $0x210] sm:$0xff]
    %v4937 = vld [vmem:[#allocation15 + $0x218] sm:$0xff]
    %v4938 = vld [vmem:[#allocation15 + $0x220] sm:$0xff]
    %v4939 = vld [vmem:[#allocation15 + $0x228] sm:$0xff]
    %v4940 = vld [vmem:[#allocation15 + $0x230] sm:$0xff]
    %v4941 = vld [vmem:[#allocation15 + $0x238] sm:$0xff]
    %v4942 = vld [vmem:[#allocation15 + $0x240] sm:$0xff]
    %v4943 = vld [vmem:[#allocation15 + $0x248] sm:$0xff]
    %v4944 = vld [vmem:[#allocation15 + $0x250] sm:$0xff]
    %v4945 = vld [vmem:[#allocation15 + $0x258] sm:$0xff]
    %v4946 = vld [vmem:[#allocation15 + $0x260] sm:$0xff]
    %v4947 = vld [vmem:[#allocation15 + $0x268] sm:$0xff]
    %v4948 = vld [vmem:[#allocation15 + $0x270] sm:$0xff]
    %v4949 = vld [vmem:[#allocation15 + $0x278] sm:$0xff]
    %v4950 = vld [vmem:[#allocation15 + $0x280] sm:$0xff]
    %v4951 = vld [vmem:[#allocation15 + $0x288] sm:$0xff]
    %v4952 = vld [vmem:[#allocation15 + $0x290] sm:$0xff]
    %v4953 = vld [vmem:[#allocation15 + $0x298] sm:$0xff]
    %v4954 = vld [vmem:[#allocation15 + $0x2a0] sm:$0xff]
    %v4955 = vld [vmem:[#allocation15 + $0x2a8] sm:$0xff]
    %v4956 = vld [vmem:[#allocation15 + $0x2b0] sm:$0xff]
    %v4957 = vld [vmem:[#allocation15 + $0x2b8] sm:$0xff]
    %v4958 = vld [vmem:[#allocation15 + $0x2c0] sm:$0xff]
    %v4959 = vld [vmem:[#allocation15 + $0x2c8] sm:$0xff]
    %v4960 = vld [vmem:[#allocation15 + $0x2d0] sm:$0xff]
    %v4961 = vld [vmem:[#allocation15 + $0x2d8] sm:$0xff]
    %v4962 = vld [vmem:[#allocation15 + $0x2e0] sm:$0xff]
    %v4963 = vld [vmem:[#allocation15 + $0x2e8] sm:$0xff]
    %v4964 = vld [vmem:[#allocation15 + $0x2f0] sm:$0xff]
    %v4965 = vld [vmem:[#allocation15 + $0x2f8] sm:$0xff]
    %v4966 = vld [vmem:[#allocation15 + $0x300] sm:$0xff]
    %v4967 = vld [vmem:[#allocation15 + $0x308] sm:$0xff]
    %v4968 = vld [vmem:[#allocation15 + $0x310] sm:$0xff]
    %v4969 = vld [vmem:[#allocation15 + $0x318] sm:$0xff]
    %v4970 = vld [vmem:[#allocation15 + $0x320] sm:$0xff]
    %v4971 = vld [vmem:[#allocation15 + $0x328] sm:$0xff]
    %v4972 = vld [vmem:[#allocation15 + $0x330] sm:$0xff]
    %v4973 = vld [vmem:[#allocation15 + $0x338] sm:$0xff]
    %v4974 = vld [vmem:[#allocation15 + $0x340] sm:$0xff]
    %v4975 = vld [vmem:[#allocation15 + $0x348] sm:$0xff]
    %v4976 = vld [vmem:[#allocation15 + $0x350] sm:$0xff]
    %v4977 = vld [vmem:[#allocation15 + $0x358] sm:$0xff]
    %v4978 = vld [vmem:[#allocation15 + $0x360] sm:$0xff]
    %v4979 = vld [vmem:[#allocation15 + $0x368] sm:$0xff]
    %v4980 = vld [vmem:[#allocation15 + $0x370] sm:$0xff]
    %v4981 = vld [vmem:[#allocation15 + $0x378] sm:$0xff]
    %v4982 = vld [vmem:[#allocation15 + $0x380] sm:$0xff]
    %v4983 = vld [vmem:[#allocation15 + $0x388] sm:$0xff]
    %v4984 = vld [vmem:[#allocation15 + $0x390] sm:$0xff]
    %v4985 = vld [vmem:[#allocation15 + $0x398] sm:$0xff]
    %v4986 = vld [vmem:[#allocation15 + $0x3a0] sm:$0xff]
    %v4987 = vld [vmem:[#allocation15 + $0x3a8] sm:$0xff]
    %v4988 = vld [vmem:[#allocation15 + $0x3b0] sm:$0xff]
    %v4989 = vld [vmem:[#allocation15 + $0x3b8] sm:$0xff]
    %v4990 = vld [vmem:[#allocation15 + $0x3c0] sm:$0xff]
    %v4991 = vld [vmem:[#allocation15 + $0x3c8] sm:$0xff]
    %v4992 = vld [vmem:[#allocation15 + $0x3d0] sm:$0xff]
    %v4993 = vld [vmem:[#allocation15 + $0x3d8] sm:$0xff]
    %v4994 = vld [vmem:[#allocation15 + $0x3e0] sm:$0xff]
    %v4995 = vld [vmem:[#allocation15 + $0x3e8] sm:$0xff]
    %v4996 = vld [vmem:[#allocation15 + $0x3f0] sm:$0xff]
    %v4997 = vld [vmem:[#allocation15 + $0x3f8] sm:$0xff]
    %v4998 = vld [vmem:[#allocation15 + $0x400] sm:$0xff]
    %v4999 = vld [vmem:[#allocation15 + $0x408] sm:$0xff]
    %v5000 = vld [vmem:[#allocation15 + $0x410] sm:$0xff]
    %v5001 = vld [vmem:[#allocation15 + $0x418] sm:$0xff]
    %v5002 = vld [vmem:[#allocation15 + $0x420] sm:$0xff]
    %v5003 = vld [vmem:[#allocation15 + $0x428] sm:$0xff]
    %v5004 = vld [vmem:[#allocation15 + $0x430] sm:$0xff]
    %v5005 = vld [vmem:[#allocation15 + $0x438] sm:$0xff]
    %v5006 = vld [vmem:[#allocation15 + $0x440] sm:$0xff]
    %v5007 = vld [vmem:[#allocation15 + $0x448] sm:$0xff]
    %v5008 = vld [vmem:[#allocation15 + $0x450] sm:$0xff]
    %v5009 = vld [vmem:[#allocation15 + $0x458] sm:$0xff]
    %v5010 = vld [vmem:[#allocation15 + $0x460] sm:$0xff]
    %v5011 = vld [vmem:[#allocation15 + $0x468] sm:$0xff]
    %v5012 = vld [vmem:[#allocation15 + $0x470] sm:$0xff]
    %v5013 = vld [vmem:[#allocation15 + $0x478] sm:$0xff]
    %v5014 = vld [vmem:[#allocation16] sm:$0x3f]
    %v5016 = vlaneseq
    %v5017 = vshrl.u32 %v5016, 7
    %v5018 = vsub.s32 0, %v5017
    %v5019 = vrot.slane %v5014, %v5018
    %v5020 = vlaneseq
    %v5021 = vshrl.u32 %v5020, 7
    %v5022 = vsub.s32 1, %v5021
    %v5023 = vrot.slane %v5014, %v5022
    %v5024 = vlaneseq
    %v5025 = vshrl.u32 %v5024, 7
    %v5026 = vsub.s32 2, %v5025
    %v5027 = vrot.slane %v5014, %v5026
    %v5028 = vlaneseq
    %v5029 = vshrl.u32 %v5028, 7
    %v5030 = vsub.s32 3, %v5029
    %v5031 = vrot.slane %v5014, %v5030
    %v5032 = vlaneseq
    %v5033 = vshrl.u32 %v5032, 7
    %v5034 = vsub.s32 4, %v5033
    %v5035 = vrot.slane %v5014, %v5034
    %v5036 = vlaneseq
    %v5037 = vshrl.u32 %v5036, 7
    %v5038 = vsub.s32 5, %v5037
    %v5039 = vrot.slane %v5014, %v5038
    %v5190 = vunpack.c.l.b16 %v4870
    %v5191 = vunpack.c.h.b16 %v4870
    %v5192 = vunpack.c.l.b16 %v4871
    %v5193 = vunpack.c.h.b16 %v4871
    %v5194 = vunpack.c.l.b16 %v4872
    %v5195 = vunpack.c.h.b16 %v4872
    %v5196 = vunpack.c.l.b16 %v4873
    %v5197 = vunpack.c.h.b16 %v4873
    %v5198 = vunpack.c.l.b16 %v4874
    %v5199 = vunpack.c.h.b16 %v4874
    %v5200 = vunpack.c.l.b16 %v4875
    %v5201 = vunpack.c.h.b16 %v4875
    %v5202 = vunpack.c.l.b16 %v4876
    %v5203 = vunpack.c.h.b16 %v4876
    %v5204 = vunpack.c.l.b16 %v4877
    %v5205 = vunpack.c.h.b16 %v4877
    %v5206 = vunpack.c.l.b16 %v4878
    %v5207 = vunpack.c.h.b16 %v4878
    %v5208 = vunpack.c.l.b16 %v4879
    %v5209 = vunpack.c.h.b16 %v4879
    %v5210 = vunpack.c.l.b16 %v4880
    %v5211 = vunpack.c.h.b16 %v4880
    %v5212 = vunpack.c.l.b16 %v4881
    %v5213 = vunpack.c.h.b16 %v4881
    %v5214 = vunpack.c.l.b16 %v4882
    %v5215 = vunpack.c.h.b16 %v4882
    %v5216 = vunpack.c.l.b16 %v4883
    %v5217 = vunpack.c.h.b16 %v4883
    %v5218 = vunpack.c.l.b16 %v4884
    %v5219 = vunpack.c.h.b16 %v4884
    %v5220 = vunpack.c.l.b16 %v4885
    %v5221 = vunpack.c.h.b16 %v4885
    %v5222 = vunpack.c.l.b16 %v4886
    %v5223 = vunpack.c.h.b16 %v4886
    %v5224 = vunpack.c.l.b16 %v4887
    %v5225 = vunpack.c.h.b16 %v4887
    %v5226 = vunpack.c.l.b16 %v4888
    %v5227 = vunpack.c.h.b16 %v4888
    %v5228 = vunpack.c.l.b16 %v4889
    %v5229 = vunpack.c.h.b16 %v4889
    %v5230 = vunpack.c.l.b16 %v4890
    %v5231 = vunpack.c.h.b16 %v4890
    %v5232 = vunpack.c.l.b16 %v4891
    %v5233 = vunpack.c.h.b16 %v4891
    %v5234 = vunpack.c.l.b16 %v4892
    %v5235 = vunpack.c.h.b16 %v4892
    %v5236 = vunpack.c.l.b16 %v4893
    %v5237 = vunpack.c.h.b16 %v4893
    %v5238 = vunpack.c.l.b16 %v4894
    %v5239 = vunpack.c.h.b16 %v4894
    %v5240 = vunpack.c.l.b16 %v4895
    %v5241 = vunpack.c.h.b16 %v4895
    %v5242 = vunpack.c.l.b16 %v4896
    %v5243 = vunpack.c.h.b16 %v4896
    %v5244 = vunpack.c.l.b16 %v4897
    %v5245 = vunpack.c.h.b16 %v4897
    %v5246 = vunpack.c.l.b16 %v4898
    %v5247 = vunpack.c.h.b16 %v4898
    %v5248 = vunpack.c.l.b16 %v4899
    %v5249 = vunpack.c.h.b16 %v4899
    %v5250 = vunpack.c.l.b16 %v4900
    %v5251 = vunpack.c.h.b16 %v4900
    %v5252 = vunpack.c.l.b16 %v4901
    %v5253 = vunpack.c.h.b16 %v4901
    %v5254 = vunpack.c.l.b16 %v4902
    %v5255 = vunpack.c.h.b16 %v4902
    %v5256 = vunpack.c.l.b16 %v4903
    %v5257 = vunpack.c.h.b16 %v4903
    %v5258 = vunpack.c.l.b16 %v4904
    %v5259 = vunpack.c.h.b16 %v4904
    %v5260 = vunpack.c.l.b16 %v4905
    %v5261 = vunpack.c.h.b16 %v4905
    %v5262 = vunpack.c.l.b16 %v4906
    %v5263 = vunpack.c.h.b16 %v4906
    %v5264 = vunpack.c.l.b16 %v4907
    %v5265 = vunpack.c.h.b16 %v4907
    %v5266 = vunpack.c.l.b16 %v4908
    %v5267 = vunpack.c.h.b16 %v4908
    %v5268 = vunpack.c.l.b16 %v4909
    %v5269 = vunpack.c.h.b16 %v4909
    %v5270 = vunpack.c.l.b16 %v4910
    %v5271 = vunpack.c.h.b16 %v4910
    %v5272 = vunpack.c.l.b16 %v4911
    %v5273 = vunpack.c.h.b16 %v4911
    %v5274 = vunpack.c.l.b16 %v4912
    %v5275 = vunpack.c.h.b16 %v4912
    %v5276 = vunpack.c.l.b16 %v4913
    %v5277 = vunpack.c.h.b16 %v4913
    %v5278 = vunpack.c.l.b16 %v4914
    %v5279 = vunpack.c.h.b16 %v4914
    %v5280 = vunpack.c.l.b16 %v4915
    %v5281 = vunpack.c.h.b16 %v4915
    %v5282 = vunpack.c.l.b16 %v4916
    %v5283 = vunpack.c.h.b16 %v4916
    %v5284 = vunpack.c.l.b16 %v4917
    %v5285 = vunpack.c.h.b16 %v4917
    %v5286 = vunpack.c.l.b16 %v4918
    %v5287 = vunpack.c.h.b16 %v4918
    %v5288 = vunpack.c.l.b16 %v4919
    %v5289 = vunpack.c.h.b16 %v4919
    %v5290 = vunpack.c.l.b16 %v4920
    %v5291 = vunpack.c.h.b16 %v4920
    %v5292 = vunpack.c.l.b16 %v4921
    %v5293 = vunpack.c.h.b16 %v4921
    %v5294 = vunpack.c.l.b16 %v4922
    %v5295 = vunpack.c.h.b16 %v4922
    %v5296 = vunpack.c.l.b16 %v4923
    %v5297 = vunpack.c.h.b16 %v4923
    %v5298 = vunpack.c.l.b16 %v4924
    %v5299 = vunpack.c.h.b16 %v4924
    %v5300 = vunpack.c.l.b16 %v4925
    %v5301 = vunpack.c.h.b16 %v4925
    %v5302 = vunpack.c.l.b16 %v4926
    %v5303 = vunpack.c.h.b16 %v4926
    %v5304 = vunpack.c.l.b16 %v4927
    %v5305 = vunpack.c.h.b16 %v4927
    %v5306 = vunpack.c.l.b16 %v4928
    %v5307 = vunpack.c.h.b16 %v4928
    %v5308 = vunpack.c.l.b16 %v4929
    %v5309 = vunpack.c.h.b16 %v4929
    %v5310 = vunpack.c.l.b16 %v4930
    %v5311 = vunpack.c.h.b16 %v4930
    %v5312 = vunpack.c.l.b16 %v4931
    %v5313 = vunpack.c.h.b16 %v4931
    %v5314 = vunpack.c.l.b16 %v4932
    %v5315 = vunpack.c.h.b16 %v4932
    %v5316 = vunpack.c.l.b16 %v4933
    %v5317 = vunpack.c.h.b16 %v4933
    %v5318 = vunpack.c.l.b16 %v4934
    %v5319 = vunpack.c.h.b16 %v4934
    %v5320 = vunpack.c.l.b16 %v4935
    %v5321 = vunpack.c.h.b16 %v4935
    %v5322 = vunpack.c.l.b16 %v4936
    %v5323 = vunpack.c.h.b16 %v4936
    %v5324 = vunpack.c.l.b16 %v4937
    %v5325 = vunpack.c.h.b16 %v4937
    %v5326 = vunpack.c.l.b16 %v4938
    %v5327 = vunpack.c.h.b16 %v4938
    %v5328 = vunpack.c.l.b16 %v4939
    %v5329 = vunpack.c.h.b16 %v4939
    %v5330 = vunpack.c.l.b16 %v4940
    %v5331 = vunpack.c.h.b16 %v4940
    %v5332 = vunpack.c.l.b16 %v4941
    %v5333 = vunpack.c.h.b16 %v4941
    %v5334 = vunpack.c.l.b16 %v4942
    %v5335 = vunpack.c.h.b16 %v4942
    %v5336 = vunpack.c.l.b16 %v4943
    %v5337 = vunpack.c.h.b16 %v4943
    %v5338 = vunpack.c.l.b16 %v4944
    %v5339 = vunpack.c.h.b16 %v4944
    %v5340 = vunpack.c.l.b16 %v4945
    %v5341 = vunpack.c.h.b16 %v4945
    %v5342 = vunpack.c.l.b16 %v4946
    %v5343 = vunpack.c.h.b16 %v4946
    %v5344 = vunpack.c.l.b16 %v4947
    %v5345 = vunpack.c.h.b16 %v4947
    %v5346 = vunpack.c.l.b16 %v4948
    %v5347 = vunpack.c.h.b16 %v4948
    %v5348 = vunpack.c.l.b16 %v4949
    %v5349 = vunpack.c.h.b16 %v4949
    %v5350 = vunpack.c.l.b16 %v4950
    %v5351 = vunpack.c.h.b16 %v4950
    %v5352 = vunpack.c.l.b16 %v4951
    %v5353 = vunpack.c.h.b16 %v4951
    %v5354 = vunpack.c.l.b16 %v4952
    %v5355 = vunpack.c.h.b16 %v4952
    %v5356 = vunpack.c.l.b16 %v4953
    %v5357 = vunpack.c.h.b16 %v4953
    %v5358 = vunpack.c.l.b16 %v4954
    %v5359 = vunpack.c.h.b16 %v4954
    %v5360 = vunpack.c.l.b16 %v4955
    %v5361 = vunpack.c.h.b16 %v4955
    %v5362 = vunpack.c.l.b16 %v4956
    %v5363 = vunpack.c.h.b16 %v4956
    %v5364 = vunpack.c.l.b16 %v4957
    %v5365 = vunpack.c.h.b16 %v4957
    %v5366 = vunpack.c.l.b16 %v4958
    %v5367 = vunpack.c.h.b16 %v4958
    %v5368 = vunpack.c.l.b16 %v4959
    %v5369 = vunpack.c.h.b16 %v4959
    %v5370 = vunpack.c.l.b16 %v4960
    %v5371 = vunpack.c.h.b16 %v4960
    %v5372 = vunpack.c.l.b16 %v4961
    %v5373 = vunpack.c.h.b16 %v4961
    %v5374 = vunpack.c.l.b16 %v4962
    %v5375 = vunpack.c.h.b16 %v4962
    %v5376 = vunpack.c.l.b16 %v4963
    %v5377 = vunpack.c.h.b16 %v4963
    %v5378 = vunpack.c.l.b16 %v4964
    %v5379 = vunpack.c.h.b16 %v4964
    %v5380 = vunpack.c.l.b16 %v4965
    %v5381 = vunpack.c.h.b16 %v4965
    %v5382 = vunpack.c.l.b16 %v4966
    %v5383 = vunpack.c.h.b16 %v4966
    %v5384 = vunpack.c.l.b16 %v4967
    %v5385 = vunpack.c.h.b16 %v4967
    %v5386 = vunpack.c.l.b16 %v4968
    %v5387 = vunpack.c.h.b16 %v4968
    %v5388 = vunpack.c.l.b16 %v4969
    %v5389 = vunpack.c.h.b16 %v4969
    %v5390 = vunpack.c.l.b16 %v4970
    %v5391 = vunpack.c.h.b16 %v4970
    %v5392 = vunpack.c.l.b16 %v4971
    %v5393 = vunpack.c.h.b16 %v4971
    %v5394 = vunpack.c.l.b16 %v4972
    %v5395 = vunpack.c.h.b16 %v4972
    %v5396 = vunpack.c.l.b16 %v4973
    %v5397 = vunpack.c.h.b16 %v4973
    %v5398 = vunpack.c.l.b16 %v4974
    %v5399 = vunpack.c.h.b16 %v4974
    %v5400 = vunpack.c.l.b16 %v4975
    %v5401 = vunpack.c.h.b16 %v4975
    %v5402 = vunpack.c.l.b16 %v4976
    %v5403 = vunpack.c.h.b16 %v4976
    %v5404 = vunpack.c.l.b16 %v4977
    %v5405 = vunpack.c.h.b16 %v4977
    %v5406 = vunpack.c.l.b16 %v4978
    %v5407 = vunpack.c.h.b16 %v4978
    %v5408 = vunpack.c.l.b16 %v4979
    %v5409 = vunpack.c.h.b16 %v4979
    %v5410 = vunpack.c.l.b16 %v4980
    %v5411 = vunpack.c.h.b16 %v4980
    %v5412 = vunpack.c.l.b16 %v4981
    %v5413 = vunpack.c.h.b16 %v4981
    %v5414 = vunpack.c.l.b16 %v4982
    %v5415 = vunpack.c.h.b16 %v4982
    %v5416 = vunpack.c.l.b16 %v4983
    %v5417 = vunpack.c.h.b16 %v4983
    %v5418 = vunpack.c.l.b16 %v4984
    %v5419 = vunpack.c.h.b16 %v4984
    %v5420 = vunpack.c.l.b16 %v4985
    %v5421 = vunpack.c.h.b16 %v4985
    %v5422 = vunpack.c.l.b16 %v4986
    %v5423 = vunpack.c.h.b16 %v4986
    %v5424 = vunpack.c.l.b16 %v4987
    %v5425 = vunpack.c.h.b16 %v4987
    %v5426 = vunpack.c.l.b16 %v4988
    %v5427 = vunpack.c.h.b16 %v4988
    %v5428 = vunpack.c.l.b16 %v4989
    %v5429 = vunpack.c.h.b16 %v4989
    %v5430 = vunpack.c.l.b16 %v4990
    %v5431 = vunpack.c.h.b16 %v4990
    %v5432 = vunpack.c.l.b16 %v4991
    %v5433 = vunpack.c.h.b16 %v4991
    %v5434 = vunpack.c.l.b16 %v4992
    %v5435 = vunpack.c.h.b16 %v4992
    %v5436 = vunpack.c.l.b16 %v4993
    %v5437 = vunpack.c.h.b16 %v4993
    %v5438 = vunpack.c.l.b16 %v4994
    %v5439 = vunpack.c.h.b16 %v4994
    %v5440 = vunpack.c.l.b16 %v4995
    %v5441 = vunpack.c.h.b16 %v4995
    %v5442 = vunpack.c.l.b16 %v4996
    %v5443 = vunpack.c.h.b16 %v4996
    %v5444 = vunpack.c.l.b16 %v4997
    %v5445 = vunpack.c.h.b16 %v4997
    %v5446 = vunpack.c.l.b16 %v4998
    %v5447 = vunpack.c.h.b16 %v4998
    %v5448 = vunpack.c.l.b16 %v4999
    %v5449 = vunpack.c.h.b16 %v4999
    %v5450 = vunpack.c.l.b16 %v5000
    %v5451 = vunpack.c.h.b16 %v5000
    %v5452 = vunpack.c.l.b16 %v5001
    %v5453 = vunpack.c.h.b16 %v5001
    %v5454 = vunpack.c.l.b16 %v5002
    %v5455 = vunpack.c.h.b16 %v5002
    %v5456 = vunpack.c.l.b16 %v5003
    %v5457 = vunpack.c.h.b16 %v5003
    %v5458 = vunpack.c.l.b16 %v5004
    %v5459 = vunpack.c.h.b16 %v5004
    %v5460 = vunpack.c.l.b16 %v5005
    %v5461 = vunpack.c.h.b16 %v5005
    %v5462 = vunpack.c.l.b16 %v5006
    %v5463 = vunpack.c.h.b16 %v5006
    %v5464 = vunpack.c.l.b16 %v5007
    %v5465 = vunpack.c.h.b16 %v5007
    %v5466 = vunpack.c.l.b16 %v5008
    %v5467 = vunpack.c.h.b16 %v5008
    %v5468 = vunpack.c.l.b16 %v5009
    %v5469 = vunpack.c.h.b16 %v5009
    %v5470 = vunpack.c.l.b16 %v5010
    %v5471 = vunpack.c.h.b16 %v5010
    %v5472 = vunpack.c.l.b16 %v5011
    %v5473 = vunpack.c.h.b16 %v5011
    %v5474 = vunpack.c.l.b16 %v5012
    %v5475 = vunpack.c.h.b16 %v5012
    %v5476 = vunpack.c.l.b16 %v5013
    %v5477 = vunpack.c.h.b16 %v5013
    %v5478 = vpack.c.b16 %v5196, %v5190
    %v5479 = vpack.c.b16 %v5197, %v5191
    %v5480 = vpack.c.b16 %v5198, %v5192
    %v5481 = vpack.c.b16 %v5199, %v5193
    %v5482 = vpack.c.b16 %v5200, %v5194
    %v5483 = vpack.c.b16 %v5201, %v5195
    %v5484 = vpack.c.b16 %v5208, %v5202
    %v5485 = vpack.c.b16 %v5209, %v5203
    %v5486 = vpack.c.b16 %v5210, %v5204
    %v5487 = vpack.c.b16 %v5211, %v5205
    %v5488 = vpack.c.b16 %v5212, %v5206
    %v5489 = vpack.c.b16 %v5213, %v5207
    %v5490 = vpack.c.b16 %v5220, %v5214
    %v5491 = vpack.c.b16 %v5221, %v5215
    %v5492 = vpack.c.b16 %v5222, %v5216
    %v5493 = vpack.c.b16 %v5223, %v5217
    %v5494 = vpack.c.b16 %v5224, %v5218
    %v5495 = vpack.c.b16 %v5225, %v5219
    %v5496 = vpack.c.b16 %v5232, %v5226
    %v5497 = vpack.c.b16 %v5233, %v5227
    %v5498 = vpack.c.b16 %v5234, %v5228
    %v5499 = vpack.c.b16 %v5235, %v5229
    %v5500 = vpack.c.b16 %v5236, %v5230
    %v5501 = vpack.c.b16 %v5237, %v5231
    %v5502 = vpack.c.b16 %v5244, %v5238
    %v5503 = vpack.c.b16 %v5245, %v5239
    %v5504 = vpack.c.b16 %v5246, %v5240
    %v5505 = vpack.c.b16 %v5247, %v5241
    %v5506 = vpack.c.b16 %v5248, %v5242
    %v5507 = vpack.c.b16 %v5249, %v5243
    %v5508 = vpack.c.b16 %v5256, %v5250
    %v5509 = vpack.c.b16 %v5257, %v5251
    %v5510 = vpack.c.b16 %v5258, %v5252
    %v5511 = vpack.c.b16 %v5259, %v5253
    %v5512 = vpack.c.b16 %v5260, %v5254
    %v5513 = vpack.c.b16 %v5261, %v5255
    %v5514 = vpack.c.b16 %v5268, %v5262
    %v5515 = vpack.c.b16 %v5269, %v5263
    %v5516 = vpack.c.b16 %v5270, %v5264
    %v5517 = vpack.c.b16 %v5271, %v5265
    %v5518 = vpack.c.b16 %v5272, %v5266
    %v5519 = vpack.c.b16 %v5273, %v5267
    %v5520 = vpack.c.b16 %v5280, %v5274
    %v5521 = vpack.c.b16 %v5281, %v5275
    %v5522 = vpack.c.b16 %v5282, %v5276
    %v5523 = vpack.c.b16 %v5283, %v5277
    %v5524 = vpack.c.b16 %v5284, %v5278
    %v5525 = vpack.c.b16 %v5285, %v5279
    %v5526 = vpack.c.b16 %v5292, %v5286
    %v5527 = vpack.c.b16 %v5293, %v5287
    %v5528 = vpack.c.b16 %v5294, %v5288
    %v5529 = vpack.c.b16 %v5295, %v5289
    %v5530 = vpack.c.b16 %v5296, %v5290
    %v5531 = vpack.c.b16 %v5297, %v5291
    %v5532 = vpack.c.b16 %v5304, %v5298
    %v5533 = vpack.c.b16 %v5305, %v5299
    %v5534 = vpack.c.b16 %v5306, %v5300
    %v5535 = vpack.c.b16 %v5307, %v5301
    %v5536 = vpack.c.b16 %v5308, %v5302
    %v5537 = vpack.c.b16 %v5309, %v5303
    %v5538 = vpack.c.b16 %v5316, %v5310
    %v5539 = vpack.c.b16 %v5317, %v5311
    %v5540 = vpack.c.b16 %v5318, %v5312
    %v5541 = vpack.c.b16 %v5319, %v5313
    %v5542 = vpack.c.b16 %v5320, %v5314
    %v5543 = vpack.c.b16 %v5321, %v5315
    %v5544 = vpack.c.b16 %v5328, %v5322
    %v5545 = vpack.c.b16 %v5329, %v5323
    %v5546 = vpack.c.b16 %v5330, %v5324
    %v5547 = vpack.c.b16 %v5331, %v5325
    %v5548 = vpack.c.b16 %v5332, %v5326
    %v5549 = vpack.c.b16 %v5333, %v5327
    %v5550 = vpack.c.b16 %v5340, %v5334
    %v5551 = vpack.c.b16 %v5341, %v5335
    %v5552 = vpack.c.b16 %v5342, %v5336
    %v5553 = vpack.c.b16 %v5343, %v5337
    %v5554 = vpack.c.b16 %v5344, %v5338
    %v5555 = vpack.c.b16 %v5345, %v5339
    %v5556 = vpack.c.b16 %v5352, %v5346
    %v5557 = vpack.c.b16 %v5353, %v5347
    %v5558 = vpack.c.b16 %v5354, %v5348
    %v5559 = vpack.c.b16 %v5355, %v5349
    %v5560 = vpack.c.b16 %v5356, %v5350
    %v5561 = vpack.c.b16 %v5357, %v5351
    %v5562 = vpack.c.b16 %v5364, %v5358
    %v5563 = vpack.c.b16 %v5365, %v5359
    %v5564 = vpack.c.b16 %v5366, %v5360
    %v5565 = vpack.c.b16 %v5367, %v5361
    %v5566 = vpack.c.b16 %v5368, %v5362
    %v5567 = vpack.c.b16 %v5369, %v5363
    %v5568 = vpack.c.b16 %v5376, %v5370
    %v5569 = vpack.c.b16 %v5377, %v5371
    %v5570 = vpack.c.b16 %v5378, %v5372
    %v5571 = vpack.c.b16 %v5379, %v5373
    %v5572 = vpack.c.b16 %v5380, %v5374
    %v5573 = vpack.c.b16 %v5381, %v5375
    %v5574 = vpack.c.b16 %v5388, %v5382
    %v5575 = vpack.c.b16 %v5389, %v5383
    %v5576 = vpack.c.b16 %v5390, %v5384
    %v5577 = vpack.c.b16 %v5391, %v5385
    %v5578 = vpack.c.b16 %v5392, %v5386
    %v5579 = vpack.c.b16 %v5393, %v5387
    %v5580 = vpack.c.b16 %v5400, %v5394
    %v5581 = vpack.c.b16 %v5401, %v5395
    %v5582 = vpack.c.b16 %v5402, %v5396
    %v5583 = vpack.c.b16 %v5403, %v5397
    %v5584 = vpack.c.b16 %v5404, %v5398
    %v5585 = vpack.c.b16 %v5405, %v5399
    %v5586 = vpack.c.b16 %v5412, %v5406
    %v5587 = vpack.c.b16 %v5413, %v5407
    %v5588 = vpack.c.b16 %v5414, %v5408
    %v5589 = vpack.c.b16 %v5415, %v5409
    %v5590 = vpack.c.b16 %v5416, %v5410
    %v5591 = vpack.c.b16 %v5417, %v5411
    %v5592 = vpack.c.b16 %v5424, %v5418
    %v5593 = vpack.c.b16 %v5425, %v5419
    %v5594 = vpack.c.b16 %v5426, %v5420
    %v5595 = vpack.c.b16 %v5427, %v5421
    %v5596 = vpack.c.b16 %v5428, %v5422
    %v5597 = vpack.c.b16 %v5429, %v5423
    %v5598 = vpack.c.b16 %v5436, %v5430
    %v5599 = vpack.c.b16 %v5437, %v5431
    %v5600 = vpack.c.b16 %v5438, %v5432
    %v5601 = vpack.c.b16 %v5439, %v5433
    %v5602 = vpack.c.b16 %v5440, %v5434
    %v5603 = vpack.c.b16 %v5441, %v5435
    %v5604 = vpack.c.b16 %v5448, %v5442
    %v5605 = vpack.c.b16 %v5449, %v5443
    %v5606 = vpack.c.b16 %v5450, %v5444
    %v5607 = vpack.c.b16 %v5451, %v5445
    %v5608 = vpack.c.b16 %v5452, %v5446
    %v5609 = vpack.c.b16 %v5453, %v5447
    %v5610 = vpack.c.b16 %v5460, %v5454
    %v5611 = vpack.c.b16 %v5461, %v5455
    %v5612 = vpack.c.b16 %v5462, %v5456
    %v5613 = vpack.c.b16 %v5463, %v5457
    %v5614 = vpack.c.b16 %v5464, %v5458
    %v5615 = vpack.c.b16 %v5465, %v5459
    %v5616 = vpack.c.b16 %v5472, %v5466
    %v5617 = vpack.c.b16 %v5473, %v5467
    %v5618 = vpack.c.b16 %v5474, %v5468
    %v5619 = vpack.c.b16 %v5475, %v5469
    %v5620 = vpack.c.b16 %v5476, %v5470
    %v5621 = vpack.c.b16 %v5477, %v5471
    %5766 = vmatprep.subr.bf16.mxu0 %v5521
    %5767 = vmatpush1.bf16.msra.mxu0 %v5520
    %5768 = vmatprep.subr.bf16.mxu0 %v5515
    %5769 = vmatpush1.bf16.msra.mxu0 %v5514
    %5770 = vmatprep.subr.bf16.mxu0 %v5509
    %5771 = vmatpush1.bf16.msra.mxu0 %v5508
    %5772 = vmatprep.subr.bf16.mxu0 %v5503
    %5773 = vmatpush1.bf16.msra.mxu0 %v5502
    %5774 = vmatprep.subr.bf16.mxu0 %v5497
    %5775 = vmatpush1.bf16.msra.mxu0 %v5496
    %5776 = vmatprep.subr.bf16.mxu0 %v5491
    %5777 = vmatpush1.bf16.msra.mxu0 %v5490
    %5778 = vmatprep.subr.bf16.mxu0 %v5485
    %5779 = vmatpush1.bf16.msra.mxu0 %v5484
    %5780 = vmatprep.subr.bf16.mxu0 %v5479
    %5781 = vmatpush1.bf16.msra.mxu0 %v5478
    %5782 = vmatprep.subr.bf16.mxu0 %v5569
    %5783 = vmatpush2.bf16.msra.mxu0 %v5568
    %5784 = vmatprep.subr.bf16.mxu0 %v5563
    %5785 = vmatpush2.bf16.msra.mxu0 %v5562
    %5786 = vmatprep.subr.bf16.mxu0 %v5557
    %5787 = vmatpush2.bf16.msra.mxu0 %v5556
    %5788 = vmatprep.subr.bf16.mxu0 %v5551
    %5789 = vmatpush2.bf16.msra.mxu0 %v5550
    %5790 = vmatprep.subr.bf16.mxu0 %v5545
    %5791 = vmatpush2.bf16.msra.mxu0 %v5544
    %5792 = vmatprep.subr.bf16.mxu0 %v5539
    %5793 = vmatpush2.bf16.msra.mxu0 %v5538
    %5794 = vmatprep.subr.bf16.mxu0 %v5533
    %5795 = vmatpush2.bf16.msra.mxu0 %v5532
    %5796 = vmatprep.subr.bf16.mxu0 %v5527
    %5797 = vmatpush2.bf16.msra.mxu0 %v5526
    %5798 = vmatprep.mubr.bf16.mxu0 %v4868
    %5799 = vmatmul.mubr.bf16.gmra.mxu0 %v4867
    %v5800 = vpop.f32.mrf.mxu0
    %v5801 = vadd.f32 %v5019, %v5800
    %v5802 = vpop.f32.mrf.mxu0
    %v5803 = vadd.f32 %v5023, %v5802
    %v5804 = vpop.f32.mrf.mxu0
    %v5805 = vpop.f32.mrf.mxu0
    %5806 = vdwg.mxu0
    %5807 = vmatprep.subr.bf16.mxu0 %v5617
    %5808 = vmatpush1.bf16.msra.mxu0 %v5616
    %5809 = vmatprep.subr.bf16.mxu0 %v5611
    %5810 = vmatpush1.bf16.msra.mxu0 %v5610
    %5811 = vmatprep.subr.bf16.mxu0 %v5605
    %5812 = vmatpush1.bf16.msra.mxu0 %v5604
    %5813 = vmatprep.subr.bf16.mxu0 %v5599
    %5814 = vmatpush1.bf16.msra.mxu0 %v5598
    %5815 = vmatprep.subr.bf16.mxu0 %v5593
    %5816 = vmatpush1.bf16.msra.mxu0 %v5592
    %5817 = vmatprep.subr.bf16.mxu0 %v5587
    %5818 = vmatpush1.bf16.msra.mxu0 %v5586
    %5819 = vmatprep.subr.bf16.mxu0 %v5581
    %5820 = vmatpush1.bf16.msra.mxu0 %v5580
    %5821 = vmatprep.subr.bf16.mxu0 %v5575
    %5822 = vmatpush1.bf16.msra.mxu0 %v5574
    %5823 = vmatprep.subr.bf16.mxu0 0
    %5824 = vmatpush2.bf16.msra.mxu0 0
    %5825 = vmatprep.subr.bf16.mxu0 0
    %5826 = vmatpush2.bf16.msra.mxu0 0
    %5827 = vmatprep.subr.bf16.mxu0 0
    %5828 = vmatpush2.bf16.msra.mxu0 0
    %5829 = vmatprep.subr.bf16.mxu0 0
    %5830 = vmatpush2.bf16.msra.mxu0 0
    %5831 = vmatprep.subr.bf16.mxu0 0
    %5832 = vmatpush2.bf16.msra.mxu0 0
    %5833 = vmatprep.subr.bf16.mxu0 0
    %5834 = vmatpush2.bf16.msra.mxu0 0
    %5835 = vmatprep.subr.bf16.mxu0 0
    %5836 = vmatpush2.bf16.msra.mxu0 0
    %5837 = vmatprep.subr.bf16.mxu0 0
    %5838 = vmatpush2.bf16.msra.mxu0 0
    %5839 = vmatprep.mubr.bf16.mxu0 0
    %5840 = vmatmul.mubr.bf16.gmra.mxu0 %v4869
    %v5841 = vpop.f32.mrf.mxu0
    %v5842 = vadd.f32 %v5801, %v5841
    %v5843 = vpop.f32.mrf.mxu0
    %v5844 = vadd.f32 %v5803, %v5843
    %v5845 = vpop.f32.mrf.mxu0
    %v5846 = vpop.f32.mrf.mxu0
    %5847 = vdwg.mxu0
    %5848 = vmatprep.subr.bf16.mxu0 %v5523
    %5849 = vmatpush1.bf16.msra.mxu0 %v5522
    %5850 = vmatprep.subr.bf16.mxu0 %v5517
    %5851 = vmatpush1.bf16.msra.mxu0 %v5516
    %5852 = vmatprep.subr.bf16.mxu0 %v5511
    %5853 = vmatpush1.bf16.msra.mxu0 %v5510
    %5854 = vmatprep.subr.bf16.mxu0 %v5505
    %5855 = vmatpush1.bf16.msra.mxu0 %v5504
    %5856 = vmatprep.subr.bf16.mxu0 %v5499
    %5857 = vmatpush1.bf16.msra.mxu0 %v5498
    %5858 = vmatprep.subr.bf16.mxu0 %v5493
    %5859 = vmatpush1.bf16.msra.mxu0 %v5492
    %5860 = vmatprep.subr.bf16.mxu0 %v5487
    %5861 = vmatpush1.bf16.msra.mxu0 %v5486
    %5862 = vmatprep.subr.bf16.mxu0 %v5481
    %5863 = vmatpush1.bf16.msra.mxu0 %v5480
    %5864 = vmatprep.subr.bf16.mxu0 %v5571
    %5865 = vmatpush2.bf16.msra.mxu0 %v5570
    %5866 = vmatprep.subr.bf16.mxu0 %v5565
    %5867 = vmatpush2.bf16.msra.mxu0 %v5564
    %5868 = vmatprep.subr.bf16.mxu0 %v5559
    %5869 = vmatpush2.bf16.msra.mxu0 %v5558
    %5870 = vmatprep.subr.bf16.mxu0 %v5553
    %5871 = vmatpush2.bf16.msra.mxu0 %v5552
    %5872 = vmatprep.subr.bf16.mxu0 %v5547
    %5873 = vmatpush2.bf16.msra.mxu0 %v5546
    %5874 = vmatprep.subr.bf16.mxu0 %v5541
    %5875 = vmatpush2.bf16.msra.mxu0 %v5540
    %5876 = vmatprep.subr.bf16.mxu0 %v5535
    %5877 = vmatpush2.bf16.msra.mxu0 %v5534
    %5878 = vmatprep.subr.bf16.mxu0 %v5529
    %5879 = vmatpush2.bf16.msra.mxu0 %v5528
    %5880 = vmatprep.mubr.bf16.mxu0 %v4868
    %5881 = vmatmul.mubr.bf16.gmra.mxu0 %v4867
    %v5882 = vpop.f32.mrf.mxu0
    %v5883 = vadd.f32 %v5027, %v5882
    %v5884 = vpop.f32.mrf.mxu0
    %v5885 = vadd.f32 %v5031, %v5884
    %v5886 = vpop.f32.mrf.mxu0
    %v5887 = vpop.f32.mrf.mxu0
    %5888 = vdwg.mxu0
    %5889 = vmatprep.subr.bf16.mxu0 %v5619
    %5890 = vmatpush1.bf16.msra.mxu0 %v5618
    %5891 = vmatprep.subr.bf16.mxu0 %v5613
    %5892 = vmatpush1.bf16.msra.mxu0 %v5612
    %5893 = vmatprep.subr.bf16.mxu0 %v5607
    %5894 = vmatpush1.bf16.msra.mxu0 %v5606
    %5895 = vmatprep.subr.bf16.mxu0 %v5601
    %5896 = vmatpush1.bf16.msra.mxu0 %v5600
    %5897 = vmatprep.subr.bf16.mxu0 %v5595
    %5898 = vmatpush1.bf16.msra.mxu0 %v5594
    %5899 = vmatprep.subr.bf16.mxu0 %v5589
    %5900 = vmatpush1.bf16.msra.mxu0 %v5588
    %5901 = vmatprep.subr.bf16.mxu0 %v5583
    %5902 = vmatpush1.bf16.msra.mxu0 %v5582
    %5903 = vmatprep.subr.bf16.mxu0 %v5577
    %5904 = vmatpush1.bf16.msra.mxu0 %v5576
    %5905 = vmatprep.subr.bf16.mxu0 0
    %5906 = vmatpush2.bf16.msra.mxu0 0
    %5907 = vmatprep.subr.bf16.mxu0 0
    %5908 = vmatpush2.bf16.msra.mxu0 0
    %5909 = vmatprep.subr.bf16.mxu0 0
    %5910 = vmatpush2.bf16.msra.mxu0 0
    %5911 = vmatprep.subr.bf16.mxu0 0
    %5912 = vmatpush2.bf16.msra.mxu0 0
    %5913 = vmatprep.subr.bf16.mxu0 0
    %5914 = vmatpush2.bf16.msra.mxu0 0
    %5915 = vmatprep.subr.bf16.mxu0 0
    %5916 = vmatpush2.bf16.msra.mxu0 0
    %5917 = vmatprep.subr.bf16.mxu0 0
    %5918 = vmatpush2.bf16.msra.mxu0 0
    %5919 = vmatprep.subr.bf16.mxu0 0
    %5920 = vmatpush2.bf16.msra.mxu0 0
    %5921 = vmatprep.mubr.bf16.mxu0 0
    %5922 = vmatmul.mubr.bf16.gmra.mxu0 %v4869
    %v5923 = vpop.f32.mrf.mxu0
    %v5924 = vadd.f32 %v5883, %v5923
    %v5925 = vpop.f32.mrf.mxu0
    %v5926 = vadd.f32 %v5885, %v5925
    %v5927 = vpop.f32.mrf.mxu0
    %v5928 = vpop.f32.mrf.mxu0
    %5929 = vdwg.mxu0
    %5930 = vmatprep.subr.bf16.mxu0 %v5525
    %5931 = vmatpush1.bf16.msra.mxu0 %v5524
    %5932 = vmatprep.subr.bf16.mxu0 %v5519
    %5933 = vmatpush1.bf16.msra.mxu0 %v5518
    %5934 = vmatprep.subr.bf16.mxu0 %v5513
    %5935 = vmatpush1.bf16.msra.mxu0 %v5512
    %5936 = vmatprep.subr.bf16.mxu0 %v5507
    %5937 = vmatpush1.bf16.msra.mxu0 %v5506
    %5938 = vmatprep.subr.bf16.mxu0 %v5501
    %5939 = vmatpush1.bf16.msra.mxu0 %v5500
    %5940 = vmatprep.subr.bf16.mxu0 %v5495
    %5941 = vmatpush1.bf16.msra.mxu0 %v5494
    %5942 = vmatprep.subr.bf16.mxu0 %v5489
    %5943 = vmatpush1.bf16.msra.mxu0 %v5488
    %5944 = vmatprep.subr.bf16.mxu0 %v5483
    %5945 = vmatpush1.bf16.msra.mxu0 %v5482
    %5946 = vmatprep.subr.bf16.mxu0 %v5573
    %5947 = vmatpush2.bf16.msra.mxu0 %v5572
    %5948 = vmatprep.subr.bf16.mxu0 %v5567
    %5949 = vmatpush2.bf16.msra.mxu0 %v5566
    %5950 = vmatprep.subr.bf16.mxu0 %v5561
    %5951 = vmatpush2.bf16.msra.mxu0 %v5560
    %5952 = vmatprep.subr.bf16.mxu0 %v5555
    %5953 = vmatpush2.bf16.msra.mxu0 %v5554
    %5954 = vmatprep.subr.bf16.mxu0 %v5549
    %5955 = vmatpush2.bf16.msra.mxu0 %v5548
    %5956 = vmatprep.subr.bf16.mxu0 %v5543
    %5957 = vmatpush2.bf16.msra.mxu0 %v5542
    %5958 = vmatprep.subr.bf16.mxu0 %v5537
    %5959 = vmatpush2.bf16.msra.mxu0 %v5536
    %5960 = vmatprep.subr.bf16.mxu0 %v5531
    %5961 = vmatpush2.bf16.msra.mxu0 %v5530
    %5962 = vmatprep.mubr.bf16.mxu0 %v4868
    %5963 = vmatmul.mubr.bf16.gmra.mxu0 %v4867
    %v5964 = vpop.f32.mrf.mxu0
    %v5965 = vadd.f32 %v5035, %v5964
    %v5966 = vpop.f32.mrf.mxu0
    %v5967 = vadd.f32 %v5039, %v5966
    %v5968 = vpop.f32.mrf.mxu0
    %v5969 = vpop.f32.mrf.mxu0
    %5970 = vdwg.mxu0
    %5971 = vmatprep.subr.bf16.mxu0 %v5621
    %5972 = vmatpush1.bf16.msra.mxu0 %v5620
    %5973 = vmatprep.subr.bf16.mxu0 %v5615
    %5974 = vmatpush1.bf16.msra.mxu0 %v5614
    %5975 = vmatprep.subr.bf16.mxu0 %v5609
    %5976 = vmatpush1.bf16.msra.mxu0 %v5608
    %5977 = vmatprep.subr.bf16.mxu0 %v5603
    %5978 = vmatpush1.bf16.msra.mxu0 %v5602
    %5979 = vmatprep.subr.bf16.mxu0 %v5597
    %5980 = vmatpush1.bf16.msra.mxu0 %v5596
    %5981 = vmatprep.subr.bf16.mxu0 %v5591
    %5982 = vmatpush1.bf16.msra.mxu0 %v5590
    %5983 = vmatprep.subr.bf16.mxu0 %v5585
    %5984 = vmatpush1.bf16.msra.mxu0 %v5584
    %5985 = vmatprep.subr.bf16.mxu0 %v5579
    %5986 = vmatpush1.bf16.msra.mxu0 %v5578
    %5987 = vmatprep.subr.bf16.mxu0 0
    %5988 = vmatpush2.bf16.msra.mxu0 0
    %5989 = vmatprep.subr.bf16.mxu0 0
    %5990 = vmatpush2.bf16.msra.mxu0 0
    %5991 = vmatprep.subr.bf16.mxu0 0
    %5992 = vmatpush2.bf16.msra.mxu0 0
    %5993 = vmatprep.subr.bf16.mxu0 0
    %5994 = vmatpush2.bf16.msra.mxu0 0
    %5995 = vmatprep.subr.bf16.mxu0 0
    %5996 = vmatpush2.bf16.msra.mxu0 0
    %5997 = vmatprep.subr.bf16.mxu0 0
    %5998 = vmatpush2.bf16.msra.mxu0 0
    %5999 = vmatprep.subr.bf16.mxu0 0
    %6000 = vmatpush2.bf16.msra.mxu0 0
    %6001 = vmatprep.subr.bf16.mxu0 0
    %6002 = vmatpush2.bf16.msra.mxu0 0
    %6003 = vmatprep.mubr.bf16.mxu0 0
    %6004 = vmatmul.mubr.bf16.gmra.mxu0 %v4869
    %v6005 = vpop.f32.mrf.mxu0
    %v6006 = vadd.f32 %v5965, %v6005
    %v6007 = vpop.f32.mrf.mxu0
    %v6008 = vadd.f32 %v5967, %v6007
    %v6009 = vpop.f32.mrf.mxu0
    %v6010 = vpop.f32.mrf.mxu0
    %6011 = vdwg.mxu0
    %v6012 = vmax.f32 %v5842, 0.0
    %v6013 = vmax.f32 %v5844, 0.0
    %v6014 = vmax.f32 %v5924, 0.0
    %v6015 = vmax.f32 %v5926, 0.0
    %v6016 = vmax.f32 %v6006, 0.0
    %v6017 = vmax.f32 %v6008, 0.0
    %v6018 = vpack.c.bf16 %v6012, %v6012
    %v6019 = vpack.c.bf16 %v6013, %v6013
    %v6020 = vpack.c.bf16 %v6014, %v6014
    %v6021 = vpack.c.bf16 %v6015, %v6015
    %v6022 = vpack.c.bf16 %v6016, %v6016
    %v6023 = vpack.c.bf16 %v6017, %v6017
    %v6024 = vld [vmem:[#allocation18] sm:$0xff]
    %v6025 = vld [vmem:[#allocation18 + $0x8] sm:$0xff]
    %v6026 = vld [vmem:[#allocation18 + $0x10] sm:$0xff]
    %v6027 = vld [vmem:[#allocation18 + $0x18] sm:$0xff]
    %v6028 = vld [vmem:[#allocation18 + $0x20] sm:$0xff]
    %v6029 = vld [vmem:[#allocation18 + $0x28] sm:$0xff]
    %v6030 = vld [vmem:[#allocation18 + $0x30] sm:$0xff]
    %v6031 = vld [vmem:[#allocation18 + $0x38] sm:$0xff]
    %v6032 = vld [vmem:[#allocation18 + $0x40] sm:$0xff]
    %v6033 = vld [vmem:[#allocation18 + $0x48] sm:$0xff]
    %v6034 = vld [vmem:[#allocation18 + $0x50] sm:$0xff]
    %v6035 = vld [vmem:[#allocation18 + $0x58] sm:$0xff]
    %v6036 = vld [vmem:[#allocation18 + $0x60] sm:$0xff]
    %v6037 = vld [vmem:[#allocation18 + $0x68] sm:$0xff]
    %v6038 = vld [vmem:[#allocation18 + $0x70] sm:$0xff]
    %v6039 = vld [vmem:[#allocation18 + $0x78] sm:$0xff]
    %v6040 = vld [vmem:[#allocation18 + $0x80] sm:$0xff]
    %v6041 = vld [vmem:[#allocation18 + $0x88] sm:$0xff]
    %v6042 = vld [vmem:[#allocation18 + $0x90] sm:$0xff]
    %v6043 = vld [vmem:[#allocation18 + $0x98] sm:$0xff]
    %v6044 = vld [vmem:[#allocation18 + $0xa0] sm:$0xff]
    %v6045 = vld [vmem:[#allocation18 + $0xa8] sm:$0xff]
    %v6046 = vld [vmem:[#allocation18 + $0xb0] sm:$0xff]
    %v6047 = vld [vmem:[#allocation18 + $0xb8] sm:$0xff]
    %v6048 = vld [vmem:[#allocation18 + $0xc0] sm:$0xff]
    %v6049 = vld [vmem:[#allocation18 + $0xc8] sm:$0xff]
    %v6050 = vld [vmem:[#allocation18 + $0xd0] sm:$0xff]
    %v6051 = vld [vmem:[#allocation18 + $0xd8] sm:$0xff]
    %v6052 = vld [vmem:[#allocation18 + $0xe0] sm:$0xff]
    %v6053 = vld [vmem:[#allocation18 + $0xe8] sm:$0xff]
    %v6054 = vld [vmem:[#allocation18 + $0xf0] sm:$0xff]
    %v6055 = vld [vmem:[#allocation18 + $0xf8] sm:$0xff]
    %v6056 = vld [vmem:[#allocation18 + $0x100] sm:$0xff]
    %v6057 = vld [vmem:[#allocation18 + $0x108] sm:$0xff]
    %v6058 = vld [vmem:[#allocation18 + $0x110] sm:$0xff]
    %v6059 = vld [vmem:[#allocation18 + $0x118] sm:$0xff]
    %v6060 = vld [vmem:[#allocation18 + $0x120] sm:$0xff]
    %v6061 = vld [vmem:[#allocation18 + $0x128] sm:$0xff]
    %v6062 = vld [vmem:[#allocation18 + $0x130] sm:$0xff]
    %v6063 = vld [vmem:[#allocation18 + $0x138] sm:$0xff]
    %v6064 = vld [vmem:[#allocation18 + $0x140] sm:$0xff]
    %v6065 = vld [vmem:[#allocation18 + $0x148] sm:$0xff]
    %v6066 = vld [vmem:[#allocation18 + $0x150] sm:$0xff]
    %v6067 = vld [vmem:[#allocation18 + $0x158] sm:$0xff]
    %v6068 = vld [vmem:[#allocation18 + $0x160] sm:$0xff]
    %v6069 = vld [vmem:[#allocation18 + $0x168] sm:$0xff]
    %v6070 = vld [vmem:[#allocation18 + $0x170] sm:$0xff]
    %v6071 = vld [vmem:[#allocation18 + $0x178] sm:$0xff]
    %v6072 = vld [vmem:[#allocation18 + $0x180] sm:$0xff]
    %v6073 = vld [vmem:[#allocation18 + $0x188] sm:$0xff]
    %v6074 = vld [vmem:[#allocation18 + $0x190] sm:$0xff]
    %v6075 = vld [vmem:[#allocation18 + $0x198] sm:$0xff]
    %v6076 = vld [vmem:[#allocation18 + $0x1a0] sm:$0xff]
    %v6077 = vld [vmem:[#allocation18 + $0x1a8] sm:$0xff]
    %v6078 = vld [vmem:[#allocation18 + $0x1b0] sm:$0xff]
    %v6079 = vld [vmem:[#allocation18 + $0x1b8] sm:$0xff]
    %v6080 = vld [vmem:[#allocation18 + $0x1c0] sm:$0xff]
    %v6081 = vld [vmem:[#allocation18 + $0x1c8] sm:$0xff]
    %v6082 = vld [vmem:[#allocation18 + $0x1d0] sm:$0xff]
    %v6083 = vld [vmem:[#allocation18 + $0x1d8] sm:$0xff]
    %v6084 = vld [vmem:[#allocation18 + $0x1e0] sm:$0xff]
    %v6085 = vld [vmem:[#allocation18 + $0x1e8] sm:$0xff]
    %v6086 = vld [vmem:[#allocation18 + $0x1f0] sm:$0xff]
    %v6087 = vld [vmem:[#allocation18 + $0x1f8] sm:$0xff]
    %v6088 = vld [vmem:[#allocation18 + $0x200] sm:$0xff]
    %v6089 = vld [vmem:[#allocation18 + $0x208] sm:$0xff]
    %v6090 = vld [vmem:[#allocation18 + $0x210] sm:$0xff]
    %v6091 = vld [vmem:[#allocation18 + $0x218] sm:$0xff]
    %v6092 = vld [vmem:[#allocation18 + $0x220] sm:$0xff]
    %v6093 = vld [vmem:[#allocation18 + $0x228] sm:$0xff]
    %v6094 = vld [vmem:[#allocation18 + $0x230] sm:$0xff]
    %v6095 = vld [vmem:[#allocation18 + $0x238] sm:$0xff]
    %v6096 = vld [vmem:[#allocation18 + $0x240] sm:$0xff]
    %v6097 = vld [vmem:[#allocation18 + $0x248] sm:$0xff]
    %v6098 = vld [vmem:[#allocation18 + $0x250] sm:$0xff]
    %v6099 = vld [vmem:[#allocation18 + $0x258] sm:$0xff]
    %v6100 = vld [vmem:[#allocation18 + $0x260] sm:$0xff]
    %v6101 = vld [vmem:[#allocation18 + $0x268] sm:$0xff]
    %v6102 = vld [vmem:[#allocation18 + $0x270] sm:$0xff]
    %v6103 = vld [vmem:[#allocation18 + $0x278] sm:$0xff]
    %v6104 = vld [vmem:[#allocation18 + $0x280] sm:$0xff]
    %v6105 = vld [vmem:[#allocation18 + $0x288] sm:$0xff]
    %v6106 = vld [vmem:[#allocation18 + $0x290] sm:$0xff]
    %v6107 = vld [vmem:[#allocation18 + $0x298] sm:$0xff]
    %v6108 = vld [vmem:[#allocation18 + $0x2a0] sm:$0xff]
    %v6109 = vld [vmem:[#allocation18 + $0x2a8] sm:$0xff]
    %v6110 = vld [vmem:[#allocation18 + $0x2b0] sm:$0xff]
    %v6111 = vld [vmem:[#allocation18 + $0x2b8] sm:$0xff]
    %v6112 = vld [vmem:[#allocation18 + $0x2c0] sm:$0xff]
    %v6113 = vld [vmem:[#allocation18 + $0x2c8] sm:$0xff]
    %v6114 = vld [vmem:[#allocation18 + $0x2d0] sm:$0xff]
    %v6115 = vld [vmem:[#allocation18 + $0x2d8] sm:$0xff]
    %v6116 = vld [vmem:[#allocation18 + $0x2e0] sm:$0xff]
    %v6117 = vld [vmem:[#allocation18 + $0x2e8] sm:$0xff]
    %v6118 = vld [vmem:[#allocation18 + $0x2f0] sm:$0xff]
    %v6119 = vld [vmem:[#allocation18 + $0x2f8] sm:$0xff]
    %v6120 = vld [vmem:[#allocation18 + $0x300] sm:$0xff]
    %v6121 = vld [vmem:[#allocation18 + $0x308] sm:$0xff]
    %v6122 = vld [vmem:[#allocation18 + $0x310] sm:$0xff]
    %v6123 = vld [vmem:[#allocation18 + $0x318] sm:$0xff]
    %v6124 = vld [vmem:[#allocation18 + $0x320] sm:$0xff]
    %v6125 = vld [vmem:[#allocation18 + $0x328] sm:$0xff]
    %v6126 = vld [vmem:[#allocation18 + $0x330] sm:$0xff]
    %v6127 = vld [vmem:[#allocation18 + $0x338] sm:$0xff]
    %v6128 = vld [vmem:[#allocation18 + $0x340] sm:$0xff]
    %v6129 = vld [vmem:[#allocation18 + $0x348] sm:$0xff]
    %v6130 = vld [vmem:[#allocation18 + $0x350] sm:$0xff]
    %v6131 = vld [vmem:[#allocation18 + $0x358] sm:$0xff]
    %v6132 = vld [vmem:[#allocation18 + $0x360] sm:$0xff]
    %v6133 = vld [vmem:[#allocation18 + $0x368] sm:$0xff]
    %v6134 = vld [vmem:[#allocation18 + $0x370] sm:$0xff]
    %v6135 = vld [vmem:[#allocation18 + $0x378] sm:$0xff]
    %v6136 = vld [vmem:[#allocation18 + $0x380] sm:$0xff]
    %v6137 = vld [vmem:[#allocation18 + $0x388] sm:$0xff]
    %v6138 = vld [vmem:[#allocation18 + $0x390] sm:$0xff]
    %v6139 = vld [vmem:[#allocation18 + $0x398] sm:$0xff]
    %v6140 = vld [vmem:[#allocation18 + $0x3a0] sm:$0xff]
    %v6141 = vld [vmem:[#allocation18 + $0x3a8] sm:$0xff]
    %v6142 = vld [vmem:[#allocation18 + $0x3b0] sm:$0xff]
    %v6143 = vld [vmem:[#allocation18 + $0x3b8] sm:$0xff]
    %v6144 = vld [vmem:[#allocation18 + $0x3c0] sm:$0xff]
    %v6145 = vld [vmem:[#allocation18 + $0x3c8] sm:$0xff]
    %v6146 = vld [vmem:[#allocation18 + $0x3d0] sm:$0xff]
    %v6147 = vld [vmem:[#allocation18 + $0x3d8] sm:$0xff]
    %v6148 = vld [vmem:[#allocation18 + $0x3e0] sm:$0xff]
    %v6149 = vld [vmem:[#allocation18 + $0x3e8] sm:$0xff]
    %v6150 = vld [vmem:[#allocation18 + $0x3f0] sm:$0xff]
    %v6151 = vld [vmem:[#allocation18 + $0x3f8] sm:$0xff]
    %v6152 = vld [vmem:[#allocation18 + $0x400] sm:$0xff]
    %v6153 = vld [vmem:[#allocation18 + $0x408] sm:$0xff]
    %v6154 = vld [vmem:[#allocation18 + $0x410] sm:$0xff]
    %v6155 = vld [vmem:[#allocation18 + $0x418] sm:$0xff]
    %v6156 = vld [vmem:[#allocation18 + $0x420] sm:$0xff]
    %v6157 = vld [vmem:[#allocation18 + $0x428] sm:$0xff]
    %v6158 = vld [vmem:[#allocation18 + $0x430] sm:$0xff]
    %v6159 = vld [vmem:[#allocation18 + $0x438] sm:$0xff]
    %v6160 = vld [vmem:[#allocation18 + $0x440] sm:$0xff]
    %v6161 = vld [vmem:[#allocation18 + $0x448] sm:$0xff]
    %v6162 = vld [vmem:[#allocation18 + $0x450] sm:$0xff]
    %v6163 = vld [vmem:[#allocation18 + $0x458] sm:$0xff]
    %v6164 = vld [vmem:[#allocation18 + $0x460] sm:$0xff]
    %v6165 = vld [vmem:[#allocation18 + $0x468] sm:$0xff]
    %v6166 = vld [vmem:[#allocation18 + $0x470] sm:$0xff]
    %v6167 = vld [vmem:[#allocation18 + $0x478] sm:$0xff]
    %v6168 = vld [vmem:[#allocation18 + $0x480] sm:$0xff]
    %v6169 = vld [vmem:[#allocation18 + $0x488] sm:$0xff]
    %v6170 = vld [vmem:[#allocation18 + $0x490] sm:$0xff]
    %v6171 = vld [vmem:[#allocation18 + $0x498] sm:$0xff]
    %v6172 = vld [vmem:[#allocation18 + $0x4a0] sm:$0xff]
    %v6173 = vld [vmem:[#allocation18 + $0x4a8] sm:$0xff]
    %v6174 = vld [vmem:[#allocation18 + $0x4b0] sm:$0xff]
    %v6175 = vld [vmem:[#allocation18 + $0x4b8] sm:$0xff]
    %v6176 = vld [vmem:[#allocation18 + $0x4c0] sm:$0xff]
    %v6177 = vld [vmem:[#allocation18 + $0x4c8] sm:$0xff]
    %v6178 = vld [vmem:[#allocation18 + $0x4d0] sm:$0xff]
    %v6179 = vld [vmem:[#allocation18 + $0x4d8] sm:$0xff]
    %v6180 = vld [vmem:[#allocation18 + $0x4e0] sm:$0xff]
    %v6181 = vld [vmem:[#allocation18 + $0x4e8] sm:$0xff]
    %v6182 = vld [vmem:[#allocation18 + $0x4f0] sm:$0xff]
    %v6183 = vld [vmem:[#allocation18 + $0x4f8] sm:$0xff]
    %v6184 = vld [vmem:[#allocation18 + $0x500] sm:$0xff]
    %v6185 = vld [vmem:[#allocation18 + $0x508] sm:$0xff]
    %v6186 = vld [vmem:[#allocation18 + $0x510] sm:$0xff]
    %v6187 = vld [vmem:[#allocation18 + $0x518] sm:$0xff]
    %v6188 = vld [vmem:[#allocation18 + $0x520] sm:$0xff]
    %v6189 = vld [vmem:[#allocation18 + $0x528] sm:$0xff]
    %v6190 = vld [vmem:[#allocation18 + $0x530] sm:$0xff]
    %v6191 = vld [vmem:[#allocation18 + $0x538] sm:$0xff]
    %v6192 = vld [vmem:[#allocation18 + $0x540] sm:$0xff]
    %v6193 = vld [vmem:[#allocation18 + $0x548] sm:$0xff]
    %v6194 = vld [vmem:[#allocation18 + $0x550] sm:$0xff]
    %v6195 = vld [vmem:[#allocation18 + $0x558] sm:$0xff]
    %v6196 = vld [vmem:[#allocation18 + $0x560] sm:$0xff]
    %v6197 = vld [vmem:[#allocation18 + $0x568] sm:$0xff]
    %v6198 = vld [vmem:[#allocation18 + $0x570] sm:$0xff]
    %v6199 = vld [vmem:[#allocation18 + $0x578] sm:$0xff]
    %v6200 = vld [vmem:[#allocation18 + $0x580] sm:$0xff]
    %v6201 = vld [vmem:[#allocation18 + $0x588] sm:$0xff]
    %v6202 = vld [vmem:[#allocation18 + $0x590] sm:$0xff]
    %v6203 = vld [vmem:[#allocation18 + $0x598] sm:$0xff]
    %v6204 = vld [vmem:[#allocation18 + $0x5a0] sm:$0xff]
    %v6205 = vld [vmem:[#allocation18 + $0x5a8] sm:$0xff]
    %v6206 = vld [vmem:[#allocation18 + $0x5b0] sm:$0xff]
    %v6207 = vld [vmem:[#allocation18 + $0x5b8] sm:$0xff]
    %v6208 = vld [vmem:[#allocation18 + $0x5c0] sm:$0xff]
    %v6209 = vld [vmem:[#allocation18 + $0x5c8] sm:$0xff]
    %v6210 = vld [vmem:[#allocation18 + $0x5d0] sm:$0xff]
    %v6211 = vld [vmem:[#allocation18 + $0x5d8] sm:$0xff]
    %v6212 = vld [vmem:[#allocation18 + $0x5e0] sm:$0xff]
    %v6213 = vld [vmem:[#allocation18 + $0x5e8] sm:$0xff]
    %v6214 = vld [vmem:[#allocation18 + $0x5f0] sm:$0xff]
    %v6215 = vld [vmem:[#allocation18 + $0x5f8] sm:$0xff]
    %v6216 = vld [vmem:[#allocation18 + $0x600] sm:$0xff]
    %v6217 = vld [vmem:[#allocation18 + $0x608] sm:$0xff]
    %v6218 = vld [vmem:[#allocation18 + $0x610] sm:$0xff]
    %v6219 = vld [vmem:[#allocation18 + $0x618] sm:$0xff]
    %v6220 = vld [vmem:[#allocation18 + $0x620] sm:$0xff]
    %v6221 = vld [vmem:[#allocation18 + $0x628] sm:$0xff]
    %v6222 = vld [vmem:[#allocation18 + $0x630] sm:$0xff]
    %v6223 = vld [vmem:[#allocation18 + $0x638] sm:$0xff]
    %v6224 = vld [vmem:[#allocation18 + $0x640] sm:$0xff]
    %v6225 = vld [vmem:[#allocation18 + $0x648] sm:$0xff]
    %v6226 = vld [vmem:[#allocation18 + $0x650] sm:$0xff]
    %v6227 = vld [vmem:[#allocation18 + $0x658] sm:$0xff]
    %v6228 = vld [vmem:[#allocation18 + $0x660] sm:$0xff]
    %v6229 = vld [vmem:[#allocation18 + $0x668] sm:$0xff]
    %v6230 = vld [vmem:[#allocation18 + $0x670] sm:$0xff]
    %v6231 = vld [vmem:[#allocation18 + $0x678] sm:$0xff]
    %v6232 = vld [vmem:[#allocation18 + $0x680] sm:$0xff]
    %v6233 = vld [vmem:[#allocation18 + $0x688] sm:$0xff]
    %v6234 = vld [vmem:[#allocation18 + $0x690] sm:$0xff]
    %v6235 = vld [vmem:[#allocation18 + $0x698] sm:$0xff]
    %v6236 = vld [vmem:[#allocation18 + $0x6a0] sm:$0xff]
    %v6237 = vld [vmem:[#allocation18 + $0x6a8] sm:$0xff]
    %v6238 = vld [vmem:[#allocation18 + $0x6b0] sm:$0xff]
    %v6239 = vld [vmem:[#allocation18 + $0x6b8] sm:$0xff]
    %v6240 = vld [vmem:[#allocation18 + $0x6c0] sm:$0xff]
    %v6241 = vld [vmem:[#allocation18 + $0x6c8] sm:$0xff]
    %v6242 = vld [vmem:[#allocation18 + $0x6d0] sm:$0xff]
    %v6243 = vld [vmem:[#allocation18 + $0x6d8] sm:$0xff]
    %v6244 = vld [vmem:[#allocation18 + $0x6e0] sm:$0xff]
    %v6245 = vld [vmem:[#allocation18 + $0x6e8] sm:$0xff]
    %v6246 = vld [vmem:[#allocation18 + $0x6f0] sm:$0xff]
    %v6247 = vld [vmem:[#allocation18 + $0x6f8] sm:$0xff]
    %v6248 = vld [vmem:[#allocation18 + $0x700] sm:$0xff]
    %v6249 = vld [vmem:[#allocation18 + $0x708] sm:$0xff]
    %v6250 = vld [vmem:[#allocation18 + $0x710] sm:$0xff]
    %v6251 = vld [vmem:[#allocation18 + $0x718] sm:$0xff]
    %v6252 = vld [vmem:[#allocation18 + $0x720] sm:$0xff]
    %v6253 = vld [vmem:[#allocation18 + $0x728] sm:$0xff]
    %v6254 = vld [vmem:[#allocation18 + $0x730] sm:$0xff]
    %v6255 = vld [vmem:[#allocation18 + $0x738] sm:$0xff]
    %v6256 = vld [vmem:[#allocation18 + $0x740] sm:$0xff]
    %v6257 = vld [vmem:[#allocation18 + $0x748] sm:$0xff]
    %v6258 = vld [vmem:[#allocation18 + $0x750] sm:$0xff]
    %v6259 = vld [vmem:[#allocation18 + $0x758] sm:$0xff]
    %v6260 = vld [vmem:[#allocation18 + $0x760] sm:$0xff]
    %v6261 = vld [vmem:[#allocation18 + $0x768] sm:$0xff]
    %v6262 = vld [vmem:[#allocation18 + $0x770] sm:$0xff]
    %v6263 = vld [vmem:[#allocation18 + $0x778] sm:$0xff]
    %v6264 = vld [vmem:[#allocation18 + $0x780] sm:$0xff]
    %v6265 = vld [vmem:[#allocation18 + $0x788] sm:$0xff]
    %v6266 = vld [vmem:[#allocation18 + $0x790] sm:$0xff]
    %v6267 = vld [vmem:[#allocation18 + $0x798] sm:$0xff]
    %v6268 = vld [vmem:[#allocation18 + $0x7a0] sm:$0xff]
    %v6269 = vld [vmem:[#allocation18 + $0x7a8] sm:$0xff]
    %v6270 = vld [vmem:[#allocation18 + $0x7b0] sm:$0xff]
    %v6271 = vld [vmem:[#allocation18 + $0x7b8] sm:$0xff]
    %v6272 = vld [vmem:[#allocation18 + $0x7c0] sm:$0xff]
    %v6273 = vld [vmem:[#allocation18 + $0x7c8] sm:$0xff]
    %v6274 = vld [vmem:[#allocation18 + $0x7d0] sm:$0xff]
    %v6275 = vld [vmem:[#allocation18 + $0x7d8] sm:$0xff]
    %v6276 = vld [vmem:[#allocation18 + $0x7e0] sm:$0xff]
    %v6277 = vld [vmem:[#allocation18 + $0x7e8] sm:$0xff]
    %v6278 = vld [vmem:[#allocation18 + $0x7f0] sm:$0xff]
    %v6279 = vld [vmem:[#allocation18 + $0x7f8] sm:$0xff]
    %v6280 = vld [vmem:[#allocation18 + $0x800] sm:$0xff]
    %v6281 = vld [vmem:[#allocation18 + $0x808] sm:$0xff]
    %v6282 = vld [vmem:[#allocation18 + $0x810] sm:$0xff]
    %v6283 = vld [vmem:[#allocation18 + $0x818] sm:$0xff]
    %v6284 = vld [vmem:[#allocation18 + $0x820] sm:$0xff]
    %v6285 = vld [vmem:[#allocation18 + $0x828] sm:$0xff]
    %v6286 = vld [vmem:[#allocation18 + $0x830] sm:$0xff]
    %v6287 = vld [vmem:[#allocation18 + $0x838] sm:$0xff]
    %v6288 = vld [vmem:[#allocation18 + $0x840] sm:$0xff]
    %v6289 = vld [vmem:[#allocation18 + $0x848] sm:$0xff]
    %v6290 = vld [vmem:[#allocation18 + $0x850] sm:$0xff]
    %v6291 = vld [vmem:[#allocation18 + $0x858] sm:$0xff]
    %v6292 = vld [vmem:[#allocation18 + $0x860] sm:$0xff]
    %v6293 = vld [vmem:[#allocation18 + $0x868] sm:$0xff]
    %v6294 = vld [vmem:[#allocation18 + $0x870] sm:$0xff]
    %v6295 = vld [vmem:[#allocation18 + $0x878] sm:$0xff]
    %v6296 = vld [vmem:[#allocation18 + $0x880] sm:$0xff]
    %v6297 = vld [vmem:[#allocation18 + $0x888] sm:$0xff]
    %v6298 = vld [vmem:[#allocation18 + $0x890] sm:$0xff]
    %v6299 = vld [vmem:[#allocation18 + $0x898] sm:$0xff]
    %v6300 = vld [vmem:[#allocation18 + $0x8a0] sm:$0xff]
    %v6301 = vld [vmem:[#allocation18 + $0x8a8] sm:$0xff]
    %v6302 = vld [vmem:[#allocation18 + $0x8b0] sm:$0xff]
    %v6303 = vld [vmem:[#allocation18 + $0x8b8] sm:$0xff]
    %v6304 = vld [vmem:[#allocation18 + $0x8c0] sm:$0xff]
    %v6305 = vld [vmem:[#allocation18 + $0x8c8] sm:$0xff]
    %v6306 = vld [vmem:[#allocation18 + $0x8d0] sm:$0xff]
    %v6307 = vld [vmem:[#allocation18 + $0x8d8] sm:$0xff]
    %v6308 = vld [vmem:[#allocation18 + $0x8e0] sm:$0xff]
    %v6309 = vld [vmem:[#allocation18 + $0x8e8] sm:$0xff]
    %v6310 = vld [vmem:[#allocation18 + $0x8f0] sm:$0xff]
    %v6311 = vld [vmem:[#allocation18 + $0x8f8] sm:$0xff]
    %v6312 = vld [vmem:[#allocation19] sm:$0x3f]
    %v6314 = vlaneseq
    %v6315 = vshrl.u32 %v6314, 7
    %v6316 = vsub.s32 0, %v6315
    %v6317 = vrot.slane %v6312, %v6316
    %v6318 = vlaneseq
    %v6319 = vshrl.u32 %v6318, 7
    %v6320 = vsub.s32 1, %v6319
    %v6321 = vrot.slane %v6312, %v6320
    %v6322 = vlaneseq
    %v6323 = vshrl.u32 %v6322, 7
    %v6324 = vsub.s32 2, %v6323
    %v6325 = vrot.slane %v6312, %v6324
    %v6326 = vlaneseq
    %v6327 = vshrl.u32 %v6326, 7
    %v6328 = vsub.s32 3, %v6327
    %v6329 = vrot.slane %v6312, %v6328
    %v6330 = vlaneseq
    %v6331 = vshrl.u32 %v6330, 7
    %v6332 = vsub.s32 4, %v6331
    %v6333 = vrot.slane %v6312, %v6332
    %v6334 = vlaneseq
    %v6335 = vshrl.u32 %v6334, 7
    %v6336 = vsub.s32 5, %v6335
    %v6337 = vrot.slane %v6312, %v6336
    %v6632 = vunpack.c.l.b16 %v6024
    %v6633 = vunpack.c.h.b16 %v6024
    %v6634 = vunpack.c.l.b16 %v6025
    %v6635 = vunpack.c.h.b16 %v6025
    %v6636 = vunpack.c.l.b16 %v6026
    %v6637 = vunpack.c.h.b16 %v6026
    %v6638 = vunpack.c.l.b16 %v6027
    %v6639 = vunpack.c.h.b16 %v6027
    %v6640 = vunpack.c.l.b16 %v6028
    %v6641 = vunpack.c.h.b16 %v6028
    %v6642 = vunpack.c.l.b16 %v6029
    %v6643 = vunpack.c.h.b16 %v6029
    %v6644 = vunpack.c.l.b16 %v6030
    %v6645 = vunpack.c.h.b16 %v6030
    %v6646 = vunpack.c.l.b16 %v6031
    %v6647 = vunpack.c.h.b16 %v6031
    %v6648 = vunpack.c.l.b16 %v6032
    %v6649 = vunpack.c.h.b16 %v6032
    %v6650 = vunpack.c.l.b16 %v6033
    %v6651 = vunpack.c.h.b16 %v6033
    %v6652 = vunpack.c.l.b16 %v6034
    %v6653 = vunpack.c.h.b16 %v6034
    %v6654 = vunpack.c.l.b16 %v6035
    %v6655 = vunpack.c.h.b16 %v6035
    %v6656 = vunpack.c.l.b16 %v6036
    %v6657 = vunpack.c.h.b16 %v6036
    %v6658 = vunpack.c.l.b16 %v6037
    %v6659 = vunpack.c.h.b16 %v6037
    %v6660 = vunpack.c.l.b16 %v6038
    %v6661 = vunpack.c.h.b16 %v6038
    %v6662 = vunpack.c.l.b16 %v6039
    %v6663 = vunpack.c.h.b16 %v6039
    %v6664 = vunpack.c.l.b16 %v6040
    %v6665 = vunpack.c.h.b16 %v6040
    %v6666 = vunpack.c.l.b16 %v6041
    %v6667 = vunpack.c.h.b16 %v6041
    %v6668 = vunpack.c.l.b16 %v6042
    %v6669 = vunpack.c.h.b16 %v6042
    %v6670 = vunpack.c.l.b16 %v6043
    %v6671 = vunpack.c.h.b16 %v6043
    %v6672 = vunpack.c.l.b16 %v6044
    %v6673 = vunpack.c.h.b16 %v6044
    %v6674 = vunpack.c.l.b16 %v6045
    %v6675 = vunpack.c.h.b16 %v6045
    %v6676 = vunpack.c.l.b16 %v6046
    %v6677 = vunpack.c.h.b16 %v6046
    %v6678 = vunpack.c.l.b16 %v6047
    %v6679 = vunpack.c.h.b16 %v6047
    %v6680 = vunpack.c.l.b16 %v6048
    %v6681 = vunpack.c.h.b16 %v6048
    %v6682 = vunpack.c.l.b16 %v6049
    %v6683 = vunpack.c.h.b16 %v6049
    %v6684 = vunpack.c.l.b16 %v6050
    %v6685 = vunpack.c.h.b16 %v6050
    %v6686 = vunpack.c.l.b16 %v6051
    %v6687 = vunpack.c.h.b16 %v6051
    %v6688 = vunpack.c.l.b16 %v6052
    %v6689 = vunpack.c.h.b16 %v6052
    %v6690 = vunpack.c.l.b16 %v6053
    %v6691 = vunpack.c.h.b16 %v6053
    %v6692 = vunpack.c.l.b16 %v6054
    %v6693 = vunpack.c.h.b16 %v6054
    %v6694 = vunpack.c.l.b16 %v6055
    %v6695 = vunpack.c.h.b16 %v6055
    %v6696 = vunpack.c.l.b16 %v6056
    %v6697 = vunpack.c.h.b16 %v6056
    %v6698 = vunpack.c.l.b16 %v6057
    %v6699 = vunpack.c.h.b16 %v6057
    %v6700 = vunpack.c.l.b16 %v6058
    %v6701 = vunpack.c.h.b16 %v6058
    %v6702 = vunpack.c.l.b16 %v6059
    %v6703 = vunpack.c.h.b16 %v6059
    %v6704 = vunpack.c.l.b16 %v6060
    %v6705 = vunpack.c.h.b16 %v6060
    %v6706 = vunpack.c.l.b16 %v6061
    %v6707 = vunpack.c.h.b16 %v6061
    %v6708 = vunpack.c.l.b16 %v6062
    %v6709 = vunpack.c.h.b16 %v6062
    %v6710 = vunpack.c.l.b16 %v6063
    %v6711 = vunpack.c.h.b16 %v6063
    %v6712 = vunpack.c.l.b16 %v6064
    %v6713 = vunpack.c.h.b16 %v6064
    %v6714 = vunpack.c.l.b16 %v6065
    %v6715 = vunpack.c.h.b16 %v6065
    %v6716 = vunpack.c.l.b16 %v6066
    %v6717 = vunpack.c.h.b16 %v6066
    %v6718 = vunpack.c.l.b16 %v6067
    %v6719 = vunpack.c.h.b16 %v6067
    %v6720 = vunpack.c.l.b16 %v6068
    %v6721 = vunpack.c.h.b16 %v6068
    %v6722 = vunpack.c.l.b16 %v6069
    %v6723 = vunpack.c.h.b16 %v6069
    %v6724 = vunpack.c.l.b16 %v6070
    %v6725 = vunpack.c.h.b16 %v6070
    %v6726 = vunpack.c.l.b16 %v6071
    %v6727 = vunpack.c.h.b16 %v6071
    %v6728 = vunpack.c.l.b16 %v6072
    %v6729 = vunpack.c.h.b16 %v6072
    %v6730 = vunpack.c.l.b16 %v6073
    %v6731 = vunpack.c.h.b16 %v6073
    %v6732 = vunpack.c.l.b16 %v6074
    %v6733 = vunpack.c.h.b16 %v6074
    %v6734 = vunpack.c.l.b16 %v6075
    %v6735 = vunpack.c.h.b16 %v6075
    %v6736 = vunpack.c.l.b16 %v6076
    %v6737 = vunpack.c.h.b16 %v6076
    %v6738 = vunpack.c.l.b16 %v6077
    %v6739 = vunpack.c.h.b16 %v6077
    %v6740 = vunpack.c.l.b16 %v6078
    %v6741 = vunpack.c.h.b16 %v6078
    %v6742 = vunpack.c.l.b16 %v6079
    %v6743 = vunpack.c.h.b16 %v6079
    %v6744 = vunpack.c.l.b16 %v6080
    %v6745 = vunpack.c.h.b16 %v6080
    %v6746 = vunpack.c.l.b16 %v6081
    %v6747 = vunpack.c.h.b16 %v6081
    %v6748 = vunpack.c.l.b16 %v6082
    %v6749 = vunpack.c.h.b16 %v6082
    %v6750 = vunpack.c.l.b16 %v6083
    %v6751 = vunpack.c.h.b16 %v6083
    %v6752 = vunpack.c.l.b16 %v6084
    %v6753 = vunpack.c.h.b16 %v6084
    %v6754 = vunpack.c.l.b16 %v6085
    %v6755 = vunpack.c.h.b16 %v6085
    %v6756 = vunpack.c.l.b16 %v6086
    %v6757 = vunpack.c.h.b16 %v6086
    %v6758 = vunpack.c.l.b16 %v6087
    %v6759 = vunpack.c.h.b16 %v6087
    %v6760 = vunpack.c.l.b16 %v6088
    %v6761 = vunpack.c.h.b16 %v6088
    %v6762 = vunpack.c.l.b16 %v6089
    %v6763 = vunpack.c.h.b16 %v6089
    %v6764 = vunpack.c.l.b16 %v6090
    %v6765 = vunpack.c.h.b16 %v6090
    %v6766 = vunpack.c.l.b16 %v6091
    %v6767 = vunpack.c.h.b16 %v6091
    %v6768 = vunpack.c.l.b16 %v6092
    %v6769 = vunpack.c.h.b16 %v6092
    %v6770 = vunpack.c.l.b16 %v6093
    %v6771 = vunpack.c.h.b16 %v6093
    %v6772 = vunpack.c.l.b16 %v6094
    %v6773 = vunpack.c.h.b16 %v6094
    %v6774 = vunpack.c.l.b16 %v6095
    %v6775 = vunpack.c.h.b16 %v6095
    %v6776 = vunpack.c.l.b16 %v6096
    %v6777 = vunpack.c.h.b16 %v6096
    %v6778 = vunpack.c.l.b16 %v6097
    %v6779 = vunpack.c.h.b16 %v6097
    %v6780 = vunpack.c.l.b16 %v6098
    %v6781 = vunpack.c.h.b16 %v6098
    %v6782 = vunpack.c.l.b16 %v6099
    %v6783 = vunpack.c.h.b16 %v6099
    %v6784 = vunpack.c.l.b16 %v6100
    %v6785 = vunpack.c.h.b16 %v6100
    %v6786 = vunpack.c.l.b16 %v6101
    %v6787 = vunpack.c.h.b16 %v6101
    %v6788 = vunpack.c.l.b16 %v6102
    %v6789 = vunpack.c.h.b16 %v6102
    %v6790 = vunpack.c.l.b16 %v6103
    %v6791 = vunpack.c.h.b16 %v6103
    %v6792 = vunpack.c.l.b16 %v6104
    %v6793 = vunpack.c.h.b16 %v6104
    %v6794 = vunpack.c.l.b16 %v6105
    %v6795 = vunpack.c.h.b16 %v6105
    %v6796 = vunpack.c.l.b16 %v6106
    %v6797 = vunpack.c.h.b16 %v6106
    %v6798 = vunpack.c.l.b16 %v6107
    %v6799 = vunpack.c.h.b16 %v6107
    %v6800 = vunpack.c.l.b16 %v6108
    %v6801 = vunpack.c.h.b16 %v6108
    %v6802 = vunpack.c.l.b16 %v6109
    %v6803 = vunpack.c.h.b16 %v6109
    %v6804 = vunpack.c.l.b16 %v6110
    %v6805 = vunpack.c.h.b16 %v6110
    %v6806 = vunpack.c.l.b16 %v6111
    %v6807 = vunpack.c.h.b16 %v6111
    %v6808 = vunpack.c.l.b16 %v6112
    %v6809 = vunpack.c.h.b16 %v6112
    %v6810 = vunpack.c.l.b16 %v6113
    %v6811 = vunpack.c.h.b16 %v6113
    %v6812 = vunpack.c.l.b16 %v6114
    %v6813 = vunpack.c.h.b16 %v6114
    %v6814 = vunpack.c.l.b16 %v6115
    %v6815 = vunpack.c.h.b16 %v6115
    %v6816 = vunpack.c.l.b16 %v6116
    %v6817 = vunpack.c.h.b16 %v6116
    %v6818 = vunpack.c.l.b16 %v6117
    %v6819 = vunpack.c.h.b16 %v6117
    %v6820 = vunpack.c.l.b16 %v6118
    %v6821 = vunpack.c.h.b16 %v6118
    %v6822 = vunpack.c.l.b16 %v6119
    %v6823 = vunpack.c.h.b16 %v6119
    %v6824 = vunpack.c.l.b16 %v6120
    %v6825 = vunpack.c.h.b16 %v6120
    %v6826 = vunpack.c.l.b16 %v6121
    %v6827 = vunpack.c.h.b16 %v6121
    %v6828 = vunpack.c.l.b16 %v6122
    %v6829 = vunpack.c.h.b16 %v6122
    %v6830 = vunpack.c.l.b16 %v6123
    %v6831 = vunpack.c.h.b16 %v6123
    %v6832 = vunpack.c.l.b16 %v6124
    %v6833 = vunpack.c.h.b16 %v6124
    %v6834 = vunpack.c.l.b16 %v6125
    %v6835 = vunpack.c.h.b16 %v6125
    %v6836 = vunpack.c.l.b16 %v6126
    %v6837 = vunpack.c.h.b16 %v6126
    %v6838 = vunpack.c.l.b16 %v6127
    %v6839 = vunpack.c.h.b16 %v6127
    %v6840 = vunpack.c.l.b16 %v6128
    %v6841 = vunpack.c.h.b16 %v6128
    %v6842 = vunpack.c.l.b16 %v6129
    %v6843 = vunpack.c.h.b16 %v6129
    %v6844 = vunpack.c.l.b16 %v6130
    %v6845 = vunpack.c.h.b16 %v6130
    %v6846 = vunpack.c.l.b16 %v6131
    %v6847 = vunpack.c.h.b16 %v6131
    %v6848 = vunpack.c.l.b16 %v6132
    %v6849 = vunpack.c.h.b16 %v6132
    %v6850 = vunpack.c.l.b16 %v6133
    %v6851 = vunpack.c.h.b16 %v6133
    %v6852 = vunpack.c.l.b16 %v6134
    %v6853 = vunpack.c.h.b16 %v6134
    %v6854 = vunpack.c.l.b16 %v6135
    %v6855 = vunpack.c.h.b16 %v6135
    %v6856 = vunpack.c.l.b16 %v6136
    %v6857 = vunpack.c.h.b16 %v6136
    %v6858 = vunpack.c.l.b16 %v6137
    %v6859 = vunpack.c.h.b16 %v6137
    %v6860 = vunpack.c.l.b16 %v6138
    %v6861 = vunpack.c.h.b16 %v6138
    %v6862 = vunpack.c.l.b16 %v6139
    %v6863 = vunpack.c.h.b16 %v6139
    %v6864 = vunpack.c.l.b16 %v6140
    %v6865 = vunpack.c.h.b16 %v6140
    %v6866 = vunpack.c.l.b16 %v6141
    %v6867 = vunpack.c.h.b16 %v6141
    %v6868 = vunpack.c.l.b16 %v6142
    %v6869 = vunpack.c.h.b16 %v6142
    %v6870 = vunpack.c.l.b16 %v6143
    %v6871 = vunpack.c.h.b16 %v6143
    %v6872 = vunpack.c.l.b16 %v6144
    %v6873 = vunpack.c.h.b16 %v6144
    %v6874 = vunpack.c.l.b16 %v6145
    %v6875 = vunpack.c.h.b16 %v6145
    %v6876 = vunpack.c.l.b16 %v6146
    %v6877 = vunpack.c.h.b16 %v6146
    %v6878 = vunpack.c.l.b16 %v6147
    %v6879 = vunpack.c.h.b16 %v6147
    %v6880 = vunpack.c.l.b16 %v6148
    %v6881 = vunpack.c.h.b16 %v6148
    %v6882 = vunpack.c.l.b16 %v6149
    %v6883 = vunpack.c.h.b16 %v6149
    %v6884 = vunpack.c.l.b16 %v6150
    %v6885 = vunpack.c.h.b16 %v6150
    %v6886 = vunpack.c.l.b16 %v6151
    %v6887 = vunpack.c.h.b16 %v6151
    %v6888 = vunpack.c.l.b16 %v6152
    %v6889 = vunpack.c.h.b16 %v6152
    %v6890 = vunpack.c.l.b16 %v6153
    %v6891 = vunpack.c.h.b16 %v6153
    %v6892 = vunpack.c.l.b16 %v6154
    %v6893 = vunpack.c.h.b16 %v6154
    %v6894 = vunpack.c.l.b16 %v6155
    %v6895 = vunpack.c.h.b16 %v6155
    %v6896 = vunpack.c.l.b16 %v6156
    %v6897 = vunpack.c.h.b16 %v6156
    %v6898 = vunpack.c.l.b16 %v6157
    %v6899 = vunpack.c.h.b16 %v6157
    %v6900 = vunpack.c.l.b16 %v6158
    %v6901 = vunpack.c.h.b16 %v6158
    %v6902 = vunpack.c.l.b16 %v6159
    %v6903 = vunpack.c.h.b16 %v6159
    %v6904 = vunpack.c.l.b16 %v6160
    %v6905 = vunpack.c.h.b16 %v6160
    %v6906 = vunpack.c.l.b16 %v6161
    %v6907 = vunpack.c.h.b16 %v6161
    %v6908 = vunpack.c.l.b16 %v6162
    %v6909 = vunpack.c.h.b16 %v6162
    %v6910 = vunpack.c.l.b16 %v6163
    %v6911 = vunpack.c.h.b16 %v6163
    %v6912 = vunpack.c.l.b16 %v6164
    %v6913 = vunpack.c.h.b16 %v6164
    %v6914 = vunpack.c.l.b16 %v6165
    %v6915 = vunpack.c.h.b16 %v6165
    %v6916 = vunpack.c.l.b16 %v6166
    %v6917 = vunpack.c.h.b16 %v6166
    %v6918 = vunpack.c.l.b16 %v6167
    %v6919 = vunpack.c.h.b16 %v6167
    %v6920 = vunpack.c.l.b16 %v6168
    %v6921 = vunpack.c.h.b16 %v6168
    %v6922 = vunpack.c.l.b16 %v6169
    %v6923 = vunpack.c.h.b16 %v6169
    %v6924 = vunpack.c.l.b16 %v6170
    %v6925 = vunpack.c.h.b16 %v6170
    %v6926 = vunpack.c.l.b16 %v6171
    %v6927 = vunpack.c.h.b16 %v6171
    %v6928 = vunpack.c.l.b16 %v6172
    %v6929 = vunpack.c.h.b16 %v6172
    %v6930 = vunpack.c.l.b16 %v6173
    %v6931 = vunpack.c.h.b16 %v6173
    %v6932 = vunpack.c.l.b16 %v6174
    %v6933 = vunpack.c.h.b16 %v6174
    %v6934 = vunpack.c.l.b16 %v6175
    %v6935 = vunpack.c.h.b16 %v6175
    %v6936 = vunpack.c.l.b16 %v6176
    %v6937 = vunpack.c.h.b16 %v6176
    %v6938 = vunpack.c.l.b16 %v6177
    %v6939 = vunpack.c.h.b16 %v6177
    %v6940 = vunpack.c.l.b16 %v6178
    %v6941 = vunpack.c.h.b16 %v6178
    %v6942 = vunpack.c.l.b16 %v6179
    %v6943 = vunpack.c.h.b16 %v6179
    %v6944 = vunpack.c.l.b16 %v6180
    %v6945 = vunpack.c.h.b16 %v6180
    %v6946 = vunpack.c.l.b16 %v6181
    %v6947 = vunpack.c.h.b16 %v6181
    %v6948 = vunpack.c.l.b16 %v6182
    %v6949 = vunpack.c.h.b16 %v6182
    %v6950 = vunpack.c.l.b16 %v6183
    %v6951 = vunpack.c.h.b16 %v6183
    %v6952 = vunpack.c.l.b16 %v6184
    %v6953 = vunpack.c.h.b16 %v6184
    %v6954 = vunpack.c.l.b16 %v6185
    %v6955 = vunpack.c.h.b16 %v6185
    %v6956 = vunpack.c.l.b16 %v6186
    %v6957 = vunpack.c.h.b16 %v6186
    %v6958 = vunpack.c.l.b16 %v6187
    %v6959 = vunpack.c.h.b16 %v6187
    %v6960 = vunpack.c.l.b16 %v6188
    %v6961 = vunpack.c.h.b16 %v6188
    %v6962 = vunpack.c.l.b16 %v6189
    %v6963 = vunpack.c.h.b16 %v6189
    %v6964 = vunpack.c.l.b16 %v6190
    %v6965 = vunpack.c.h.b16 %v6190
    %v6966 = vunpack.c.l.b16 %v6191
    %v6967 = vunpack.c.h.b16 %v6191
    %v6968 = vunpack.c.l.b16 %v6192
    %v6969 = vunpack.c.h.b16 %v6192
    %v6970 = vunpack.c.l.b16 %v6193
    %v6971 = vunpack.c.h.b16 %v6193
    %v6972 = vunpack.c.l.b16 %v6194
    %v6973 = vunpack.c.h.b16 %v6194
    %v6974 = vunpack.c.l.b16 %v6195
    %v6975 = vunpack.c.h.b16 %v6195
    %v6976 = vunpack.c.l.b16 %v6196
    %v6977 = vunpack.c.h.b16 %v6196
    %v6978 = vunpack.c.l.b16 %v6197
    %v6979 = vunpack.c.h.b16 %v6197
    %v6980 = vunpack.c.l.b16 %v6198
    %v6981 = vunpack.c.h.b16 %v6198
    %v6982 = vunpack.c.l.b16 %v6199
    %v6983 = vunpack.c.h.b16 %v6199
    %v6984 = vunpack.c.l.b16 %v6200
    %v6985 = vunpack.c.h.b16 %v6200
    %v6986 = vunpack.c.l.b16 %v6201
    %v6987 = vunpack.c.h.b16 %v6201
    %v6988 = vunpack.c.l.b16 %v6202
    %v6989 = vunpack.c.h.b16 %v6202
    %v6990 = vunpack.c.l.b16 %v6203
    %v6991 = vunpack.c.h.b16 %v6203
    %v6992 = vunpack.c.l.b16 %v6204
    %v6993 = vunpack.c.h.b16 %v6204
    %v6994 = vunpack.c.l.b16 %v6205
    %v6995 = vunpack.c.h.b16 %v6205
    %v6996 = vunpack.c.l.b16 %v6206
    %v6997 = vunpack.c.h.b16 %v6206
    %v6998 = vunpack.c.l.b16 %v6207
    %v6999 = vunpack.c.h.b16 %v6207
    %v7000 = vunpack.c.l.b16 %v6208
    %v7001 = vunpack.c.h.b16 %v6208
    %v7002 = vunpack.c.l.b16 %v6209
    %v7003 = vunpack.c.h.b16 %v6209
    %v7004 = vunpack.c.l.b16 %v6210
    %v7005 = vunpack.c.h.b16 %v6210
    %v7006 = vunpack.c.l.b16 %v6211
    %v7007 = vunpack.c.h.b16 %v6211
    %v7008 = vunpack.c.l.b16 %v6212
    %v7009 = vunpack.c.h.b16 %v6212
    %v7010 = vunpack.c.l.b16 %v6213
    %v7011 = vunpack.c.h.b16 %v6213
    %v7012 = vunpack.c.l.b16 %v6214
    %v7013 = vunpack.c.h.b16 %v6214
    %v7014 = vunpack.c.l.b16 %v6215
    %v7015 = vunpack.c.h.b16 %v6215
    %v7016 = vunpack.c.l.b16 %v6216
    %v7017 = vunpack.c.h.b16 %v6216
    %v7018 = vunpack.c.l.b16 %v6217
    %v7019 = vunpack.c.h.b16 %v6217
    %v7020 = vunpack.c.l.b16 %v6218
    %v7021 = vunpack.c.h.b16 %v6218
    %v7022 = vunpack.c.l.b16 %v6219
    %v7023 = vunpack.c.h.b16 %v6219
    %v7024 = vunpack.c.l.b16 %v6220
    %v7025 = vunpack.c.h.b16 %v6220
    %v7026 = vunpack.c.l.b16 %v6221
    %v7027 = vunpack.c.h.b16 %v6221
    %v7028 = vunpack.c.l.b16 %v6222
    %v7029 = vunpack.c.h.b16 %v6222
    %v7030 = vunpack.c.l.b16 %v6223
    %v7031 = vunpack.c.h.b16 %v6223
    %v7032 = vunpack.c.l.b16 %v6224
    %v7033 = vunpack.c.h.b16 %v6224
    %v7034 = vunpack.c.l.b16 %v6225
    %v7035 = vunpack.c.h.b16 %v6225
    %v7036 = vunpack.c.l.b16 %v6226
    %v7037 = vunpack.c.h.b16 %v6226
    %v7038 = vunpack.c.l.b16 %v6227
    %v7039 = vunpack.c.h.b16 %v6227
    %v7040 = vunpack.c.l.b16 %v6228
    %v7041 = vunpack.c.h.b16 %v6228
    %v7042 = vunpack.c.l.b16 %v6229
    %v7043 = vunpack.c.h.b16 %v6229
    %v7044 = vunpack.c.l.b16 %v6230
    %v7045 = vunpack.c.h.b16 %v6230
    %v7046 = vunpack.c.l.b16 %v6231
    %v7047 = vunpack.c.h.b16 %v6231
    %v7048 = vunpack.c.l.b16 %v6232
    %v7049 = vunpack.c.h.b16 %v6232
    %v7050 = vunpack.c.l.b16 %v6233
    %v7051 = vunpack.c.h.b16 %v6233
    %v7052 = vunpack.c.l.b16 %v6234
    %v7053 = vunpack.c.h.b16 %v6234
    %v7054 = vunpack.c.l.b16 %v6235
    %v7055 = vunpack.c.h.b16 %v6235
    %v7056 = vunpack.c.l.b16 %v6236
    %v7057 = vunpack.c.h.b16 %v6236
    %v7058 = vunpack.c.l.b16 %v6237
    %v7059 = vunpack.c.h.b16 %v6237
    %v7060 = vunpack.c.l.b16 %v6238
    %v7061 = vunpack.c.h.b16 %v6238
    %v7062 = vunpack.c.l.b16 %v6239
    %v7063 = vunpack.c.h.b16 %v6239
    %v7064 = vunpack.c.l.b16 %v6240
    %v7065 = vunpack.c.h.b16 %v6240
    %v7066 = vunpack.c.l.b16 %v6241
    %v7067 = vunpack.c.h.b16 %v6241
    %v7068 = vunpack.c.l.b16 %v6242
    %v7069 = vunpack.c.h.b16 %v6242
    %v7070 = vunpack.c.l.b16 %v6243
    %v7071 = vunpack.c.h.b16 %v6243
    %v7072 = vunpack.c.l.b16 %v6244
    %v7073 = vunpack.c.h.b16 %v6244
    %v7074 = vunpack.c.l.b16 %v6245
    %v7075 = vunpack.c.h.b16 %v6245
    %v7076 = vunpack.c.l.b16 %v6246
    %v7077 = vunpack.c.h.b16 %v6246
    %v7078 = vunpack.c.l.b16 %v6247
    %v7079 = vunpack.c.h.b16 %v6247
    %v7080 = vunpack.c.l.b16 %v6248
    %v7081 = vunpack.c.h.b16 %v6248
    %v7082 = vunpack.c.l.b16 %v6249
    %v7083 = vunpack.c.h.b16 %v6249
    %v7084 = vunpack.c.l.b16 %v6250
    %v7085 = vunpack.c.h.b16 %v6250
    %v7086 = vunpack.c.l.b16 %v6251
    %v7087 = vunpack.c.h.b16 %v6251
    %v7088 = vunpack.c.l.b16 %v6252
    %v7089 = vunpack.c.h.b16 %v6252
    %v7090 = vunpack.c.l.b16 %v6253
    %v7091 = vunpack.c.h.b16 %v6253
    %v7092 = vunpack.c.l.b16 %v6254
    %v7093 = vunpack.c.h.b16 %v6254
    %v7094 = vunpack.c.l.b16 %v6255
    %v7095 = vunpack.c.h.b16 %v6255
    %v7096 = vunpack.c.l.b16 %v6256
    %v7097 = vunpack.c.h.b16 %v6256
    %v7098 = vunpack.c.l.b16 %v6257
    %v7099 = vunpack.c.h.b16 %v6257
    %v7100 = vunpack.c.l.b16 %v6258
    %v7101 = vunpack.c.h.b16 %v6258
    %v7102 = vunpack.c.l.b16 %v6259
    %v7103 = vunpack.c.h.b16 %v6259
    %v7104 = vunpack.c.l.b16 %v6260
    %v7105 = vunpack.c.h.b16 %v6260
    %v7106 = vunpack.c.l.b16 %v6261
    %v7107 = vunpack.c.h.b16 %v6261
    %v7108 = vunpack.c.l.b16 %v6262
    %v7109 = vunpack.c.h.b16 %v6262
    %v7110 = vunpack.c.l.b16 %v6263
    %v7111 = vunpack.c.h.b16 %v6263
    %v7112 = vunpack.c.l.b16 %v6264
    %v7113 = vunpack.c.h.b16 %v6264
    %v7114 = vunpack.c.l.b16 %v6265
    %v7115 = vunpack.c.h.b16 %v6265
    %v7116 = vunpack.c.l.b16 %v6266
    %v7117 = vunpack.c.h.b16 %v6266
    %v7118 = vunpack.c.l.b16 %v6267
    %v7119 = vunpack.c.h.b16 %v6267
    %v7120 = vunpack.c.l.b16 %v6268
    %v7121 = vunpack.c.h.b16 %v6268
    %v7122 = vunpack.c.l.b16 %v6269
    %v7123 = vunpack.c.h.b16 %v6269
    %v7124 = vunpack.c.l.b16 %v6270
    %v7125 = vunpack.c.h.b16 %v6270
    %v7126 = vunpack.c.l.b16 %v6271
    %v7127 = vunpack.c.h.b16 %v6271
    %v7128 = vunpack.c.l.b16 %v6272
    %v7129 = vunpack.c.h.b16 %v6272
    %v7130 = vunpack.c.l.b16 %v6273
    %v7131 = vunpack.c.h.b16 %v6273
    %v7132 = vunpack.c.l.b16 %v6274
    %v7133 = vunpack.c.h.b16 %v6274
    %v7134 = vunpack.c.l.b16 %v6275
    %v7135 = vunpack.c.h.b16 %v6275
    %v7136 = vunpack.c.l.b16 %v6276
    %v7137 = vunpack.c.h.b16 %v6276
    %v7138 = vunpack.c.l.b16 %v6277
    %v7139 = vunpack.c.h.b16 %v6277
    %v7140 = vunpack.c.l.b16 %v6278
    %v7141 = vunpack.c.h.b16 %v6278
    %v7142 = vunpack.c.l.b16 %v6279
    %v7143 = vunpack.c.h.b16 %v6279
    %v7144 = vunpack.c.l.b16 %v6280
    %v7145 = vunpack.c.h.b16 %v6280
    %v7146 = vunpack.c.l.b16 %v6281
    %v7147 = vunpack.c.h.b16 %v6281
    %v7148 = vunpack.c.l.b16 %v6282
    %v7149 = vunpack.c.h.b16 %v6282
    %v7150 = vunpack.c.l.b16 %v6283
    %v7151 = vunpack.c.h.b16 %v6283
    %v7152 = vunpack.c.l.b16 %v6284
    %v7153 = vunpack.c.h.b16 %v6284
    %v7154 = vunpack.c.l.b16 %v6285
    %v7155 = vunpack.c.h.b16 %v6285
    %v7156 = vunpack.c.l.b16 %v6286
    %v7157 = vunpack.c.h.b16 %v6286
    %v7158 = vunpack.c.l.b16 %v6287
    %v7159 = vunpack.c.h.b16 %v6287
    %v7160 = vunpack.c.l.b16 %v6288
    %v7161 = vunpack.c.h.b16 %v6288
    %v7162 = vunpack.c.l.b16 %v6289
    %v7163 = vunpack.c.h.b16 %v6289
    %v7164 = vunpack.c.l.b16 %v6290
    %v7165 = vunpack.c.h.b16 %v6290
    %v7166 = vunpack.c.l.b16 %v6291
    %v7167 = vunpack.c.h.b16 %v6291
    %v7168 = vunpack.c.l.b16 %v6292
    %v7169 = vunpack.c.h.b16 %v6292
    %v7170 = vunpack.c.l.b16 %v6293
    %v7171 = vunpack.c.h.b16 %v6293
    %v7172 = vunpack.c.l.b16 %v6294
    %v7173 = vunpack.c.h.b16 %v6294
    %v7174 = vunpack.c.l.b16 %v6295
    %v7175 = vunpack.c.h.b16 %v6295
    %v7176 = vunpack.c.l.b16 %v6296
    %v7177 = vunpack.c.h.b16 %v6296
    %v7178 = vunpack.c.l.b16 %v6297
    %v7179 = vunpack.c.h.b16 %v6297
    %v7180 = vunpack.c.l.b16 %v6298
    %v7181 = vunpack.c.h.b16 %v6298
    %v7182 = vunpack.c.l.b16 %v6299
    %v7183 = vunpack.c.h.b16 %v6299
    %v7184 = vunpack.c.l.b16 %v6300
    %v7185 = vunpack.c.h.b16 %v6300
    %v7186 = vunpack.c.l.b16 %v6301
    %v7187 = vunpack.c.h.b16 %v6301
    %v7188 = vunpack.c.l.b16 %v6302
    %v7189 = vunpack.c.h.b16 %v6302
    %v7190 = vunpack.c.l.b16 %v6303
    %v7191 = vunpack.c.h.b16 %v6303
    %v7192 = vunpack.c.l.b16 %v6304
    %v7193 = vunpack.c.h.b16 %v6304
    %v7194 = vunpack.c.l.b16 %v6305
    %v7195 = vunpack.c.h.b16 %v6305
    %v7196 = vunpack.c.l.b16 %v6306
    %v7197 = vunpack.c.h.b16 %v6306
    %v7198 = vunpack.c.l.b16 %v6307
    %v7199 = vunpack.c.h.b16 %v6307
    %v7200 = vunpack.c.l.b16 %v6308
    %v7201 = vunpack.c.h.b16 %v6308
    %v7202 = vunpack.c.l.b16 %v6309
    %v7203 = vunpack.c.h.b16 %v6309
    %v7204 = vunpack.c.l.b16 %v6310
    %v7205 = vunpack.c.h.b16 %v6310
    %v7206 = vunpack.c.l.b16 %v6311
    %v7207 = vunpack.c.h.b16 %v6311
    %v7208 = vpack.c.b16 %v6638, %v6632
    %v7209 = vpack.c.b16 %v6639, %v6633
    %v7210 = vpack.c.b16 %v6640, %v6634
    %v7211 = vpack.c.b16 %v6641, %v6635
    %v7212 = vpack.c.b16 %v6642, %v6636
    %v7213 = vpack.c.b16 %v6643, %v6637
    %v7214 = vpack.c.b16 %v6650, %v6644
    %v7215 = vpack.c.b16 %v6651, %v6645
    %v7216 = vpack.c.b16 %v6652, %v6646
    %v7217 = vpack.c.b16 %v6653, %v6647
    %v7218 = vpack.c.b16 %v6654, %v6648
    %v7219 = vpack.c.b16 %v6655, %v6649
    %v7220 = vpack.c.b16 %v6662, %v6656
    %v7221 = vpack.c.b16 %v6663, %v6657
    %v7222 = vpack.c.b16 %v6664, %v6658
    %v7223 = vpack.c.b16 %v6665, %v6659
    %v7224 = vpack.c.b16 %v6666, %v6660
    %v7225 = vpack.c.b16 %v6667, %v6661
    %v7226 = vpack.c.b16 %v6674, %v6668
    %v7227 = vpack.c.b16 %v6675, %v6669
    %v7228 = vpack.c.b16 %v6676, %v6670
    %v7229 = vpack.c.b16 %v6677, %v6671
    %v7230 = vpack.c.b16 %v6678, %v6672
    %v7231 = vpack.c.b16 %v6679, %v6673
    %v7232 = vpack.c.b16 %v6686, %v6680
    %v7233 = vpack.c.b16 %v6687, %v6681
    %v7234 = vpack.c.b16 %v6688, %v6682
    %v7235 = vpack.c.b16 %v6689, %v6683
    %v7236 = vpack.c.b16 %v6690, %v6684
    %v7237 = vpack.c.b16 %v6691, %v6685
    %v7238 = vpack.c.b16 %v6698, %v6692
    %v7239 = vpack.c.b16 %v6699, %v6693
    %v7240 = vpack.c.b16 %v6700, %v6694
    %v7241 = vpack.c.b16 %v6701, %v6695
    %v7242 = vpack.c.b16 %v6702, %v6696
    %v7243 = vpack.c.b16 %v6703, %v6697
    %v7244 = vpack.c.b16 %v6710, %v6704
    %v7245 = vpack.c.b16 %v6711, %v6705
    %v7246 = vpack.c.b16 %v6712, %v6706
    %v7247 = vpack.c.b16 %v6713, %v6707
    %v7248 = vpack.c.b16 %v6714, %v6708
    %v7249 = vpack.c.b16 %v6715, %v6709
    %v7250 = vpack.c.b16 %v6722, %v6716
    %v7251 = vpack.c.b16 %v6723, %v6717
    %v7252 = vpack.c.b16 %v6724, %v6718
    %v7253 = vpack.c.b16 %v6725, %v6719
    %v7254 = vpack.c.b16 %v6726, %v6720
    %v7255 = vpack.c.b16 %v6727, %v6721
    %v7256 = vpack.c.b16 %v6734, %v6728
    %v7257 = vpack.c.b16 %v6735, %v6729
    %v7258 = vpack.c.b16 %v6736, %v6730
    %v7259 = vpack.c.b16 %v6737, %v6731
    %v7260 = vpack.c.b16 %v6738, %v6732
    %v7261 = vpack.c.b16 %v6739, %v6733
    %v7262 = vpack.c.b16 %v6746, %v6740
    %v7263 = vpack.c.b16 %v6747, %v6741
    %v7264 = vpack.c.b16 %v6748, %v6742
    %v7265 = vpack.c.b16 %v6749, %v6743
    %v7266 = vpack.c.b16 %v6750, %v6744
    %v7267 = vpack.c.b16 %v6751, %v6745
    %v7268 = vpack.c.b16 %v6758, %v6752
    %v7269 = vpack.c.b16 %v6759, %v6753
    %v7270 = vpack.c.b16 %v6760, %v6754
    %v7271 = vpack.c.b16 %v6761, %v6755
    %v7272 = vpack.c.b16 %v6762, %v6756
    %v7273 = vpack.c.b16 %v6763, %v6757
    %v7274 = vpack.c.b16 %v6770, %v6764
    %v7275 = vpack.c.b16 %v6771, %v6765
    %v7276 = vpack.c.b16 %v6772, %v6766
    %v7277 = vpack.c.b16 %v6773, %v6767
    %v7278 = vpack.c.b16 %v6774, %v6768
    %v7279 = vpack.c.b16 %v6775, %v6769
    %v7280 = vpack.c.b16 %v6782, %v6776
    %v7281 = vpack.c.b16 %v6783, %v6777
    %v7282 = vpack.c.b16 %v6784, %v6778
    %v7283 = vpack.c.b16 %v6785, %v6779
    %v7284 = vpack.c.b16 %v6786, %v6780
    %v7285 = vpack.c.b16 %v6787, %v6781
    %v7286 = vpack.c.b16 %v6794, %v6788
    %v7287 = vpack.c.b16 %v6795, %v6789
    %v7288 = vpack.c.b16 %v6796, %v6790
    %v7289 = vpack.c.b16 %v6797, %v6791
    %v7290 = vpack.c.b16 %v6798, %v6792
    %v7291 = vpack.c.b16 %v6799, %v6793
    %v7292 = vpack.c.b16 %v6806, %v6800
    %v7293 = vpack.c.b16 %v6807, %v6801
    %v7294 = vpack.c.b16 %v6808, %v6802
    %v7295 = vpack.c.b16 %v6809, %v6803
    %v7296 = vpack.c.b16 %v6810, %v6804
    %v7297 = vpack.c.b16 %v6811, %v6805
    %v7298 = vpack.c.b16 %v6818, %v6812
    %v7299 = vpack.c.b16 %v6819, %v6813
    %v7300 = vpack.c.b16 %v6820, %v6814
    %v7301 = vpack.c.b16 %v6821, %v6815
    %v7302 = vpack.c.b16 %v6822, %v6816
    %v7303 = vpack.c.b16 %v6823, %v6817
    %v7304 = vpack.c.b16 %v6830, %v6824
    %v7305 = vpack.c.b16 %v6831, %v6825
    %v7306 = vpack.c.b16 %v6832, %v6826
    %v7307 = vpack.c.b16 %v6833, %v6827
    %v7308 = vpack.c.b16 %v6834, %v6828
    %v7309 = vpack.c.b16 %v6835, %v6829
    %v7310 = vpack.c.b16 %v6842, %v6836
    %v7311 = vpack.c.b16 %v6843, %v6837
    %v7312 = vpack.c.b16 %v6844, %v6838
    %v7313 = vpack.c.b16 %v6845, %v6839
    %v7314 = vpack.c.b16 %v6846, %v6840
    %v7315 = vpack.c.b16 %v6847, %v6841
    %v7316 = vpack.c.b16 %v6854, %v6848
    %v7317 = vpack.c.b16 %v6855, %v6849
    %v7318 = vpack.c.b16 %v6856, %v6850
    %v7319 = vpack.c.b16 %v6857, %v6851
    %v7320 = vpack.c.b16 %v6858, %v6852
    %v7321 = vpack.c.b16 %v6859, %v6853
    %v7322 = vpack.c.b16 %v6866, %v6860
    %v7323 = vpack.c.b16 %v6867, %v6861
    %v7324 = vpack.c.b16 %v6868, %v6862
    %v7325 = vpack.c.b16 %v6869, %v6863
    %v7326 = vpack.c.b16 %v6870, %v6864
    %v7327 = vpack.c.b16 %v6871, %v6865
    %v7328 = vpack.c.b16 %v6878, %v6872
    %v7329 = vpack.c.b16 %v6879, %v6873
    %v7330 = vpack.c.b16 %v6880, %v6874
    %v7331 = vpack.c.b16 %v6881, %v6875
    %v7332 = vpack.c.b16 %v6882, %v6876
    %v7333 = vpack.c.b16 %v6883, %v6877
    %v7334 = vpack.c.b16 %v6890, %v6884
    %v7335 = vpack.c.b16 %v6891, %v6885
    %v7336 = vpack.c.b16 %v6892, %v6886
    %v7337 = vpack.c.b16 %v6893, %v6887
    %v7338 = vpack.c.b16 %v6894, %v6888
    %v7339 = vpack.c.b16 %v6895, %v6889
    %v7340 = vpack.c.b16 %v6902, %v6896
    %v7341 = vpack.c.b16 %v6903, %v6897
    %v7342 = vpack.c.b16 %v6904, %v6898
    %v7343 = vpack.c.b16 %v6905, %v6899
    %v7344 = vpack.c.b16 %v6906, %v6900
    %v7345 = vpack.c.b16 %v6907, %v6901
    %v7346 = vpack.c.b16 %v6914, %v6908
    %v7347 = vpack.c.b16 %v6915, %v6909
    %v7348 = vpack.c.b16 %v6916, %v6910
    %v7349 = vpack.c.b16 %v6917, %v6911
    %v7350 = vpack.c.b16 %v6918, %v6912
    %v7351 = vpack.c.b16 %v6919, %v6913
    %v7352 = vpack.c.b16 %v6926, %v6920
    %v7353 = vpack.c.b16 %v6927, %v6921
    %v7354 = vpack.c.b16 %v6928, %v6922
    %v7355 = vpack.c.b16 %v6929, %v6923
    %v7356 = vpack.c.b16 %v6930, %v6924
    %v7357 = vpack.c.b16 %v6931, %v6925
    %v7358 = vpack.c.b16 %v6938, %v6932
    %v7359 = vpack.c.b16 %v6939, %v6933
    %v7360 = vpack.c.b16 %v6940, %v6934
    %v7361 = vpack.c.b16 %v6941, %v6935
    %v7362 = vpack.c.b16 %v6942, %v6936
    %v7363 = vpack.c.b16 %v6943, %v6937
    %v7364 = vpack.c.b16 %v6950, %v6944
    %v7365 = vpack.c.b16 %v6951, %v6945
    %v7366 = vpack.c.b16 %v6952, %v6946
    %v7367 = vpack.c.b16 %v6953, %v6947
    %v7368 = vpack.c.b16 %v6954, %v6948
    %v7369 = vpack.c.b16 %v6955, %v6949
    %v7370 = vpack.c.b16 %v6962, %v6956
    %v7371 = vpack.c.b16 %v6963, %v6957
    %v7372 = vpack.c.b16 %v6964, %v6958
    %v7373 = vpack.c.b16 %v6965, %v6959
    %v7374 = vpack.c.b16 %v6966, %v6960
    %v7375 = vpack.c.b16 %v6967, %v6961
    %v7376 = vpack.c.b16 %v6974, %v6968
    %v7377 = vpack.c.b16 %v6975, %v6969
    %v7378 = vpack.c.b16 %v6976, %v6970
    %v7379 = vpack.c.b16 %v6977, %v6971
    %v7380 = vpack.c.b16 %v6978, %v6972
    %v7381 = vpack.c.b16 %v6979, %v6973
    %v7382 = vpack.c.b16 %v6986, %v6980
    %v7383 = vpack.c.b16 %v6987, %v6981
    %v7384 = vpack.c.b16 %v6988, %v6982
    %v7385 = vpack.c.b16 %v6989, %v6983
    %v7386 = vpack.c.b16 %v6990, %v6984
    %v7387 = vpack.c.b16 %v6991, %v6985
    %v7388 = vpack.c.b16 %v6998, %v6992
    %v7389 = vpack.c.b16 %v6999, %v6993
    %v7390 = vpack.c.b16 %v7000, %v6994
    %v7391 = vpack.c.b16 %v7001, %v6995
    %v7392 = vpack.c.b16 %v7002, %v6996
    %v7393 = vpack.c.b16 %v7003, %v6997
    %v7394 = vpack.c.b16 %v7010, %v7004
    %v7395 = vpack.c.b16 %v7011, %v7005
    %v7396 = vpack.c.b16 %v7012, %v7006
    %v7397 = vpack.c.b16 %v7013, %v7007
    %v7398 = vpack.c.b16 %v7014, %v7008
    %v7399 = vpack.c.b16 %v7015, %v7009
    %v7400 = vpack.c.b16 %v7022, %v7016
    %v7401 = vpack.c.b16 %v7023, %v7017
    %v7402 = vpack.c.b16 %v7024, %v7018
    %v7403 = vpack.c.b16 %v7025, %v7019
    %v7404 = vpack.c.b16 %v7026, %v7020
    %v7405 = vpack.c.b16 %v7027, %v7021
    %v7406 = vpack.c.b16 %v7034, %v7028
    %v7407 = vpack.c.b16 %v7035, %v7029
    %v7408 = vpack.c.b16 %v7036, %v7030
    %v7409 = vpack.c.b16 %v7037, %v7031
    %v7410 = vpack.c.b16 %v7038, %v7032
    %v7411 = vpack.c.b16 %v7039, %v7033
    %v7412 = vpack.c.b16 %v7046, %v7040
    %v7413 = vpack.c.b16 %v7047, %v7041
    %v7414 = vpack.c.b16 %v7048, %v7042
    %v7415 = vpack.c.b16 %v7049, %v7043
    %v7416 = vpack.c.b16 %v7050, %v7044
    %v7417 = vpack.c.b16 %v7051, %v7045
    %v7418 = vpack.c.b16 %v7058, %v7052
    %v7419 = vpack.c.b16 %v7059, %v7053
    %v7420 = vpack.c.b16 %v7060, %v7054
    %v7421 = vpack.c.b16 %v7061, %v7055
    %v7422 = vpack.c.b16 %v7062, %v7056
    %v7423 = vpack.c.b16 %v7063, %v7057
    %v7424 = vpack.c.b16 %v7070, %v7064
    %v7425 = vpack.c.b16 %v7071, %v7065
    %v7426 = vpack.c.b16 %v7072, %v7066
    %v7427 = vpack.c.b16 %v7073, %v7067
    %v7428 = vpack.c.b16 %v7074, %v7068
    %v7429 = vpack.c.b16 %v7075, %v7069
    %v7430 = vpack.c.b16 %v7082, %v7076
    %v7431 = vpack.c.b16 %v7083, %v7077
    %v7432 = vpack.c.b16 %v7084, %v7078
    %v7433 = vpack.c.b16 %v7085, %v7079
    %v7434 = vpack.c.b16 %v7086, %v7080
    %v7435 = vpack.c.b16 %v7087, %v7081
    %v7436 = vpack.c.b16 %v7094, %v7088
    %v7437 = vpack.c.b16 %v7095, %v7089
    %v7438 = vpack.c.b16 %v7096, %v7090
    %v7439 = vpack.c.b16 %v7097, %v7091
    %v7440 = vpack.c.b16 %v7098, %v7092
    %v7441 = vpack.c.b16 %v7099, %v7093
    %v7442 = vpack.c.b16 %v7106, %v7100
    %v7443 = vpack.c.b16 %v7107, %v7101
    %v7444 = vpack.c.b16 %v7108, %v7102
    %v7445 = vpack.c.b16 %v7109, %v7103
    %v7446 = vpack.c.b16 %v7110, %v7104
    %v7447 = vpack.c.b16 %v7111, %v7105
    %v7448 = vpack.c.b16 %v7118, %v7112
    %v7449 = vpack.c.b16 %v7119, %v7113
    %v7450 = vpack.c.b16 %v7120, %v7114
    %v7451 = vpack.c.b16 %v7121, %v7115
    %v7452 = vpack.c.b16 %v7122, %v7116
    %v7453 = vpack.c.b16 %v7123, %v7117
    %v7454 = vpack.c.b16 %v7130, %v7124
    %v7455 = vpack.c.b16 %v7131, %v7125
    %v7456 = vpack.c.b16 %v7132, %v7126
    %v7457 = vpack.c.b16 %v7133, %v7127
    %v7458 = vpack.c.b16 %v7134, %v7128
    %v7459 = vpack.c.b16 %v7135, %v7129
    %v7460 = vpack.c.b16 %v7142, %v7136
    %v7461 = vpack.c.b16 %v7143, %v7137
    %v7462 = vpack.c.b16 %v7144, %v7138
    %v7463 = vpack.c.b16 %v7145, %v7139
    %v7464 = vpack.c.b16 %v7146, %v7140
    %v7465 = vpack.c.b16 %v7147, %v7141
    %v7466 = vpack.c.b16 %v7154, %v7148
    %v7467 = vpack.c.b16 %v7155, %v7149
    %v7468 = vpack.c.b16 %v7156, %v7150
    %v7469 = vpack.c.b16 %v7157, %v7151
    %v7470 = vpack.c.b16 %v7158, %v7152
    %v7471 = vpack.c.b16 %v7159, %v7153
    %v7472 = vpack.c.b16 %v7166, %v7160
    %v7473 = vpack.c.b16 %v7167, %v7161
    %v7474 = vpack.c.b16 %v7168, %v7162
    %v7475 = vpack.c.b16 %v7169, %v7163
    %v7476 = vpack.c.b16 %v7170, %v7164
    %v7477 = vpack.c.b16 %v7171, %v7165
    %v7478 = vpack.c.b16 %v7178, %v7172
    %v7479 = vpack.c.b16 %v7179, %v7173
    %v7480 = vpack.c.b16 %v7180, %v7174
    %v7481 = vpack.c.b16 %v7181, %v7175
    %v7482 = vpack.c.b16 %v7182, %v7176
    %v7483 = vpack.c.b16 %v7183, %v7177
    %v7484 = vpack.c.b16 %v7190, %v7184
    %v7485 = vpack.c.b16 %v7191, %v7185
    %v7486 = vpack.c.b16 %v7192, %v7186
    %v7487 = vpack.c.b16 %v7193, %v7187
    %v7488 = vpack.c.b16 %v7194, %v7188
    %v7489 = vpack.c.b16 %v7195, %v7189
    %v7490 = vpack.c.b16 %v7202, %v7196
    %v7491 = vpack.c.b16 %v7203, %v7197
    %v7492 = vpack.c.b16 %v7204, %v7198
    %v7493 = vpack.c.b16 %v7205, %v7199
    %v7494 = vpack.c.b16 %v7206, %v7200
    %v7495 = vpack.c.b16 %v7207, %v7201
    %7784 = vmatprep.subr.bf16.mxu0 %v7251
    %7785 = vmatpush1.bf16.msra.mxu0 %v7250
    %7786 = vmatprep.subr.bf16.mxu0 %v7245
    %7787 = vmatpush1.bf16.msra.mxu0 %v7244
    %7788 = vmatprep.subr.bf16.mxu0 %v7239
    %7789 = vmatpush1.bf16.msra.mxu0 %v7238
    %7790 = vmatprep.subr.bf16.mxu0 %v7233
    %7791 = vmatpush1.bf16.msra.mxu0 %v7232
    %7792 = vmatprep.subr.bf16.mxu0 %v7227
    %7793 = vmatpush1.bf16.msra.mxu0 %v7226
    %7794 = vmatprep.subr.bf16.mxu0 %v7221
    %7795 = vmatpush1.bf16.msra.mxu0 %v7220
    %7796 = vmatprep.subr.bf16.mxu0 %v7215
    %7797 = vmatpush1.bf16.msra.mxu0 %v7214
    %7798 = vmatprep.subr.bf16.mxu0 %v7209
    %7799 = vmatpush1.bf16.msra.mxu0 %v7208
    %7800 = vmatprep.subr.bf16.mxu0 %v7299
    %7801 = vmatpush2.bf16.msra.mxu0 %v7298
    %7802 = vmatprep.subr.bf16.mxu0 %v7293
    %7803 = vmatpush2.bf16.msra.mxu0 %v7292
    %7804 = vmatprep.subr.bf16.mxu0 %v7287
    %7805 = vmatpush2.bf16.msra.mxu0 %v7286
    %7806 = vmatprep.subr.bf16.mxu0 %v7281
    %7807 = vmatpush2.bf16.msra.mxu0 %v7280
    %7808 = vmatprep.subr.bf16.mxu0 %v7275
    %7809 = vmatpush2.bf16.msra.mxu0 %v7274
    %7810 = vmatprep.subr.bf16.mxu0 %v7269
    %7811 = vmatpush2.bf16.msra.mxu0 %v7268
    %7812 = vmatprep.subr.bf16.mxu0 %v7263
    %7813 = vmatpush2.bf16.msra.mxu0 %v7262
    %7814 = vmatprep.subr.bf16.mxu0 %v7257
    %7815 = vmatpush2.bf16.msra.mxu0 %v7256
    %7816 = vmatprep.mubr.bf16.mxu0 %v6019
    %7817 = vmatmul.mubr.bf16.gmra.mxu0 %v6018
    %v7818 = vpop.f32.mrf.mxu0
    %v7819 = vadd.f32 %v6317, %v7818
    %v7820 = vpop.f32.mrf.mxu0
    %v7821 = vadd.f32 %v6321, %v7820
    %v7822 = vpop.f32.mrf.mxu0
    %v7823 = vpop.f32.mrf.mxu0
    %7824 = vdwg.mxu0
    %7825 = vmatprep.subr.bf16.mxu0 %v7347
    %7826 = vmatpush1.bf16.msra.mxu0 %v7346
    %7827 = vmatprep.subr.bf16.mxu0 %v7341
    %7828 = vmatpush1.bf16.msra.mxu0 %v7340
    %7829 = vmatprep.subr.bf16.mxu0 %v7335
    %7830 = vmatpush1.bf16.msra.mxu0 %v7334
    %7831 = vmatprep.subr.bf16.mxu0 %v7329
    %7832 = vmatpush1.bf16.msra.mxu0 %v7328
    %7833 = vmatprep.subr.bf16.mxu0 %v7323
    %7834 = vmatpush1.bf16.msra.mxu0 %v7322
    %7835 = vmatprep.subr.bf16.mxu0 %v7317
    %7836 = vmatpush1.bf16.msra.mxu0 %v7316
    %7837 = vmatprep.subr.bf16.mxu0 %v7311
    %7838 = vmatpush1.bf16.msra.mxu0 %v7310
    %7839 = vmatprep.subr.bf16.mxu0 %v7305
    %7840 = vmatpush1.bf16.msra.mxu0 %v7304
    %7841 = vmatprep.subr.bf16.mxu0 %v7395
    %7842 = vmatpush2.bf16.msra.mxu0 %v7394
    %7843 = vmatprep.subr.bf16.mxu0 %v7389
    %7844 = vmatpush2.bf16.msra.mxu0 %v7388
    %7845 = vmatprep.subr.bf16.mxu0 %v7383
    %7846 = vmatpush2.bf16.msra.mxu0 %v7382
    %7847 = vmatprep.subr.bf16.mxu0 %v7377
    %7848 = vmatpush2.bf16.msra.mxu0 %v7376
    %7849 = vmatprep.subr.bf16.mxu0 %v7371
    %7850 = vmatpush2.bf16.msra.mxu0 %v7370
    %7851 = vmatprep.subr.bf16.mxu0 %v7365
    %7852 = vmatpush2.bf16.msra.mxu0 %v7364
    %7853 = vmatprep.subr.bf16.mxu0 %v7359
    %7854 = vmatpush2.bf16.msra.mxu0 %v7358
    %7855 = vmatprep.subr.bf16.mxu0 %v7353
    %7856 = vmatpush2.bf16.msra.mxu0 %v7352
    %7857 = vmatprep.mubr.bf16.mxu0 %v6021
    %7858 = vmatmul.mubr.bf16.gmra.mxu0 %v6020
    %v7859 = vpop.f32.mrf.mxu0
    %v7860 = vadd.f32 %v7819, %v7859
    %v7861 = vpop.f32.mrf.mxu0
    %v7862 = vadd.f32 %v7821, %v7861
    %v7863 = vpop.f32.mrf.mxu0
    %v7864 = vpop.f32.mrf.mxu0
    %7865 = vdwg.mxu0
    %7866 = vmatprep.subr.bf16.mxu0 %v7443
    %7867 = vmatpush1.bf16.msra.mxu0 %v7442
    %7868 = vmatprep.subr.bf16.mxu0 %v7437
    %7869 = vmatpush1.bf16.msra.mxu0 %v7436
    %7870 = vmatprep.subr.bf16.mxu0 %v7431
    %7871 = vmatpush1.bf16.msra.mxu0 %v7430
    %7872 = vmatprep.subr.bf16.mxu0 %v7425
    %7873 = vmatpush1.bf16.msra.mxu0 %v7424
    %7874 = vmatprep.subr.bf16.mxu0 %v7419
    %7875 = vmatpush1.bf16.msra.mxu0 %v7418
    %7876 = vmatprep.subr.bf16.mxu0 %v7413
    %7877 = vmatpush1.bf16.msra.mxu0 %v7412
    %7878 = vmatprep.subr.bf16.mxu0 %v7407
    %7879 = vmatpush1.bf16.msra.mxu0 %v7406
    %7880 = vmatprep.subr.bf16.mxu0 %v7401
    %7881 = vmatpush1.bf16.msra.mxu0 %v7400
    %7882 = vmatprep.subr.bf16.mxu0 %v7491
    %7883 = vmatpush2.bf16.msra.mxu0 %v7490
    %7884 = vmatprep.subr.bf16.mxu0 %v7485
    %7885 = vmatpush2.bf16.msra.mxu0 %v7484
    %7886 = vmatprep.subr.bf16.mxu0 %v7479
    %7887 = vmatpush2.bf16.msra.mxu0 %v7478
    %7888 = vmatprep.subr.bf16.mxu0 %v7473
    %7889 = vmatpush2.bf16.msra.mxu0 %v7472
    %7890 = vmatprep.subr.bf16.mxu0 %v7467
    %7891 = vmatpush2.bf16.msra.mxu0 %v7466
    %7892 = vmatprep.subr.bf16.mxu0 %v7461
    %7893 = vmatpush2.bf16.msra.mxu0 %v7460
    %7894 = vmatprep.subr.bf16.mxu0 %v7455
    %7895 = vmatpush2.bf16.msra.mxu0 %v7454
    %7896 = vmatprep.subr.bf16.mxu0 %v7449
    %7897 = vmatpush2.bf16.msra.mxu0 %v7448
    %7898 = vmatprep.mubr.bf16.mxu0 %v6023
    %7899 = vmatmul.mubr.bf16.gmra.mxu0 %v6022
    %v7900 = vpop.f32.mrf.mxu0
    %v7901 = vadd.f32 %v7860, %v7900
    %v7902 = vpop.f32.mrf.mxu0
    %v7903 = vadd.f32 %v7862, %v7902
    %v7904 = vpop.f32.mrf.mxu0
    %v7905 = vpop.f32.mrf.mxu0
    %7906 = vdwg.mxu0
    %7907 = vmatprep.subr.bf16.mxu0 %v7253
    %7908 = vmatpush1.bf16.msra.mxu0 %v7252
    %7909 = vmatprep.subr.bf16.mxu0 %v7247
    %7910 = vmatpush1.bf16.msra.mxu0 %v7246
    %7911 = vmatprep.subr.bf16.mxu0 %v7241
    %7912 = vmatpush1.bf16.msra.mxu0 %v7240
    %7913 = vmatprep.subr.bf16.mxu0 %v7235
    %7914 = vmatpush1.bf16.msra.mxu0 %v7234
    %7915 = vmatprep.subr.bf16.mxu0 %v7229
    %7916 = vmatpush1.bf16.msra.mxu0 %v7228
    %7917 = vmatprep.subr.bf16.mxu0 %v7223
    %7918 = vmatpush1.bf16.msra.mxu0 %v7222
    %7919 = vmatprep.subr.bf16.mxu0 %v7217
    %7920 = vmatpush1.bf16.msra.mxu0 %v7216
    %7921 = vmatprep.subr.bf16.mxu0 %v7211
    %7922 = vmatpush1.bf16.msra.mxu0 %v7210
    %7923 = vmatprep.subr.bf16.mxu0 %v7301
    %7924 = vmatpush2.bf16.msra.mxu0 %v7300
    %7925 = vmatprep.subr.bf16.mxu0 %v7295
    %7926 = vmatpush2.bf16.msra.mxu0 %v7294
    %7927 = vmatprep.subr.bf16.mxu0 %v7289
    %7928 = vmatpush2.bf16.msra.mxu0 %v7288
    %7929 = vmatprep.subr.bf16.mxu0 %v7283
    %7930 = vmatpush2.bf16.msra.mxu0 %v7282
    %7931 = vmatprep.subr.bf16.mxu0 %v7277
    %7932 = vmatpush2.bf16.msra.mxu0 %v7276
    %7933 = vmatprep.subr.bf16.mxu0 %v7271
    %7934 = vmatpush2.bf16.msra.mxu0 %v7270
    %7935 = vmatprep.subr.bf16.mxu0 %v7265
    %7936 = vmatpush2.bf16.msra.mxu0 %v7264
    %7937 = vmatprep.subr.bf16.mxu0 %v7259
    %7938 = vmatpush2.bf16.msra.mxu0 %v7258
    %7939 = vmatprep.mubr.bf16.mxu0 %v6019
    %7940 = vmatmul.mubr.bf16.gmra.mxu0 %v6018
    %v7941 = vpop.f32.mrf.mxu0
    %v7942 = vadd.f32 %v6325, %v7941
    %v7943 = vpop.f32.mrf.mxu0
    %v7944 = vadd.f32 %v6329, %v7943
    %v7945 = vpop.f32.mrf.mxu0
    %v7946 = vpop.f32.mrf.mxu0
    %7947 = vdwg.mxu0
    %7948 = vmatprep.subr.bf16.mxu0 %v7349
    %7949 = vmatpush1.bf16.msra.mxu0 %v7348
    %7950 = vmatprep.subr.bf16.mxu0 %v7343
    %7951 = vmatpush1.bf16.msra.mxu0 %v7342
    %7952 = vmatprep.subr.bf16.mxu0 %v7337
    %7953 = vmatpush1.bf16.msra.mxu0 %v7336
    %7954 = vmatprep.subr.bf16.mxu0 %v7331
    %7955 = vmatpush1.bf16.msra.mxu0 %v7330
    %7956 = vmatprep.subr.bf16.mxu0 %v7325
    %7957 = vmatpush1.bf16.msra.mxu0 %v7324
    %7958 = vmatprep.subr.bf16.mxu0 %v7319
    %7959 = vmatpush1.bf16.msra.mxu0 %v7318
    %7960 = vmatprep.subr.bf16.mxu0 %v7313
    %7961 = vmatpush1.bf16.msra.mxu0 %v7312
    %7962 = vmatprep.subr.bf16.mxu0 %v7307
    %7963 = vmatpush1.bf16.msra.mxu0 %v7306
    %7964 = vmatprep.subr.bf16.mxu0 %v7397
    %7965 = vmatpush2.bf16.msra.mxu0 %v7396
    %7966 = vmatprep.subr.bf16.mxu0 %v7391
    %7967 = vmatpush2.bf16.msra.mxu0 %v7390
    %7968 = vmatprep.subr.bf16.mxu0 %v7385
    %7969 = vmatpush2.bf16.msra.mxu0 %v7384
    %7970 = vmatprep.subr.bf16.mxu0 %v7379
    %7971 = vmatpush2.bf16.msra.mxu0 %v7378
    %7972 = vmatprep.subr.bf16.mxu0 %v7373
    %7973 = vmatpush2.bf16.msra.mxu0 %v7372
    %7974 = vmatprep.subr.bf16.mxu0 %v7367
    %7975 = vmatpush2.bf16.msra.mxu0 %v7366
    %7976 = vmatprep.subr.bf16.mxu0 %v7361
    %7977 = vmatpush2.bf16.msra.mxu0 %v7360
    %7978 = vmatprep.subr.bf16.mxu0 %v7355
    %7979 = vmatpush2.bf16.msra.mxu0 %v7354
    %7980 = vmatprep.mubr.bf16.mxu0 %v6021
    %7981 = vmatmul.mubr.bf16.gmra.mxu0 %v6020
    %v7982 = vpop.f32.mrf.mxu0
    %v7983 = vadd.f32 %v7942, %v7982
    %v7984 = vpop.f32.mrf.mxu0
    %v7985 = vadd.f32 %v7944, %v7984
    %v7986 = vpop.f32.mrf.mxu0
    %v7987 = vpop.f32.mrf.mxu0
    %7988 = vdwg.mxu0
    %7989 = vmatprep.subr.bf16.mxu0 %v7445
    %7990 = vmatpush1.bf16.msra.mxu0 %v7444
    %7991 = vmatprep.subr.bf16.mxu0 %v7439
    %7992 = vmatpush1.bf16.msra.mxu0 %v7438
    %7993 = vmatprep.subr.bf16.mxu0 %v7433
    %7994 = vmatpush1.bf16.msra.mxu0 %v7432
    %7995 = vmatprep.subr.bf16.mxu0 %v7427
    %7996 = vmatpush1.bf16.msra.mxu0 %v7426
    %7997 = vmatprep.subr.bf16.mxu0 %v7421
    %7998 = vmatpush1.bf16.msra.mxu0 %v7420
    %7999 = vmatprep.subr.bf16.mxu0 %v7415
    %8000 = vmatpush1.bf16.msra.mxu0 %v7414
    %8001 = vmatprep.subr.bf16.mxu0 %v7409
    %8002 = vmatpush1.bf16.msra.mxu0 %v7408
    %8003 = vmatprep.subr.bf16.mxu0 %v7403
    %8004 = vmatpush1.bf16.msra.mxu0 %v7402
    %8005 = vmatprep.subr.bf16.mxu0 %v7493
    %8006 = vmatpush2.bf16.msra.mxu0 %v7492
    %8007 = vmatprep.subr.bf16.mxu0 %v7487
    %8008 = vmatpush2.bf16.msra.mxu0 %v7486
    %8009 = vmatprep.subr.bf16.mxu0 %v7481
    %8010 = vmatpush2.bf16.msra.mxu0 %v7480
    %8011 = vmatprep.subr.bf16.mxu0 %v7475
    %8012 = vmatpush2.bf16.msra.mxu0 %v7474
    %8013 = vmatprep.subr.bf16.mxu0 %v7469
    %8014 = vmatpush2.bf16.msra.mxu0 %v7468
    %8015 = vmatprep.subr.bf16.mxu0 %v7463
    %8016 = vmatpush2.bf16.msra.mxu0 %v7462
    %8017 = vmatprep.subr.bf16.mxu0 %v7457
    %8018 = vmatpush2.bf16.msra.mxu0 %v7456
    %8019 = vmatprep.subr.bf16.mxu0 %v7451
    %8020 = vmatpush2.bf16.msra.mxu0 %v7450
    %8021 = vmatprep.mubr.bf16.mxu0 %v6023
    %8022 = vmatmul.mubr.bf16.gmra.mxu0 %v6022
    %v8023 = vpop.f32.mrf.mxu0
    %v8024 = vadd.f32 %v7983, %v8023
    %v8025 = vpop.f32.mrf.mxu0
    %v8026 = vadd.f32 %v7985, %v8025
    %v8027 = vpop.f32.mrf.mxu0
    %v8028 = vpop.f32.mrf.mxu0
    %8029 = vdwg.mxu0
    %8030 = vmatprep.subr.bf16.mxu0 %v7255
    %8031 = vmatpush1.bf16.msra.mxu0 %v7254
    %8032 = vmatprep.subr.bf16.mxu0 %v7249
    %8033 = vmatpush1.bf16.msra.mxu0 %v7248
    %8034 = vmatprep.subr.bf16.mxu0 %v7243
    %8035 = vmatpush1.bf16.msra.mxu0 %v7242
    %8036 = vmatprep.subr.bf16.mxu0 %v7237
    %8037 = vmatpush1.bf16.msra.mxu0 %v7236
    %8038 = vmatprep.subr.bf16.mxu0 %v7231
    %8039 = vmatpush1.bf16.msra.mxu0 %v7230
    %8040 = vmatprep.subr.bf16.mxu0 %v7225
    %8041 = vmatpush1.bf16.msra.mxu0 %v7224
    %8042 = vmatprep.subr.bf16.mxu0 %v7219
    %8043 = vmatpush1.bf16.msra.mxu0 %v7218
    %8044 = vmatprep.subr.bf16.mxu0 %v7213
    %8045 = vmatpush1.bf16.msra.mxu0 %v7212
    %8046 = vmatprep.subr.bf16.mxu0 %v7303
    %8047 = vmatpush2.bf16.msra.mxu0 %v7302
    %8048 = vmatprep.subr.bf16.mxu0 %v7297
    %8049 = vmatpush2.bf16.msra.mxu0 %v7296
    %8050 = vmatprep.subr.bf16.mxu0 %v7291
    %8051 = vmatpush2.bf16.msra.mxu0 %v7290
    %8052 = vmatprep.subr.bf16.mxu0 %v7285
    %8053 = vmatpush2.bf16.msra.mxu0 %v7284
    %8054 = vmatprep.subr.bf16.mxu0 %v7279
    %8055 = vmatpush2.bf16.msra.mxu0 %v7278
    %8056 = vmatprep.subr.bf16.mxu0 %v7273
    %8057 = vmatpush2.bf16.msra.mxu0 %v7272
    %8058 = vmatprep.subr.bf16.mxu0 %v7267
    %8059 = vmatpush2.bf16.msra.mxu0 %v7266
    %8060 = vmatprep.subr.bf16.mxu0 %v7261
    %8061 = vmatpush2.bf16.msra.mxu0 %v7260
    %8062 = vmatprep.mubr.bf16.mxu0 %v6019
    %8063 = vmatmul.mubr.bf16.gmra.mxu0 %v6018
    %v8064 = vpop.f32.mrf.mxu0
    %v8065 = vadd.f32 %v6333, %v8064
    %v8066 = vpop.f32.mrf.mxu0
    %v8067 = vadd.f32 %v6337, %v8066
    %v8068 = vpop.f32.mrf.mxu0
    %v8069 = vpop.f32.mrf.mxu0
    %8070 = vdwg.mxu0
    %8071 = vmatprep.subr.bf16.mxu0 %v7351
    %8072 = vmatpush1.bf16.msra.mxu0 %v7350
    %8073 = vmatprep.subr.bf16.mxu0 %v7345
    %8074 = vmatpush1.bf16.msra.mxu0 %v7344
    %8075 = vmatprep.subr.bf16.mxu0 %v7339
    %8076 = vmatpush1.bf16.msra.mxu0 %v7338
    %8077 = vmatprep.subr.bf16.mxu0 %v7333
    %8078 = vmatpush1.bf16.msra.mxu0 %v7332
    %8079 = vmatprep.subr.bf16.mxu0 %v7327
    %8080 = vmatpush1.bf16.msra.mxu0 %v7326
    %8081 = vmatprep.subr.bf16.mxu0 %v7321
    %8082 = vmatpush1.bf16.msra.mxu0 %v7320
    %8083 = vmatprep.subr.bf16.mxu0 %v7315
    %8084 = vmatpush1.bf16.msra.mxu0 %v7314
    %8085 = vmatprep.subr.bf16.mxu0 %v7309
    %8086 = vmatpush1.bf16.msra.mxu0 %v7308
    %8087 = vmatprep.subr.bf16.mxu0 %v7399
    %8088 = vmatpush2.bf16.msra.mxu0 %v7398
    %8089 = vmatprep.subr.bf16.mxu0 %v7393
    %8090 = vmatpush2.bf16.msra.mxu0 %v7392
    %8091 = vmatprep.subr.bf16.mxu0 %v7387
    %8092 = vmatpush2.bf16.msra.mxu0 %v7386
    %8093 = vmatprep.subr.bf16.mxu0 %v7381
    %8094 = vmatpush2.bf16.msra.mxu0 %v7380
    %8095 = vmatprep.subr.bf16.mxu0 %v7375
    %8096 = vmatpush2.bf16.msra.mxu0 %v7374
    %8097 = vmatprep.subr.bf16.mxu0 %v7369
    %8098 = vmatpush2.bf16.msra.mxu0 %v7368
    %8099 = vmatprep.subr.bf16.mxu0 %v7363
    %8100 = vmatpush2.bf16.msra.mxu0 %v7362
    %8101 = vmatprep.subr.bf16.mxu0 %v7357
    %8102 = vmatpush2.bf16.msra.mxu0 %v7356
    %8103 = vmatprep.mubr.bf16.mxu0 %v6021
    %8104 = vmatmul.mubr.bf16.gmra.mxu0 %v6020
    %v8105 = vpop.f32.mrf.mxu0
    %v8106 = vadd.f32 %v8065, %v8105
    %v8107 = vpop.f32.mrf.mxu0
    %v8108 = vadd.f32 %v8067, %v8107
    %v8109 = vpop.f32.mrf.mxu0
    %v8110 = vpop.f32.mrf.mxu0
    %8111 = vdwg.mxu0
    %8112 = vmatprep.subr.bf16.mxu0 %v7447
    %8113 = vmatpush1.bf16.msra.mxu0 %v7446
    %8114 = vmatprep.subr.bf16.mxu0 %v7441
    %8115 = vmatpush1.bf16.msra.mxu0 %v7440
    %8116 = vmatprep.subr.bf16.mxu0 %v7435
    %8117 = vmatpush1.bf16.msra.mxu0 %v7434
    %8118 = vmatprep.subr.bf16.mxu0 %v7429
    %8119 = vmatpush1.bf16.msra.mxu0 %v7428
    %8120 = vmatprep.subr.bf16.mxu0 %v7423
    %8121 = vmatpush1.bf16.msra.mxu0 %v7422
    %8122 = vmatprep.subr.bf16.mxu0 %v7417
    %8123 = vmatpush1.bf16.msra.mxu0 %v7416
    %8124 = vmatprep.subr.bf16.mxu0 %v7411
    %8125 = vmatpush1.bf16.msra.mxu0 %v7410
    %8126 = vmatprep.subr.bf16.mxu0 %v7405
    %8127 = vmatpush1.bf16.msra.mxu0 %v7404
    %8128 = vmatprep.subr.bf16.mxu0 %v7495
    %8129 = vmatpush2.bf16.msra.mxu0 %v7494
    %8130 = vmatprep.subr.bf16.mxu0 %v7489
    %8131 = vmatpush2.bf16.msra.mxu0 %v7488
    %8132 = vmatprep.subr.bf16.mxu0 %v7483
    %8133 = vmatpush2.bf16.msra.mxu0 %v7482
    %8134 = vmatprep.subr.bf16.mxu0 %v7477
    %8135 = vmatpush2.bf16.msra.mxu0 %v7476
    %8136 = vmatprep.subr.bf16.mxu0 %v7471
    %8137 = vmatpush2.bf16.msra.mxu0 %v7470
    %8138 = vmatprep.subr.bf16.mxu0 %v7465
    %8139 = vmatpush2.bf16.msra.mxu0 %v7464
    %8140 = vmatprep.subr.bf16.mxu0 %v7459
    %8141 = vmatpush2.bf16.msra.mxu0 %v7458
    %8142 = vmatprep.subr.bf16.mxu0 %v7453
    %8143 = vmatpush2.bf16.msra.mxu0 %v7452
    %8144 = vmatprep.mubr.bf16.mxu0 %v6023
    %8145 = vmatmul.mubr.bf16.gmra.mxu0 %v6022
    %v8146 = vpop.f32.mrf.mxu0
    %v8147 = vadd.f32 %v8106, %v8146
    %v8148 = vpop.f32.mrf.mxu0
    %v8149 = vadd.f32 %v8108, %v8148
    %v8150 = vpop.f32.mrf.mxu0
    %v8151 = vpop.f32.mrf.mxu0
    %8152 = vdwg.mxu0
    %v8153 = vtanh.pop %v7901
    %v8154 = vtanh.pop %v7903
    %v8155 = vtanh.pop %v8024
    %v8156 = vtanh.pop %v8026
    %v8157 = vtanh.pop %v8147
    %v8158 = vtanh.pop %v8149
    %v8165 = vcombine.low %v8153, %v8154
    %v8166 = vcombine.low %v8155, %v8156
    %v8168 = vunpack.c.l.s4 1983009808
    %v8169 = vunpack.c.0.s8 %v8168
    %v8170 = vlaneseq
    %v8171 = vshrl.u32 %v8170, 7
    %v8172 = vsub.s32 %v8169, %v8171
    %v8173 = vrot.slane %v8165, %v8172
    %v8175 = vunpack.c.l.s4 1983009808
    %v8176 = vunpack.c.0.s8 %v8175
    %v8177 = vlaneseq
    %v8178 = vshrl.u32 %v8177, 7
    %v8179 = vsub.s32 %v8176, %v8178
    %v8180 = vrot.slane %v8166, %v8179
    %v8181 = vcombine.low %v8173, %v8180
    %v8182 = vcombine.low %v8157, %v8158
    %v8184 = vunpack.c.l.s4 1983009808
    %v8185 = vunpack.c.0.s8 %v8184
    %v8186 = vlaneseq
    %v8187 = vshrl.u32 %v8186, 7
    %v8188 = vsub.s32 %v8185, %v8187
    %v8189 = vrot.slane %v8182, %v8188
    %8192 = vst [vmem:[%s14] sm:$0xff] %v8181
    %8193 = vst [vmem:[%s14 + $0x8] sm:$0xf] %v8189
    // Predicated region
    $region106: #{vae_forward.1} parent=1 // pred_check
      _
    $region107: #{vae_forward.1} parent=1 // pred_check_branch
      %8195 = sbr.rel (0) target = $region109
    $region108: #{vae_forward.1} parent=1 // pred_region
      _
    $region109: #{vae_forward.1} parent=1 // pred_fallthru
      _
    // Predicated region
    $region110: #{vae_forward.1} parent=1 // pred_check
      _
    $region111: #{vae_forward.1} parent=1 // pred_check_branch
      %8197 = sbr.rel (0) target = $region113
    $region112: #{vae_forward.1} parent=1 // pred_region
      _
    $region113: #{vae_forward.1} parent=1 // pred_fallthru
      _
    // Predicated region
    $region114: #{vae_forward.1} parent=1 // pred_check
      _
    $region115: #{vae_forward.1} parent=1 // pred_check_branch
      %8199 = sbr.rel (0) target = $region117
    $region116: #{vae_forward.1} parent=1 // pred_region
      _
    $region117: #{vae_forward.1} parent=1 // pred_fallthru
      _
    // Predicated region
    $region118: #{vae_forward.1} parent=1 // pred_check
      _
    $region119: #{vae_forward.1} parent=1 // pred_check_branch
      %8201 = sbr.rel (0) target = $region121
    $region120: #{vae_forward.1} parent=1 // pred_region
      _
    $region121: #{vae_forward.1} parent=1 // pred_fallthru
      _
    %8202 = vsyncpa [#allocation3], 1
    %8203 = vsyncpa [#allocation5], 1
    %8204 = vsyncpa [#allocation8], 1
    %8205 = vsyncpa [#allocation11], 1
    %8206 = vsyncpa [#allocation14], 1
    %8207 = vsyncpa [#allocation17], 1
    %8208 = vsyncpa [#allocation20], 1

</llo_original>
